<compile_context>
chip_gen: v7x
topology: tpu7x:2x2x1
jax: 0.10.0
libtpu: 0.0.40
codegen_flags: <defaults>
</compile_context>

<pallas_src>
import functools
from itertools import product

import jax
import jax.numpy as jnp
from jax import lax
from jax.experimental import pallas as pl
from jax.experimental.pallas import tpu as pltpu

BETA = 0.25  # commitment cost of the vector quantizer


# --------------------------------------------------------------------------- kernel
def _vqvae_fused_kernel(xp_ref, enc_w_ref, enc_b_ref, cb_ref, e2_ref,
                        dec_w_ref, dec_b_ref,
                        recon_ref, sq_ref,
                        z_ref, qpad_ref,
                        *, H, W, C, D, Cout, K):
    f32 = jnp.float32

    # Zero the spatially padded quantized-latent scratch (its border must stay 0 for
    # the decoder's "same" padding; scratch contents persist across grid steps).
    qpad_ref[...] = jnp.zeros_like(qpad_ref)

    # ---------------- encoder: 3x3 same conv + ReLU (lane-folded, 9 taps) ----------
    # xp_ref block: (1, H+2, (W+2)*C)   ->   z: (H, W*D)
    acc = jnp.zeros((H, W * D), f32)
    for t, (dy, dx) in enumerate(product(range(3), range(3))):
        tap = xp_ref[0, dy:dy + H, dx * C:dx * C + W * C]          # (H, W*C) f32
        acc += jnp.dot(tap.astype(jnp.bfloat16), enc_w_ref[t],      # bf16 x bf16
                       preferred_element_type=f32)                  # f32 accumulate
    z_ref[...] = jnp.maximum(acc + enc_b_ref[...], 0.0)             # (H, W*D) f32

    # ---------------- vector quantizer (per spatial column group, f32) -------------
    cb = cb_ref[...]                                                 # (K, D)
    e2 = e2_ref[...]                                                 # (1, K) precomputed
    sse_rows = jnp.zeros((H, 1), f32)
    for w in range(W):
        z_w = z_ref[:, w * D:(w + 1) * D]                            # (H, D)
        ze = lax.dot_general(z_w, cb, (((1,), (1,)), ((), ())),
                             preferred_element_type=f32)             # (H, K)
        z2 = jnp.sum(z_w * z_w, axis=-1, keepdims=True)              # (H, 1)
        dist = z2 + e2 - 2.0 * ze                                    # (H, K)
        dmin = jnp.min(dist, axis=-1, keepdims=True)
        iota = lax.broadcasted_iota(jnp.int32, (H, K), 1)
        idx = jnp.min(jnp.where(dist <= dmin, iota, K),
                      axis=-1, keepdims=True)                        # first-index argmin
        onehot = (iota == idx).astype(f32)                           # (H, K)
        q_w = jnp.dot(onehot, cb, preferred_element_type=f32)        # (H, D)
        sse_rows += jnp.sum((z_w - q_w) * (z_w - q_w),
                            axis=-1, keepdims=True)
        # write into the interior of the spatially padded scratch
        qpad_ref[1:H + 1, (w + 1) * D:(w + 2) * D] = q_w

    total = jnp.sum(sse_rows, axis=0, keepdims=True)                 # (1, 1) per image
    sq_ref[0] = jnp.broadcast_to(total, (1, 128))

    # ---------------- decoder: 3x3 same conv on quantized latents ------------------
    racc = jnp.zeros((H, W * Cout), f32)
    for t, (dy, dx) in enumerate(product(range(3), range(3))):
        tap = qpad_ref[dy:dy + H, dx * D:dx * D + W * D]             # (H, W*D) f32
        racc += jnp.dot(tap.astype(jnp.bfloat16), dec_w_ref[t],
                        preferred_element_type=f32)
    recon_ref[0] = racc + dec_b_ref[...]                             # (H, W*Cout)


# --------------------------------------------------------------------------- wrapper
def _block_diag_taps(w_taps, W):
    """(9, Cin, Cout) tap weights -> (9, W*Cin, W*Cout) block-diag kron(eye(W), tap)."""
    t, ci, co = w_taps.shape
    eye = jnp.eye(W, dtype=w_taps.dtype)
    bd = jnp.einsum('wv,tcd->twcvd', eye, w_taps)
    return bd.reshape(t, W * ci, W * co)


def vqvae_forward(x_nchw, params, *, training=True):
    """Mirrors VQVAE_Module.forward: E(x) -> vq_layer -> D(quantized)."""
    N, C, H, W = x_nchw.shape
    enc_w = params["enc_w"]          # (3, 3, C, D)  == torch (D, C, 3, 3).transpose(2,3,1,0)
    enc_b = params["enc_b"]          # (D,)
    dec_w = params["dec_w"]          # (3, 3, D, C)
    dec_b = params["dec_b"]          # (C,)
    cb = params["codebook"].astype(jnp.float32)     # (K, D)
    K, D = cb.shape
    Cout = dec_w.shape[-1]

    # NCHW -> NHWC, spatial 'same' zero-padding, fold W into the lane axis.
    x = jnp.transpose(x_nchw, (0, 2, 3, 1)).astype(jnp.float32)
    xp = jnp.pad(x, ((0, 0), (1, 1), (1, 1), (0, 0)))
    xp2 = xp.reshape(N, H + 2, (W + 2) * C)

    enc_wbd = _block_diag_taps(enc_w.reshape(9, C, D), W).astype(jnp.bfloat16)
    dec_wbd = _block_diag_taps(dec_w.reshape(9, D, Cout), W).astype(jnp.bfloat16)
    enc_bf = jnp.tile(enc_b.astype(jnp.float32), W)[None, :]        # (1, W*D)
    dec_bf = jnp.tile(dec_b.astype(jnp.float32), W)[None, :]        # (1, W*Cout)
    e2 = jnp.sum(cb * cb, axis=-1)[None, :]                         # (1, K) precomputed

    kernel = functools.partial(_vqvae_fused_kernel,
                               H=H, W=W, C=C, D=D, Cout=Cout, K=K)

    recon_f, sq = pl.pallas_call(
        kernel,
        out_shape=(
            jax.ShapeDtypeStruct((N, H, W * Cout), jnp.float32),
            jax.ShapeDtypeStruct((N, 1, 128), jnp.float32),
        ),
        grid_spec=pltpu.PrefetchScalarGridSpec(
            num_scalar_prefetch=0,
            grid=(N,),
            in_specs=[
                pl.BlockSpec((1, H + 2, (W + 2) * C), lambda n: (n, 0, 0)),  # image
                pl.BlockSpec((9, W * C, W * D), lambda n: (0, 0, 0)),        # enc taps
                pl.BlockSpec((1, W * D), lambda n: (0, 0)),                  # enc bias
                pl.BlockSpec((K, D), lambda n: (0, 0)),                      # codebook
                pl.BlockSpec((1, K), lambda n: (0, 0)),                      # ||cb||^2
                pl.BlockSpec((9, W * D, W * Cout), lambda n: (0, 0, 0)),     # dec taps
                pl.BlockSpec((1, W * Cout), lambda n: (0, 0)),               # dec bias
            ],
            out_specs=(
                pl.BlockSpec((1, H, W * Cout), lambda n: (n, 0, 0)),         # recon
                pl.BlockSpec((1, 1, 128), lambda n: (n, 0, 0)),              # SSE partial
            ),
            scratch_shapes=[
                pltpu.VMEM((H, W * D), jnp.float32),                 # latents z
                pltpu.VMEM((H + 2, (W + 2) * D), jnp.float32),       # padded quantized q
            ],
        ),
        compiler_params=pltpu.CompilerParams(
            dimension_semantics=("parallel",),
            vmem_limit_bytes=32 * 1024 * 1024,
        ),
    )(xp2, enc_wbd, enc_bf, cb, e2, dec_wbd, dec_bf)

    # vq_loss = beta * mse(sg(q), z) + mse(q, sg(z))  -> forward value (1+beta)*mse(q, z)
    sse = jnp.sum(sq[:, 0, 0])
    vq_loss = (1.0 + BETA) * sse / (N * H * W * D)

    recon = recon_f.reshape(N, H, W, Cout).transpose(0, 3, 1, 2)     # NHWC -> NCHW
    if training:
        return recon, vq_loss
    return recon


def init_params(key, c_in, latent_dim, num_emb):
    ks = jax.random.split(key, 5)
    enc_w = (jax.random.normal(ks[0], (3, 3, c_in, latent_dim), jnp.float32)
             / jnp.sqrt(9.0 * c_in))
    enc_b = jax.random.normal(ks[1], (latent_dim,), jnp.float32) * 0.01
    dec_w = (jax.random.normal(ks[2], (3, 3, latent_dim, c_in), jnp.float32)
             / jnp.sqrt(9.0 * latent_dim))
    dec_b = jax.random.normal(ks[3], (c_in,), jnp.float32) * 0.01
    codebook = jax.random.uniform(ks[4], (num_emb, latent_dim), jnp.float32,
                                  minval=-1.0 / num_emb, maxval=1.0 / num_emb)
    return dict(enc_w=enc_w, enc_b=enc_b, dec_w=dec_w, dec_b=dec_b, codebook=codebook)


if __name__ == "__main__":
    key = jax.random.PRNGKey(0)
    kx, kp = jax.random.split(key)
    # small shapes consistent with the module: batch=2, channels=4, spatial=16x16,
    # latent dim=8, codebook size=32  (W*D = 128 -> lane-dense latent slab)
    x = jax.random.normal(kx, (2, 4, 16, 16), jnp.float32)
    params = init_params(kp, c_in=4, latent_dim=8, num_emb=32)

    fwd = jax.jit(functools.partial(vqvae_forward, training=True))
    recon, vq_loss = fwd(x, params)
    jax.block_until_ready((recon, vq_loss))

    assert recon.shape == x.shape and recon.dtype == jnp.float32
    assert vq_loss.shape == () and jnp.isfinite(vq_loss)
    print("KERNEL_OK")
</pallas_src>

<mosaic_0001>
module attributes {stable_mosaic.version = 11 : i64} {
  func.func @_vqvae_fused_kernel(%arg0: i32, %arg1: memref<1x18x72xf32, #tpu.memory_space<vmem>>, %arg2: memref<9x64x128xbf16, #tpu.memory_space<vmem>>, %arg3: memref<1x128xf32, #tpu.memory_space<vmem>>, %arg4: memref<32x8xf32, #tpu.memory_space<vmem>>, %arg5: memref<1x32xf32, #tpu.memory_space<vmem>>, %arg6: memref<9x128x64xbf16, #tpu.memory_space<vmem>>, %arg7: memref<1x64xf32, #tpu.memory_space<vmem>>, %arg8: memref<1x16x64xf32, #tpu.memory_space<vmem>>, %arg9: memref<1x1x128xf32, #tpu.memory_space<vmem>>, %arg10: memref<16x128xf32, #tpu.memory_space<vmem>>, %arg11: memref<18x144xf32, #tpu.memory_space<vmem>>) attributes {dimension_semantics = [#tpu.dimension_semantics<parallel>], iteration_bounds = array<i64: 2>, scalar_prefetch = 0 : i64, scratch_operands = 2 : i64, tpu.core_type = #tpu.core_type<tc>, window_params = [{transform_indices = @transform_0, window_bounds = array<i64: 1, 18, 72>}, {pipeline_mode = #tpu.pipeline_mode<synchronous>, transform_indices = @transform_1, window_bounds = array<i64: 9, 64, 128>}, {pipeline_mode = #tpu.pipeline_mode<synchronous>, transform_indices = @transform_2, window_bounds = array<i64: 1, 128>}, {pipeline_mode = #tpu.pipeline_mode<synchronous>, transform_indices = @transform_3, window_bounds = array<i64: 32, 8>}, {pipeline_mode = #tpu.pipeline_mode<synchronous>, transform_indices = @transform_4, window_bounds = array<i64: 1, 32>}, {pipeline_mode = #tpu.pipeline_mode<synchronous>, transform_indices = @transform_5, window_bounds = array<i64: 9, 128, 64>}, {pipeline_mode = #tpu.pipeline_mode<synchronous>, transform_indices = @transform_6, window_bounds = array<i64: 1, 64>}, {transform_indices = @transform_7, window_bounds = array<i64: 1, 16, 64>}, {transform_indices = @transform_8, window_bounds = array<i64: 1, 1, 128>}]} {
    %cst = arith.constant 0.000000e+00 : f32
    %0 = vector.broadcast %cst : f32 to vector<18x144xf32>
    %c0 = arith.constant 0 : index
    %c0_0 = arith.constant 0 : index
    %1 = vector.load %arg11[%c0, %c0_0] : memref<18x144xf32, #tpu.memory_space<vmem>>, vector<18x144xf32>
    tpu.vector_store %arg11[%c0, %c0_0], %0 {strides = array<i32>} : memref<18x144xf32, #tpu.memory_space<vmem>>, vector<18x144xf32>,
    %cst_1 = arith.constant 0.000000e+00 : f32
    %2 = vector.broadcast %cst_1 : f32 to vector<16x128xf32>
    %c0_2 = arith.constant 0 : index
    %c0_3 = arith.constant 0 : index
    %c0_4 = arith.constant 0 : index
    %3 = vector.load %arg1[%c0_2, %c0_3, %c0_4] : memref<1x18x72xf32, #tpu.memory_space<vmem>>, vector<1x16x64xf32>
    %4 = vector.shape_cast %3 : vector<1x16x64xf32> to vector<16x64xf32>
    %5 = arith.truncf %4 : vector<16x64xf32> to vector<16x64xbf16>
    %c0_5 = arith.constant 0 : index
    %c0_6 = arith.constant 0 : index
    %c0_7 = arith.constant 0 : index
    %6 = vector.load %arg2[%c0_5, %c0_6, %c0_7] : memref<9x64x128xbf16, #tpu.memory_space<vmem>>, vector<1x64x128xbf16>
    %7 = vector.shape_cast %6 : vector<1x64x128xbf16> to vector<64x128xbf16>
    %cst_8 = arith.constant dense<0.000000e+00> : vector<16x128xf32>
    %8 = tpu.matmul %5, %7, %cst_8 {dimension_numbers = #tpu.dot_dimension_numbers<[1], [0], [0], [1], [0, 0, 1, 1], [], []>} : vector<16x64xbf16>, vector<64x128xbf16>, vector<16x128xf32> -> vector<16x128xf32>
    %9 = arith.addf %2, %8 : vector<16x128xf32>
    %c0_9 = arith.constant 0 : index
    %c0_10 = arith.constant 0 : index
    %c4 = arith.constant 4 : index
    %10 = vector.load %arg1[%c0_9, %c0_10, %c4] : memref<1x18x72xf32, #tpu.memory_space<vmem>>, vector<1x16x64xf32>
    %11 = vector.shape_cast %10 : vector<1x16x64xf32> to vector<16x64xf32>
    %12 = arith.truncf %11 : vector<16x64xf32> to vector<16x64xbf16>
    %c1 = arith.constant 1 : index
    %c0_11 = arith.constant 0 : index
    %c0_12 = arith.constant 0 : index
    %13 = vector.load %arg2[%c1, %c0_11, %c0_12] : memref<9x64x128xbf16, #tpu.memory_space<vmem>>, vector<1x64x128xbf16>
    %14 = vector.shape_cast %13 : vector<1x64x128xbf16> to vector<64x128xbf16>
    %cst_13 = arith.constant dense<0.000000e+00> : vector<16x128xf32>
    %15 = tpu.matmul %12, %14, %cst_13 {dimension_numbers = #tpu.dot_dimension_numbers<[1], [0], [0], [1], [0, 0, 1, 1], [], []>} : vector<16x64xbf16>, vector<64x128xbf16>, vector<16x128xf32> -> vector<16x128xf32>
    %16 = arith.addf %9, %15 : vector<16x128xf32>
    %c0_14 = arith.constant 0 : index
    %c0_15 = arith.constant 0 : index
    %c8 = arith.constant 8 : index
    %17 = vector.load %arg1[%c0_14, %c0_15, %c8] : memref<1x18x72xf32, #tpu.memory_space<vmem>>, vector<1x16x64xf32>
    %18 = vector.shape_cast %17 : vector<1x16x64xf32> to vector<16x64xf32>
    %19 = arith.truncf %18 : vector<16x64xf32> to vector<16x64xbf16>
    %c2 = arith.constant 2 : index
    %c0_16 = arith.constant 0 : index
    %c0_17 = arith.constant 0 : index
    %20 = vector.load %arg2[%c2, %c0_16, %c0_17] : memref<9x64x128xbf16, #tpu.memory_space<vmem>>, vector<1x64x128xbf16>
    %21 = vector.shape_cast %20 : vector<1x64x128xbf16> to vector<64x128xbf16>
    %cst_18 = arith.constant dense<0.000000e+00> : vector<16x128xf32>
    %22 = tpu.matmul %19, %21, %cst_18 {dimension_numbers = #tpu.dot_dimension_numbers<[1], [0], [0], [1], [0, 0, 1, 1], [], []>} : vector<16x64xbf16>, vector<64x128xbf16>, vector<16x128xf32> -> vector<16x128xf32>
    %23 = arith.addf %16, %22 : vector<16x128xf32>
    %c0_19 = arith.constant 0 : index
    %c1_20 = arith.constant 1 : index
    %c0_21 = arith.constant 0 : index
    %24 = vector.load %arg1[%c0_19, %c1_20, %c0_21] : memref<1x18x72xf32, #tpu.memory_space<vmem>>, vector<1x16x64xf32>
    %25 = vector.shape_cast %24 : vector<1x16x64xf32> to vector<16x64xf32>
    %26 = arith.truncf %25 : vector<16x64xf32> to vector<16x64xbf16>
    %c3 = arith.constant 3 : index
    %c0_22 = arith.constant 0 : index
    %c0_23 = arith.constant 0 : index
    %27 = vector.load %arg2[%c3, %c0_22, %c0_23] : memref<9x64x128xbf16, #tpu.memory_space<vmem>>, vector<1x64x128xbf16>
    %28 = vector.shape_cast %27 : vector<1x64x128xbf16> to vector<64x128xbf16>
    %cst_24 = arith.constant dense<0.000000e+00> : vector<16x128xf32>
    %29 = tpu.matmul %26, %28, %cst_24 {dimension_numbers = #tpu.dot_dimension_numbers<[1], [0], [0], [1], [0, 0, 1, 1], [], []>} : vector<16x64xbf16>, vector<64x128xbf16>, vector<16x128xf32> -> vector<16x128xf32>
    %30 = arith.addf %23, %29 : vector<16x128xf32>
    %c0_25 = arith.constant 0 : index
    %c1_26 = arith.constant 1 : index
    %c4_27 = arith.constant 4 : index
    %31 = vector.load %arg1[%c0_25, %c1_26, %c4_27] : memref<1x18x72xf32, #tpu.memory_space<vmem>>, vector<1x16x64xf32>
    %32 = vector.shape_cast %31 : vector<1x16x64xf32> to vector<16x64xf32>
    %33 = arith.truncf %32 : vector<16x64xf32> to vector<16x64xbf16>
    %c4_28 = arith.constant 4 : index
    %c0_29 = arith.constant 0 : index
    %c0_30 = arith.constant 0 : index
    %34 = vector.load %arg2[%c4_28, %c0_29, %c0_30] : memref<9x64x128xbf16, #tpu.memory_space<vmem>>, vector<1x64x128xbf16>
    %35 = vector.shape_cast %34 : vector<1x64x128xbf16> to vector<64x128xbf16>
    %cst_31 = arith.constant dense<0.000000e+00> : vector<16x128xf32>
    %36 = tpu.matmul %33, %35, %cst_31 {dimension_numbers = #tpu.dot_dimension_numbers<[1], [0], [0], [1], [0, 0, 1, 1], [], []>} : vector<16x64xbf16>, vector<64x128xbf16>, vector<16x128xf32> -> vector<16x128xf32>
    %37 = arith.addf %30, %36 : vector<16x128xf32>
    %c0_32 = arith.constant 0 : index
    %c1_33 = arith.constant 1 : index
    %c8_34 = arith.constant 8 : index
    %38 = vector.load %arg1[%c0_32, %c1_33, %c8_34] : memref<1x18x72xf32, #tpu.memory_space<vmem>>, vector<1x16x64xf32>
    %39 = vector.shape_cast %38 : vector<1x16x64xf32> to vector<16x64xf32>
    %40 = arith.truncf %39 : vector<16x64xf32> to vector<16x64xbf16>
    %c5 = arith.constant 5 : index
    %c0_35 = arith.constant 0 : index
    %c0_36 = arith.constant 0 : index
    %41 = vector.load %arg2[%c5, %c0_35, %c0_36] : memref<9x64x128xbf16, #tpu.memory_space<vmem>>, vector<1x64x128xbf16>
    %42 = vector.shape_cast %41 : vector<1x64x128xbf16> to vector<64x128xbf16>
    %cst_37 = arith.constant dense<0.000000e+00> : vector<16x128xf32>
    %43 = tpu.matmul %40, %42, %cst_37 {dimension_numbers = #tpu.dot_dimension_numbers<[1], [0], [0], [1], [0, 0, 1, 1], [], []>} : vector<16x64xbf16>, vector<64x128xbf16>, vector<16x128xf32> -> vector<16x128xf32>
    %44 = arith.addf %37, %43 : vector<16x128xf32>
    %c0_38 = arith.constant 0 : index
    %c2_39 = arith.constant 2 : index
    %c0_40 = arith.constant 0 : index
    %45 = vector.load %arg1[%c0_38, %c2_39, %c0_40] : memref<1x18x72xf32, #tpu.memory_space<vmem>>, vector<1x16x64xf32>
    %46 = vector.shape_cast %45 : vector<1x16x64xf32> to vector<16x64xf32>
    %47 = arith.truncf %46 : vector<16x64xf32> to vector<16x64xbf16>
    %c6 = arith.constant 6 : index
    %c0_41 = arith.constant 0 : index
    %c0_42 = arith.constant 0 : index
    %48 = vector.load %arg2[%c6, %c0_41, %c0_42] : memref<9x64x128xbf16, #tpu.memory_space<vmem>>, vector<1x64x128xbf16>
    %49 = vector.shape_cast %48 : vector<1x64x128xbf16> to vector<64x128xbf16>
    %cst_43 = arith.constant dense<0.000000e+00> : vector<16x128xf32>
    %50 = tpu.matmul %47, %49, %cst_43 {dimension_numbers = #tpu.dot_dimension_numbers<[1], [0], [0], [1], [0, 0, 1, 1], [], []>} : vector<16x64xbf16>, vector<64x128xbf16>, vector<16x128xf32> -> vector<16x128xf32>
    %51 = arith.addf %44, %50 : vector<16x128xf32>
    %c0_44 = arith.constant 0 : index
    %c2_45 = arith.constant 2 : index
    %c4_46 = arith.constant 4 : index
    %52 = vector.load %arg1[%c0_44, %c2_45, %c4_46] : memref<1x18x72xf32, #tpu.memory_space<vmem>>, vector<1x16x64xf32>
    %53 = vector.shape_cast %52 : vector<1x16x64xf32> to vector<16x64xf32>
    %54 = arith.truncf %53 : vector<16x64xf32> to vector<16x64xbf16>
    %c7 = arith.constant 7 : index
    %c0_47 = arith.constant 0 : index
    %c0_48 = arith.constant 0 : index
    %55 = vector.load %arg2[%c7, %c0_47, %c0_48] : memref<9x64x128xbf16, #tpu.memory_space<vmem>>, vector<1x64x128xbf16>
    %56 = vector.shape_cast %55 : vector<1x64x128xbf16> to vector<64x128xbf16>
    %cst_49 = arith.constant dense<0.000000e+00> : vector<16x128xf32>
    %57 = tpu.matmul %54, %56, %cst_49 {dimension_numbers = #tpu.dot_dimension_numbers<[1], [0], [0], [1], [0, 0, 1, 1], [], []>} : vector<16x64xbf16>, vector<64x128xbf16>, vector<16x128xf32> -> vector<16x128xf32>
    %58 = arith.addf %51, %57 : vector<16x128xf32>
    %c0_50 = arith.constant 0 : index
    %c2_51 = arith.constant 2 : index
    %c8_52 = arith.constant 8 : index
    %59 = vector.load %arg1[%c0_50, %c2_51, %c8_52] : memref<1x18x72xf32, #tpu.memory_space<vmem>>, vector<1x16x64xf32>
    %60 = vector.shape_cast %59 : vector<1x16x64xf32> to vector<16x64xf32>
    %61 = arith.truncf %60 : vector<16x64xf32> to vector<16x64xbf16>
    %c8_53 = arith.constant 8 : index
    %c0_54 = arith.constant 0 : index
    %c0_55 = arith.constant 0 : index
    %62 = vector.load %arg2[%c8_53, %c0_54, %c0_55] : memref<9x64x128xbf16, #tpu.memory_space<vmem>>, vector<1x64x128xbf16>
    %63 = vector.shape_cast %62 : vector<1x64x128xbf16> to vector<64x128xbf16>
    %cst_56 = arith.constant dense<0.000000e+00> : vector<16x128xf32>
    %64 = tpu.matmul %61, %63, %cst_56 {dimension_numbers = #tpu.dot_dimension_numbers<[1], [0], [0], [1], [0, 0, 1, 1], [], []>} : vector<16x64xbf16>, vector<64x128xbf16>, vector<16x128xf32> -> vector<16x128xf32>
    %65 = arith.addf %58, %64 : vector<16x128xf32>
    %c0_57 = arith.constant 0 : index
    %c0_58 = arith.constant 0 : index
    %66 = vector.load %arg3[%c0_57, %c0_58] : memref<1x128xf32, #tpu.memory_space<vmem>>, vector<1x128xf32>
    %67 = vector.broadcast %66 : vector<1x128xf32> to vector<16x128xf32>
    %68 = arith.addf %65, %67 : vector<16x128xf32>
    %cst_59 = arith.constant 0.000000e+00 : f32
    %69 = vector.broadcast %cst_59 : f32 to vector<16x128xf32>
    %70 = arith.maximumf %68, %69 : vector<16x128xf32>
    %c0_60 = arith.constant 0 : index
    %c0_61 = arith.constant 0 : index
    %71 = vector.load %arg10[%c0_60, %c0_61] : memref<16x128xf32, #tpu.memory_space<vmem>>, vector<16x128xf32>
    tpu.vector_store %arg10[%c0_60, %c0_61], %70 {strides = array<i32>} : memref<16x128xf32, #tpu.memory_space<vmem>>, vector<16x128xf32>,
    %c0_62 = arith.constant 0 : index
    %c0_63 = arith.constant 0 : index
    %72 = vector.load %arg4[%c0_62, %c0_63] : memref<32x8xf32, #tpu.memory_space<vmem>>, vector<32x8xf32>
    %c0_64 = arith.constant 0 : index
    %c0_65 = arith.constant 0 : index
    %73 = vector.load %arg5[%c0_64, %c0_65] : memref<1x32xf32, #tpu.memory_space<vmem>>, vector<1x32xf32>
    %cst_66 = arith.constant 0.000000e+00 : f32
    %74 = vector.broadcast %cst_66 : f32 to vector<16x1xf32>
    %c0_67 = arith.constant 0 : index
    %c0_68 = arith.constant 0 : index
    %75 = vector.load %arg10[%c0_67, %c0_68] : memref<16x128xf32, #tpu.memory_space<vmem>>, vector<16x8xf32>
    %cst_69 = arith.constant dense<0.000000e+00> : vector<16x32xf32>
    %76 = tpu.matmul %75, %72, %cst_69 {dimension_numbers = #tpu.dot_dimension_numbers<[1], [1], [0], [0], [0, 0, 1, 0], [], []>} : vector<16x8xf32>, vector<32x8xf32>, vector<16x32xf32> -> vector<16x32xf32>
    %77 = arith.mulf %75, %75 : vector<16x8xf32>
    %cst_70 = arith.constant dense<0.000000e+00> : vector<16xf32>
    %78 = vector.multi_reduction <add>, %77, %cst_70 [1] : vector<16x8xf32> to vector<16xf32>
    %79 = vector.shape_cast %78 : vector<16xf32> to vector<16x1xf32>
    %80 = vector.broadcast %79 : vector<16x1xf32> to vector<16x32xf32>
    %81 = vector.broadcast %73 : vector<1x32xf32> to vector<16x32xf32>
    %82 = arith.addf %80, %81 : vector<16x32xf32>
    %cst_71 = arith.constant 2.000000e+00 : f32
    %83 = vector.broadcast %cst_71 : f32 to vector<16x32xf32>
    %84 = arith.mulf %83, %76 : vector<16x32xf32>
    %85 = arith.subf %82, %84 : vector<16x32xf32>
    %cst_72 = arith.constant dense<0x7F800000> : vector<16xf32>
    %86 = vector.multi_reduction <minimumf>, %85, %cst_72 [1] : vector<16x32xf32> to vector<16xf32>
    %87 = vector.shape_cast %86 : vector<16xf32> to vector<16x1xf32>
    %88 = tpu.iota {dimensions = array<i32: 1>} : vector<16x32xi32>
    %89 = vector.broadcast %87 : vector<16x1xf32> to vector<16x32xf32>
    %90 = arith.cmpf ole, %85, %89 : vector<16x32xf32>
    %c32_i32 = arith.constant 32 : i32
    %91 = vector.broadcast %c32_i32 : i32 to vector<16x32xi32>
    %92 = arith.select %90, %88, %91 : vector<16x32xi1>, vector<16x32xi32>
    %cst_73 = arith.constant dense<2147483647> : vector<16xi32>
    %93 = vector.multi_reduction <minsi>, %92, %cst_73 [1] : vector<16x32xi32> to vector<16xi32>
    %94 = vector.shape_cast %93 : vector<16xi32> to vector<16x1xi32>
    %95 = vector.broadcast %94 : vector<16x1xi32> to vector<16x32xi32>
    %96 = arith.cmpi eq, %88, %95 : vector<16x32xi32>
    %97 = arith.extui %96 : vector<16x32xi1> to vector<16x32xi32>
    %98 = arith.sitofp %97 : vector<16x32xi32> to vector<16x32xf32>
    %cst_74 = arith.constant dense<0.000000e+00> : vector<16x8xf32>
    %99 = tpu.matmul %98, %72, %cst_74 {dimension_numbers = #tpu.dot_dimension_numbers<[1], [0], [0], [1], [0, 0, 1, 1], [], []>} : vector<16x32xf32>, vector<32x8xf32>, vector<16x8xf32> -> vector<16x8xf32>
    %100 = arith.subf %75, %99 : vector<16x8xf32>
    %101 = arith.subf %75, %99 : vector<16x8xf32>
    %102 = arith.mulf %100, %101 : vector<16x8xf32>
    %cst_75 = arith.constant dense<0.000000e+00> : vector<16xf32>
    %103 = vector.multi_reduction <add>, %102, %cst_75 [1] : vector<16x8xf32> to vector<16xf32>
    %104 = vector.shape_cast %103 : vector<16xf32> to vector<16x1xf32>
    %105 = arith.addf %74, %104 : vector<16x1xf32>
    %c1_76 = arith.constant 1 : index
    %c8_77 = arith.constant 8 : index
    %106 = vector.load %arg11[%c1_76, %c8_77] : memref<18x144xf32, #tpu.memory_space<vmem>>, vector<16x8xf32>
    tpu.vector_store %arg11[%c1_76, %c8_77], %99 {strides = array<i32>} : memref<18x144xf32, #tpu.memory_space<vmem>>, vector<16x8xf32>,
    %c0_78 = arith.constant 0 : index
    %c8_79 = arith.constant 8 : index
    %107 = vector.load %arg10[%c0_78, %c8_79] : memref<16x128xf32, #tpu.memory_space<vmem>>, vector<16x8xf32>
    %cst_80 = arith.constant dense<0.000000e+00> : vector<16x32xf32>
    %108 = tpu.matmul %107, %72, %cst_80 {dimension_numbers = #tpu.dot_dimension_numbers<[1], [1], [0], [0], [0, 0, 1, 0], [], []>} : vector<16x8xf32>, vector<32x8xf32>, vector<16x32xf32> -> vector<16x32xf32>
    %109 = arith.mulf %107, %107 : vector<16x8xf32>
    %cst_81 = arith.constant dense<0.000000e+00> : vector<16xf32>
    %110 = vector.multi_reduction <add>, %109, %cst_81 [1] : vector<16x8xf32> to vector<16xf32>
    %111 = vector.shape_cast %110 : vector<16xf32> to vector<16x1xf32>
    %112 = vector.broadcast %111 : vector<16x1xf32> to vector<16x32xf32>
    %113 = vector.broadcast %73 : vector<1x32xf32> to vector<16x32xf32>
    %114 = arith.addf %112, %113 : vector<16x32xf32>
    %cst_82 = arith.constant 2.000000e+00 : f32
    %115 = vector.broadcast %cst_82 : f32 to vector<16x32xf32>
    %116 = arith.mulf %115, %108 : vector<16x32xf32>
    %117 = arith.subf %114, %116 : vector<16x32xf32>
    %cst_83 = arith.constant dense<0x7F800000> : vector<16xf32>
    %118 = vector.multi_reduction <minimumf>, %117, %cst_83 [1] : vector<16x32xf32> to vector<16xf32>
    %119 = vector.shape_cast %118 : vector<16xf32> to vector<16x1xf32>
    %120 = tpu.iota {dimensions = array<i32: 1>} : vector<16x32xi32>
    %121 = vector.broadcast %119 : vector<16x1xf32> to vector<16x32xf32>
    %122 = arith.cmpf ole, %117, %121 : vector<16x32xf32>
    %c32_i32_84 = arith.constant 32 : i32
    %123 = vector.broadcast %c32_i32_84 : i32 to vector<16x32xi32>
    %124 = arith.select %122, %120, %123 : vector<16x32xi1>, vector<16x32xi32>
    %cst_85 = arith.constant dense<2147483647> : vector<16xi32>
    %125 = vector.multi_reduction <minsi>, %124, %cst_85 [1] : vector<16x32xi32> to vector<16xi32>
    %126 = vector.shape_cast %125 : vector<16xi32> to vector<16x1xi32>
    %127 = vector.broadcast %126 : vector<16x1xi32> to vector<16x32xi32>
    %128 = arith.cmpi eq, %120, %127 : vector<16x32xi32>
    %129 = arith.extui %128 : vector<16x32xi1> to vector<16x32xi32>
    %130 = arith.sitofp %129 : vector<16x32xi32> to vector<16x32xf32>
    %cst_86 = arith.constant dense<0.000000e+00> : vector<16x8xf32>
    %131 = tpu.matmul %130, %72, %cst_86 {dimension_numbers = #tpu.dot_dimension_numbers<[1], [0], [0], [1], [0, 0, 1, 1], [], []>} : vector<16x32xf32>, vector<32x8xf32>, vector<16x8xf32> -> vector<16x8xf32>
    %132 = arith.subf %107, %131 : vector<16x8xf32>
    %133 = arith.subf %107, %131 : vector<16x8xf32>
    %134 = arith.mulf %132, %133 : vector<16x8xf32>
    %cst_87 = arith.constant dense<0.000000e+00> : vector<16xf32>
    %135 = vector.multi_reduction <add>, %134, %cst_87 [1] : vector<16x8xf32> to vector<16xf32>
    %136 = vector.shape_cast %135 : vector<16xf32> to vector<16x1xf32>
    %137 = arith.addf %105, %136 : vector<16x1xf32>
    %c1_88 = arith.constant 1 : index
    %c16 = arith.constant 16 : index
    %138 = vector.load %arg11[%c1_88, %c16] : memref<18x144xf32, #tpu.memory_space<vmem>>, vector<16x8xf32>
    tpu.vector_store %arg11[%c1_88, %c16], %131 {strides = array<i32>} : memref<18x144xf32, #tpu.memory_space<vmem>>, vector<16x8xf32>,
    %c0_89 = arith.constant 0 : index
    %c16_90 = arith.constant 16 : index
    %139 = vector.load %arg10[%c0_89, %c16_90] : memref<16x128xf32, #tpu.memory_space<vmem>>, vector<16x8xf32>
    %cst_91 = arith.constant dense<0.000000e+00> : vector<16x32xf32>
    %140 = tpu.matmul %139, %72, %cst_91 {dimension_numbers = #tpu.dot_dimension_numbers<[1], [1], [0], [0], [0, 0, 1, 0], [], []>} : vector<16x8xf32>, vector<32x8xf32>, vector<16x32xf32> -> vector<16x32xf32>
    %141 = arith.mulf %139, %139 : vector<16x8xf32>
    %cst_92 = arith.constant dense<0.000000e+00> : vector<16xf32>
    %142 = vector.multi_reduction <add>, %141, %cst_92 [1] : vector<16x8xf32> to vector<16xf32>
    %143 = vector.shape_cast %142 : vector<16xf32> to vector<16x1xf32>
    %144 = vector.broadcast %143 : vector<16x1xf32> to vector<16x32xf32>
    %145 = vector.broadcast %73 : vector<1x32xf32> to vector<16x32xf32>
    %146 = arith.addf %144, %145 : vector<16x32xf32>
    %cst_93 = arith.constant 2.000000e+00 : f32
    %147 = vector.broadcast %cst_93 : f32 to vector<16x32xf32>
    %148 = arith.mulf %147, %140 : vector<16x32xf32>
    %149 = arith.subf %146, %148 : vector<16x32xf32>
    %cst_94 = arith.constant dense<0x7F800000> : vector<16xf32>
    %150 = vector.multi_reduction <minimumf>, %149, %cst_94 [1] : vector<16x32xf32> to vector<16xf32>
    %151 = vector.shape_cast %150 : vector<16xf32> to vector<16x1xf32>
    %152 = tpu.iota {dimensions = array<i32: 1>} : vector<16x32xi32>
    %153 = vector.broadcast %151 : vector<16x1xf32> to vector<16x32xf32>
    %154 = arith.cmpf ole, %149, %153 : vector<16x32xf32>
    %c32_i32_95 = arith.constant 32 : i32
    %155 = vector.broadcast %c32_i32_95 : i32 to vector<16x32xi32>
    %156 = arith.select %154, %152, %155 : vector<16x32xi1>, vector<16x32xi32>
    %cst_96 = arith.constant dense<2147483647> : vector<16xi32>
    %157 = vector.multi_reduction <minsi>, %156, %cst_96 [1] : vector<16x32xi32> to vector<16xi32>
    %158 = vector.shape_cast %157 : vector<16xi32> to vector<16x1xi32>
    %159 = vector.broadcast %158 : vector<16x1xi32> to vector<16x32xi32>
    %160 = arith.cmpi eq, %152, %159 : vector<16x32xi32>
    %161 = arith.extui %160 : vector<16x32xi1> to vector<16x32xi32>
    %162 = arith.sitofp %161 : vector<16x32xi32> to vector<16x32xf32>
    %cst_97 = arith.constant dense<0.000000e+00> : vector<16x8xf32>
    %163 = tpu.matmul %162, %72, %cst_97 {dimension_numbers = #tpu.dot_dimension_numbers<[1], [0], [0], [1], [0, 0, 1, 1], [], []>} : vector<16x32xf32>, vector<32x8xf32>, vector<16x8xf32> -> vector<16x8xf32>
    %164 = arith.subf %139, %163 : vector<16x8xf32>
    %165 = arith.subf %139, %163 : vector<16x8xf32>
    %166 = arith.mulf %164, %165 : vector<16x8xf32>
    %cst_98 = arith.constant dense<0.000000e+00> : vector<16xf32>
    %167 = vector.multi_reduction <add>, %166, %cst_98 [1] : vector<16x8xf32> to vector<16xf32>
    %168 = vector.shape_cast %167 : vector<16xf32> to vector<16x1xf32>
    %169 = arith.addf %137, %168 : vector<16x1xf32>
    %c1_99 = arith.constant 1 : index
    %c24 = arith.constant 24 : index
    %170 = vector.load %arg11[%c1_99, %c24] : memref<18x144xf32, #tpu.memory_space<vmem>>, vector<16x8xf32>
    tpu.vector_store %arg11[%c1_99, %c24], %163 {strides = array<i32>} : memref<18x144xf32, #tpu.memory_space<vmem>>, vector<16x8xf32>,
    %c0_100 = arith.constant 0 : index
    %c24_101 = arith.constant 24 : index
    %171 = vector.load %arg10[%c0_100, %c24_101] : memref<16x128xf32, #tpu.memory_space<vmem>>, vector<16x8xf32>
    %cst_102 = arith.constant dense<0.000000e+00> : vector<16x32xf32>
    %172 = tpu.matmul %171, %72, %cst_102 {dimension_numbers = #tpu.dot_dimension_numbers<[1], [1], [0], [0], [0, 0, 1, 0], [], []>} : vector<16x8xf32>, vector<32x8xf32>, vector<16x32xf32> -> vector<16x32xf32>
    %173 = arith.mulf %171, %171 : vector<16x8xf32>
    %cst_103 = arith.constant dense<0.000000e+00> : vector<16xf32>
    %174 = vector.multi_reduction <add>, %173, %cst_103 [1] : vector<16x8xf32> to vector<16xf32>
    %175 = vector.shape_cast %174 : vector<16xf32> to vector<16x1xf32>
    %176 = vector.broadcast %175 : vector<16x1xf32> to vector<16x32xf32>
    %177 = vector.broadcast %73 : vector<1x32xf32> to vector<16x32xf32>
    %178 = arith.addf %176, %177 : vector<16x32xf32>
    %cst_104 = arith.constant 2.000000e+00 : f32
    %179 = vector.broadcast %cst_104 : f32 to vector<16x32xf32>
    %180 = arith.mulf %179, %172 : vector<16x32xf32>
    %181 = arith.subf %178, %180 : vector<16x32xf32>
    %cst_105 = arith.constant dense<0x7F800000> : vector<16xf32>
    %182 = vector.multi_reduction <minimumf>, %181, %cst_105 [1] : vector<16x32xf32> to vector<16xf32>
    %183 = vector.shape_cast %182 : vector<16xf32> to vector<16x1xf32>
    %184 = tpu.iota {dimensions = array<i32: 1>} : vector<16x32xi32>
    %185 = vector.broadcast %183 : vector<16x1xf32> to vector<16x32xf32>
    %186 = arith.cmpf ole, %181, %185 : vector<16x32xf32>
    %c32_i32_106 = arith.constant 32 : i32
    %187 = vector.broadcast %c32_i32_106 : i32 to vector<16x32xi32>
    %188 = arith.select %186, %184, %187 : vector<16x32xi1>, vector<16x32xi32>
    %cst_107 = arith.constant dense<2147483647> : vector<16xi32>
    %189 = vector.multi_reduction <minsi>, %188, %cst_107 [1] : vector<16x32xi32> to vector<16xi32>
    %190 = vector.shape_cast %189 : vector<16xi32> to vector<16x1xi32>
    %191 = vector.broadcast %190 : vector<16x1xi32> to vector<16x32xi32>
    %192 = arith.cmpi eq, %184, %191 : vector<16x32xi32>
    %193 = arith.extui %192 : vector<16x32xi1> to vector<16x32xi32>
    %194 = arith.sitofp %193 : vector<16x32xi32> to vector<16x32xf32>
    %cst_108 = arith.constant dense<0.000000e+00> : vector<16x8xf32>
    %195 = tpu.matmul %194, %72, %cst_108 {dimension_numbers = #tpu.dot_dimension_numbers<[1], [0], [0], [1], [0, 0, 1, 1], [], []>} : vector<16x32xf32>, vector<32x8xf32>, vector<16x8xf32> -> vector<16x8xf32>
    %196 = arith.subf %171, %195 : vector<16x8xf32>
    %197 = arith.subf %171, %195 : vector<16x8xf32>
    %198 = arith.mulf %196, %197 : vector<16x8xf32>
    %cst_109 = arith.constant dense<0.000000e+00> : vector<16xf32>
    %199 = vector.multi_reduction <add>, %198, %cst_109 [1] : vector<16x8xf32> to vector<16xf32>
    %200 = vector.shape_cast %199 : vector<16xf32> to vector<16x1xf32>
    %201 = arith.addf %169, %200 : vector<16x1xf32>
    %c1_110 = arith.constant 1 : index
    %c32 = arith.constant 32 : index
    %202 = vector.load %arg11[%c1_110, %c32] : memref<18x144xf32, #tpu.memory_space<vmem>>, vector<16x8xf32>
    tpu.vector_store %arg11[%c1_110, %c32], %195 {strides = array<i32>} : memref<18x144xf32, #tpu.memory_space<vmem>>, vector<16x8xf32>,
    %c0_111 = arith.constant 0 : index
    %c32_112 = arith.constant 32 : index
    %203 = vector.load %arg10[%c0_111, %c32_112] : memref<16x128xf32, #tpu.memory_space<vmem>>, vector<16x8xf32>
    %cst_113 = arith.constant dense<0.000000e+00> : vector<16x32xf32>
    %204 = tpu.matmul %203, %72, %cst_113 {dimension_numbers = #tpu.dot_dimension_numbers<[1], [1], [0], [0], [0, 0, 1, 0], [], []>} : vector<16x8xf32>, vector<32x8xf32>, vector<16x32xf32> -> vector<16x32xf32>
    %205 = arith.mulf %203, %203 : vector<16x8xf32>
    %cst_114 = arith.constant dense<0.000000e+00> : vector<16xf32>
    %206 = vector.multi_reduction <add>, %205, %cst_114 [1] : vector<16x8xf32> to vector<16xf32>
    %207 = vector.shape_cast %206 : vector<16xf32> to vector<16x1xf32>
    %208 = vector.broadcast %207 : vector<16x1xf32> to vector<16x32xf32>
    %209 = vector.broadcast %73 : vector<1x32xf32> to vector<16x32xf32>
    %210 = arith.addf %208, %209 : vector<16x32xf32>
    %cst_115 = arith.constant 2.000000e+00 : f32
    %211 = vector.broadcast %cst_115 : f32 to vector<16x32xf32>
    %212 = arith.mulf %211, %204 : vector<16x32xf32>
    %213 = arith.subf %210, %212 : vector<16x32xf32>
    %cst_116 = arith.constant dense<0x7F800000> : vector<16xf32>
    %214 = vector.multi_reduction <minimumf>, %213, %cst_116 [1] : vector<16x32xf32> to vector<16xf32>
    %215 = vector.shape_cast %214 : vector<16xf32> to vector<16x1xf32>
    %216 = tpu.iota {dimensions = array<i32: 1>} : vector<16x32xi32>
    %217 = vector.broadcast %215 : vector<16x1xf32> to vector<16x32xf32>
    %218 = arith.cmpf ole, %213, %217 : vector<16x32xf32>
    %c32_i32_117 = arith.constant 32 : i32
    %219 = vector.broadcast %c32_i32_117 : i32 to vector<16x32xi32>
    %220 = arith.select %218, %216, %219 : vector<16x32xi1>, vector<16x32xi32>
    %cst_118 = arith.constant dense<2147483647> : vector<16xi32>
    %221 = vector.multi_reduction <minsi>, %220, %cst_118 [1] : vector<16x32xi32> to vector<16xi32>
    %222 = vector.shape_cast %221 : vector<16xi32> to vector<16x1xi32>
    %223 = vector.broadcast %222 : vector<16x1xi32> to vector<16x32xi32>
    %224 = arith.cmpi eq, %216, %223 : vector<16x32xi32>
    %225 = arith.extui %224 : vector<16x32xi1> to vector<16x32xi32>
    %226 = arith.sitofp %225 : vector<16x32xi32> to vector<16x32xf32>
    %cst_119 = arith.constant dense<0.000000e+00> : vector<16x8xf32>
    %227 = tpu.matmul %226, %72, %cst_119 {dimension_numbers = #tpu.dot_dimension_numbers<[1], [0], [0], [1], [0, 0, 1, 1], [], []>} : vector<16x32xf32>, vector<32x8xf32>, vector<16x8xf32> -> vector<16x8xf32>
    %228 = arith.subf %203, %227 : vector<16x8xf32>
    %229 = arith.subf %203, %227 : vector<16x8xf32>
    %230 = arith.mulf %228, %229 : vector<16x8xf32>
    %cst_120 = arith.constant dense<0.000000e+00> : vector<16xf32>
    %231 = vector.multi_reduction <add>, %230, %cst_120 [1] : vector<16x8xf32> to vector<16xf32>
    %232 = vector.shape_cast %231 : vector<16xf32> to vector<16x1xf32>
    %233 = arith.addf %201, %232 : vector<16x1xf32>
    %c1_121 = arith.constant 1 : index
    %c40 = arith.constant 40 : index
    %234 = vector.load %arg11[%c1_121, %c40] : memref<18x144xf32, #tpu.memory_space<vmem>>, vector<16x8xf32>
    tpu.vector_store %arg11[%c1_121, %c40], %227 {strides = array<i32>} : memref<18x144xf32, #tpu.memory_space<vmem>>, vector<16x8xf32>,
    %c0_122 = arith.constant 0 : index
    %c40_123 = arith.constant 40 : index
    %235 = vector.load %arg10[%c0_122, %c40_123] : memref<16x128xf32, #tpu.memory_space<vmem>>, vector<16x8xf32>
    %cst_124 = arith.constant dense<0.000000e+00> : vector<16x32xf32>
    %236 = tpu.matmul %235, %72, %cst_124 {dimension_numbers = #tpu.dot_dimension_numbers<[1], [1], [0], [0], [0, 0, 1, 0], [], []>} : vector<16x8xf32>, vector<32x8xf32>, vector<16x32xf32> -> vector<16x32xf32>
    %237 = arith.mulf %235, %235 : vector<16x8xf32>
    %cst_125 = arith.constant dense<0.000000e+00> : vector<16xf32>
    %238 = vector.multi_reduction <add>, %237, %cst_125 [1] : vector<16x8xf32> to vector<16xf32>
    %239 = vector.shape_cast %238 : vector<16xf32> to vector<16x1xf32>
    %240 = vector.broadcast %239 : vector<16x1xf32> to vector<16x32xf32>
    %241 = vector.broadcast %73 : vector<1x32xf32> to vector<16x32xf32>
    %242 = arith.addf %240, %241 : vector<16x32xf32>
    %cst_126 = arith.constant 2.000000e+00 : f32
    %243 = vector.broadcast %cst_126 : f32 to vector<16x32xf32>
    %244 = arith.mulf %243, %236 : vector<16x32xf32>
    %245 = arith.subf %242, %244 : vector<16x32xf32>
    %cst_127 = arith.constant dense<0x7F800000> : vector<16xf32>
    %246 = vector.multi_reduction <minimumf>, %245, %cst_127 [1] : vector<16x32xf32> to vector<16xf32>
    %247 = vector.shape_cast %246 : vector<16xf32> to vector<16x1xf32>
    %248 = tpu.iota {dimensions = array<i32: 1>} : vector<16x32xi32>
    %249 = vector.broadcast %247 : vector<16x1xf32> to vector<16x32xf32>
    %250 = arith.cmpf ole, %245, %249 : vector<16x32xf32>
    %c32_i32_128 = arith.constant 32 : i32
    %251 = vector.broadcast %c32_i32_128 : i32 to vector<16x32xi32>
    %252 = arith.select %250, %248, %251 : vector<16x32xi1>, vector<16x32xi32>
    %cst_129 = arith.constant dense<2147483647> : vector<16xi32>
    %253 = vector.multi_reduction <minsi>, %252, %cst_129 [1] : vector<16x32xi32> to vector<16xi32>
    %254 = vector.shape_cast %253 : vector<16xi32> to vector<16x1xi32>
    %255 = vector.broadcast %254 : vector<16x1xi32> to vector<16x32xi32>
    %256 = arith.cmpi eq, %248, %255 : vector<16x32xi32>
    %257 = arith.extui %256 : vector<16x32xi1> to vector<16x32xi32>
    %258 = arith.sitofp %257 : vector<16x32xi32> to vector<16x32xf32>
    %cst_130 = arith.constant dense<0.000000e+00> : vector<16x8xf32>
    %259 = tpu.matmul %258, %72, %cst_130 {dimension_numbers = #tpu.dot_dimension_numbers<[1], [0], [0], [1], [0, 0, 1, 1], [], []>} : vector<16x32xf32>, vector<32x8xf32>, vector<16x8xf32> -> vector<16x8xf32>
    %260 = arith.subf %235, %259 : vector<16x8xf32>
    %261 = arith.subf %235, %259 : vector<16x8xf32>
    %262 = arith.mulf %260, %261 : vector<16x8xf32>
    %cst_131 = arith.constant dense<0.000000e+00> : vector<16xf32>
    %263 = vector.multi_reduction <add>, %262, %cst_131 [1] : vector<16x8xf32> to vector<16xf32>
    %264 = vector.shape_cast %263 : vector<16xf32> to vector<16x1xf32>
    %265 = arith.addf %233, %264 : vector<16x1xf32>
    %c1_132 = arith.constant 1 : index
    %c48 = arith.constant 48 : index
    %266 = vector.load %arg11[%c1_132, %c48] : memref<18x144xf32, #tpu.memory_space<vmem>>, vector<16x8xf32>
    tpu.vector_store %arg11[%c1_132, %c48], %259 {strides = array<i32>} : memref<18x144xf32, #tpu.memory_space<vmem>>, vector<16x8xf32>,
    %c0_133 = arith.constant 0 : index
    %c48_134 = arith.constant 48 : index
    %267 = vector.load %arg10[%c0_133, %c48_134] : memref<16x128xf32, #tpu.memory_space<vmem>>, vector<16x8xf32>
    %cst_135 = arith.constant dense<0.000000e+00> : vector<16x32xf32>
    %268 = tpu.matmul %267, %72, %cst_135 {dimension_numbers = #tpu.dot_dimension_numbers<[1], [1], [0], [0], [0, 0, 1, 0], [], []>} : vector<16x8xf32>, vector<32x8xf32>, vector<16x32xf32> -> vector<16x32xf32>
    %269 = arith.mulf %267, %267 : vector<16x8xf32>
    %cst_136 = arith.constant dense<0.000000e+00> : vector<16xf32>
    %270 = vector.multi_reduction <add>, %269, %cst_136 [1] : vector<16x8xf32> to vector<16xf32>
    %271 = vector.shape_cast %270 : vector<16xf32> to vector<16x1xf32>
    %272 = vector.broadcast %271 : vector<16x1xf32> to vector<16x32xf32>
    %273 = vector.broadcast %73 : vector<1x32xf32> to vector<16x32xf32>
    %274 = arith.addf %272, %273 : vector<16x32xf32>
    %cst_137 = arith.constant 2.000000e+00 : f32
    %275 = vector.broadcast %cst_137 : f32 to vector<16x32xf32>
    %276 = arith.mulf %275, %268 : vector<16x32xf32>
    %277 = arith.subf %274, %276 : vector<16x32xf32>
    %cst_138 = arith.constant dense<0x7F800000> : vector<16xf32>
    %278 = vector.multi_reduction <minimumf>, %277, %cst_138 [1] : vector<16x32xf32> to vector<16xf32>
    %279 = vector.shape_cast %278 : vector<16xf32> to vector<16x1xf32>
    %280 = tpu.iota {dimensions = array<i32: 1>} : vector<16x32xi32>
    %281 = vector.broadcast %279 : vector<16x1xf32> to vector<16x32xf32>
    %282 = arith.cmpf ole, %277, %281 : vector<16x32xf32>
    %c32_i32_139 = arith.constant 32 : i32
    %283 = vector.broadcast %c32_i32_139 : i32 to vector<16x32xi32>
    %284 = arith.select %282, %280, %283 : vector<16x32xi1>, vector<16x32xi32>
    %cst_140 = arith.constant dense<2147483647> : vector<16xi32>
    %285 = vector.multi_reduction <minsi>, %284, %cst_140 [1] : vector<16x32xi32> to vector<16xi32>
    %286 = vector.shape_cast %285 : vector<16xi32> to vector<16x1xi32>
    %287 = vector.broadcast %286 : vector<16x1xi32> to vector<16x32xi32>
    %288 = arith.cmpi eq, %280, %287 : vector<16x32xi32>
    %289 = arith.extui %288 : vector<16x32xi1> to vector<16x32xi32>
    %290 = arith.sitofp %289 : vector<16x32xi32> to vector<16x32xf32>
    %cst_141 = arith.constant dense<0.000000e+00> : vector<16x8xf32>
    %291 = tpu.matmul %290, %72, %cst_141 {dimension_numbers = #tpu.dot_dimension_numbers<[1], [0], [0], [1], [0, 0, 1, 1], [], []>} : vector<16x32xf32>, vector<32x8xf32>, vector<16x8xf32> -> vector<16x8xf32>
    %292 = arith.subf %267, %291 : vector<16x8xf32>
    %293 = arith.subf %267, %291 : vector<16x8xf32>
    %294 = arith.mulf %292, %293 : vector<16x8xf32>
    %cst_142 = arith.constant dense<0.000000e+00> : vector<16xf32>
    %295 = vector.multi_reduction <add>, %294, %cst_142 [1] : vector<16x8xf32> to vector<16xf32>
    %296 = vector.shape_cast %295 : vector<16xf32> to vector<16x1xf32>
    %297 = arith.addf %265, %296 : vector<16x1xf32>
    %c1_143 = arith.constant 1 : index
    %c56 = arith.constant 56 : index
    %298 = vector.load %arg11[%c1_143, %c56] : memref<18x144xf32, #tpu.memory_space<vmem>>, vector<16x8xf32>
    tpu.vector_store %arg11[%c1_143, %c56], %291 {strides = array<i32>} : memref<18x144xf32, #tpu.memory_space<vmem>>, vector<16x8xf32>,
    %c0_144 = arith.constant 0 : index
    %c56_145 = arith.constant 56 : index
    %299 = vector.load %arg10[%c0_144, %c56_145] : memref<16x128xf32, #tpu.memory_space<vmem>>, vector<16x8xf32>
    %cst_146 = arith.constant dense<0.000000e+00> : vector<16x32xf32>
    %300 = tpu.matmul %299, %72, %cst_146 {dimension_numbers = #tpu.dot_dimension_numbers<[1], [1], [0], [0], [0, 0, 1, 0], [], []>} : vector<16x8xf32>, vector<32x8xf32>, vector<16x32xf32> -> vector<16x32xf32>
    %301 = arith.mulf %299, %299 : vector<16x8xf32>
    %cst_147 = arith.constant dense<0.000000e+00> : vector<16xf32>
    %302 = vector.multi_reduction <add>, %301, %cst_147 [1] : vector<16x8xf32> to vector<16xf32>
    %303 = vector.shape_cast %302 : vector<16xf32> to vector<16x1xf32>
    %304 = vector.broadcast %303 : vector<16x1xf32> to vector<16x32xf32>
    %305 = vector.broadcast %73 : vector<1x32xf32> to vector<16x32xf32>
    %306 = arith.addf %304, %305 : vector<16x32xf32>
    %cst_148 = arith.constant 2.000000e+00 : f32
    %307 = vector.broadcast %cst_148 : f32 to vector<16x32xf32>
    %308 = arith.mulf %307, %300 : vector<16x32xf32>
    %309 = arith.subf %306, %308 : vector<16x32xf32>
    %cst_149 = arith.constant dense<0x7F800000> : vector<16xf32>
    %310 = vector.multi_reduction <minimumf>, %309, %cst_149 [1] : vector<16x32xf32> to vector<16xf32>
    %311 = vector.shape_cast %310 : vector<16xf32> to vector<16x1xf32>
    %312 = tpu.iota {dimensions = array<i32: 1>} : vector<16x32xi32>
    %313 = vector.broadcast %311 : vector<16x1xf32> to vector<16x32xf32>
    %314 = arith.cmpf ole, %309, %313 : vector<16x32xf32>
    %c32_i32_150 = arith.constant 32 : i32
    %315 = vector.broadcast %c32_i32_150 : i32 to vector<16x32xi32>
    %316 = arith.select %314, %312, %315 : vector<16x32xi1>, vector<16x32xi32>
    %cst_151 = arith.constant dense<2147483647> : vector<16xi32>
    %317 = vector.multi_reduction <minsi>, %316, %cst_151 [1] : vector<16x32xi32> to vector<16xi32>
    %318 = vector.shape_cast %317 : vector<16xi32> to vector<16x1xi32>
    %319 = vector.broadcast %318 : vector<16x1xi32> to vector<16x32xi32>
    %320 = arith.cmpi eq, %312, %319 : vector<16x32xi32>
    %321 = arith.extui %320 : vector<16x32xi1> to vector<16x32xi32>
    %322 = arith.sitofp %321 : vector<16x32xi32> to vector<16x32xf32>
    %cst_152 = arith.constant dense<0.000000e+00> : vector<16x8xf32>
    %323 = tpu.matmul %322, %72, %cst_152 {dimension_numbers = #tpu.dot_dimension_numbers<[1], [0], [0], [1], [0, 0, 1, 1], [], []>} : vector<16x32xf32>, vector<32x8xf32>, vector<16x8xf32> -> vector<16x8xf32>
    %324 = arith.subf %299, %323 : vector<16x8xf32>
    %325 = arith.subf %299, %323 : vector<16x8xf32>
    %326 = arith.mulf %324, %325 : vector<16x8xf32>
    %cst_153 = arith.constant dense<0.000000e+00> : vector<16xf32>
    %327 = vector.multi_reduction <add>, %326, %cst_153 [1] : vector<16x8xf32> to vector<16xf32>
    %328 = vector.shape_cast %327 : vector<16xf32> to vector<16x1xf32>
    %329 = arith.addf %297, %328 : vector<16x1xf32>
    %c1_154 = arith.constant 1 : index
    %c64 = arith.constant 64 : index
    %330 = vector.load %arg11[%c1_154, %c64] : memref<18x144xf32, #tpu.memory_space<vmem>>, vector<16x8xf32>
    tpu.vector_store %arg11[%c1_154, %c64], %323 {strides = array<i32>} : memref<18x144xf32, #tpu.memory_space<vmem>>, vector<16x8xf32>,
    %c0_155 = arith.constant 0 : index
    %c64_156 = arith.constant 64 : index
    %331 = vector.load %arg10[%c0_155, %c64_156] : memref<16x128xf32, #tpu.memory_space<vmem>>, vector<16x8xf32>
    %cst_157 = arith.constant dense<0.000000e+00> : vector<16x32xf32>
    %332 = tpu.matmul %331, %72, %cst_157 {dimension_numbers = #tpu.dot_dimension_numbers<[1], [1], [0], [0], [0, 0, 1, 0], [], []>} : vector<16x8xf32>, vector<32x8xf32>, vector<16x32xf32> -> vector<16x32xf32>
    %333 = arith.mulf %331, %331 : vector<16x8xf32>
    %cst_158 = arith.constant dense<0.000000e+00> : vector<16xf32>
    %334 = vector.multi_reduction <add>, %333, %cst_158 [1] : vector<16x8xf32> to vector<16xf32>
    %335 = vector.shape_cast %334 : vector<16xf32> to vector<16x1xf32>
    %336 = vector.broadcast %335 : vector<16x1xf32> to vector<16x32xf32>
    %337 = vector.broadcast %73 : vector<1x32xf32> to vector<16x32xf32>
    %338 = arith.addf %336, %337 : vector<16x32xf32>
    %cst_159 = arith.constant 2.000000e+00 : f32
    %339 = vector.broadcast %cst_159 : f32 to vector<16x32xf32>
    %340 = arith.mulf %339, %332 : vector<16x32xf32>
    %341 = arith.subf %338, %340 : vector<16x32xf32>
    %cst_160 = arith.constant dense<0x7F800000> : vector<16xf32>
    %342 = vector.multi_reduction <minimumf>, %341, %cst_160 [1] : vector<16x32xf32> to vector<16xf32>
    %343 = vector.shape_cast %342 : vector<16xf32> to vector<16x1xf32>
    %344 = tpu.iota {dimensions = array<i32: 1>} : vector<16x32xi32>
    %345 = vector.broadcast %343 : vector<16x1xf32> to vector<16x32xf32>
    %346 = arith.cmpf ole, %341, %345 : vector<16x32xf32>
    %c32_i32_161 = arith.constant 32 : i32
    %347 = vector.broadcast %c32_i32_161 : i32 to vector<16x32xi32>
    %348 = arith.select %346, %344, %347 : vector<16x32xi1>, vector<16x32xi32>
    %cst_162 = arith.constant dense<2147483647> : vector<16xi32>
    %349 = vector.multi_reduction <minsi>, %348, %cst_162 [1] : vector<16x32xi32> to vector<16xi32>
    %350 = vector.shape_cast %349 : vector<16xi32> to vector<16x1xi32>
    %351 = vector.broadcast %350 : vector<16x1xi32> to vector<16x32xi32>
    %352 = arith.cmpi eq, %344, %351 : vector<16x32xi32>
    %353 = arith.extui %352 : vector<16x32xi1> to vector<16x32xi32>
    %354 = arith.sitofp %353 : vector<16x32xi32> to vector<16x32xf32>
    %cst_163 = arith.constant dense<0.000000e+00> : vector<16x8xf32>
    %355 = tpu.matmul %354, %72, %cst_163 {dimension_numbers = #tpu.dot_dimension_numbers<[1], [0], [0], [1], [0, 0, 1, 1], [], []>} : vector<16x32xf32>, vector<32x8xf32>, vector<16x8xf32> -> vector<16x8xf32>
    %356 = arith.subf %331, %355 : vector<16x8xf32>
    %357 = arith.subf %331, %355 : vector<16x8xf32>
    %358 = arith.mulf %356, %357 : vector<16x8xf32>
    %cst_164 = arith.constant dense<0.000000e+00> : vector<16xf32>
    %359 = vector.multi_reduction <add>, %358, %cst_164 [1] : vector<16x8xf32> to vector<16xf32>
    %360 = vector.shape_cast %359 : vector<16xf32> to vector<16x1xf32>
    %361 = arith.addf %329, %360 : vector<16x1xf32>
    %c1_165 = arith.constant 1 : index
    %c72 = arith.constant 72 : index
    %362 = vector.load %arg11[%c1_165, %c72] : memref<18x144xf32, #tpu.memory_space<vmem>>, vector<16x8xf32>
    tpu.vector_store %arg11[%c1_165, %c72], %355 {strides = array<i32>} : memref<18x144xf32, #tpu.memory_space<vmem>>, vector<16x8xf32>,
    %c0_166 = arith.constant 0 : index
    %c72_167 = arith.constant 72 : index
    %363 = vector.load %arg10[%c0_166, %c72_167] : memref<16x128xf32, #tpu.memory_space<vmem>>, vector<16x8xf32>
    %cst_168 = arith.constant dense<0.000000e+00> : vector<16x32xf32>
    %364 = tpu.matmul %363, %72, %cst_168 {dimension_numbers = #tpu.dot_dimension_numbers<[1], [1], [0], [0], [0, 0, 1, 0], [], []>} : vector<16x8xf32>, vector<32x8xf32>, vector<16x32xf32> -> vector<16x32xf32>
    %365 = arith.mulf %363, %363 : vector<16x8xf32>
    %cst_169 = arith.constant dense<0.000000e+00> : vector<16xf32>
    %366 = vector.multi_reduction <add>, %365, %cst_169 [1] : vector<16x8xf32> to vector<16xf32>
    %367 = vector.shape_cast %366 : vector<16xf32> to vector<16x1xf32>
    %368 = vector.broadcast %367 : vector<16x1xf32> to vector<16x32xf32>
    %369 = vector.broadcast %73 : vector<1x32xf32> to vector<16x32xf32>
    %370 = arith.addf %368, %369 : vector<16x32xf32>
    %cst_170 = arith.constant 2.000000e+00 : f32
    %371 = vector.broadcast %cst_170 : f32 to vector<16x32xf32>
    %372 = arith.mulf %371, %364 : vector<16x32xf32>
    %373 = arith.subf %370, %372 : vector<16x32xf32>
    %cst_171 = arith.constant dense<0x7F800000> : vector<16xf32>
    %374 = vector.multi_reduction <minimumf>, %373, %cst_171 [1] : vector<16x32xf32> to vector<16xf32>
    %375 = vector.shape_cast %374 : vector<16xf32> to vector<16x1xf32>
    %376 = tpu.iota {dimensions = array<i32: 1>} : vector<16x32xi32>
    %377 = vector.broadcast %375 : vector<16x1xf32> to vector<16x32xf32>
    %378 = arith.cmpf ole, %373, %377 : vector<16x32xf32>
    %c32_i32_172 = arith.constant 32 : i32
    %379 = vector.broadcast %c32_i32_172 : i32 to vector<16x32xi32>
    %380 = arith.select %378, %376, %379 : vector<16x32xi1>, vector<16x32xi32>
    %cst_173 = arith.constant dense<2147483647> : vector<16xi32>
    %381 = vector.multi_reduction <minsi>, %380, %cst_173 [1] : vector<16x32xi32> to vector<16xi32>
    %382 = vector.shape_cast %381 : vector<16xi32> to vector<16x1xi32>
    %383 = vector.broadcast %382 : vector<16x1xi32> to vector<16x32xi32>
    %384 = arith.cmpi eq, %376, %383 : vector<16x32xi32>
    %385 = arith.extui %384 : vector<16x32xi1> to vector<16x32xi32>
    %386 = arith.sitofp %385 : vector<16x32xi32> to vector<16x32xf32>
    %cst_174 = arith.constant dense<0.000000e+00> : vector<16x8xf32>
    %387 = tpu.matmul %386, %72, %cst_174 {dimension_numbers = #tpu.dot_dimension_numbers<[1], [0], [0], [1], [0, 0, 1, 1], [], []>} : vector<16x32xf32>, vector<32x8xf32>, vector<16x8xf32> -> vector<16x8xf32>
    %388 = arith.subf %363, %387 : vector<16x8xf32>
    %389 = arith.subf %363, %387 : vector<16x8xf32>
    %390 = arith.mulf %388, %389 : vector<16x8xf32>
    %cst_175 = arith.constant dense<0.000000e+00> : vector<16xf32>
    %391 = vector.multi_reduction <add>, %390, %cst_175 [1] : vector<16x8xf32> to vector<16xf32>
    %392 = vector.shape_cast %391 : vector<16xf32> to vector<16x1xf32>
    %393 = arith.addf %361, %392 : vector<16x1xf32>
    %c1_176 = arith.constant 1 : index
    %c80 = arith.constant 80 : index
    %394 = vector.load %arg11[%c1_176, %c80] : memref<18x144xf32, #tpu.memory_space<vmem>>, vector<16x8xf32>
    tpu.vector_store %arg11[%c1_176, %c80], %387 {strides = array<i32>} : memref<18x144xf32, #tpu.memory_space<vmem>>, vector<16x8xf32>,
    %c0_177 = arith.constant 0 : index
    %c80_178 = arith.constant 80 : index
    %395 = vector.load %arg10[%c0_177, %c80_178] : memref<16x128xf32, #tpu.memory_space<vmem>>, vector<16x8xf32>
    %cst_179 = arith.constant dense<0.000000e+00> : vector<16x32xf32>
    %396 = tpu.matmul %395, %72, %cst_179 {dimension_numbers = #tpu.dot_dimension_numbers<[1], [1], [0], [0], [0, 0, 1, 0], [], []>} : vector<16x8xf32>, vector<32x8xf32>, vector<16x32xf32> -> vector<16x32xf32>
    %397 = arith.mulf %395, %395 : vector<16x8xf32>
    %cst_180 = arith.constant dense<0.000000e+00> : vector<16xf32>
    %398 = vector.multi_reduction <add>, %397, %cst_180 [1] : vector<16x8xf32> to vector<16xf32>
    %399 = vector.shape_cast %398 : vector<16xf32> to vector<16x1xf32>
    %400 = vector.broadcast %399 : vector<16x1xf32> to vector<16x32xf32>
    %401 = vector.broadcast %73 : vector<1x32xf32> to vector<16x32xf32>
    %402 = arith.addf %400, %401 : vector<16x32xf32>
    %cst_181 = arith.constant 2.000000e+00 : f32
    %403 = vector.broadcast %cst_181 : f32 to vector<16x32xf32>
    %404 = arith.mulf %403, %396 : vector<16x32xf32>
    %405 = arith.subf %402, %404 : vector<16x32xf32>
    %cst_182 = arith.constant dense<0x7F800000> : vector<16xf32>
    %406 = vector.multi_reduction <minimumf>, %405, %cst_182 [1] : vector<16x32xf32> to vector<16xf32>
    %407 = vector.shape_cast %406 : vector<16xf32> to vector<16x1xf32>
    %408 = tpu.iota {dimensions = array<i32: 1>} : vector<16x32xi32>
    %409 = vector.broadcast %407 : vector<16x1xf32> to vector<16x32xf32>
    %410 = arith.cmpf ole, %405, %409 : vector<16x32xf32>
    %c32_i32_183 = arith.constant 32 : i32
    %411 = vector.broadcast %c32_i32_183 : i32 to vector<16x32xi32>
    %412 = arith.select %410, %408, %411 : vector<16x32xi1>, vector<16x32xi32>
    %cst_184 = arith.constant dense<2147483647> : vector<16xi32>
    %413 = vector.multi_reduction <minsi>, %412, %cst_184 [1] : vector<16x32xi32> to vector<16xi32>
    %414 = vector.shape_cast %413 : vector<16xi32> to vector<16x1xi32>
    %415 = vector.broadcast %414 : vector<16x1xi32> to vector<16x32xi32>
    %416 = arith.cmpi eq, %408, %415 : vector<16x32xi32>
    %417 = arith.extui %416 : vector<16x32xi1> to vector<16x32xi32>
    %418 = arith.sitofp %417 : vector<16x32xi32> to vector<16x32xf32>
    %cst_185 = arith.constant dense<0.000000e+00> : vector<16x8xf32>
    %419 = tpu.matmul %418, %72, %cst_185 {dimension_numbers = #tpu.dot_dimension_numbers<[1], [0], [0], [1], [0, 0, 1, 1], [], []>} : vector<16x32xf32>, vector<32x8xf32>, vector<16x8xf32> -> vector<16x8xf32>
    %420 = arith.subf %395, %419 : vector<16x8xf32>
    %421 = arith.subf %395, %419 : vector<16x8xf32>
    %422 = arith.mulf %420, %421 : vector<16x8xf32>
    %cst_186 = arith.constant dense<0.000000e+00> : vector<16xf32>
    %423 = vector.multi_reduction <add>, %422, %cst_186 [1] : vector<16x8xf32> to vector<16xf32>
    %424 = vector.shape_cast %423 : vector<16xf32> to vector<16x1xf32>
    %425 = arith.addf %393, %424 : vector<16x1xf32>
    %c1_187 = arith.constant 1 : index
    %c88 = arith.constant 88 : index
    %426 = vector.load %arg11[%c1_187, %c88] : memref<18x144xf32, #tpu.memory_space<vmem>>, vector<16x8xf32>
    tpu.vector_store %arg11[%c1_187, %c88], %419 {strides = array<i32>} : memref<18x144xf32, #tpu.memory_space<vmem>>, vector<16x8xf32>,
    %c0_188 = arith.constant 0 : index
    %c88_189 = arith.constant 88 : index
    %427 = vector.load %arg10[%c0_188, %c88_189] : memref<16x128xf32, #tpu.memory_space<vmem>>, vector<16x8xf32>
    %cst_190 = arith.constant dense<0.000000e+00> : vector<16x32xf32>
    %428 = tpu.matmul %427, %72, %cst_190 {dimension_numbers = #tpu.dot_dimension_numbers<[1], [1], [0], [0], [0, 0, 1, 0], [], []>} : vector<16x8xf32>, vector<32x8xf32>, vector<16x32xf32> -> vector<16x32xf32>
    %429 = arith.mulf %427, %427 : vector<16x8xf32>
    %cst_191 = arith.constant dense<0.000000e+00> : vector<16xf32>
    %430 = vector.multi_reduction <add>, %429, %cst_191 [1] : vector<16x8xf32> to vector<16xf32>
    %431 = vector.shape_cast %430 : vector<16xf32> to vector<16x1xf32>
    %432 = vector.broadcast %431 : vector<16x1xf32> to vector<16x32xf32>
    %433 = vector.broadcast %73 : vector<1x32xf32> to vector<16x32xf32>
    %434 = arith.addf %432, %433 : vector<16x32xf32>
    %cst_192 = arith.constant 2.000000e+00 : f32
    %435 = vector.broadcast %cst_192 : f32 to vector<16x32xf32>
    %436 = arith.mulf %435, %428 : vector<16x32xf32>
    %437 = arith.subf %434, %436 : vector<16x32xf32>
    %cst_193 = arith.constant dense<0x7F800000> : vector<16xf32>
    %438 = vector.multi_reduction <minimumf>, %437, %cst_193 [1] : vector<16x32xf32> to vector<16xf32>
    %439 = vector.shape_cast %438 : vector<16xf32> to vector<16x1xf32>
    %440 = tpu.iota {dimensions = array<i32: 1>} : vector<16x32xi32>
    %441 = vector.broadcast %439 : vector<16x1xf32> to vector<16x32xf32>
    %442 = arith.cmpf ole, %437, %441 : vector<16x32xf32>
    %c32_i32_194 = arith.constant 32 : i32
    %443 = vector.broadcast %c32_i32_194 : i32 to vector<16x32xi32>
    %444 = arith.select %442, %440, %443 : vector<16x32xi1>, vector<16x32xi32>
    %cst_195 = arith.constant dense<2147483647> : vector<16xi32>
    %445 = vector.multi_reduction <minsi>, %444, %cst_195 [1] : vector<16x32xi32> to vector<16xi32>
    %446 = vector.shape_cast %445 : vector<16xi32> to vector<16x1xi32>
    %447 = vector.broadcast %446 : vector<16x1xi32> to vector<16x32xi32>
    %448 = arith.cmpi eq, %440, %447 : vector<16x32xi32>
    %449 = arith.extui %448 : vector<16x32xi1> to vector<16x32xi32>
    %450 = arith.sitofp %449 : vector<16x32xi32> to vector<16x32xf32>
    %cst_196 = arith.constant dense<0.000000e+00> : vector<16x8xf32>
    %451 = tpu.matmul %450, %72, %cst_196 {dimension_numbers = #tpu.dot_dimension_numbers<[1], [0], [0], [1], [0, 0, 1, 1], [], []>} : vector<16x32xf32>, vector<32x8xf32>, vector<16x8xf32> -> vector<16x8xf32>
    %452 = arith.subf %427, %451 : vector<16x8xf32>
    %453 = arith.subf %427, %451 : vector<16x8xf32>
    %454 = arith.mulf %452, %453 : vector<16x8xf32>
    %cst_197 = arith.constant dense<0.000000e+00> : vector<16xf32>
    %455 = vector.multi_reduction <add>, %454, %cst_197 [1] : vector<16x8xf32> to vector<16xf32>
    %456 = vector.shape_cast %455 : vector<16xf32> to vector<16x1xf32>
    %457 = arith.addf %425, %456 : vector<16x1xf32>
    %c1_198 = arith.constant 1 : index
    %c96 = arith.constant 96 : index
    %458 = vector.load %arg11[%c1_198, %c96] : memref<18x144xf32, #tpu.memory_space<vmem>>, vector<16x8xf32>
    tpu.vector_store %arg11[%c1_198, %c96], %451 {strides = array<i32>} : memref<18x144xf32, #tpu.memory_space<vmem>>, vector<16x8xf32>,
    %c0_199 = arith.constant 0 : index
    %c96_200 = arith.constant 96 : index
    %459 = vector.load %arg10[%c0_199, %c96_200] : memref<16x128xf32, #tpu.memory_space<vmem>>, vector<16x8xf32>
    %cst_201 = arith.constant dense<0.000000e+00> : vector<16x32xf32>
    %460 = tpu.matmul %459, %72, %cst_201 {dimension_numbers = #tpu.dot_dimension_numbers<[1], [1], [0], [0], [0, 0, 1, 0], [], []>} : vector<16x8xf32>, vector<32x8xf32>, vector<16x32xf32> -> vector<16x32xf32>
    %461 = arith.mulf %459, %459 : vector<16x8xf32>
    %cst_202 = arith.constant dense<0.000000e+00> : vector<16xf32>
    %462 = vector.multi_reduction <add>, %461, %cst_202 [1] : vector<16x8xf32> to vector<16xf32>
    %463 = vector.shape_cast %462 : vector<16xf32> to vector<16x1xf32>
    %464 = vector.broadcast %463 : vector<16x1xf32> to vector<16x32xf32>
    %465 = vector.broadcast %73 : vector<1x32xf32> to vector<16x32xf32>
    %466 = arith.addf %464, %465 : vector<16x32xf32>
    %cst_203 = arith.constant 2.000000e+00 : f32
    %467 = vector.broadcast %cst_203 : f32 to vector<16x32xf32>
    %468 = arith.mulf %467, %460 : vector<16x32xf32>
    %469 = arith.subf %466, %468 : vector<16x32xf32>
    %cst_204 = arith.constant dense<0x7F800000> : vector<16xf32>
    %470 = vector.multi_reduction <minimumf>, %469, %cst_204 [1] : vector<16x32xf32> to vector<16xf32>
    %471 = vector.shape_cast %470 : vector<16xf32> to vector<16x1xf32>
    %472 = tpu.iota {dimensions = array<i32: 1>} : vector<16x32xi32>
    %473 = vector.broadcast %471 : vector<16x1xf32> to vector<16x32xf32>
    %474 = arith.cmpf ole, %469, %473 : vector<16x32xf32>
    %c32_i32_205 = arith.constant 32 : i32
    %475 = vector.broadcast %c32_i32_205 : i32 to vector<16x32xi32>
    %476 = arith.select %474, %472, %475 : vector<16x32xi1>, vector<16x32xi32>
    %cst_206 = arith.constant dense<2147483647> : vector<16xi32>
    %477 = vector.multi_reduction <minsi>, %476, %cst_206 [1] : vector<16x32xi32> to vector<16xi32>
    %478 = vector.shape_cast %477 : vector<16xi32> to vector<16x1xi32>
    %479 = vector.broadcast %478 : vector<16x1xi32> to vector<16x32xi32>
    %480 = arith.cmpi eq, %472, %479 : vector<16x32xi32>
    %481 = arith.extui %480 : vector<16x32xi1> to vector<16x32xi32>
    %482 = arith.sitofp %481 : vector<16x32xi32> to vector<16x32xf32>
    %cst_207 = arith.constant dense<0.000000e+00> : vector<16x8xf32>
    %483 = tpu.matmul %482, %72, %cst_207 {dimension_numbers = #tpu.dot_dimension_numbers<[1], [0], [0], [1], [0, 0, 1, 1], [], []>} : vector<16x32xf32>, vector<32x8xf32>, vector<16x8xf32> -> vector<16x8xf32>
    %484 = arith.subf %459, %483 : vector<16x8xf32>
    %485 = arith.subf %459, %483 : vector<16x8xf32>
    %486 = arith.mulf %484, %485 : vector<16x8xf32>
    %cst_208 = arith.constant dense<0.000000e+00> : vector<16xf32>
    %487 = vector.multi_reduction <add>, %486, %cst_208 [1] : vector<16x8xf32> to vector<16xf32>
    %488 = vector.shape_cast %487 : vector<16xf32> to vector<16x1xf32>
    %489 = arith.addf %457, %488 : vector<16x1xf32>
    %c1_209 = arith.constant 1 : index
    %c104 = arith.constant 104 : index
    %490 = vector.load %arg11[%c1_209, %c104] : memref<18x144xf32, #tpu.memory_space<vmem>>, vector<16x8xf32>
    tpu.vector_store %arg11[%c1_209, %c104], %483 {strides = array<i32>} : memref<18x144xf32, #tpu.memory_space<vmem>>, vector<16x8xf32>,
    %c0_210 = arith.constant 0 : index
    %c104_211 = arith.constant 104 : index
    %491 = vector.load %arg10[%c0_210, %c104_211] : memref<16x128xf32, #tpu.memory_space<vmem>>, vector<16x8xf32>
    %cst_212 = arith.constant dense<0.000000e+00> : vector<16x32xf32>
    %492 = tpu.matmul %491, %72, %cst_212 {dimension_numbers = #tpu.dot_dimension_numbers<[1], [1], [0], [0], [0, 0, 1, 0], [], []>} : vector<16x8xf32>, vector<32x8xf32>, vector<16x32xf32> -> vector<16x32xf32>
    %493 = arith.mulf %491, %491 : vector<16x8xf32>
    %cst_213 = arith.constant dense<0.000000e+00> : vector<16xf32>
    %494 = vector.multi_reduction <add>, %493, %cst_213 [1] : vector<16x8xf32> to vector<16xf32>
    %495 = vector.shape_cast %494 : vector<16xf32> to vector<16x1xf32>
    %496 = vector.broadcast %495 : vector<16x1xf32> to vector<16x32xf32>
    %497 = vector.broadcast %73 : vector<1x32xf32> to vector<16x32xf32>
    %498 = arith.addf %496, %497 : vector<16x32xf32>
    %cst_214 = arith.constant 2.000000e+00 : f32
    %499 = vector.broadcast %cst_214 : f32 to vector<16x32xf32>
    %500 = arith.mulf %499, %492 : vector<16x32xf32>
    %501 = arith.subf %498, %500 : vector<16x32xf32>
    %cst_215 = arith.constant dense<0x7F800000> : vector<16xf32>
    %502 = vector.multi_reduction <minimumf>, %501, %cst_215 [1] : vector<16x32xf32> to vector<16xf32>
    %503 = vector.shape_cast %502 : vector<16xf32> to vector<16x1xf32>
    %504 = tpu.iota {dimensions = array<i32: 1>} : vector<16x32xi32>
    %505 = vector.broadcast %503 : vector<16x1xf32> to vector<16x32xf32>
    %506 = arith.cmpf ole, %501, %505 : vector<16x32xf32>
    %c32_i32_216 = arith.constant 32 : i32
    %507 = vector.broadcast %c32_i32_216 : i32 to vector<16x32xi32>
    %508 = arith.select %506, %504, %507 : vector<16x32xi1>, vector<16x32xi32>
    %cst_217 = arith.constant dense<2147483647> : vector<16xi32>
    %509 = vector.multi_reduction <minsi>, %508, %cst_217 [1] : vector<16x32xi32> to vector<16xi32>
    %510 = vector.shape_cast %509 : vector<16xi32> to vector<16x1xi32>
    %511 = vector.broadcast %510 : vector<16x1xi32> to vector<16x32xi32>
    %512 = arith.cmpi eq, %504, %511 : vector<16x32xi32>
    %513 = arith.extui %512 : vector<16x32xi1> to vector<16x32xi32>
    %514 = arith.sitofp %513 : vector<16x32xi32> to vector<16x32xf32>
    %cst_218 = arith.constant dense<0.000000e+00> : vector<16x8xf32>
    %515 = tpu.matmul %514, %72, %cst_218 {dimension_numbers = #tpu.dot_dimension_numbers<[1], [0], [0], [1], [0, 0, 1, 1], [], []>} : vector<16x32xf32>, vector<32x8xf32>, vector<16x8xf32> -> vector<16x8xf32>
    %516 = arith.subf %491, %515 : vector<16x8xf32>
    %517 = arith.subf %491, %515 : vector<16x8xf32>
    %518 = arith.mulf %516, %517 : vector<16x8xf32>
    %cst_219 = arith.constant dense<0.000000e+00> : vector<16xf32>
    %519 = vector.multi_reduction <add>, %518, %cst_219 [1] : vector<16x8xf32> to vector<16xf32>
    %520 = vector.shape_cast %519 : vector<16xf32> to vector<16x1xf32>
    %521 = arith.addf %489, %520 : vector<16x1xf32>
    %c1_220 = arith.constant 1 : index
    %c112 = arith.constant 112 : index
    %522 = vector.load %arg11[%c1_220, %c112] : memref<18x144xf32, #tpu.memory_space<vmem>>, vector<16x8xf32>
    tpu.vector_store %arg11[%c1_220, %c112], %515 {strides = array<i32>} : memref<18x144xf32, #tpu.memory_space<vmem>>, vector<16x8xf32>,
    %c0_221 = arith.constant 0 : index
    %c112_222 = arith.constant 112 : index
    %523 = vector.load %arg10[%c0_221, %c112_222] : memref<16x128xf32, #tpu.memory_space<vmem>>, vector<16x8xf32>
    %cst_223 = arith.constant dense<0.000000e+00> : vector<16x32xf32>
    %524 = tpu.matmul %523, %72, %cst_223 {dimension_numbers = #tpu.dot_dimension_numbers<[1], [1], [0], [0], [0, 0, 1, 0], [], []>} : vector<16x8xf32>, vector<32x8xf32>, vector<16x32xf32> -> vector<16x32xf32>
    %525 = arith.mulf %523, %523 : vector<16x8xf32>
    %cst_224 = arith.constant dense<0.000000e+00> : vector<16xf32>
    %526 = vector.multi_reduction <add>, %525, %cst_224 [1] : vector<16x8xf32> to vector<16xf32>
    %527 = vector.shape_cast %526 : vector<16xf32> to vector<16x1xf32>
    %528 = vector.broadcast %527 : vector<16x1xf32> to vector<16x32xf32>
    %529 = vector.broadcast %73 : vector<1x32xf32> to vector<16x32xf32>
    %530 = arith.addf %528, %529 : vector<16x32xf32>
    %cst_225 = arith.constant 2.000000e+00 : f32
    %531 = vector.broadcast %cst_225 : f32 to vector<16x32xf32>
    %532 = arith.mulf %531, %524 : vector<16x32xf32>
    %533 = arith.subf %530, %532 : vector<16x32xf32>
    %cst_226 = arith.constant dense<0x7F800000> : vector<16xf32>
    %534 = vector.multi_reduction <minimumf>, %533, %cst_226 [1] : vector<16x32xf32> to vector<16xf32>
    %535 = vector.shape_cast %534 : vector<16xf32> to vector<16x1xf32>
    %536 = tpu.iota {dimensions = array<i32: 1>} : vector<16x32xi32>
    %537 = vector.broadcast %535 : vector<16x1xf32> to vector<16x32xf32>
    %538 = arith.cmpf ole, %533, %537 : vector<16x32xf32>
    %c32_i32_227 = arith.constant 32 : i32
    %539 = vector.broadcast %c32_i32_227 : i32 to vector<16x32xi32>
    %540 = arith.select %538, %536, %539 : vector<16x32xi1>, vector<16x32xi32>
    %cst_228 = arith.constant dense<2147483647> : vector<16xi32>
    %541 = vector.multi_reduction <minsi>, %540, %cst_228 [1] : vector<16x32xi32> to vector<16xi32>
    %542 = vector.shape_cast %541 : vector<16xi32> to vector<16x1xi32>
    %543 = vector.broadcast %542 : vector<16x1xi32> to vector<16x32xi32>
    %544 = arith.cmpi eq, %536, %543 : vector<16x32xi32>
    %545 = arith.extui %544 : vector<16x32xi1> to vector<16x32xi32>
    %546 = arith.sitofp %545 : vector<16x32xi32> to vector<16x32xf32>
    %cst_229 = arith.constant dense<0.000000e+00> : vector<16x8xf32>
    %547 = tpu.matmul %546, %72, %cst_229 {dimension_numbers = #tpu.dot_dimension_numbers<[1], [0], [0], [1], [0, 0, 1, 1], [], []>} : vector<16x32xf32>, vector<32x8xf32>, vector<16x8xf32> -> vector<16x8xf32>
    %548 = arith.subf %523, %547 : vector<16x8xf32>
    %549 = arith.subf %523, %547 : vector<16x8xf32>
    %550 = arith.mulf %548, %549 : vector<16x8xf32>
    %cst_230 = arith.constant dense<0.000000e+00> : vector<16xf32>
    %551 = vector.multi_reduction <add>, %550, %cst_230 [1] : vector<16x8xf32> to vector<16xf32>
    %552 = vector.shape_cast %551 : vector<16xf32> to vector<16x1xf32>
    %553 = arith.addf %521, %552 : vector<16x1xf32>
    %c1_231 = arith.constant 1 : index
    %c120 = arith.constant 120 : index
    %554 = vector.load %arg11[%c1_231, %c120] : memref<18x144xf32, #tpu.memory_space<vmem>>, vector<16x8xf32>
    tpu.vector_store %arg11[%c1_231, %c120], %547 {strides = array<i32>} : memref<18x144xf32, #tpu.memory_space<vmem>>, vector<16x8xf32>,
    %c0_232 = arith.constant 0 : index
    %c120_233 = arith.constant 120 : index
    %555 = vector.load %arg10[%c0_232, %c120_233] : memref<16x128xf32, #tpu.memory_space<vmem>>, vector<16x8xf32>
    %cst_234 = arith.constant dense<0.000000e+00> : vector<16x32xf32>
    %556 = tpu.matmul %555, %72, %cst_234 {dimension_numbers = #tpu.dot_dimension_numbers<[1], [1], [0], [0], [0, 0, 1, 0], [], []>} : vector<16x8xf32>, vector<32x8xf32>, vector<16x32xf32> -> vector<16x32xf32>
    %557 = arith.mulf %555, %555 : vector<16x8xf32>
    %cst_235 = arith.constant dense<0.000000e+00> : vector<16xf32>
    %558 = vector.multi_reduction <add>, %557, %cst_235 [1] : vector<16x8xf32> to vector<16xf32>
    %559 = vector.shape_cast %558 : vector<16xf32> to vector<16x1xf32>
    %560 = vector.broadcast %559 : vector<16x1xf32> to vector<16x32xf32>
    %561 = vector.broadcast %73 : vector<1x32xf32> to vector<16x32xf32>
    %562 = arith.addf %560, %561 : vector<16x32xf32>
    %cst_236 = arith.constant 2.000000e+00 : f32
    %563 = vector.broadcast %cst_236 : f32 to vector<16x32xf32>
    %564 = arith.mulf %563, %556 : vector<16x32xf32>
    %565 = arith.subf %562, %564 : vector<16x32xf32>
    %cst_237 = arith.constant dense<0x7F800000> : vector<16xf32>
    %566 = vector.multi_reduction <minimumf>, %565, %cst_237 [1] : vector<16x32xf32> to vector<16xf32>
    %567 = vector.shape_cast %566 : vector<16xf32> to vector<16x1xf32>
    %568 = tpu.iota {dimensions = array<i32: 1>} : vector<16x32xi32>
    %569 = vector.broadcast %567 : vector<16x1xf32> to vector<16x32xf32>
    %570 = arith.cmpf ole, %565, %569 : vector<16x32xf32>
    %c32_i32_238 = arith.constant 32 : i32
    %571 = vector.broadcast %c32_i32_238 : i32 to vector<16x32xi32>
    %572 = arith.select %570, %568, %571 : vector<16x32xi1>, vector<16x32xi32>
    %cst_239 = arith.constant dense<2147483647> : vector<16xi32>
    %573 = vector.multi_reduction <minsi>, %572, %cst_239 [1] : vector<16x32xi32> to vector<16xi32>
    %574 = vector.shape_cast %573 : vector<16xi32> to vector<16x1xi32>
    %575 = vector.broadcast %574 : vector<16x1xi32> to vector<16x32xi32>
    %576 = arith.cmpi eq, %568, %575 : vector<16x32xi32>
    %577 = arith.extui %576 : vector<16x32xi1> to vector<16x32xi32>
    %578 = arith.sitofp %577 : vector<16x32xi32> to vector<16x32xf32>
    %cst_240 = arith.constant dense<0.000000e+00> : vector<16x8xf32>
    %579 = tpu.matmul %578, %72, %cst_240 {dimension_numbers = #tpu.dot_dimension_numbers<[1], [0], [0], [1], [0, 0, 1, 1], [], []>} : vector<16x32xf32>, vector<32x8xf32>, vector<16x8xf32> -> vector<16x8xf32>
    %580 = arith.subf %555, %579 : vector<16x8xf32>
    %581 = arith.subf %555, %579 : vector<16x8xf32>
    %582 = arith.mulf %580, %581 : vector<16x8xf32>
    %cst_241 = arith.constant dense<0.000000e+00> : vector<16xf32>
    %583 = vector.multi_reduction <add>, %582, %cst_241 [1] : vector<16x8xf32> to vector<16xf32>
    %584 = vector.shape_cast %583 : vector<16xf32> to vector<16x1xf32>
    %585 = arith.addf %553, %584 : vector<16x1xf32>
    %c1_242 = arith.constant 1 : index
    %c128 = arith.constant 128 : index
    %586 = vector.load %arg11[%c1_242, %c128] : memref<18x144xf32, #tpu.memory_space<vmem>>, vector<16x8xf32>
    tpu.vector_store %arg11[%c1_242, %c128], %579 {strides = array<i32>} : memref<18x144xf32, #tpu.memory_space<vmem>>, vector<16x8xf32>,
    %cst_243 = arith.constant dense<0.000000e+00> : vector<1xf32>
    %587 = vector.multi_reduction <add>, %585, %cst_243 [0] : vector<16x1xf32> to vector<1xf32>
    %588 = vector.shape_cast %587 : vector<1xf32> to vector<1x1xf32>
    %589 = vector.shape_cast %588 : vector<1x1xf32> to vector<1x1xf32>
    %590 = vector.broadcast %589 : vector<1x1xf32> to vector<1x128xf32>
    %c0_244 = arith.constant 0 : index
    %c0_245 = arith.constant 0 : index
    %c0_246 = arith.constant 0 : index
    %591 = vector.load %arg9[%c0_244, %c0_245, %c0_246] : memref<1x1x128xf32, #tpu.memory_space<vmem>>, vector<1x1x128xf32>
    %592 = vector.shape_cast %591 : vector<1x1x128xf32> to vector<1x128xf32>
    %593 = vector.shape_cast %590 : vector<1x128xf32> to vector<1x1x128xf32>
    tpu.vector_store %arg9[%c0_244, %c0_245, %c0_246], %593 {strides = array<i32>} : memref<1x1x128xf32, #tpu.memory_space<vmem>>, vector<1x1x128xf32>,
    %cst_247 = arith.constant 0.000000e+00 : f32
    %594 = vector.broadcast %cst_247 : f32 to vector<16x64xf32>
    %c0_248 = arith.constant 0 : index
    %c0_249 = arith.constant 0 : index
    %595 = vector.load %arg11[%c0_248, %c0_249] : memref<18x144xf32, #tpu.memory_space<vmem>>, vector<16x128xf32>
    %596 = arith.truncf %595 : vector<16x128xf32> to vector<16x128xbf16>
    %c0_250 = arith.constant 0 : index
    %c0_251 = arith.constant 0 : index
    %c0_252 = arith.constant 0 : index
    %597 = vector.load %arg6[%c0_250, %c0_251, %c0_252] : memref<9x128x64xbf16, #tpu.memory_space<vmem>>, vector<1x128x64xbf16>
    %598 = vector.shape_cast %597 : vector<1x128x64xbf16> to vector<128x64xbf16>
    %cst_253 = arith.constant dense<0.000000e+00> : vector<16x64xf32>
    %599 = tpu.matmul %596, %598, %cst_253 {dimension_numbers = #tpu.dot_dimension_numbers<[1], [0], [0], [1], [0, 0, 1, 1], [], []>} : vector<16x128xbf16>, vector<128x64xbf16>, vector<16x64xf32> -> vector<16x64xf32>
    %600 = arith.addf %594, %599 : vector<16x64xf32>
    %c0_254 = arith.constant 0 : index
    %c8_255 = arith.constant 8 : index
    %601 = vector.load %arg11[%c0_254, %c8_255] : memref<18x144xf32, #tpu.memory_space<vmem>>, vector<16x128xf32>
    %602 = arith.truncf %601 : vector<16x128xf32> to vector<16x128xbf16>
    %c1_256 = arith.constant 1 : index
    %c0_257 = arith.constant 0 : index
    %c0_258 = arith.constant 0 : index
    %603 = vector.load %arg6[%c1_256, %c0_257, %c0_258] : memref<9x128x64xbf16, #tpu.memory_space<vmem>>, vector<1x128x64xbf16>
    %604 = vector.shape_cast %603 : vector<1x128x64xbf16> to vector<128x64xbf16>
    %cst_259 = arith.constant dense<0.000000e+00> : vector<16x64xf32>
    %605 = tpu.matmul %602, %604, %cst_259 {dimension_numbers = #tpu.dot_dimension_numbers<[1], [0], [0], [1], [0, 0, 1, 1], [], []>} : vector<16x128xbf16>, vector<128x64xbf16>, vector<16x64xf32> -> vector<16x64xf32>
    %606 = arith.addf %600, %605 : vector<16x64xf32>
    %c0_260 = arith.constant 0 : index
    %c16_261 = arith.constant 16 : index
    %607 = vector.load %arg11[%c0_260, %c16_261] : memref<18x144xf32, #tpu.memory_space<vmem>>, vector<16x128xf32>
    %608 = arith.truncf %607 : vector<16x128xf32> to vector<16x128xbf16>
    %c2_262 = arith.constant 2 : index
    %c0_263 = arith.constant 0 : index
    %c0_264 = arith.constant 0 : index
    %609 = vector.load %arg6[%c2_262, %c0_263, %c0_264] : memref<9x128x64xbf16, #tpu.memory_space<vmem>>, vector<1x128x64xbf16>
    %610 = vector.shape_cast %609 : vector<1x128x64xbf16> to vector<128x64xbf16>
    %cst_265 = arith.constant dense<0.000000e+00> : vector<16x64xf32>
    %611 = tpu.matmul %608, %610, %cst_265 {dimension_numbers = #tpu.dot_dimension_numbers<[1], [0], [0], [1], [0, 0, 1, 1], [], []>} : vector<16x128xbf16>, vector<128x64xbf16>, vector<16x64xf32> -> vector<16x64xf32>
    %612 = arith.addf %606, %611 : vector<16x64xf32>
    %c1_266 = arith.constant 1 : index
    %c0_267 = arith.constant 0 : index
    %613 = vector.load %arg11[%c1_266, %c0_267] : memref<18x144xf32, #tpu.memory_space<vmem>>, vector<16x128xf32>
    %614 = arith.truncf %613 : vector<16x128xf32> to vector<16x128xbf16>
    %c3_268 = arith.constant 3 : index
    %c0_269 = arith.constant 0 : index
    %c0_270 = arith.constant 0 : index
    %615 = vector.load %arg6[%c3_268, %c0_269, %c0_270] : memref<9x128x64xbf16, #tpu.memory_space<vmem>>, vector<1x128x64xbf16>
    %616 = vector.shape_cast %615 : vector<1x128x64xbf16> to vector<128x64xbf16>
    %cst_271 = arith.constant dense<0.000000e+00> : vector<16x64xf32>
    %617 = tpu.matmul %614, %616, %cst_271 {dimension_numbers = #tpu.dot_dimension_numbers<[1], [0], [0], [1], [0, 0, 1, 1], [], []>} : vector<16x128xbf16>, vector<128x64xbf16>, vector<16x64xf32> -> vector<16x64xf32>
    %618 = arith.addf %612, %617 : vector<16x64xf32>
    %c1_272 = arith.constant 1 : index
    %c8_273 = arith.constant 8 : index
    %619 = vector.load %arg11[%c1_272, %c8_273] : memref<18x144xf32, #tpu.memory_space<vmem>>, vector<16x128xf32>
    %620 = arith.truncf %619 : vector<16x128xf32> to vector<16x128xbf16>
    %c4_274 = arith.constant 4 : index
    %c0_275 = arith.constant 0 : index
    %c0_276 = arith.constant 0 : index
    %621 = vector.load %arg6[%c4_274, %c0_275, %c0_276] : memref<9x128x64xbf16, #tpu.memory_space<vmem>>, vector<1x128x64xbf16>
    %622 = vector.shape_cast %621 : vector<1x128x64xbf16> to vector<128x64xbf16>
    %cst_277 = arith.constant dense<0.000000e+00> : vector<16x64xf32>
    %623 = tpu.matmul %620, %622, %cst_277 {dimension_numbers = #tpu.dot_dimension_numbers<[1], [0], [0], [1], [0, 0, 1, 1], [], []>} : vector<16x128xbf16>, vector<128x64xbf16>, vector<16x64xf32> -> vector<16x64xf32>
    %624 = arith.addf %618, %623 : vector<16x64xf32>
    %c1_278 = arith.constant 1 : index
    %c16_279 = arith.constant 16 : index
    %625 = vector.load %arg11[%c1_278, %c16_279] : memref<18x144xf32, #tpu.memory_space<vmem>>, vector<16x128xf32>
    %626 = arith.truncf %625 : vector<16x128xf32> to vector<16x128xbf16>
    %c5_280 = arith.constant 5 : index
    %c0_281 = arith.constant 0 : index
    %c0_282 = arith.constant 0 : index
    %627 = vector.load %arg6[%c5_280, %c0_281, %c0_282] : memref<9x128x64xbf16, #tpu.memory_space<vmem>>, vector<1x128x64xbf16>
    %628 = vector.shape_cast %627 : vector<1x128x64xbf16> to vector<128x64xbf16>
    %cst_283 = arith.constant dense<0.000000e+00> : vector<16x64xf32>
    %629 = tpu.matmul %626, %628, %cst_283 {dimension_numbers = #tpu.dot_dimension_numbers<[1], [0], [0], [1], [0, 0, 1, 1], [], []>} : vector<16x128xbf16>, vector<128x64xbf16>, vector<16x64xf32> -> vector<16x64xf32>
    %630 = arith.addf %624, %629 : vector<16x64xf32>
    %c2_284 = arith.constant 2 : index
    %c0_285 = arith.constant 0 : index
    %631 = vector.load %arg11[%c2_284, %c0_285] : memref<18x144xf32, #tpu.memory_space<vmem>>, vector<16x128xf32>
    %632 = arith.truncf %631 : vector<16x128xf32> to vector<16x128xbf16>
    %c6_286 = arith.constant 6 : index
    %c0_287 = arith.constant 0 : index
    %c0_288 = arith.constant 0 : index
    %633 = vector.load %arg6[%c6_286, %c0_287, %c0_288] : memref<9x128x64xbf16, #tpu.memory_space<vmem>>, vector<1x128x64xbf16>
    %634 = vector.shape_cast %633 : vector<1x128x64xbf16> to vector<128x64xbf16>
    %cst_289 = arith.constant dense<0.000000e+00> : vector<16x64xf32>
    %635 = tpu.matmul %632, %634, %cst_289 {dimension_numbers = #tpu.dot_dimension_numbers<[1], [0], [0], [1], [0, 0, 1, 1], [], []>} : vector<16x128xbf16>, vector<128x64xbf16>, vector<16x64xf32> -> vector<16x64xf32>
    %636 = arith.addf %630, %635 : vector<16x64xf32>
    %c2_290 = arith.constant 2 : index
    %c8_291 = arith.constant 8 : index
    %637 = vector.load %arg11[%c2_290, %c8_291] : memref<18x144xf32, #tpu.memory_space<vmem>>, vector<16x128xf32>
    %638 = arith.truncf %637 : vector<16x128xf32> to vector<16x128xbf16>
    %c7_292 = arith.constant 7 : index
    %c0_293 = arith.constant 0 : index
    %c0_294 = arith.constant 0 : index
    %639 = vector.load %arg6[%c7_292, %c0_293, %c0_294] : memref<9x128x64xbf16, #tpu.memory_space<vmem>>, vector<1x128x64xbf16>
    %640 = vector.shape_cast %639 : vector<1x128x64xbf16> to vector<128x64xbf16>
    %cst_295 = arith.constant dense<0.000000e+00> : vector<16x64xf32>
    %641 = tpu.matmul %638, %640, %cst_295 {dimension_numbers = #tpu.dot_dimension_numbers<[1], [0], [0], [1], [0, 0, 1, 1], [], []>} : vector<16x128xbf16>, vector<128x64xbf16>, vector<16x64xf32> -> vector<16x64xf32>
    %642 = arith.addf %636, %641 : vector<16x64xf32>
    %c2_296 = arith.constant 2 : index
    %c16_297 = arith.constant 16 : index
    %643 = vector.load %arg11[%c2_296, %c16_297] : memref<18x144xf32, #tpu.memory_space<vmem>>, vector<16x128xf32>
    %644 = arith.truncf %643 : vector<16x128xf32> to vector<16x128xbf16>
    %c8_298 = arith.constant 8 : index
    %c0_299 = arith.constant 0 : index
    %c0_300 = arith.constant 0 : index
    %645 = vector.load %arg6[%c8_298, %c0_299, %c0_300] : memref<9x128x64xbf16, #tpu.memory_space<vmem>>, vector<1x128x64xbf16>
    %646 = vector.shape_cast %645 : vector<1x128x64xbf16> to vector<128x64xbf16>
    %cst_301 = arith.constant dense<0.000000e+00> : vector<16x64xf32>
    %647 = tpu.matmul %644, %646, %cst_301 {dimension_numbers = #tpu.dot_dimension_numbers<[1], [0], [0], [1], [0, 0, 1, 1], [], []>} : vector<16x128xbf16>, vector<128x64xbf16>, vector<16x64xf32> -> vector<16x64xf32>
    %648 = arith.addf %642, %647 : vector<16x64xf32>
    %c0_302 = arith.constant 0 : index
    %c0_303 = arith.constant 0 : index
    %649 = vector.load %arg7[%c0_302, %c0_303] : memref<1x64xf32, #tpu.memory_space<vmem>>, vector<1x64xf32>
    %650 = vector.broadcast %649 : vector<1x64xf32> to vector<16x64xf32>
    %651 = arith.addf %648, %650 : vector<16x64xf32>
    %c0_304 = arith.constant 0 : index
    %c0_305 = arith.constant 0 : index
    %c0_306 = arith.constant 0 : index
    %652 = vector.load %arg8[%c0_304, %c0_305, %c0_306] : memref<1x16x64xf32, #tpu.memory_space<vmem>>, vector<1x16x64xf32>
    %653 = vector.shape_cast %652 : vector<1x16x64xf32> to vector<16x64xf32>
    %654 = vector.shape_cast %651 : vector<16x64xf32> to vector<1x16x64xf32>
    tpu.vector_store %arg8[%c0_304, %c0_305, %c0_306], %654 {strides = array<i32>} : memref<1x16x64xf32, #tpu.memory_space<vmem>>, vector<1x16x64xf32>,
    return
  }
  func.func @transform_0(%arg0: i32) -> (i32, i32, i32) {
    %c0_i32 = arith.constant 0 : i32
    %c0_i32_0 = arith.constant 0 : i32
    %c0_i32_1 = arith.constant 0 : i32
    return %arg0, %c0_i32, %c0_i32_0 : i32, i32, i32
  }
  func.func @transform_1(%arg0: i32) -> (i32, i32, i32) {
    %c0_i32 = arith.constant 0 : i32
    %c0_i32_0 = arith.constant 0 : i32
    %c0_i32_1 = arith.constant 0 : i32
    %c0_i32_2 = arith.constant 0 : i32
    return %c0_i32, %c0_i32_0, %c0_i32_1 : i32, i32, i32
  }
  func.func @transform_2(%arg0: i32) -> (i32, i32) {
    %c0_i32 = arith.constant 0 : i32
    %c0_i32_0 = arith.constant 0 : i32
    %c0_i32_1 = arith.constant 0 : i32
    return %c0_i32, %c0_i32_0 : i32, i32
  }
  func.func @transform_3(%arg0: i32) -> (i32, i32) {
    %c0_i32 = arith.constant 0 : i32
    %c0_i32_0 = arith.constant 0 : i32
    %c0_i32_1 = arith.constant 0 : i32
    return %c0_i32, %c0_i32_0 : i32, i32
  }
  func.func @transform_4(%arg0: i32) -> (i32, i32) {
    %c0_i32 = arith.constant 0 : i32
    %c0_i32_0 = arith.constant 0 : i32
    %c0_i32_1 = arith.constant 0 : i32
    return %c0_i32, %c0_i32_0 : i32, i32
  }
  func.func @transform_5(%arg0: i32) -> (i32, i32, i32) {
    %c0_i32 = arith.constant 0 : i32
    %c0_i32_0 = arith.constant 0 : i32
    %c0_i32_1 = arith.constant 0 : i32
    %c0_i32_2 = arith.constant 0 : i32
    return %c0_i32, %c0_i32_0, %c0_i32_1 : i32, i32, i32
  }
  func.func @transform_6(%arg0: i32) -> (i32, i32) {
    %c0_i32 = arith.constant 0 : i32
    %c0_i32_0 = arith.constant 0 : i32
    %c0_i32_1 = arith.constant 0 : i32
    return %c0_i32, %c0_i32_0 : i32, i32
  }
  func.func @transform_7(%arg0: i32) -> (i32, i32, i32) {
    %c0_i32 = arith.constant 0 : i32
    %c0_i32_0 = arith.constant 0 : i32
    %c0_i32_1 = arith.constant 0 : i32
    return %arg0, %c0_i32, %c0_i32_0 : i32, i32, i32
  }
  func.func @transform_8(%arg0: i32) -> (i32, i32, i32) {
    %c0_i32 = arith.constant 0 : i32
    %c0_i32_0 = arith.constant 0 : i32
    %c0_i32_1 = arith.constant 0 : i32
    return %arg0, %c0_i32, %c0_i32_0 : i32, i32, i32
  }
}

</mosaic_0001>

<llo_original>
// kernel: tile.13
$region0: #{tile.13}
  #allocation0 [shape = 's32[1]{0}', space=sflag, size = 0x4, scoped, tag = 'scoped memory for tile.13']
  %s0 = inlined_call_operand.vmem [shape: f32[8], index: 0, kind: input, shape index: {}]
  %s1 = inlined_call_operand.vmem [shape: f32[16,8], index: 1, kind: output, shape index: {}]
  // Predicated region
  $region2: #{tile.13} parent=0 // pred_check
    _
  $region3: #{tile.13} parent=0 // pred_check_branch
    %3 = sbr.rel (0) target = $region5
  $region4: #{tile.13} parent=0 // pred_region
    _
  $region5: #{tile.13} parent=0 // pred_fallthru
    _
  %v4 = vld [vmem:[%s0] ss:$0 sm:$0xff]
  %5 = vst [vmem:[%s1] sm:$0xff] %v4
  %s6 = scalar_lea.vmem %s1, 8
  %7 = vst [vmem:[%s6] sm:$0xff] %v4

// kernel: tile.14
$region0: #{tile.14}
  %s0 = inlined_call_operand.vmem [shape: f32[16,8], index: 0, kind: input, shape index: {}]
  %s1 = inlined_call_operand.vmem [shape: f32[1,128], index: 1, kind: output, shape index: {}]
  $region1: #{tile.14} parent=0
    #allocation0 [shape = 'u8[4096]{0}', space=vmem, size = 0x1000, scoped, tag = 'scoped mem for output reshape']
    %v2 = vld [vmem:[%s0] sm:$0x1]
    %vm3 = vcmask 64512
    %4 = vst.msk [vmem:[#allocation0] sm:$0x1] %vm3, %v2
    %s5 = scalar_lea.vmem %s0, 15
    %v6 = vld [vmem:[%s5] sm:$0x1]
    %7 = vrot.lane.b32.xlu0 %v6, 120
    %v8 = vpop.permute.xlu0 %7
    %vm9 = vcmask 1048512
    %10 = vst.msk [vmem:[#allocation0] sm:$0x1] %vm9, %v8
    %s11 = scalar_lea.vmem %s0, 14
    %v12 = vld [vmem:[%s11] sm:$0x1]
    %13 = vrot.lane.b32.xlu0 %v12, 112
    %v14 = vpop.permute.xlu0 %13
    %vm15 = vcmask 982912
    %16 = vst.msk [vmem:[#allocation0] sm:$0x1] %vm15, %v14
    %s17 = scalar_lea.vmem %s0, 13
    %v18 = vld [vmem:[%s17] sm:$0x1]
    %19 = vrot.lane.b32.xlu0 %v18, 104
    %v20 = vpop.permute.xlu0 %19
    %vm21 = vcmask 917312
    %22 = vst.msk [vmem:[#allocation0] sm:$0x1] %vm21, %v20
    %s23 = scalar_lea.vmem %s0, 12
    %v24 = vld [vmem:[%s23] sm:$0x1]
    %25 = vrot.lane.b32.xlu0 %v24, 96
    %v26 = vpop.permute.xlu0 %25
    %vm27 = vcmask 851712
    %28 = vst.msk [vmem:[#allocation0] sm:$0x1] %vm27, %v26
    %s29 = scalar_lea.vmem %s0, 11
    %v30 = vld [vmem:[%s29] sm:$0x1]
    %31 = vrot.lane.b32.xlu0 %v30, 88
    %v32 = vpop.permute.xlu0 %31
    %vm33 = vcmask 786112
    %34 = vst.msk [vmem:[#allocation0] sm:$0x1] %vm33, %v32
    %s35 = scalar_lea.vmem %s0, 10
    %v36 = vld [vmem:[%s35] sm:$0x1]
    %37 = vrot.lane.b32.xlu0 %v36, 80
    %v38 = vpop.permute.xlu0 %37
    %vm39 = vcmask 720512
    %40 = vst.msk [vmem:[#allocation0] sm:$0x1] %vm39, %v38
    %s41 = scalar_lea.vmem %s0, 9
    %v42 = vld [vmem:[%s41] sm:$0x1]
    %43 = vrot.lane.b32.xlu0 %v42, 72
    %v44 = vpop.permute.xlu0 %43
    %vm45 = vcmask 654912
    %46 = vst.msk [vmem:[#allocation0] sm:$0x1] %vm45, %v44
    %s47 = scalar_lea.vmem %s0, 8
    %v48 = vld [vmem:[%s47] sm:$0x1]
    %49 = vrot.lane.b32.xlu0 %v48, 64
    %v50 = vpop.permute.xlu0 %49
    %vm51 = vcmask 589312
    %52 = vst.msk [vmem:[#allocation0] sm:$0x1] %vm51, %v50
    %s53 = scalar_lea.vmem %s0, 7
    %v54 = vld [vmem:[%s53] sm:$0x1]
    %55 = vrot.lane.b32.xlu0 %v54, 56
    %v56 = vpop.permute.xlu0 %55
    %vm57 = vcmask 523712
    %58 = vst.msk [vmem:[#allocation0] sm:$0x1] %vm57, %v56
    %s59 = scalar_lea.vmem %s0, 6
    %v60 = vld [vmem:[%s59] sm:$0x1]
    %61 = vrot.lane.b32.xlu0 %v60, 48
    %v62 = vpop.permute.xlu0 %61
    %vm63 = vcmask 458112
    %64 = vst.msk [vmem:[#allocation0] sm:$0x1] %vm63, %v62
    %s65 = scalar_lea.vmem %s0, 5
    %v66 = vld [vmem:[%s65] sm:$0x1]
    %67 = vrot.lane.b32.xlu0 %v66, 40
    %v68 = vpop.permute.xlu0 %67
    %vm69 = vcmask 392512
    %70 = vst.msk [vmem:[#allocation0] sm:$0x1] %vm69, %v68
    %s71 = scalar_lea.vmem %s0, 4
    %v72 = vld [vmem:[%s71] sm:$0x1]
    %73 = vrot.lane.b32.xlu0 %v72, 32
    %v74 = vpop.permute.xlu0 %73
    %vm75 = vcmask 326912
    %76 = vst.msk [vmem:[#allocation0] sm:$0x1] %vm75, %v74
    %s77 = scalar_lea.vmem %s0, 3
    %v78 = vld [vmem:[%s77] sm:$0x1]
    %79 = vrot.lane.b32.xlu0 %v78, 24
    %v80 = vpop.permute.xlu0 %79
    %vm81 = vcmask 261312
    %82 = vst.msk [vmem:[#allocation0] sm:$0x1] %vm81, %v80
    %s83 = scalar_lea.vmem %s0, 2
    %v84 = vld [vmem:[%s83] sm:$0x1]
    %85 = vrot.lane.b32.xlu0 %v84, 16
    %v86 = vpop.permute.xlu0 %85
    %vm87 = vcmask 195712
    %88 = vst.msk [vmem:[#allocation0] sm:$0x1] %vm87, %v86
    %s89 = scalar_lea.vmem %s0, 1
    %v90 = vld [vmem:[%s89] sm:$0x1]
    %91 = vrot.lane.b32.xlu0 %v90, 8
    %v92 = vpop.permute.xlu0 %91
    %vm93 = vcmask 130112
    %94 = vst.msk [vmem:[#allocation0] sm:$0x1] %vm93, %v92
    %s96 = sshllo.u32 0, 1
    %v98 = vld [vmem:[#allocation0] sm:%s96]
    %s99 = sshllo.u32 0, 1
    %100 = vst [vmem:[%s1] sm:%s99] %v98

// kernel: tile.18
$region0: #{tile.18}
  #allocation0 [shape = 's32[1]{0}', space=sflag, size = 0x4, scoped, tag = 'scoped memory for tile.18']
  %s0 = inlined_call_operand.vmem [shape: f32[4], index: 0, kind: input, shape index: {}]
  %s1 = inlined_call_operand.vmem [shape: f32[16,4], index: 1, kind: output, shape index: {}]
  // Predicated region
  $region2: #{tile.18} parent=0 // pred_check
    _
  $region3: #{tile.18} parent=0 // pred_check_branch
    %3 = sbr.rel (0) target = $region5
  $region4: #{tile.18} parent=0 // pred_region
    _
  $region5: #{tile.18} parent=0 // pred_fallthru
    _
  %v4 = vld [vmem:[%s0] ss:$0 sm:$0xff]
  %5 = vst [vmem:[%s1] sm:$0xff] %v4
  %s6 = scalar_lea.vmem %s1, 8
  %7 = vst [vmem:[%s6] sm:$0xff] %v4

// kernel: tile.19
$region0: #{tile.19}
  %s0 = inlined_call_operand.vmem [shape: f32[16,4], index: 0, kind: input, shape index: {}]
  %s1 = inlined_call_operand.vmem [shape: f32[1,64], index: 1, kind: output, shape index: {}]
  $region1: #{tile.19} parent=0
    #allocation0 [shape = 'u8[4096]{0}', space=vmem, size = 0x1000, scoped, tag = 'scoped mem for output reshape']
    %v2 = vld [vmem:[%s0] sm:$0x1]
    %vm3 = vcmask 31744
    %4 = vst.msk [vmem:[#allocation0] sm:$0x1] %vm3, %v2
    %s5 = scalar_lea.vmem %s0, 15
    %v6 = vld [vmem:[%s5] sm:$0x1]
    %7 = vrot.lane.b32.xlu0 %v6, 60
    %v8 = vpop.permute.xlu0 %7
    %vm9 = vcmask 523744
    %10 = vst.msk [vmem:[#allocation0] sm:$0x1] %vm9, %v8
    %s11 = scalar_lea.vmem %s0, 14
    %v12 = vld [vmem:[%s11] sm:$0x1]
    %13 = vrot.lane.b32.xlu0 %v12, 56
    %v14 = vpop.permute.xlu0 %13
    %vm15 = vcmask 490944
    %16 = vst.msk [vmem:[#allocation0] sm:$0x1] %vm15, %v14
    %s17 = scalar_lea.vmem %s0, 13
    %v18 = vld [vmem:[%s17] sm:$0x1]
    %19 = vrot.lane.b32.xlu0 %v18, 52
    %v20 = vpop.permute.xlu0 %19
    %vm21 = vcmask 458144
    %22 = vst.msk [vmem:[#allocation0] sm:$0x1] %vm21, %v20
    %s23 = scalar_lea.vmem %s0, 12
    %v24 = vld [vmem:[%s23] sm:$0x1]
    %25 = vrot.lane.b32.xlu0 %v24, 48
    %v26 = vpop.permute.xlu0 %25
    %vm27 = vcmask 425344
    %28 = vst.msk [vmem:[#allocation0] sm:$0x1] %vm27, %v26
    %s29 = scalar_lea.vmem %s0, 11
    %v30 = vld [vmem:[%s29] sm:$0x1]
    %31 = vrot.lane.b32.xlu0 %v30, 44
    %v32 = vpop.permute.xlu0 %31
    %vm33 = vcmask 392544
    %34 = vst.msk [vmem:[#allocation0] sm:$0x1] %vm33, %v32
    %s35 = scalar_lea.vmem %s0, 10
    %v36 = vld [vmem:[%s35] sm:$0x1]
    %37 = vrot.lane.b32.xlu0 %v36, 40
    %v38 = vpop.permute.xlu0 %37
    %vm39 = vcmask 359744
    %40 = vst.msk [vmem:[#allocation0] sm:$0x1] %vm39, %v38
    %s41 = scalar_lea.vmem %s0, 9
    %v42 = vld [vmem:[%s41] sm:$0x1]
    %43 = vrot.lane.b32.xlu0 %v42, 36
    %v44 = vpop.permute.xlu0 %43
    %vm45 = vcmask 326944
    %46 = vst.msk [vmem:[#allocation0] sm:$0x1] %vm45, %v44
    %s47 = scalar_lea.vmem %s0, 8
    %v48 = vld [vmem:[%s47] sm:$0x1]
    %49 = vrot.lane.b32.xlu0 %v48, 32
    %v50 = vpop.permute.xlu0 %49
    %vm51 = vcmask 294144
    %52 = vst.msk [vmem:[#allocation0] sm:$0x1] %vm51, %v50
    %s53 = scalar_lea.vmem %s0, 7
    %v54 = vld [vmem:[%s53] sm:$0x1]
    %55 = vrot.lane.b32.xlu0 %v54, 28
    %v56 = vpop.permute.xlu0 %55
    %vm57 = vcmask 261344
    %58 = vst.msk [vmem:[#allocation0] sm:$0x1] %vm57, %v56
    %s59 = scalar_lea.vmem %s0, 6
    %v60 = vld [vmem:[%s59] sm:$0x1]
    %61 = vrot.lane.b32.xlu0 %v60, 24
    %v62 = vpop.permute.xlu0 %61
    %vm63 = vcmask 228544
    %64 = vst.msk [vmem:[#allocation0] sm:$0x1] %vm63, %v62
    %s65 = scalar_lea.vmem %s0, 5
    %v66 = vld [vmem:[%s65] sm:$0x1]
    %67 = vrot.lane.b32.xlu0 %v66, 20
    %v68 = vpop.permute.xlu0 %67
    %vm69 = vcmask 195744
    %70 = vst.msk [vmem:[#allocation0] sm:$0x1] %vm69, %v68
    %s71 = scalar_lea.vmem %s0, 4
    %v72 = vld [vmem:[%s71] sm:$0x1]
    %73 = vrot.lane.b32.xlu0 %v72, 16
    %v74 = vpop.permute.xlu0 %73
    %vm75 = vcmask 162944
    %76 = vst.msk [vmem:[#allocation0] sm:$0x1] %vm75, %v74
    %s77 = scalar_lea.vmem %s0, 3
    %v78 = vld [vmem:[%s77] sm:$0x1]
    %79 = vrot.lane.b32.xlu0 %v78, 12
    %v80 = vpop.permute.xlu0 %79
    %vm81 = vcmask 130144
    %82 = vst.msk [vmem:[#allocation0] sm:$0x1] %vm81, %v80
    %s83 = scalar_lea.vmem %s0, 2
    %v84 = vld [vmem:[%s83] sm:$0x1]
    %85 = vrot.lane.b32.xlu0 %v84, 8
    %v86 = vpop.permute.xlu0 %85
    %vm87 = vcmask 97344
    %88 = vst.msk [vmem:[#allocation0] sm:$0x1] %vm87, %v86
    %s89 = scalar_lea.vmem %s0, 1
    %v90 = vld [vmem:[%s89] sm:$0x1]
    %91 = vrot.lane.b32.xlu0 %v90, 4
    %v92 = vpop.permute.xlu0 %91
    %vm93 = vcmask 64544
    %94 = vst.msk [vmem:[#allocation0] sm:$0x1] %vm93, %v92
    %s96 = sshllo.u32 0, 1
    %v98 = vld [vmem:[#allocation0] sm:%s96]
    %s99 = sshllo.u32 0, 1
    %100 = vst [vmem:[%s1] sm:%s99] %v98

// kernel: vqvae_forward.1
$region0: #{vqvae_forward.1}
  #allocation0 [shape = 'u32[]', space=smem, size = 0x4, offset = 0x4, fixed_abs, tag = 'smem constant byte address 0x4 - core index']
  #allocation1 [shape = 'u32[144,128]{1,0:T(1,128)}', space=vmem, size = 0x12000, scoped, tag = 'internal scratch']
  #allocation2 [shape = 'f32[16,128]{1,0:T(8,128)}', space=vmem, size = 0x2000, scoped, tag = 'scratch operand']
  #allocation3 [shape = 'f32[18,144]{1,0:T(8,128)}', space=vmem, size = 0x6000, scoped, tag = 'scratch operand']
  %s0 = inlined_call_operand.vmem [shape: f32[2,18,72], index: 0, kind: input, shape index: {}]
  %s1 = inlined_call_operand.vmem [shape: bf16[9,64,128], index: 1, kind: input, shape index: {}]
  %s2 = inlined_call_operand.vmem [shape: f32[1,128], index: 2, kind: input, shape index: {}]
  %s3 = inlined_call_operand.vmem [shape: f32[32,8], index: 3, kind: input, shape index: {}]
  %s4 = inlined_call_operand.vmem [shape: f32[1,32], index: 4, kind: input, shape index: {}]
  %s5 = inlined_call_operand.vmem [shape: bf16[9,128,64], index: 5, kind: input, shape index: {}]
  %s6 = inlined_call_operand.vmem [shape: f32[1,64], index: 6, kind: input, shape index: {}]
  %s7 = inlined_call_operand.vmem [shape: f32[2,16,64], index: 7, kind: output, shape index: {0}]
  %s8 = inlined_call_operand.vmem [shape: f32[2,1,128], index: 8, kind: output, shape index: {1}]
  %9 = xla_tuple %s7, %s8
  %s10 = sld [smem:[#allocation0]]
  $region69: #{vqvae_forward.1} parent=0
    _
  %s12 = ssub.s32 1, %s10
  %s13 = scalar_select 0, %s12, %s10
  loop: start=0, step=1, limit=4
  $region2: #{vqvae_forward.1} parent=0 // loop_pre_header
    _
  $region3: #{vqvae_forward.1} parent=0 // loop_header
    %s15 = sphi 0, %s19
    %p16 = scmp.ge.s32.totalorder %s15, 4
    %s25 = sphi 0, %s27
    %s28 = sphi 0, %s25
    %s29 = sphi 0, %s28
    %s45 = sphi 0, %s29
    %s49 = sphi 0, %s49
    %s51 = sphi 0, %s49
    %s52 = sphi 0, %s51
    %s66 = sphi 0, %s52
    %s70 = sphi 0, %s70
    %s72 = sphi 0, %s70
    %s73 = sphi 0, %s72
    %s87 = sphi 0, %s73
    %s91 = sphi 0, %s91
    %s93 = sphi 0, %s91
    %s94 = sphi 0, %s93
    %s108 = sphi 0, %s94
    %s112 = sphi 0, %s112
    %s114 = sphi 0, %s112
    %s115 = sphi 0, %s114
    %s129 = sphi 0, %s115
    %s133 = sphi 0, %s133
    %s135 = sphi 0, %s133
    %s136 = sphi 0, %s135
    %s150 = sphi 0, %s136
    %s154 = sphi 0, %s154
    %s156 = sphi 0, %s154
    %s157 = sphi 0, %s156
    %s171 = sphi 0, %s157
    %s177 = sphi 0, %s179
    %s180 = sphi 0, %s177
    %s181 = sphi 0, %s180
    %s197 = sphi 0, %s181
    %s203 = sphi 0, %s205
    %s206 = sphi 0, %s203
    %s207 = sphi 0, %s206
    %s223 = sphi 0, %s207
  $region4: #{vqvae_forward.1} parent=0 // loop_header_branch
    %18 = sbr.rel (%p16) target = $region8
  $region5: #{vqvae_forward.1} parent=0 // loop_body
    %s20 = ssub.s32 %s15, 1
    %s21 = ssub.s32 %s15, 2
    %s22 = sadd.s32 %s15, 1
    %s23 = ssub.s32 %s15, %s22
    %p24 = scmp.eq.s32.totalorder %s23, 0
    %s26 = sadd.s32 %s25, 1
    %s27 = scalar_select %p24, %s25, %s26
    %p30 = pneg %p24
    %p31 = scmp.eq.s32.totalorder %s15, 1
    %p32 = por %p30, %p31
    %p33 = scmp.ne.s32.totalorder %s25, %s28
    %p34 = scmp.eq.s32.totalorder %s15, 0
    %p35 = por %p33, %p34
    %p36 = scmp.ne.s32.totalorder %s25, %s28
    %p37 = scmp.eq.s32.totalorder %s20, 1
    %p38 = por %p36, %p37
    %p39 = scmp.ne.s32.totalorder %s28, %s29
    %p40 = scmp.eq.s32.totalorder %s20, 0
    %p41 = por %p39, %p40
    %p42 = scmp.ne.s32.totalorder %s28, %s29
    %p43 = scmp.eq.s32.totalorder %s21, 1
    %p44 = por %p42, %p43
    %p46 = scmp.ne.s32.totalorder %s29, %s45
    %p47 = scmp.eq.s32.totalorder %s21, 0
    %p48 = por %p46, %p47
    %s50 = sadd.s32 %s49, 1
    %p53 = scmp.eq.s32.totalorder %s15, 1
    %p54 = scmp.ne.s32.totalorder %s49, %s51
    %p55 = scmp.eq.s32.totalorder %s15, 0
    %p56 = por %p54, %p55
    %p57 = scmp.ne.s32.totalorder %s49, %s51
    %p58 = scmp.eq.s32.totalorder %s20, 1
    %p59 = por %p57, %p58
    %p60 = scmp.ne.s32.totalorder %s51, %s52
    %p61 = scmp.eq.s32.totalorder %s20, 0
    %p62 = por %p60, %p61
    %p63 = scmp.ne.s32.totalorder %s51, %s52
    %p64 = scmp.eq.s32.totalorder %s21, 1
    %p65 = por %p63, %p64
    %p67 = scmp.ne.s32.totalorder %s52, %s66
    %p68 = scmp.eq.s32.totalorder %s21, 0
    %p69 = por %p67, %p68
    %s71 = sadd.s32 %s70, 1
    %p74 = scmp.eq.s32.totalorder %s15, 1
    %p75 = scmp.ne.s32.totalorder %s70, %s72
    %p76 = scmp.eq.s32.totalorder %s15, 0
    %p77 = por %p75, %p76
    %p78 = scmp.ne.s32.totalorder %s70, %s72
    %p79 = scmp.eq.s32.totalorder %s20, 1
    %p80 = por %p78, %p79
    %p81 = scmp.ne.s32.totalorder %s72, %s73
    %p82 = scmp.eq.s32.totalorder %s20, 0
    %p83 = por %p81, %p82
    %p84 = scmp.ne.s32.totalorder %s72, %s73
    %p85 = scmp.eq.s32.totalorder %s21, 1
    %p86 = por %p84, %p85
    %p88 = scmp.ne.s32.totalorder %s73, %s87
    %p89 = scmp.eq.s32.totalorder %s21, 0
    %p90 = por %p88, %p89
    %s92 = sadd.s32 %s91, 1
    %p95 = scmp.eq.s32.totalorder %s15, 1
    %p96 = scmp.ne.s32.totalorder %s91, %s93
    %p97 = scmp.eq.s32.totalorder %s15, 0
    %p98 = por %p96, %p97
    %p99 = scmp.ne.s32.totalorder %s91, %s93
    %p100 = scmp.eq.s32.totalorder %s20, 1
    %p101 = por %p99, %p100
    %p102 = scmp.ne.s32.totalorder %s93, %s94
    %p103 = scmp.eq.s32.totalorder %s20, 0
    %p104 = por %p102, %p103
    %p105 = scmp.ne.s32.totalorder %s93, %s94
    %p106 = scmp.eq.s32.totalorder %s21, 1
    %p107 = por %p105, %p106
    %p109 = scmp.ne.s32.totalorder %s94, %s108
    %p110 = scmp.eq.s32.totalorder %s21, 0
    %p111 = por %p109, %p110
    %s113 = sadd.s32 %s112, 1
    %p116 = scmp.eq.s32.totalorder %s15, 1
    %p117 = scmp.ne.s32.totalorder %s112, %s114
    %p118 = scmp.eq.s32.totalorder %s15, 0
    %p119 = por %p117, %p118
    %p120 = scmp.ne.s32.totalorder %s112, %s114
    %p121 = scmp.eq.s32.totalorder %s20, 1
    %p122 = por %p120, %p121
    %p123 = scmp.ne.s32.totalorder %s114, %s115
    %p124 = scmp.eq.s32.totalorder %s20, 0
    %p125 = por %p123, %p124
    %p126 = scmp.ne.s32.totalorder %s114, %s115
    %p127 = scmp.eq.s32.totalorder %s21, 1
    %p128 = por %p126, %p127
    %p130 = scmp.ne.s32.totalorder %s115, %s129
    %p131 = scmp.eq.s32.totalorder %s21, 0
    %p132 = por %p130, %p131
    %s134 = sadd.s32 %s133, 1
    %p137 = scmp.eq.s32.totalorder %s15, 1
    %p138 = scmp.ne.s32.totalorder %s133, %s135
    %p139 = scmp.eq.s32.totalorder %s15, 0
    %p140 = por %p138, %p139
    %p141 = scmp.ne.s32.totalorder %s133, %s135
    %p142 = scmp.eq.s32.totalorder %s20, 1
    %p143 = por %p141, %p142
    %p144 = scmp.ne.s32.totalorder %s135, %s136
    %p145 = scmp.eq.s32.totalorder %s20, 0
    %p146 = por %p144, %p145
    %p147 = scmp.ne.s32.totalorder %s135, %s136
    %p148 = scmp.eq.s32.totalorder %s21, 1
    %p149 = por %p147, %p148
    %p151 = scmp.ne.s32.totalorder %s136, %s150
    %p152 = scmp.eq.s32.totalorder %s21, 0
    %p153 = por %p151, %p152
    %s155 = sadd.s32 %s154, 1
    %p158 = scmp.eq.s32.totalorder %s15, 1
    %p159 = scmp.ne.s32.totalorder %s154, %s156
    %p160 = scmp.eq.s32.totalorder %s15, 0
    %p161 = por %p159, %p160
    %p162 = scmp.ne.s32.totalorder %s154, %s156
    %p163 = scmp.eq.s32.totalorder %s20, 1
    %p164 = por %p162, %p163
    %p165 = scmp.ne.s32.totalorder %s156, %s157
    %p166 = scmp.eq.s32.totalorder %s20, 0
    %p167 = por %p165, %p166
    %p168 = scmp.ne.s32.totalorder %s156, %s157
    %p169 = scmp.eq.s32.totalorder %s21, 1
    %p170 = por %p168, %p169
    %p172 = scmp.ne.s32.totalorder %s157, %s171
    %p173 = scmp.eq.s32.totalorder %s21, 0
    %p174 = por %p172, %p173
    %s175 = ssub.s32 %s15, %s22
    %p176 = scmp.eq.s32.totalorder %s175, 0
    %s178 = sadd.s32 %s177, 1
    %s179 = scalar_select %p176, %s177, %s178
    %p182 = pneg %p176
    %p183 = scmp.eq.s32.totalorder %s15, 1
    %p184 = por %p182, %p183
    %p185 = scmp.ne.s32.totalorder %s177, %s180
    %p186 = scmp.eq.s32.totalorder %s15, 0
    %p187 = por %p185, %p186
    %p188 = scmp.ne.s32.totalorder %s177, %s180
    %p189 = scmp.eq.s32.totalorder %s20, 1
    %p190 = por %p188, %p189
    %p191 = scmp.ne.s32.totalorder %s180, %s181
    %p192 = scmp.eq.s32.totalorder %s20, 0
    %p193 = por %p191, %p192
    %p194 = scmp.ne.s32.totalorder %s180, %s181
    %p195 = scmp.eq.s32.totalorder %s21, 1
    %p196 = por %p194, %p195
    %p198 = scmp.ne.s32.totalorder %s181, %s197
    %p199 = scmp.eq.s32.totalorder %s21, 0
    %p200 = por %p198, %p199
    %s201 = ssub.s32 %s15, %s22
    %p202 = scmp.eq.s32.totalorder %s201, 0
    %s204 = sadd.s32 %s203, 1
    %s205 = scalar_select %p202, %s203, %s204
    %p208 = pneg %p202
    %p209 = scmp.eq.s32.totalorder %s15, 1
    %p210 = por %p208, %p209
    %p211 = scmp.ne.s32.totalorder %s203, %s206
    %p212 = scmp.eq.s32.totalorder %s15, 0
    %p213 = por %p211, %p212
    %p214 = scmp.ne.s32.totalorder %s203, %s206
    %p215 = scmp.eq.s32.totalorder %s20, 1
    %p216 = por %p214, %p215
    %p217 = scmp.ne.s32.totalorder %s206, %s207
    %p218 = scmp.eq.s32.totalorder %s20, 0
    %p219 = por %p217, %p218
    %p220 = scmp.ne.s32.totalorder %s206, %s207
    %p221 = scmp.eq.s32.totalorder %s21, 1
    %p222 = por %p220, %p221
    %p224 = scmp.ne.s32.totalorder %s207, %s223
    %p225 = scmp.eq.s32.totalorder %s21, 0
    %p226 = por %p224, %p225
    %p227 = scmp.le.s32.totalorder 1, %s15
    %p228 = scmp.lt.s32.totalorder %s15, 3
    %p229 = pnand %p227, %p228
    %p230 = pneg %p229
    // Predicated region
    $region9: #{vqvae_forward.1} parent=5 // pred_check
      _
    $region10: #{vqvae_forward.1} parent=5 // pred_check_branch
      %232 = sbr.rel (%p229) target = $region12
    $region11: #{vqvae_forward.1} parent=5 // pred_region
      %s233 = ssub.s32 %s15, 1
      // Predicated region
      $region13: #{vqvae_forward.1} parent=11 // pred_check
        %p234 = pneg %p62
      $region14: #{vqvae_forward.1} parent=11 // pred_check_branch
        %236 = sbr.rel (%p234) target = $region16
      $region15: #{vqvae_forward.1} parent=11 // pred_region
        _
      $region16: #{vqvae_forward.1} parent=11 // pred_fallthru
        _
      // Predicated region
      $region17: #{vqvae_forward.1} parent=11 // pred_check
        %p237 = pneg %p83
      $region18: #{vqvae_forward.1} parent=11 // pred_check_branch
        %239 = sbr.rel (%p237) target = $region20
      $region19: #{vqvae_forward.1} parent=11 // pred_region
        _
      $region20: #{vqvae_forward.1} parent=11 // pred_fallthru
        _
      // Predicated region
      $region21: #{vqvae_forward.1} parent=11 // pred_check
        %p240 = pneg %p104
      $region22: #{vqvae_forward.1} parent=11 // pred_check_branch
        %242 = sbr.rel (%p240) target = $region24
      $region23: #{vqvae_forward.1} parent=11 // pred_region
        _
      $region24: #{vqvae_forward.1} parent=11 // pred_fallthru
        _
      // Predicated region
      $region25: #{vqvae_forward.1} parent=11 // pred_check
        %p243 = pneg %p125
      $region26: #{vqvae_forward.1} parent=11 // pred_check_branch
        %245 = sbr.rel (%p243) target = $region28
      $region27: #{vqvae_forward.1} parent=11 // pred_region
        _
      $region28: #{vqvae_forward.1} parent=11 // pred_fallthru
        _
      // Predicated region
      $region29: #{vqvae_forward.1} parent=11 // pred_check
        %p246 = pneg %p146
      $region30: #{vqvae_forward.1} parent=11 // pred_check_branch
        %248 = sbr.rel (%p246) target = $region32
      $region31: #{vqvae_forward.1} parent=11 // pred_region
        _
      $region32: #{vqvae_forward.1} parent=11 // pred_fallthru
        _
      // Predicated region
      $region33: #{vqvae_forward.1} parent=11 // pred_check
        %p249 = pneg %p167
      $region34: #{vqvae_forward.1} parent=11 // pred_check_branch
        %251 = sbr.rel (%p249) target = $region36
      $region35: #{vqvae_forward.1} parent=11 // pred_region
        _
      $region36: #{vqvae_forward.1} parent=11 // pred_fallthru
        _
    $region12: #{vqvae_forward.1} parent=5 // pred_fallthru
      _
    %p252 = scmp.lt.s32.totalorder %s15, 2
    // Predicated region
    $region37: #{vqvae_forward.1} parent=5 // pred_check
      %p253 = pneg %p252
    $region38: #{vqvae_forward.1} parent=5 // pred_check_branch
      %255 = sbr.rel (%p253) target = $region40
    $region39: #{vqvae_forward.1} parent=5 // pred_region
      // Predicated region
      $region41: #{vqvae_forward.1} parent=39 // pred_check
        %p256 = pneg %p35
      $region42: #{vqvae_forward.1} parent=39 // pred_check_branch
        %258 = sbr.rel (%p256) target = $region44
      $region43: #{vqvae_forward.1} parent=39 // pred_region
        %p259 = scmp.lt.s32.totalorder %s15, 1
        %s260 = scalar_select %p259, %s15, 1
        %s261 = smul.addr %s260, 3
        %s262 = smul.addr %s261, 8
        %s263 = scalar_lea.vmem %s0, %s262
      $region44: #{vqvae_forward.1} parent=39 // pred_fallthru
        _
    $region40: #{vqvae_forward.1} parent=5 // pred_fallthru
      _
    %p264 = scmp.le.s32.totalorder 1, %s15
    %p265 = scmp.lt.s32.totalorder %s15, 3
    %p266 = pnand %p264, %p265
    %p267 = pneg %p266
    // Predicated region
    $region45: #{vqvae_forward.1} parent=5 // pred_check
      _
    $region46: #{vqvae_forward.1} parent=5 // pred_check_branch
      %269 = sbr.rel (%p266) target = $region48
    $region47: #{vqvae_forward.1} parent=5 // pred_region
      %s270 = ssub.s32 %s15, 1
      %p271 = scmp.lt.s32.totalorder %s20, 1
      %s272 = scalar_select %p271, %s20, 1
      %s273 = smul.addr %s272, 3
      %s274 = smul.addr %s273, 8
      %s275 = scalar_lea.vmem %s0, %s274
      %p276 = pneg %p41
      %p277 = pneg %p38
      %p278 = pneg %p62
      %p279 = pneg %p59
      %p280 = pneg %p83
      %p281 = pneg %p80
      %p282 = pneg %p104
      %p283 = pneg %p101
      %p284 = pneg %p125
      %p285 = pneg %p122
      %p286 = pneg %p146
      %p287 = pneg %p143
      %p288 = pneg %p167
      %p289 = pneg %p164
      %p290 = pneg %p193
      %p291 = pneg %p190
      %p292 = scmp.lt.s32.totalorder %s20, 1
      %s293 = scalar_select %p292, %s20, 1
      %s294 = smul.addr %s293, 2
      %s295 = smul.addr %s294, 8
      %s296 = scalar_lea.vmem %s7, %s295
      %p297 = pneg %p219
      %p298 = pneg %p216
      %p299 = scmp.lt.s32.totalorder %s20, 1
      %s300 = scalar_select %p299, %s20, 1
      %s301 = scalar_lea.vmem %s8, %s300
      %p302 = scmp.lt.s32.totalorder %s20, 1
      %s303 = scalar_select %p302, %s20, 1
      %s304 = smul.addr %s303, 3
      %s305 = smul.addr %s304, 8
      %s306 = scalar_lea.vmem %s0, %s305
      %p307 = scmp.lt.s32.totalorder %s20, 1
      %s308 = scalar_select %p307, %s20, 1
      %s309 = smul.addr %s308, 2
      %s310 = smul.addr %s309, 8
      %s311 = scalar_lea.vmem %s7, %s310
      %p312 = scmp.lt.s32.totalorder %s20, 1
      %s313 = scalar_select %p312, %s20, 1
      %s314 = scalar_lea.vmem %s8, %s313
      %316 = vst [vmem:[#allocation3] sm:$0xff] 0.0
      %vm317 = vcmask 130048
      %318 = vst.msk [vmem:[#allocation3 + $0x8] sm:$0xff] %vm317, 0.0
      %319 = vst [vmem:[#allocation3 + $0x10] sm:$0xff] 0.0
      %320 = vst.msk [vmem:[#allocation3 + $0x18] sm:$0xff] %vm317, 0.0
      %321 = vst [vmem:[#allocation3 + $0x20] sm:$0x3] 0.0
      %vm322 = vcmask 123904
      %323 = vst.msk [vmem:[#allocation3 + $0x28] sm:$0x3] %vm322, 0.0
      %v324 = vld [vmem:[%s306] sm:$0xff]
      %v325 = vld [vmem:[%s306 + $0x8] sm:$0xff]
      %v326 = vpack.c.bf16 %v325, %v324
      %v327 = vld [vmem:[%s1] sm:$0xf]
      %v328 = vld [vmem:[%s1 + $0x4] sm:$0xf]
      %v329 = vld [vmem:[%s1 + $0x8] sm:$0xf]
      %v330 = vld [vmem:[%s1 + $0xc] sm:$0xf]
      %v331 = vld [vmem:[%s1 + $0x10] sm:$0xf]
      %v332 = vld [vmem:[%s1 + $0x14] sm:$0xf]
      %v333 = vld [vmem:[%s1 + $0x18] sm:$0xf]
      %v334 = vld [vmem:[%s1 + $0x1c] sm:$0xf]
      %s335 = scalar_lea.vmem %s1, 32
      %v336 = vld [vmem:[%s335] sm:$0xf]
      %v337 = vld [vmem:[%s335 + $0x4] sm:$0xf]
      %v338 = vld [vmem:[%s335 + $0x8] sm:$0xf]
      %v339 = vld [vmem:[%s335 + $0xc] sm:$0xf]
      %v340 = vld [vmem:[%s335 + $0x10] sm:$0xf]
      %v341 = vld [vmem:[%s335 + $0x14] sm:$0xf]
      %v342 = vld [vmem:[%s335 + $0x18] sm:$0xf]
      %v343 = vld [vmem:[%s335 + $0x1c] sm:$0xf]
      %345 = vrot.lane.b32.xlu0 %v326, 124
      %v346 = vpop.permute.xlu0 %345
      %v355 = vunpack.c.l.b16 %v336
      %v356 = vunpack.c.l.b16 %v337
      %v357 = vunpack.c.l.b16 %v338
      %v358 = vunpack.c.l.b16 %v339
      %v359 = vunpack.c.l.b16 %v340
      %v360 = vunpack.c.l.b16 %v341
      %v361 = vunpack.c.l.b16 %v342
      %v362 = vunpack.c.l.b16 %v343
      %v363 = vpack.c.b16 %v356, %v355
      %v364 = vpack.c.b16 %v358, %v357
      %v365 = vpack.c.b16 %v360, %v359
      %v366 = vpack.c.b16 %v362, %v361
      %vm371 = vcmask 523264
      %v373 = vsel %vm371, %v346, 0
      %375 = vmatprep.subr.bf16.mxu0 0
      %376 = vmatpush1.bf16.msra.mxu0 %v363
      %377 = vmatprep.subr.bf16.mxu0 0
      %378 = vmatpush1.bf16.msra.mxu0 %v364
      %379 = vmatprep.subr.bf16.mxu0 0
      %380 = vmatpush1.bf16.msra.mxu0 %v365
      %381 = vmatprep.subr.bf16.mxu0 0
      %382 = vmatpush1.bf16.msra.mxu0 %v366
      %383 = vmatprep.subr.bf16.mxu0 0
      %384 = vmatpush1.bf16.msra.mxu0 0
      %385 = vmatprep.subr.bf16.mxu0 0
      %386 = vmatpush1.bf16.msra.mxu0 0
      %387 = vmatprep.subr.bf16.mxu0 0
      %388 = vmatpush1.bf16.msra.mxu0 0
      %389 = vmatprep.subr.bf16.mxu0 0
      %390 = vmatpush1.bf16.msra.mxu0 0
      %391 = vmatprep.subr.bf16.mxu0 0
      %392 = vmatpush1.bf16.msra.mxu0 0
      %393 = vmatprep.subr.bf16.mxu0 0
      %394 = vmatpush1.bf16.msra.mxu0 0
      %395 = vmatprep.subr.bf16.mxu0 0
      %396 = vmatpush1.bf16.msra.mxu0 0
      %397 = vmatprep.subr.bf16.mxu0 0
      %398 = vmatpush1.bf16.msra.mxu0 0
      %399 = vmatprep.subr.bf16.mxu0 0
      %400 = vmatpush1.bf16.msra.mxu0 0
      %401 = vmatprep.subr.bf16.mxu0 0
      %402 = vmatpush1.bf16.msra.mxu0 0
      %403 = vmatprep.subr.bf16.mxu0 0
      %404 = vmatpush1.bf16.msra.mxu0 0
      %405 = vmatprep.subr.bf16.mxu0 0
      %406 = vmatpush1.bf16.msra.mxu0 0
      %407 = vmatprep.mubr.bf16.mxu0 0
      %408 = vmatmul.mubr.bf16.gmra.mrb[0].mxu0 %v373
      %v409 = vpop.f32.mrb[0].mxu0
      %v410 = vadd.f32 0.0, %v409
      %v411 = vpop.f32.mrb[0].mxu0
      %v412 = vpop.f32.mrb[0].mxu0
      %v413 = vadd.f32 0.0, %v412
      %v414 = vpop.f32.mrb[0].mxu0
      %415 = vdwg.mxu0
      %v424 = vunpack.c.l.b16 %v327
      %v425 = vunpack.c.l.b16 %v328
      %v426 = vunpack.c.l.b16 %v329
      %v427 = vunpack.c.l.b16 %v330
      %v428 = vunpack.c.l.b16 %v331
      %v429 = vunpack.c.l.b16 %v332
      %v430 = vunpack.c.l.b16 %v333
      %v431 = vunpack.c.l.b16 %v334
      %v432 = vpack.c.b16 %v425, %v424
      %v433 = vpack.c.b16 %v427, %v426
      %v434 = vpack.c.b16 %v429, %v428
      %v435 = vpack.c.b16 %v431, %v430
      %v441 = vsel %vm371, %v326, 0
      %443 = vmatprep.subr.bf16.mxu0 0
      %444 = vmatpush1.bf16.msra.mxu0 %v432
      %445 = vmatprep.subr.bf16.mxu0 0
      %446 = vmatpush1.bf16.msra.mxu0 %v433
      %447 = vmatprep.subr.bf16.mxu0 0
      %448 = vmatpush1.bf16.msra.mxu0 %v434
      %449 = vmatprep.subr.bf16.mxu0 0
      %450 = vmatpush1.bf16.msra.mxu0 %v435
      %451 = vmatprep.subr.bf16.mxu0 0
      %452 = vmatpush1.bf16.msra.mxu0 0
      %453 = vmatprep.subr.bf16.mxu0 0
      %454 = vmatpush1.bf16.msra.mxu0 0
      %455 = vmatprep.subr.bf16.mxu0 0
      %456 = vmatpush1.bf16.msra.mxu0 0
      %457 = vmatprep.subr.bf16.mxu0 0
      %458 = vmatpush1.bf16.msra.mxu0 0
      %459 = vmatprep.subr.bf16.mxu0 0
      %460 = vmatpush1.bf16.msra.mxu0 0
      %461 = vmatprep.subr.bf16.mxu0 0
      %462 = vmatpush1.bf16.msra.mxu0 0
      %463 = vmatprep.subr.bf16.mxu0 0
      %464 = vmatpush1.bf16.msra.mxu0 0
      %465 = vmatprep.subr.bf16.mxu0 0
      %466 = vmatpush1.bf16.msra.mxu0 0
      %467 = vmatprep.subr.bf16.mxu0 0
      %468 = vmatpush1.bf16.msra.mxu0 0
      %469 = vmatprep.subr.bf16.mxu0 0
      %470 = vmatpush1.bf16.msra.mxu0 0
      %471 = vmatprep.subr.bf16.mxu0 0
      %472 = vmatpush1.bf16.msra.mxu0 0
      %473 = vmatprep.subr.bf16.mxu0 0
      %474 = vmatpush1.bf16.msra.mxu0 0
      %475 = vmatprep.mubr.bf16.mxu0 0
      %476 = vmatmul.mubr.bf16.gmra.mrb[0].mxu0 %v441
      %v477 = vpop.f32.mrb[0].mxu0
      %v478 = vadd.f32 %v410, %v477
      %v479 = vpop.f32.mrb[0].mxu0
      %v480 = vpop.f32.mrb[0].mxu0
      %v481 = vadd.f32 %v413, %v480
      %v482 = vpop.f32.mrb[0].mxu0
      %483 = vdwg.mxu0
      %s484 = scalar_lea.vmem %s1, 64
      %v485 = vld [vmem:[%s484] sm:$0xf]
      %v486 = vld [vmem:[%s484 + $0x4] sm:$0xf]
      %v487 = vld [vmem:[%s484 + $0x8] sm:$0xf]
      %v488 = vld [vmem:[%s484 + $0xc] sm:$0xf]
      %v489 = vld [vmem:[%s484 + $0x10] sm:$0xf]
      %v490 = vld [vmem:[%s484 + $0x14] sm:$0xf]
      %v491 = vld [vmem:[%s484 + $0x18] sm:$0xf]
      %v492 = vld [vmem:[%s484 + $0x1c] sm:$0xf]
      %493 = vrot.lane.b32.xlu0 %v326, 120
      %v494 = vpop.permute.xlu0 %493
      %v503 = vunpack.c.l.b16 %v485
      %v504 = vunpack.c.l.b16 %v486
      %v505 = vunpack.c.l.b16 %v487
      %v506 = vunpack.c.l.b16 %v488
      %v507 = vunpack.c.l.b16 %v489
      %v508 = vunpack.c.l.b16 %v490
      %v509 = vunpack.c.l.b16 %v491
      %v510 = vunpack.c.l.b16 %v492
      %v511 = vpack.c.b16 %v504, %v503
      %v512 = vpack.c.b16 %v506, %v505
      %v513 = vpack.c.b16 %v508, %v507
      %v514 = vpack.c.b16 %v510, %v509
      %v520 = vsel %vm371, %v494, 0
      %522 = vmatprep.subr.bf16.mxu0 0
      %523 = vmatpush1.bf16.msra.mxu0 %v511
      %524 = vmatprep.subr.bf16.mxu0 0
      %525 = vmatpush1.bf16.msra.mxu0 %v512
      %526 = vmatprep.subr.bf16.mxu0 0
      %527 = vmatpush1.bf16.msra.mxu0 %v513
      %528 = vmatprep.subr.bf16.mxu0 0
      %529 = vmatpush1.bf16.msra.mxu0 %v514
      %530 = vmatprep.subr.bf16.mxu0 0
      %531 = vmatpush1.bf16.msra.mxu0 0
      %532 = vmatprep.subr.bf16.mxu0 0
      %533 = vmatpush1.bf16.msra.mxu0 0
      %534 = vmatprep.subr.bf16.mxu0 0
      %535 = vmatpush1.bf16.msra.mxu0 0
      %536 = vmatprep.subr.bf16.mxu0 0
      %537 = vmatpush1.bf16.msra.mxu0 0
      %538 = vmatprep.subr.bf16.mxu0 0
      %539 = vmatpush1.bf16.msra.mxu0 0
      %540 = vmatprep.subr.bf16.mxu0 0
      %541 = vmatpush1.bf16.msra.mxu0 0
      %542 = vmatprep.subr.bf16.mxu0 0
      %543 = vmatpush1.bf16.msra.mxu0 0
      %544 = vmatprep.subr.bf16.mxu0 0
      %545 = vmatpush1.bf16.msra.mxu0 0
      %546 = vmatprep.subr.bf16.mxu0 0
      %547 = vmatpush1.bf16.msra.mxu0 0
      %548 = vmatprep.subr.bf16.mxu0 0
      %549 = vmatpush1.bf16.msra.mxu0 0
      %550 = vmatprep.subr.bf16.mxu0 0
      %551 = vmatpush1.bf16.msra.mxu0 0
      %552 = vmatprep.subr.bf16.mxu0 0
      %553 = vmatpush1.bf16.msra.mxu0 0
      %554 = vmatprep.mubr.bf16.mxu0 0
      %555 = vmatmul.mubr.bf16.gmra.mrb[0].mxu0 %v520
      %v556 = vpop.f32.mrb[0].mxu0
      %v557 = vadd.f32 0.0, %v556
      %v558 = vpop.f32.mrb[0].mxu0
      %v559 = vpop.f32.mrb[0].mxu0
      %v560 = vadd.f32 0.0, %v559
      %v561 = vpop.f32.mrb[0].mxu0
      %562 = vdwg.mxu0
      %v563 = vadd.f32 %v478, %v557
      %v564 = vadd.f32 %v481, %v560
      %v565 = vld [vmem:[%s306 + $0x1] sm:$0xff]
      %v566 = vld [vmem:[%s306 + $0x9] sm:$0xff]
      %v567 = vpack.c.bf16 %v566, %v565
      %s568 = scalar_lea.vmem %s1, 96
      %v569 = vld [vmem:[%s568] sm:$0xf]
      %v570 = vld [vmem:[%s568 + $0x4] sm:$0xf]
      %v571 = vld [vmem:[%s568 + $0x8] sm:$0xf]
      %v572 = vld [vmem:[%s568 + $0xc] sm:$0xf]
      %v573 = vld [vmem:[%s568 + $0x10] sm:$0xf]
      %v574 = vld [vmem:[%s568 + $0x14] sm:$0xf]
      %v575 = vld [vmem:[%s568 + $0x18] sm:$0xf]
      %v576 = vld [vmem:[%s568 + $0x1c] sm:$0xf]
      %v585 = vunpack.c.l.b16 %v569
      %v586 = vunpack.c.l.b16 %v570
      %v587 = vunpack.c.l.b16 %v571
      %v588 = vunpack.c.l.b16 %v572
      %v589 = vunpack.c.l.b16 %v573
      %v590 = vunpack.c.l.b16 %v574
      %v591 = vunpack.c.l.b16 %v575
      %v592 = vunpack.c.l.b16 %v576
      %v593 = vpack.c.b16 %v586, %v585
      %v594 = vpack.c.b16 %v588, %v587
      %v595 = vpack.c.b16 %v590, %v589
      %v596 = vpack.c.b16 %v592, %v591
      %v602 = vsel %vm371, %v567, 0
      %604 = vmatprep.subr.bf16.mxu0 0
      %605 = vmatpush1.bf16.msra.mxu0 %v593
      %606 = vmatprep.subr.bf16.mxu0 0
      %607 = vmatpush1.bf16.msra.mxu0 %v594
      %608 = vmatprep.subr.bf16.mxu0 0
      %609 = vmatpush1.bf16.msra.mxu0 %v595
      %610 = vmatprep.subr.bf16.mxu0 0
      %611 = vmatpush1.bf16.msra.mxu0 %v596
      %612 = vmatprep.subr.bf16.mxu0 0
      %613 = vmatpush1.bf16.msra.mxu0 0
      %614 = vmatprep.subr.bf16.mxu0 0
      %615 = vmatpush1.bf16.msra.mxu0 0
      %616 = vmatprep.subr.bf16.mxu0 0
      %617 = vmatpush1.bf16.msra.mxu0 0
      %618 = vmatprep.subr.bf16.mxu0 0
      %619 = vmatpush1.bf16.msra.mxu0 0
      %620 = vmatprep.subr.bf16.mxu0 0
      %621 = vmatpush1.bf16.msra.mxu0 0
      %622 = vmatprep.subr.bf16.mxu0 0
      %623 = vmatpush1.bf16.msra.mxu0 0
      %624 = vmatprep.subr.bf16.mxu0 0
      %625 = vmatpush1.bf16.msra.mxu0 0
      %626 = vmatprep.subr.bf16.mxu0 0
      %627 = vmatpush1.bf16.msra.mxu0 0
      %628 = vmatprep.subr.bf16.mxu0 0
      %629 = vmatpush1.bf16.msra.mxu0 0
      %630 = vmatprep.subr.bf16.mxu0 0
      %631 = vmatpush1.bf16.msra.mxu0 0
      %632 = vmatprep.subr.bf16.mxu0 0
      %633 = vmatpush1.bf16.msra.mxu0 0
      %634 = vmatprep.subr.bf16.mxu0 0
      %635 = vmatpush1.bf16.msra.mxu0 0
      %636 = vmatprep.mubr.bf16.mxu0 0
      %637 = vmatmul.mubr.bf16.gmra.mrb[0].mxu0 %v602
      %v638 = vpop.f32.mrb[0].mxu0
      %v639 = vadd.f32 0.0, %v638
      %v640 = vpop.f32.mrb[0].mxu0
      %v641 = vpop.f32.mrb[0].mxu0
      %v642 = vadd.f32 0.0, %v641
      %v643 = vpop.f32.mrb[0].mxu0
      %644 = vdwg.mxu0
      %v645 = vadd.f32 %v563, %v639
      %v646 = vadd.f32 %v564, %v642
      %s647 = scalar_lea.vmem %s1, 128
      %v648 = vld [vmem:[%s647] sm:$0xf]
      %v649 = vld [vmem:[%s647 + $0x4] sm:$0xf]
      %v650 = vld [vmem:[%s647 + $0x8] sm:$0xf]
      %v651 = vld [vmem:[%s647 + $0xc] sm:$0xf]
      %v652 = vld [vmem:[%s647 + $0x10] sm:$0xf]
      %v653 = vld [vmem:[%s647 + $0x14] sm:$0xf]
      %v654 = vld [vmem:[%s647 + $0x18] sm:$0xf]
      %v655 = vld [vmem:[%s647 + $0x1c] sm:$0xf]
      %657 = vrot.lane.b32.xlu0 %v567, 124
      %v658 = vpop.permute.xlu0 %657
      %v667 = vunpack.c.l.b16 %v648
      %v668 = vunpack.c.l.b16 %v649
      %v669 = vunpack.c.l.b16 %v650
      %v670 = vunpack.c.l.b16 %v651
      %v671 = vunpack.c.l.b16 %v652
      %v672 = vunpack.c.l.b16 %v653
      %v673 = vunpack.c.l.b16 %v654
      %v674 = vunpack.c.l.b16 %v655
      %v675 = vpack.c.b16 %v668, %v667
      %v676 = vpack.c.b16 %v670, %v669
      %v677 = vpack.c.b16 %v672, %v671
      %v678 = vpack.c.b16 %v674, %v673
      %v684 = vsel %vm371, %v658, 0
      %686 = vmatprep.subr.bf16.mxu0 0
      %687 = vmatpush1.bf16.msra.mxu0 %v675
      %688 = vmatprep.subr.bf16.mxu0 0
      %689 = vmatpush1.bf16.msra.mxu0 %v676
      %690 = vmatprep.subr.bf16.mxu0 0
      %691 = vmatpush1.bf16.msra.mxu0 %v677
      %692 = vmatprep.subr.bf16.mxu0 0
      %693 = vmatpush1.bf16.msra.mxu0 %v678
      %694 = vmatprep.subr.bf16.mxu0 0
      %695 = vmatpush1.bf16.msra.mxu0 0
      %696 = vmatprep.subr.bf16.mxu0 0
      %697 = vmatpush1.bf16.msra.mxu0 0
      %698 = vmatprep.subr.bf16.mxu0 0
      %699 = vmatpush1.bf16.msra.mxu0 0
      %700 = vmatprep.subr.bf16.mxu0 0
      %701 = vmatpush1.bf16.msra.mxu0 0
      %702 = vmatprep.subr.bf16.mxu0 0
      %703 = vmatpush1.bf16.msra.mxu0 0
      %704 = vmatprep.subr.bf16.mxu0 0
      %705 = vmatpush1.bf16.msra.mxu0 0
      %706 = vmatprep.subr.bf16.mxu0 0
      %707 = vmatpush1.bf16.msra.mxu0 0
      %708 = vmatprep.subr.bf16.mxu0 0
      %709 = vmatpush1.bf16.msra.mxu0 0
      %710 = vmatprep.subr.bf16.mxu0 0
      %711 = vmatpush1.bf16.msra.mxu0 0
      %712 = vmatprep.subr.bf16.mxu0 0
      %713 = vmatpush1.bf16.msra.mxu0 0
      %714 = vmatprep.subr.bf16.mxu0 0
      %715 = vmatpush1.bf16.msra.mxu0 0
      %716 = vmatprep.subr.bf16.mxu0 0
      %717 = vmatpush1.bf16.msra.mxu0 0
      %718 = vmatprep.mubr.bf16.mxu0 0
      %719 = vmatmul.mubr.bf16.gmra.mrb[0].mxu0 %v684
      %v720 = vpop.f32.mrb[0].mxu0
      %v721 = vadd.f32 0.0, %v720
      %v722 = vpop.f32.mrb[0].mxu0
      %v723 = vpop.f32.mrb[0].mxu0
      %v724 = vadd.f32 0.0, %v723
      %v725 = vpop.f32.mrb[0].mxu0
      %726 = vdwg.mxu0
      %v727 = vadd.f32 %v645, %v721
      %v728 = vadd.f32 %v646, %v724
      %s729 = scalar_lea.vmem %s1, 160
      %v730 = vld [vmem:[%s729] sm:$0xf]
      %v731 = vld [vmem:[%s729 + $0x4] sm:$0xf]
      %v732 = vld [vmem:[%s729 + $0x8] sm:$0xf]
      %v733 = vld [vmem:[%s729 + $0xc] sm:$0xf]
      %v734 = vld [vmem:[%s729 + $0x10] sm:$0xf]
      %v735 = vld [vmem:[%s729 + $0x14] sm:$0xf]
      %v736 = vld [vmem:[%s729 + $0x18] sm:$0xf]
      %v737 = vld [vmem:[%s729 + $0x1c] sm:$0xf]
      %738 = vrot.lane.b32.xlu0 %v567, 120
      %v739 = vpop.permute.xlu0 %738
      %v748 = vunpack.c.l.b16 %v730
      %v749 = vunpack.c.l.b16 %v731
      %v750 = vunpack.c.l.b16 %v732
      %v751 = vunpack.c.l.b16 %v733
      %v752 = vunpack.c.l.b16 %v734
      %v753 = vunpack.c.l.b16 %v735
      %v754 = vunpack.c.l.b16 %v736
      %v755 = vunpack.c.l.b16 %v737
      %v756 = vpack.c.b16 %v749, %v748
      %v757 = vpack.c.b16 %v751, %v750
      %v758 = vpack.c.b16 %v753, %v752
      %v759 = vpack.c.b16 %v755, %v754
      %v765 = vsel %vm371, %v739, 0
      %767 = vmatprep.subr.bf16.mxu0 0
      %768 = vmatpush1.bf16.msra.mxu0 %v756
      %769 = vmatprep.subr.bf16.mxu0 0
      %770 = vmatpush1.bf16.msra.mxu0 %v757
      %771 = vmatprep.subr.bf16.mxu0 0
      %772 = vmatpush1.bf16.msra.mxu0 %v758
      %773 = vmatprep.subr.bf16.mxu0 0
      %774 = vmatpush1.bf16.msra.mxu0 %v759
      %775 = vmatprep.subr.bf16.mxu0 0
      %776 = vmatpush1.bf16.msra.mxu0 0
      %777 = vmatprep.subr.bf16.mxu0 0
      %778 = vmatpush1.bf16.msra.mxu0 0
      %779 = vmatprep.subr.bf16.mxu0 0
      %780 = vmatpush1.bf16.msra.mxu0 0
      %781 = vmatprep.subr.bf16.mxu0 0
      %782 = vmatpush1.bf16.msra.mxu0 0
      %783 = vmatprep.subr.bf16.mxu0 0
      %784 = vmatpush1.bf16.msra.mxu0 0
      %785 = vmatprep.subr.bf16.mxu0 0
      %786 = vmatpush1.bf16.msra.mxu0 0
      %787 = vmatprep.subr.bf16.mxu0 0
      %788 = vmatpush1.bf16.msra.mxu0 0
      %789 = vmatprep.subr.bf16.mxu0 0
      %790 = vmatpush1.bf16.msra.mxu0 0
      %791 = vmatprep.subr.bf16.mxu0 0
      %792 = vmatpush1.bf16.msra.mxu0 0
      %793 = vmatprep.subr.bf16.mxu0 0
      %794 = vmatpush1.bf16.msra.mxu0 0
      %795 = vmatprep.subr.bf16.mxu0 0
      %796 = vmatpush1.bf16.msra.mxu0 0
      %797 = vmatprep.subr.bf16.mxu0 0
      %798 = vmatpush1.bf16.msra.mxu0 0
      %799 = vmatprep.mubr.bf16.mxu0 0
      %800 = vmatmul.mubr.bf16.gmra.mrb[0].mxu0 %v765
      %v801 = vpop.f32.mrb[0].mxu0
      %v802 = vadd.f32 0.0, %v801
      %v803 = vpop.f32.mrb[0].mxu0
      %v804 = vpop.f32.mrb[0].mxu0
      %v805 = vadd.f32 0.0, %v804
      %v806 = vpop.f32.mrb[0].mxu0
      %807 = vdwg.mxu0
      %v808 = vadd.f32 %v727, %v802
      %v809 = vadd.f32 %v728, %v805
      %v810 = vld [vmem:[%s306 + $0x2] sm:$0xff]
      %v811 = vld [vmem:[%s306 + $0xa] sm:$0xff]
      %v812 = vpack.c.bf16 %v811, %v810
      %s813 = scalar_lea.vmem %s1, 192
      %v814 = vld [vmem:[%s813] sm:$0xf]
      %v815 = vld [vmem:[%s813 + $0x4] sm:$0xf]
      %v816 = vld [vmem:[%s813 + $0x8] sm:$0xf]
      %v817 = vld [vmem:[%s813 + $0xc] sm:$0xf]
      %v818 = vld [vmem:[%s813 + $0x10] sm:$0xf]
      %v819 = vld [vmem:[%s813 + $0x14] sm:$0xf]
      %v820 = vld [vmem:[%s813 + $0x18] sm:$0xf]
      %v821 = vld [vmem:[%s813 + $0x1c] sm:$0xf]
      %v830 = vunpack.c.l.b16 %v814
      %v831 = vunpack.c.l.b16 %v815
      %v832 = vunpack.c.l.b16 %v816
      %v833 = vunpack.c.l.b16 %v817
      %v834 = vunpack.c.l.b16 %v818
      %v835 = vunpack.c.l.b16 %v819
      %v836 = vunpack.c.l.b16 %v820
      %v837 = vunpack.c.l.b16 %v821
      %v838 = vpack.c.b16 %v831, %v830
      %v839 = vpack.c.b16 %v833, %v832
      %v840 = vpack.c.b16 %v835, %v834
      %v841 = vpack.c.b16 %v837, %v836
      %v847 = vsel %vm371, %v812, 0
      %849 = vmatprep.subr.bf16.mxu0 0
      %850 = vmatpush1.bf16.msra.mxu0 %v838
      %851 = vmatprep.subr.bf16.mxu0 0
      %852 = vmatpush1.bf16.msra.mxu0 %v839
      %853 = vmatprep.subr.bf16.mxu0 0
      %854 = vmatpush1.bf16.msra.mxu0 %v840
      %855 = vmatprep.subr.bf16.mxu0 0
      %856 = vmatpush1.bf16.msra.mxu0 %v841
      %857 = vmatprep.subr.bf16.mxu0 0
      %858 = vmatpush1.bf16.msra.mxu0 0
      %859 = vmatprep.subr.bf16.mxu0 0
      %860 = vmatpush1.bf16.msra.mxu0 0
      %861 = vmatprep.subr.bf16.mxu0 0
      %862 = vmatpush1.bf16.msra.mxu0 0
      %863 = vmatprep.subr.bf16.mxu0 0
      %864 = vmatpush1.bf16.msra.mxu0 0
      %865 = vmatprep.subr.bf16.mxu0 0
      %866 = vmatpush1.bf16.msra.mxu0 0
      %867 = vmatprep.subr.bf16.mxu0 0
      %868 = vmatpush1.bf16.msra.mxu0 0
      %869 = vmatprep.subr.bf16.mxu0 0
      %870 = vmatpush1.bf16.msra.mxu0 0
      %871 = vmatprep.subr.bf16.mxu0 0
      %872 = vmatpush1.bf16.msra.mxu0 0
      %873 = vmatprep.subr.bf16.mxu0 0
      %874 = vmatpush1.bf16.msra.mxu0 0
      %875 = vmatprep.subr.bf16.mxu0 0
      %876 = vmatpush1.bf16.msra.mxu0 0
      %877 = vmatprep.subr.bf16.mxu0 0
      %878 = vmatpush1.bf16.msra.mxu0 0
      %879 = vmatprep.subr.bf16.mxu0 0
      %880 = vmatpush1.bf16.msra.mxu0 0
      %881 = vmatprep.mubr.bf16.mxu0 0
      %882 = vmatmul.mubr.bf16.gmra.mrb[0].mxu0 %v847
      %v883 = vpop.f32.mrb[0].mxu0
      %v884 = vadd.f32 0.0, %v883
      %v885 = vpop.f32.mrb[0].mxu0
      %v886 = vpop.f32.mrb[0].mxu0
      %v887 = vadd.f32 0.0, %v886
      %v888 = vpop.f32.mrb[0].mxu0
      %889 = vdwg.mxu0
      %v890 = vadd.f32 %v808, %v884
      %v891 = vadd.f32 %v809, %v887
      %s892 = scalar_lea.vmem %s1, 224
      %v893 = vld [vmem:[%s892] sm:$0xf]
      %v894 = vld [vmem:[%s892 + $0x4] sm:$0xf]
      %v895 = vld [vmem:[%s892 + $0x8] sm:$0xf]
      %v896 = vld [vmem:[%s892 + $0xc] sm:$0xf]
      %v897 = vld [vmem:[%s892 + $0x10] sm:$0xf]
      %v898 = vld [vmem:[%s892 + $0x14] sm:$0xf]
      %v899 = vld [vmem:[%s892 + $0x18] sm:$0xf]
      %v900 = vld [vmem:[%s892 + $0x1c] sm:$0xf]
      %902 = vrot.lane.b32.xlu0 %v812, 124
      %v903 = vpop.permute.xlu0 %902
      %v912 = vunpack.c.l.b16 %v893
      %v913 = vunpack.c.l.b16 %v894
      %v914 = vunpack.c.l.b16 %v895
      %v915 = vunpack.c.l.b16 %v896
      %v916 = vunpack.c.l.b16 %v897
      %v917 = vunpack.c.l.b16 %v898
      %v918 = vunpack.c.l.b16 %v899
      %v919 = vunpack.c.l.b16 %v900
      %v920 = vpack.c.b16 %v913, %v912
      %v921 = vpack.c.b16 %v915, %v914
      %v922 = vpack.c.b16 %v917, %v916
      %v923 = vpack.c.b16 %v919, %v918
      %v929 = vsel %vm371, %v903, 0
      %931 = vmatprep.subr.bf16.mxu0 0
      %932 = vmatpush1.bf16.msra.mxu0 %v920
      %933 = vmatprep.subr.bf16.mxu0 0
      %934 = vmatpush1.bf16.msra.mxu0 %v921
      %935 = vmatprep.subr.bf16.mxu0 0
      %936 = vmatpush1.bf16.msra.mxu0 %v922
      %937 = vmatprep.subr.bf16.mxu0 0
      %938 = vmatpush1.bf16.msra.mxu0 %v923
      %939 = vmatprep.subr.bf16.mxu0 0
      %940 = vmatpush1.bf16.msra.mxu0 0
      %941 = vmatprep.subr.bf16.mxu0 0
      %942 = vmatpush1.bf16.msra.mxu0 0
      %943 = vmatprep.subr.bf16.mxu0 0
      %944 = vmatpush1.bf16.msra.mxu0 0
      %945 = vmatprep.subr.bf16.mxu0 0
      %946 = vmatpush1.bf16.msra.mxu0 0
      %947 = vmatprep.subr.bf16.mxu0 0
      %948 = vmatpush1.bf16.msra.mxu0 0
      %949 = vmatprep.subr.bf16.mxu0 0
      %950 = vmatpush1.bf16.msra.mxu0 0
      %951 = vmatprep.subr.bf16.mxu0 0
      %952 = vmatpush1.bf16.msra.mxu0 0
      %953 = vmatprep.subr.bf16.mxu0 0
      %954 = vmatpush1.bf16.msra.mxu0 0
      %955 = vmatprep.subr.bf16.mxu0 0
      %956 = vmatpush1.bf16.msra.mxu0 0
      %957 = vmatprep.subr.bf16.mxu0 0
      %958 = vmatpush1.bf16.msra.mxu0 0
      %959 = vmatprep.subr.bf16.mxu0 0
      %960 = vmatpush1.bf16.msra.mxu0 0
      %961 = vmatprep.subr.bf16.mxu0 0
      %962 = vmatpush1.bf16.msra.mxu0 0
      %963 = vmatprep.mubr.bf16.mxu0 0
      %964 = vmatmul.mubr.bf16.gmra.mrb[0].mxu0 %v929
      %v965 = vpop.f32.mrb[0].mxu0
      %v966 = vadd.f32 0.0, %v965
      %v967 = vpop.f32.mrb[0].mxu0
      %v968 = vpop.f32.mrb[0].mxu0
      %v969 = vadd.f32 0.0, %v968
      %v970 = vpop.f32.mrb[0].mxu0
      %971 = vdwg.mxu0
      %v972 = vadd.f32 %v890, %v966
      %v973 = vadd.f32 %v891, %v969
      %s974 = scalar_lea.vmem %s1, 256
      %v975 = vld [vmem:[%s974] sm:$0xf]
      %v976 = vld [vmem:[%s974 + $0x4] sm:$0xf]
      %v977 = vld [vmem:[%s974 + $0x8] sm:$0xf]
      %v978 = vld [vmem:[%s974 + $0xc] sm:$0xf]
      %v979 = vld [vmem:[%s974 + $0x10] sm:$0xf]
      %v980 = vld [vmem:[%s974 + $0x14] sm:$0xf]
      %v981 = vld [vmem:[%s974 + $0x18] sm:$0xf]
      %v982 = vld [vmem:[%s974 + $0x1c] sm:$0xf]
      %983 = vrot.lane.b32.xlu0 %v812, 120
      %v984 = vpop.permute.xlu0 %983
      %v993 = vunpack.c.l.b16 %v975
      %v994 = vunpack.c.l.b16 %v976
      %v995 = vunpack.c.l.b16 %v977
      %v996 = vunpack.c.l.b16 %v978
      %v997 = vunpack.c.l.b16 %v979
      %v998 = vunpack.c.l.b16 %v980
      %v999 = vunpack.c.l.b16 %v981
      %v1000 = vunpack.c.l.b16 %v982
      %v1001 = vpack.c.b16 %v994, %v993
      %v1002 = vpack.c.b16 %v996, %v995
      %v1003 = vpack.c.b16 %v998, %v997
      %v1004 = vpack.c.b16 %v1000, %v999
      %v1010 = vsel %vm371, %v984, 0
      %1012 = vmatprep.subr.bf16.mxu0 0
      %1013 = vmatpush1.bf16.msra.mxu0 %v1001
      %1014 = vmatprep.subr.bf16.mxu0 0
      %1015 = vmatpush1.bf16.msra.mxu0 %v1002
      %1016 = vmatprep.subr.bf16.mxu0 0
      %1017 = vmatpush1.bf16.msra.mxu0 %v1003
      %1018 = vmatprep.subr.bf16.mxu0 0
      %1019 = vmatpush1.bf16.msra.mxu0 %v1004
      %1020 = vmatprep.subr.bf16.mxu0 0
      %1021 = vmatpush1.bf16.msra.mxu0 0
      %1022 = vmatprep.subr.bf16.mxu0 0
      %1023 = vmatpush1.bf16.msra.mxu0 0
      %1024 = vmatprep.subr.bf16.mxu0 0
      %1025 = vmatpush1.bf16.msra.mxu0 0
      %1026 = vmatprep.subr.bf16.mxu0 0
      %1027 = vmatpush1.bf16.msra.mxu0 0
      %1028 = vmatprep.subr.bf16.mxu0 0
      %1029 = vmatpush1.bf16.msra.mxu0 0
      %1030 = vmatprep.subr.bf16.mxu0 0
      %1031 = vmatpush1.bf16.msra.mxu0 0
      %1032 = vmatprep.subr.bf16.mxu0 0
      %1033 = vmatpush1.bf16.msra.mxu0 0
      %1034 = vmatprep.subr.bf16.mxu0 0
      %1035 = vmatpush1.bf16.msra.mxu0 0
      %1036 = vmatprep.subr.bf16.mxu0 0
      %1037 = vmatpush1.bf16.msra.mxu0 0
      %1038 = vmatprep.subr.bf16.mxu0 0
      %1039 = vmatpush1.bf16.msra.mxu0 0
      %1040 = vmatprep.subr.bf16.mxu0 0
      %1041 = vmatpush1.bf16.msra.mxu0 0
      %1042 = vmatprep.subr.bf16.mxu0 0
      %1043 = vmatpush1.bf16.msra.mxu0 0
      %1044 = vmatprep.mubr.bf16.mxu0 0
      %1045 = vmatmul.mubr.bf16.gmra.mrb[0].mxu0 %v1010
      %v1046 = vpop.f32.mrb[0].mxu0
      %v1047 = vadd.f32 0.0, %v1046
      %v1048 = vpop.f32.mrb[0].mxu0
      %v1049 = vpop.f32.mrb[0].mxu0
      %v1050 = vadd.f32 0.0, %v1049
      %v1051 = vpop.f32.mrb[0].mxu0
      %1052 = vdwg.mxu0
      %v1053 = vadd.f32 %v972, %v1047
      %v1054 = vadd.f32 %v973, %v1050
      %v1055 = vld [vmem:[%s2] sm:$0x1]
      %v1057 = vlaneseq
      %v1058 = vshrl.u32 %v1057, 7
      %v1059 = vsub.s32 0, %v1058
      %v1060 = vrot.slane %v1055, %v1059
      %v1062 = vadd.f32 %v1053, %v1060
      %v1063 = vadd.f32 %v1054, %v1060
      %v1064 = vmax.f32 %v1062, 0.0
      %v1065 = vmax.f32 %v1063, 0.0
      %1066 = vst [vmem:[#allocation2] sm:$0xff] %v1064
      %1067 = vst [vmem:[#allocation2 + $0x8] sm:$0xff] %v1065
      %v1068 = vld [vmem:[%s3] sm:$0xff]
      %v1069 = vld [vmem:[%s3 + $0x8] sm:$0xff]
      %v1070 = vld [vmem:[%s3 + $0x10] sm:$0xff]
      %v1071 = vld [vmem:[%s3 + $0x18] sm:$0xff]
      %v1072 = vld [vmem:[%s4] sm:$0x1]
      %v1073 = vld [vmem:[#allocation2] sm:$0xff]
      %v1074 = vld [vmem:[#allocation2 + $0x8] sm:$0xff]
      %vm1075 = vcmask 64512
      %v1077 = vsel %vm1075, %v1073, 0
      %v1080 = vsel %vm1075, %v1074, 0
      %v1083 = vsel %vm1075, %v1068, 0
      %v1086 = vsel %vm1075, %v1069, 0
      %v1089 = vsel %vm1075, %v1070, 0
      %v1092 = vsel %vm1075, %v1071, 0
      %1094 = vmatprep.subr.mxu0 0.0
      %1095 = vmatpush1.xpose.msra.mxu0 %v1083
      %1096 = vmatprep.subr.mxu0 0.0
      %1097 = vmatpush1.xpose.msra.mxu0 %v1086
      %1098 = vmatprep.subr.mxu0 0.0
      %1099 = vmatpush1.xpose.msra.mxu0 %v1089
      %1100 = vmatprep.subr.mxu0 0.0
      %1101 = vmatpush1.xpose.msra.mxu0 %v1092
      %1102 = vmatprep.subr.mxu0 0.0
      %1103 = vmatpush1.xpose.msra.mxu0 0.0
      %1104 = vmatprep.subr.mxu0 0.0
      %1105 = vmatpush1.xpose.msra.mxu0 0.0
      %1106 = vmatprep.subr.mxu0 0.0
      %1107 = vmatpush1.xpose.msra.mxu0 0.0
      %1108 = vmatprep.subr.mxu0 0.0
      %1109 = vmatpush1.xpose.msra.mxu0 0.0
      %1110 = vmatprep.subr.mxu0 0.0
      %1111 = vmatpush1.xpose.msra.mxu0 0.0
      %1112 = vmatprep.subr.mxu0 0.0
      %1113 = vmatpush1.xpose.msra.mxu0 0.0
      %1114 = vmatprep.subr.mxu0 0.0
      %1115 = vmatpush1.xpose.msra.mxu0 0.0
      %1116 = vmatprep.subr.mxu0 0.0
      %1117 = vmatpush1.xpose.msra.mxu0 0.0
      %1118 = vmatprep.subr.mxu0 0.0
      %1119 = vmatpush1.xpose.msra.mxu0 0.0
      %1120 = vmatprep.subr.mxu0 0.0
      %1121 = vmatpush1.xpose.msra.mxu0 0.0
      %1122 = vmatprep.subr.mxu0 0.0
      %1123 = vmatpush1.xpose.msra.mxu0 0.0
      %1124 = vmatprep.subr.mxu0 0.0
      %1125 = vmatpush1.xpose.msra.mxu0 0.0
      %1126 = vmatprep.subr.mxu0 0.0
      %1127 = vmatpush1.xpose.msra.mxu0 0.0
      %1128 = vmatprep.subr.mxu0 0.0
      %1129 = vmatpush1.xpose.msra.mxu0 0.0
      %1130 = vmatprep.subr.mxu0 0.0
      %1131 = vmatpush1.xpose.msra.mxu0 0.0
      %1132 = vmatprep.subr.mxu0 0.0
      %1133 = vmatpush1.xpose.msra.mxu0 0.0
      %1134 = vmatprep.subr.mxu0 0.0
      %1135 = vmatpush1.xpose.msra.mxu0 0.0
      %1136 = vmatprep.subr.mxu0 0.0
      %1137 = vmatpush1.xpose.msra.mxu0 0.0
      %1138 = vmatprep.subr.mxu0 0.0
      %1139 = vmatpush1.xpose.msra.mxu0 0.0
      %1140 = vmatprep.subr.mxu0 0.0
      %1141 = vmatpush1.xpose.msra.mxu0 0.0
      %1142 = vmatprep.subr.mxu0 0.0
      %1143 = vmatpush1.xpose.msra.mxu0 0.0
      %1144 = vmatprep.subr.mxu0 0.0
      %1145 = vmatpush1.xpose.msra.mxu0 0.0
      %1146 = vmatprep.subr.mxu0 0.0
      %1147 = vmatpush1.xpose.msra.mxu0 0.0
      %1148 = vmatprep.subr.mxu0 0.0
      %1149 = vmatpush1.xpose.msra.mxu0 0.0
      %1150 = vmatprep.subr.mxu0 0.0
      %1151 = vmatpush1.xpose.msra.mxu0 0.0
      %1152 = vmatprep.subr.mxu0 0.0
      %1153 = vmatpush1.xpose.msra.mxu0 0.0
      %1154 = vmatprep.subr.mxu0 0.0
      %1155 = vmatpush1.xpose.msra.mxu0 0.0
      %1156 = vmatprep.subr.mxu0 0.0
      %1157 = vmatpush1.xpose.msra.mxu0 0.0
      %1158 = vmatprep.mubr.f32.mxu0 0.0
      %1159 = vmatmul.mubr.f32.gmra.mrb[0].mxu0 %v1077
      %v1160 = vpop.f32.mrb[0].mxu0
      %v1161 = vadd.f32 0.0, %v1160
      %v1162 = vpop.f32.mrb[0].mxu0
      %1163 = vmatprep.mubr.f32.mxu0 0.0
      %1164 = vmatmul.mubr.f32.gmra.mrb[0].mxu0 %v1080
      %v1165 = vpop.f32.mrb[0].mxu0
      %v1166 = vadd.f32 0.0, %v1165
      %v1167 = vpop.f32.mrb[0].mxu0
      %1168 = vdwg.mxu0
      %v1169 = vmul.f32 %v1073, %v1073
      %v1170 = vmul.f32 %v1074, %v1074
      %v1171 = vsel %vm1075, %v1169, 0.0
      %1172 = vadd.xlane.f32.xlu0 %v1171
      %v1173 = vpop.xlane.xlu0 %1172
      %v1174 = vsel %vm1075, %v1170, 0.0
      %1175 = vadd.xlane.f32.xlu0 %v1174
      %v1176 = vpop.xlane.xlu0 %1175
      %v1178 = vlaneseq
      %v1179 = vshrl.u32 %v1178, 7
      %v1180 = vsub.s32 0, %v1179
      %v1181 = vrot.slane %v1072, %v1180
      %v1183 = vadd.f32 %v1173, %v1181
      %v1184 = vadd.f32 %v1176, %v1181
      %v1185 = vmul.f32 %v1161, 2.0
      %v1186 = vmul.f32 %v1166, 2.0
      %v1187 = vsub.f32 %v1183, %v1185
      %v1188 = vsub.f32 %v1184, %v1186
      %vm1189 = vcmask 261120
      %v1190 = vsel %vm1189, %v1187, inf
      %1191 = vmin.xlane.f32.xlu0 %v1190
      %v1192 = vpop.xlane.xlu0 %1191
      %v1193 = vsel %vm1189, %v1188, inf
      %1194 = vmin.xlane.f32.xlu0 %v1193
      %v1195 = vpop.xlane.xlu0 %1194
      %v1196 = vlaneseq
      %v1197 = vand.u32 %v1196, 127
      %vm1198 = vcmp.le.f32.partialorder %v1187, %v1192
      %vm1199 = vcmp.le.f32.partialorder %v1188, %v1195
      %v1200 = vsel %vm1198, %v1197, 32
      %v1201 = vsel %vm1199, %v1197, 32
      %v1202 = vsel %vm1189, %v1200, 2147483647
      %v1203 = vand.u32 %v1202, 65535
      %v1204 = vshra.s32 %v1202, 16
      %v1205 = vcvt.s32.f32 %v1203
      %v1206 = vcvt.s32.f32 %v1204
      %1207 = vmin.xlane.f32.xlu0 %v1206
      %v1208 = vpop.xlane.xlu0 %1207
      %vm1209 = vcmp.eq.f32.partialorder %v1206, %v1208
      %v1210 = vsel %vm1209, %v1205, inf
      %1211 = vmin.xlane.f32.xlu0 %v1210
      %v1212 = vpop.xlane.xlu0 %1211
      %v1213 = vcvt.f32.s32 %v1212
      %v1214 = vcvt.f32.s32 %v1208
      %v1215 = vshll.u32 %v1214, 16
      %v1216 = vadd.s32 %v1215, %v1213
      %v1217 = vsel %vm1189, %v1201, 2147483647
      %v1218 = vand.u32 %v1217, 65535
      %v1219 = vshra.s32 %v1217, 16
      %v1220 = vcvt.s32.f32 %v1218
      %v1221 = vcvt.s32.f32 %v1219
      %1222 = vmin.xlane.f32.xlu0 %v1221
      %v1223 = vpop.xlane.xlu0 %1222
      %vm1224 = vcmp.eq.f32.partialorder %v1221, %v1223
      %v1225 = vsel %vm1224, %v1220, inf
      %1226 = vmin.xlane.f32.xlu0 %v1225
      %v1227 = vpop.xlane.xlu0 %1226
      %v1228 = vcvt.f32.s32 %v1227
      %v1229 = vcvt.f32.s32 %v1223
      %v1230 = vshll.u32 %v1229, 16
      %v1231 = vadd.s32 %v1230, %v1228
      %vm1232 = vcmp.eq.s32.totalorder %v1197, %v1216
      %vm1233 = vcmp.eq.s32.totalorder %v1197, %v1231
      %v1234 = vsel %vm1232, 1, 0
      %v1235 = vsel %vm1233, 1, 0
      %v1236 = vcvt.s32.f32 %v1234
      %v1237 = vcvt.s32.f32 %v1235
      %v1239 = vsel %vm1189, %v1236, 0
      %v1242 = vsel %vm1189, %v1237, 0
      %1244 = vmatprep.subr.mxu0 0.0
      %1245 = vmatpush1.msra.mxu0 %v1068
      %1246 = vmatprep.subr.mxu0 0.0
      %1247 = vmatpush1.msra.mxu0 %v1069
      %1248 = vmatprep.subr.mxu0 0.0
      %1249 = vmatpush1.msra.mxu0 %v1070
      %1250 = vmatprep.subr.mxu0 0.0
      %1251 = vmatpush1.msra.mxu0 %v1071
      %1252 = vmatprep.subr.mxu0 0.0
      %1253 = vmatpush1.msra.mxu0 0.0
      %1254 = vmatprep.subr.mxu0 0.0
      %1255 = vmatpush1.msra.mxu0 0.0
      %1256 = vmatprep.subr.mxu0 0.0
      %1257 = vmatpush1.msra.mxu0 0.0
      %1258 = vmatprep.subr.mxu0 0.0
      %1259 = vmatpush1.msra.mxu0 0.0
      %1260 = vmatprep.subr.mxu0 0.0
      %1261 = vmatpush1.msra.mxu0 0.0
      %1262 = vmatprep.subr.mxu0 0.0
      %1263 = vmatpush1.msra.mxu0 0.0
      %1264 = vmatprep.subr.mxu0 0.0
      %1265 = vmatpush1.msra.mxu0 0.0
      %1266 = vmatprep.subr.mxu0 0.0
      %1267 = vmatpush1.msra.mxu0 0.0
      %1268 = vmatprep.subr.mxu0 0.0
      %1269 = vmatpush1.msra.mxu0 0.0
      %1270 = vmatprep.subr.mxu0 0.0
      %1271 = vmatpush1.msra.mxu0 0.0
      %1272 = vmatprep.subr.mxu0 0.0
      %1273 = vmatpush1.msra.mxu0 0.0
      %1274 = vmatprep.subr.mxu0 0.0
      %1275 = vmatpush1.msra.mxu0 0.0
      %1276 = vmatprep.subr.mxu0 0.0
      %1277 = vmatpush1.msra.mxu0 0.0
      %1278 = vmatprep.subr.mxu0 0.0
      %1279 = vmatpush1.msra.mxu0 0.0
      %1280 = vmatprep.subr.mxu0 0.0
      %1281 = vmatpush1.msra.mxu0 0.0
      %1282 = vmatprep.subr.mxu0 0.0
      %1283 = vmatpush1.msra.mxu0 0.0
      %1284 = vmatprep.subr.mxu0 0.0
      %1285 = vmatpush1.msra.mxu0 0.0
      %1286 = vmatprep.subr.mxu0 0.0
      %1287 = vmatpush1.msra.mxu0 0.0
      %1288 = vmatprep.subr.mxu0 0.0
      %1289 = vmatpush1.msra.mxu0 0.0
      %1290 = vmatprep.subr.mxu0 0.0
      %1291 = vmatpush1.msra.mxu0 0.0
      %1292 = vmatprep.subr.mxu0 0.0
      %1293 = vmatpush1.msra.mxu0 0.0
      %1294 = vmatprep.subr.mxu0 0.0
      %1295 = vmatpush1.msra.mxu0 0.0
      %1296 = vmatprep.subr.mxu0 0.0
      %1297 = vmatpush1.msra.mxu0 0.0
      %1298 = vmatprep.subr.mxu0 0.0
      %1299 = vmatpush1.msra.mxu0 0.0
      %1300 = vmatprep.subr.mxu0 0.0
      %1301 = vmatpush1.msra.mxu0 0.0
      %1302 = vmatprep.subr.mxu0 0.0
      %1303 = vmatpush1.msra.mxu0 0.0
      %1304 = vmatprep.subr.mxu0 0.0
      %1305 = vmatpush1.msra.mxu0 0.0
      %1306 = vmatprep.subr.mxu0 0.0
      %1307 = vmatpush1.msra.mxu0 0.0
      %1308 = vmatprep.mubr.f32.mxu0 0.0
      %1309 = vmatmul.mubr.f32.gmra.mrb[0].mxu0 %v1239
      %v1310 = vpop.f32.mrb[0].mxu0
      %v1311 = vadd.f32 0.0, %v1310
      %v1312 = vpop.f32.mrb[0].mxu0
      %1313 = vmatprep.mubr.f32.mxu0 0.0
      %1314 = vmatmul.mubr.f32.gmra.mrb[0].mxu0 %v1242
      %v1315 = vpop.f32.mrb[0].mxu0
      %v1316 = vadd.f32 0.0, %v1315
      %v1317 = vpop.f32.mrb[0].mxu0
      %1318 = vdwg.mxu0
      %v1319 = vsub.f32 %v1073, %v1311
      %v1320 = vsub.f32 %v1074, %v1316
      %v1321 = vmul.f32 %v1319, %v1319
      %v1322 = vmul.f32 %v1320, %v1320
      %v1323 = vsel %vm1075, %v1321, 0.0
      %1324 = vadd.xlane.f32.xlu0 %v1323
      %v1325 = vpop.xlane.xlu0 %1324
      %v1326 = vsel %vm1075, %v1322, 0.0
      %1327 = vadd.xlane.f32.xlu0 %v1326
      %v1328 = vpop.xlane.xlu0 %1327
      %v1329 = vadd.f32 %v1325, 0.0
      %v1330 = vadd.f32 %v1328, 0.0
      %vm1333 = vcmask 1040384
      %v1334 = vrot.slane %v1311, 7
      %v1335 = vrot.slane %v1316, 7
      %v1336 = vsel %vm1333, %v1334, %v1335
      %1337 = vrot.lane.b32.xlu0 %v1334, 8
      %v1338 = vpop.permute.xlu0 %1337
      %1339 = vrot.lane.b32.xlu0 %v1336, 8
      %v1340 = vpop.permute.xlu0 %1339
      %1341 = vrot.lane.b32.xlu0 %v1335, 8
      %v1342 = vpop.permute.xlu0 %1341
      %vm1346 = vcmask 130113
      %1347 = vst.msk [vmem:[#allocation3] sm:$0xfe] %vm1346, %v1338
      %vm1348 = vcmask 130112
      %1349 = vst.msk [vmem:[#allocation3 + $0x10] sm:$0xff] %vm1348, %v1340
      %vm1350 = vcmask 122944
      %1351 = vst.msk [vmem:[#allocation3 + $0x20] sm:$0x1] %vm1350, %v1342
      %v1352 = vld [vmem:[#allocation2] sm:$0xff]
      %v1353 = vld [vmem:[#allocation2 + $0x8] sm:$0xff]
      %1356 = vrot.lane.b32.xlu0 %v1352, 120
      %v1357 = vpop.permute.xlu0 %1356
      %1358 = vrot.lane.b32.xlu0 %v1353, 120
      %v1359 = vpop.permute.xlu0 %1358
      %v1360 = vsel %vm1075, %v1357, 0
      %v1362 = vsel %vm1075, %v1359, 0
      %1364 = vmatprep.subr.mxu0 0.0
      %1365 = vmatpush1.xpose.msra.mxu0 %v1083
      %1366 = vmatprep.subr.mxu0 0.0
      %1367 = vmatpush1.xpose.msra.mxu0 %v1086
      %1368 = vmatprep.subr.mxu0 0.0
      %1369 = vmatpush1.xpose.msra.mxu0 %v1089
      %1370 = vmatprep.subr.mxu0 0.0
      %1371 = vmatpush1.xpose.msra.mxu0 %v1092
      %1372 = vmatprep.subr.mxu0 0.0
      %1373 = vmatpush1.xpose.msra.mxu0 0.0
      %1374 = vmatprep.subr.mxu0 0.0
      %1375 = vmatpush1.xpose.msra.mxu0 0.0
      %1376 = vmatprep.subr.mxu0 0.0
      %1377 = vmatpush1.xpose.msra.mxu0 0.0
      %1378 = vmatprep.subr.mxu0 0.0
      %1379 = vmatpush1.xpose.msra.mxu0 0.0
      %1380 = vmatprep.subr.mxu0 0.0
      %1381 = vmatpush1.xpose.msra.mxu0 0.0
      %1382 = vmatprep.subr.mxu0 0.0
      %1383 = vmatpush1.xpose.msra.mxu0 0.0
      %1384 = vmatprep.subr.mxu0 0.0
      %1385 = vmatpush1.xpose.msra.mxu0 0.0
      %1386 = vmatprep.subr.mxu0 0.0
      %1387 = vmatpush1.xpose.msra.mxu0 0.0
      %1388 = vmatprep.subr.mxu0 0.0
      %1389 = vmatpush1.xpose.msra.mxu0 0.0
      %1390 = vmatprep.subr.mxu0 0.0
      %1391 = vmatpush1.xpose.msra.mxu0 0.0
      %1392 = vmatprep.subr.mxu0 0.0
      %1393 = vmatpush1.xpose.msra.mxu0 0.0
      %1394 = vmatprep.subr.mxu0 0.0
      %1395 = vmatpush1.xpose.msra.mxu0 0.0
      %1396 = vmatprep.subr.mxu0 0.0
      %1397 = vmatpush1.xpose.msra.mxu0 0.0
      %1398 = vmatprep.subr.mxu0 0.0
      %1399 = vmatpush1.xpose.msra.mxu0 0.0
      %1400 = vmatprep.subr.mxu0 0.0
      %1401 = vmatpush1.xpose.msra.mxu0 0.0
      %1402 = vmatprep.subr.mxu0 0.0
      %1403 = vmatpush1.xpose.msra.mxu0 0.0
      %1404 = vmatprep.subr.mxu0 0.0
      %1405 = vmatpush1.xpose.msra.mxu0 0.0
      %1406 = vmatprep.subr.mxu0 0.0
      %1407 = vmatpush1.xpose.msra.mxu0 0.0
      %1408 = vmatprep.subr.mxu0 0.0
      %1409 = vmatpush1.xpose.msra.mxu0 0.0
      %1410 = vmatprep.subr.mxu0 0.0
      %1411 = vmatpush1.xpose.msra.mxu0 0.0
      %1412 = vmatprep.subr.mxu0 0.0
      %1413 = vmatpush1.xpose.msra.mxu0 0.0
      %1414 = vmatprep.subr.mxu0 0.0
      %1415 = vmatpush1.xpose.msra.mxu0 0.0
      %1416 = vmatprep.subr.mxu0 0.0
      %1417 = vmatpush1.xpose.msra.mxu0 0.0
      %1418 = vmatprep.subr.mxu0 0.0
      %1419 = vmatpush1.xpose.msra.mxu0 0.0
      %1420 = vmatprep.subr.mxu0 0.0
      %1421 = vmatpush1.xpose.msra.mxu0 0.0
      %1422 = vmatprep.subr.mxu0 0.0
      %1423 = vmatpush1.xpose.msra.mxu0 0.0
      %1424 = vmatprep.subr.mxu0 0.0
      %1425 = vmatpush1.xpose.msra.mxu0 0.0
      %1426 = vmatprep.subr.mxu0 0.0
      %1427 = vmatpush1.xpose.msra.mxu0 0.0
      %1428 = vmatprep.mubr.f32.mxu0 0.0
      %1429 = vmatmul.mubr.f32.gmra.mrb[0].mxu0 %v1360
      %v1430 = vpop.f32.mrb[0].mxu0
      %v1431 = vadd.f32 0.0, %v1430
      %v1432 = vpop.f32.mrb[0].mxu0
      %1433 = vmatprep.mubr.f32.mxu0 0.0
      %1434 = vmatmul.mubr.f32.gmra.mrb[0].mxu0 %v1362
      %v1435 = vpop.f32.mrb[0].mxu0
      %v1436 = vadd.f32 0.0, %v1435
      %v1437 = vpop.f32.mrb[0].mxu0
      %1438 = vdwg.mxu0
      %v1439 = vmul.f32 %v1352, %v1352
      %v1440 = vmul.f32 %v1353, %v1353
      %1443 = vrot.lane.b32.xlu0 %v1439, 120
      %v1444 = vpop.permute.xlu0 %1443
      %1445 = vrot.lane.b32.xlu0 %v1440, 120
      %v1446 = vpop.permute.xlu0 %1445
      %v1449 = vsel %vm1075, %v1444, 0.0
      %1450 = vadd.xlane.f32.xlu0 %v1449
      %v1451 = vpop.xlane.xlu0 %1450
      %v1452 = vsel %vm1075, %v1446, 0.0
      %1453 = vadd.xlane.f32.xlu0 %v1452
      %v1454 = vpop.xlane.xlu0 %1453
      %v1455 = vadd.f32 %v1451, %v1181
      %v1456 = vadd.f32 %v1454, %v1181
      %v1457 = vmul.f32 %v1431, 2.0
      %v1458 = vmul.f32 %v1436, 2.0
      %v1459 = vsub.f32 %v1455, %v1457
      %v1460 = vsub.f32 %v1456, %v1458
      %v1461 = vsel %vm1189, %v1459, inf
      %1462 = vmin.xlane.f32.xlu0 %v1461
      %v1463 = vpop.xlane.xlu0 %1462
      %v1464 = vsel %vm1189, %v1460, inf
      %1465 = vmin.xlane.f32.xlu0 %v1464
      %v1466 = vpop.xlane.xlu0 %1465
      %vm1467 = vcmp.le.f32.partialorder %v1459, %v1463
      %vm1468 = vcmp.le.f32.partialorder %v1460, %v1466
      %v1469 = vsel %vm1467, %v1197, 32
      %v1470 = vsel %vm1468, %v1197, 32
      %v1471 = vsel %vm1189, %v1469, 2147483647
      %v1472 = vand.u32 %v1471, 65535
      %v1473 = vshra.s32 %v1471, 16
      %v1474 = vcvt.s32.f32 %v1472
      %v1475 = vcvt.s32.f32 %v1473
      %1476 = vmin.xlane.f32.xlu0 %v1475
      %v1477 = vpop.xlane.xlu0 %1476
      %vm1478 = vcmp.eq.f32.partialorder %v1475, %v1477
      %v1479 = vsel %vm1478, %v1474, inf
      %1480 = vmin.xlane.f32.xlu0 %v1479
      %v1481 = vpop.xlane.xlu0 %1480
      %v1482 = vcvt.f32.s32 %v1481
      %v1483 = vcvt.f32.s32 %v1477
      %v1484 = vshll.u32 %v1483, 16
      %v1485 = vadd.s32 %v1484, %v1482
      %v1486 = vsel %vm1189, %v1470, 2147483647
      %v1487 = vand.u32 %v1486, 65535
      %v1488 = vshra.s32 %v1486, 16
      %v1489 = vcvt.s32.f32 %v1487
      %v1490 = vcvt.s32.f32 %v1488
      %1491 = vmin.xlane.f32.xlu0 %v1490
      %v1492 = vpop.xlane.xlu0 %1491
      %vm1493 = vcmp.eq.f32.partialorder %v1490, %v1492
      %v1494 = vsel %vm1493, %v1489, inf
      %1495 = vmin.xlane.f32.xlu0 %v1494
      %v1496 = vpop.xlane.xlu0 %1495
      %v1497 = vcvt.f32.s32 %v1496
      %v1498 = vcvt.f32.s32 %v1492
      %v1499 = vshll.u32 %v1498, 16
      %v1500 = vadd.s32 %v1499, %v1497
      %vm1501 = vcmp.eq.s32.totalorder %v1197, %v1485
      %vm1502 = vcmp.eq.s32.totalorder %v1197, %v1500
      %v1503 = vsel %vm1501, 1, 0
      %v1504 = vsel %vm1502, 1, 0
      %v1505 = vcvt.s32.f32 %v1503
      %v1506 = vcvt.s32.f32 %v1504
      %v1508 = vsel %vm1189, %v1505, 0
      %v1511 = vsel %vm1189, %v1506, 0
      %1513 = vmatprep.subr.mxu0 0.0
      %1514 = vmatpush1.msra.mxu0 %v1068
      %1515 = vmatprep.subr.mxu0 0.0
      %1516 = vmatpush1.msra.mxu0 %v1069
      %1517 = vmatprep.subr.mxu0 0.0
      %1518 = vmatpush1.msra.mxu0 %v1070
      %1519 = vmatprep.subr.mxu0 0.0
      %1520 = vmatpush1.msra.mxu0 %v1071
      %1521 = vmatprep.subr.mxu0 0.0
      %1522 = vmatpush1.msra.mxu0 0.0
      %1523 = vmatprep.subr.mxu0 0.0
      %1524 = vmatpush1.msra.mxu0 0.0
      %1525 = vmatprep.subr.mxu0 0.0
      %1526 = vmatpush1.msra.mxu0 0.0
      %1527 = vmatprep.subr.mxu0 0.0
      %1528 = vmatpush1.msra.mxu0 0.0
      %1529 = vmatprep.subr.mxu0 0.0
      %1530 = vmatpush1.msra.mxu0 0.0
      %1531 = vmatprep.subr.mxu0 0.0
      %1532 = vmatpush1.msra.mxu0 0.0
      %1533 = vmatprep.subr.mxu0 0.0
      %1534 = vmatpush1.msra.mxu0 0.0
      %1535 = vmatprep.subr.mxu0 0.0
      %1536 = vmatpush1.msra.mxu0 0.0
      %1537 = vmatprep.subr.mxu0 0.0
      %1538 = vmatpush1.msra.mxu0 0.0
      %1539 = vmatprep.subr.mxu0 0.0
      %1540 = vmatpush1.msra.mxu0 0.0
      %1541 = vmatprep.subr.mxu0 0.0
      %1542 = vmatpush1.msra.mxu0 0.0
      %1543 = vmatprep.subr.mxu0 0.0
      %1544 = vmatpush1.msra.mxu0 0.0
      %1545 = vmatprep.subr.mxu0 0.0
      %1546 = vmatpush1.msra.mxu0 0.0
      %1547 = vmatprep.subr.mxu0 0.0
      %1548 = vmatpush1.msra.mxu0 0.0
      %1549 = vmatprep.subr.mxu0 0.0
      %1550 = vmatpush1.msra.mxu0 0.0
      %1551 = vmatprep.subr.mxu0 0.0
      %1552 = vmatpush1.msra.mxu0 0.0
      %1553 = vmatprep.subr.mxu0 0.0
      %1554 = vmatpush1.msra.mxu0 0.0
      %1555 = vmatprep.subr.mxu0 0.0
      %1556 = vmatpush1.msra.mxu0 0.0
      %1557 = vmatprep.subr.mxu0 0.0
      %1558 = vmatpush1.msra.mxu0 0.0
      %1559 = vmatprep.subr.mxu0 0.0
      %1560 = vmatpush1.msra.mxu0 0.0
      %1561 = vmatprep.subr.mxu0 0.0
      %1562 = vmatpush1.msra.mxu0 0.0
      %1563 = vmatprep.subr.mxu0 0.0
      %1564 = vmatpush1.msra.mxu0 0.0
      %1565 = vmatprep.subr.mxu0 0.0
      %1566 = vmatpush1.msra.mxu0 0.0
      %1567 = vmatprep.subr.mxu0 0.0
      %1568 = vmatpush1.msra.mxu0 0.0
      %1569 = vmatprep.subr.mxu0 0.0
      %1570 = vmatpush1.msra.mxu0 0.0
      %1571 = vmatprep.subr.mxu0 0.0
      %1572 = vmatpush1.msra.mxu0 0.0
      %1573 = vmatprep.subr.mxu0 0.0
      %1574 = vmatpush1.msra.mxu0 0.0
      %1575 = vmatprep.subr.mxu0 0.0
      %1576 = vmatpush1.msra.mxu0 0.0
      %1577 = vmatprep.mubr.f32.mxu0 0.0
      %1578 = vmatmul.mubr.f32.gmra.mrb[0].mxu0 %v1508
      %v1579 = vpop.f32.mrb[0].mxu0
      %v1580 = vadd.f32 0.0, %v1579
      %v1581 = vpop.f32.mrb[0].mxu0
      %1582 = vmatprep.mubr.f32.mxu0 0.0
      %1583 = vmatmul.mubr.f32.gmra.mrb[0].mxu0 %v1511
      %v1584 = vpop.f32.mrb[0].mxu0
      %v1585 = vadd.f32 0.0, %v1584
      %v1586 = vpop.f32.mrb[0].mxu0
      %1587 = vdwg.mxu0
      %1590 = vrot.lane.b32.xlu0 %v1580, 8
      %v1591 = vpop.permute.xlu0 %1590
      %1592 = vrot.lane.b32.xlu0 %v1585, 8
      %v1593 = vpop.permute.xlu0 %1592
      %v1596 = vsub.f32 %v1352, %v1591
      %v1597 = vsub.f32 %v1353, %v1593
      %v1598 = vmul.f32 %v1596, %v1596
      %v1599 = vmul.f32 %v1597, %v1597
      %1602 = vrot.lane.b32.xlu0 %v1598, 120
      %v1603 = vpop.permute.xlu0 %1602
      %1604 = vrot.lane.b32.xlu0 %v1599, 120
      %v1605 = vpop.permute.xlu0 %1604
      %v1608 = vsel %vm1075, %v1603, 0.0
      %1609 = vadd.xlane.f32.xlu0 %v1608
      %v1610 = vpop.xlane.xlu0 %1609
      %v1611 = vsel %vm1075, %v1605, 0.0
      %1612 = vadd.xlane.f32.xlu0 %v1611
      %v1613 = vpop.xlane.xlu0 %1612
      %v1614 = vadd.f32 %v1329, %v1610
      %v1615 = vadd.f32 %v1330, %v1613
      %v1616 = vrot.slane %v1580, 7
      %v1617 = vrot.slane %v1585, 7
      %v1618 = vsel %vm1333, %v1616, %v1617
      %1619 = vrot.lane.b32.xlu0 %v1616, 16
      %v1620 = vpop.permute.xlu0 %1619
      %1621 = vrot.lane.b32.xlu0 %v1618, 16
      %v1622 = vpop.permute.xlu0 %1621
      %1623 = vrot.lane.b32.xlu0 %v1617, 16
      %v1624 = vpop.permute.xlu0 %1623
      %vm1628 = vcmask 195713
      %1629 = vst.msk [vmem:[#allocation3] sm:$0xfe] %vm1628, %v1620
      %vm1630 = vcmask 195712
      %1631 = vst.msk [vmem:[#allocation3 + $0x10] sm:$0xff] %vm1630, %v1622
      %vm1632 = vcmask 188544
      %1633 = vst.msk [vmem:[#allocation3 + $0x20] sm:$0x1] %vm1632, %v1624
      %v1634 = vld [vmem:[#allocation2] sm:$0xff]
      %v1635 = vld [vmem:[#allocation2 + $0x8] sm:$0xff]
      %1638 = vrot.lane.b32.xlu0 %v1634, 112
      %v1639 = vpop.permute.xlu0 %1638
      %1640 = vrot.lane.b32.xlu0 %v1635, 112
      %v1641 = vpop.permute.xlu0 %1640
      %v1642 = vsel %vm1075, %v1639, 0
      %v1644 = vsel %vm1075, %v1641, 0
      %1646 = vmatprep.subr.mxu0 0.0
      %1647 = vmatpush1.xpose.msra.mxu0 %v1083
      %1648 = vmatprep.subr.mxu0 0.0
      %1649 = vmatpush1.xpose.msra.mxu0 %v1086
      %1650 = vmatprep.subr.mxu0 0.0
      %1651 = vmatpush1.xpose.msra.mxu0 %v1089
      %1652 = vmatprep.subr.mxu0 0.0
      %1653 = vmatpush1.xpose.msra.mxu0 %v1092
      %1654 = vmatprep.subr.mxu0 0.0
      %1655 = vmatpush1.xpose.msra.mxu0 0.0
      %1656 = vmatprep.subr.mxu0 0.0
      %1657 = vmatpush1.xpose.msra.mxu0 0.0
      %1658 = vmatprep.subr.mxu0 0.0
      %1659 = vmatpush1.xpose.msra.mxu0 0.0
      %1660 = vmatprep.subr.mxu0 0.0
      %1661 = vmatpush1.xpose.msra.mxu0 0.0
      %1662 = vmatprep.subr.mxu0 0.0
      %1663 = vmatpush1.xpose.msra.mxu0 0.0
      %1664 = vmatprep.subr.mxu0 0.0
      %1665 = vmatpush1.xpose.msra.mxu0 0.0
      %1666 = vmatprep.subr.mxu0 0.0
      %1667 = vmatpush1.xpose.msra.mxu0 0.0
      %1668 = vmatprep.subr.mxu0 0.0
      %1669 = vmatpush1.xpose.msra.mxu0 0.0
      %1670 = vmatprep.subr.mxu0 0.0
      %1671 = vmatpush1.xpose.msra.mxu0 0.0
      %1672 = vmatprep.subr.mxu0 0.0
      %1673 = vmatpush1.xpose.msra.mxu0 0.0
      %1674 = vmatprep.subr.mxu0 0.0
      %1675 = vmatpush1.xpose.msra.mxu0 0.0
      %1676 = vmatprep.subr.mxu0 0.0
      %1677 = vmatpush1.xpose.msra.mxu0 0.0
      %1678 = vmatprep.subr.mxu0 0.0
      %1679 = vmatpush1.xpose.msra.mxu0 0.0
      %1680 = vmatprep.subr.mxu0 0.0
      %1681 = vmatpush1.xpose.msra.mxu0 0.0
      %1682 = vmatprep.subr.mxu0 0.0
      %1683 = vmatpush1.xpose.msra.mxu0 0.0
      %1684 = vmatprep.subr.mxu0 0.0
      %1685 = vmatpush1.xpose.msra.mxu0 0.0
      %1686 = vmatprep.subr.mxu0 0.0
      %1687 = vmatpush1.xpose.msra.mxu0 0.0
      %1688 = vmatprep.subr.mxu0 0.0
      %1689 = vmatpush1.xpose.msra.mxu0 0.0
      %1690 = vmatprep.subr.mxu0 0.0
      %1691 = vmatpush1.xpose.msra.mxu0 0.0
      %1692 = vmatprep.subr.mxu0 0.0
      %1693 = vmatpush1.xpose.msra.mxu0 0.0
      %1694 = vmatprep.subr.mxu0 0.0
      %1695 = vmatpush1.xpose.msra.mxu0 0.0
      %1696 = vmatprep.subr.mxu0 0.0
      %1697 = vmatpush1.xpose.msra.mxu0 0.0
      %1698 = vmatprep.subr.mxu0 0.0
      %1699 = vmatpush1.xpose.msra.mxu0 0.0
      %1700 = vmatprep.subr.mxu0 0.0
      %1701 = vmatpush1.xpose.msra.mxu0 0.0
      %1702 = vmatprep.subr.mxu0 0.0
      %1703 = vmatpush1.xpose.msra.mxu0 0.0
      %1704 = vmatprep.subr.mxu0 0.0
      %1705 = vmatpush1.xpose.msra.mxu0 0.0
      %1706 = vmatprep.subr.mxu0 0.0
      %1707 = vmatpush1.xpose.msra.mxu0 0.0
      %1708 = vmatprep.subr.mxu0 0.0
      %1709 = vmatpush1.xpose.msra.mxu0 0.0
      %1710 = vmatprep.mubr.f32.mxu0 0.0
      %1711 = vmatmul.mubr.f32.gmra.mrb[0].mxu0 %v1642
      %v1712 = vpop.f32.mrb[0].mxu0
      %v1713 = vadd.f32 0.0, %v1712
      %v1714 = vpop.f32.mrb[0].mxu0
      %1715 = vmatprep.mubr.f32.mxu0 0.0
      %1716 = vmatmul.mubr.f32.gmra.mrb[0].mxu0 %v1644
      %v1717 = vpop.f32.mrb[0].mxu0
      %v1718 = vadd.f32 0.0, %v1717
      %v1719 = vpop.f32.mrb[0].mxu0
      %1720 = vdwg.mxu0
      %v1721 = vmul.f32 %v1634, %v1634
      %v1722 = vmul.f32 %v1635, %v1635
      %1725 = vrot.lane.b32.xlu0 %v1721, 112
      %v1726 = vpop.permute.xlu0 %1725
      %1727 = vrot.lane.b32.xlu0 %v1722, 112
      %v1728 = vpop.permute.xlu0 %1727
      %v1731 = vsel %vm1075, %v1726, 0.0
      %1732 = vadd.xlane.f32.xlu0 %v1731
      %v1733 = vpop.xlane.xlu0 %1732
      %v1734 = vsel %vm1075, %v1728, 0.0
      %1735 = vadd.xlane.f32.xlu0 %v1734
      %v1736 = vpop.xlane.xlu0 %1735
      %v1737 = vadd.f32 %v1733, %v1181
      %v1738 = vadd.f32 %v1736, %v1181
      %v1739 = vmul.f32 %v1713, 2.0
      %v1740 = vmul.f32 %v1718, 2.0
      %v1741 = vsub.f32 %v1737, %v1739
      %v1742 = vsub.f32 %v1738, %v1740
      %v1743 = vsel %vm1189, %v1741, inf
      %1744 = vmin.xlane.f32.xlu0 %v1743
      %v1745 = vpop.xlane.xlu0 %1744
      %v1746 = vsel %vm1189, %v1742, inf
      %1747 = vmin.xlane.f32.xlu0 %v1746
      %v1748 = vpop.xlane.xlu0 %1747
      %vm1749 = vcmp.le.f32.partialorder %v1741, %v1745
      %vm1750 = vcmp.le.f32.partialorder %v1742, %v1748
      %v1751 = vsel %vm1749, %v1197, 32
      %v1752 = vsel %vm1750, %v1197, 32
      %v1753 = vsel %vm1189, %v1751, 2147483647
      %v1754 = vand.u32 %v1753, 65535
      %v1755 = vshra.s32 %v1753, 16
      %v1756 = vcvt.s32.f32 %v1754
      %v1757 = vcvt.s32.f32 %v1755
      %1758 = vmin.xlane.f32.xlu0 %v1757
      %v1759 = vpop.xlane.xlu0 %1758
      %vm1760 = vcmp.eq.f32.partialorder %v1757, %v1759
      %v1761 = vsel %vm1760, %v1756, inf
      %1762 = vmin.xlane.f32.xlu0 %v1761
      %v1763 = vpop.xlane.xlu0 %1762
      %v1764 = vcvt.f32.s32 %v1763
      %v1765 = vcvt.f32.s32 %v1759
      %v1766 = vshll.u32 %v1765, 16
      %v1767 = vadd.s32 %v1766, %v1764
      %v1768 = vsel %vm1189, %v1752, 2147483647
      %v1769 = vand.u32 %v1768, 65535
      %v1770 = vshra.s32 %v1768, 16
      %v1771 = vcvt.s32.f32 %v1769
      %v1772 = vcvt.s32.f32 %v1770
      %1773 = vmin.xlane.f32.xlu0 %v1772
      %v1774 = vpop.xlane.xlu0 %1773
      %vm1775 = vcmp.eq.f32.partialorder %v1772, %v1774
      %v1776 = vsel %vm1775, %v1771, inf
      %1777 = vmin.xlane.f32.xlu0 %v1776
      %v1778 = vpop.xlane.xlu0 %1777
      %v1779 = vcvt.f32.s32 %v1778
      %v1780 = vcvt.f32.s32 %v1774
      %v1781 = vshll.u32 %v1780, 16
      %v1782 = vadd.s32 %v1781, %v1779
      %vm1783 = vcmp.eq.s32.totalorder %v1197, %v1767
      %vm1784 = vcmp.eq.s32.totalorder %v1197, %v1782
      %v1785 = vsel %vm1783, 1, 0
      %v1786 = vsel %vm1784, 1, 0
      %v1787 = vcvt.s32.f32 %v1785
      %v1788 = vcvt.s32.f32 %v1786
      %v1790 = vsel %vm1189, %v1787, 0
      %v1793 = vsel %vm1189, %v1788, 0
      %1795 = vmatprep.subr.mxu0 0.0
      %1796 = vmatpush1.msra.mxu0 %v1068
      %1797 = vmatprep.subr.mxu0 0.0
      %1798 = vmatpush1.msra.mxu0 %v1069
      %1799 = vmatprep.subr.mxu0 0.0
      %1800 = vmatpush1.msra.mxu0 %v1070
      %1801 = vmatprep.subr.mxu0 0.0
      %1802 = vmatpush1.msra.mxu0 %v1071
      %1803 = vmatprep.subr.mxu0 0.0
      %1804 = vmatpush1.msra.mxu0 0.0
      %1805 = vmatprep.subr.mxu0 0.0
      %1806 = vmatpush1.msra.mxu0 0.0
      %1807 = vmatprep.subr.mxu0 0.0
      %1808 = vmatpush1.msra.mxu0 0.0
      %1809 = vmatprep.subr.mxu0 0.0
      %1810 = vmatpush1.msra.mxu0 0.0
      %1811 = vmatprep.subr.mxu0 0.0
      %1812 = vmatpush1.msra.mxu0 0.0
      %1813 = vmatprep.subr.mxu0 0.0
      %1814 = vmatpush1.msra.mxu0 0.0
      %1815 = vmatprep.subr.mxu0 0.0
      %1816 = vmatpush1.msra.mxu0 0.0
      %1817 = vmatprep.subr.mxu0 0.0
      %1818 = vmatpush1.msra.mxu0 0.0
      %1819 = vmatprep.subr.mxu0 0.0
      %1820 = vmatpush1.msra.mxu0 0.0
      %1821 = vmatprep.subr.mxu0 0.0
      %1822 = vmatpush1.msra.mxu0 0.0
      %1823 = vmatprep.subr.mxu0 0.0
      %1824 = vmatpush1.msra.mxu0 0.0
      %1825 = vmatprep.subr.mxu0 0.0
      %1826 = vmatpush1.msra.mxu0 0.0
      %1827 = vmatprep.subr.mxu0 0.0
      %1828 = vmatpush1.msra.mxu0 0.0
      %1829 = vmatprep.subr.mxu0 0.0
      %1830 = vmatpush1.msra.mxu0 0.0
      %1831 = vmatprep.subr.mxu0 0.0
      %1832 = vmatpush1.msra.mxu0 0.0
      %1833 = vmatprep.subr.mxu0 0.0
      %1834 = vmatpush1.msra.mxu0 0.0
      %1835 = vmatprep.subr.mxu0 0.0
      %1836 = vmatpush1.msra.mxu0 0.0
      %1837 = vmatprep.subr.mxu0 0.0
      %1838 = vmatpush1.msra.mxu0 0.0
      %1839 = vmatprep.subr.mxu0 0.0
      %1840 = vmatpush1.msra.mxu0 0.0
      %1841 = vmatprep.subr.mxu0 0.0
      %1842 = vmatpush1.msra.mxu0 0.0
      %1843 = vmatprep.subr.mxu0 0.0
      %1844 = vmatpush1.msra.mxu0 0.0
      %1845 = vmatprep.subr.mxu0 0.0
      %1846 = vmatpush1.msra.mxu0 0.0
      %1847 = vmatprep.subr.mxu0 0.0
      %1848 = vmatpush1.msra.mxu0 0.0
      %1849 = vmatprep.subr.mxu0 0.0
      %1850 = vmatpush1.msra.mxu0 0.0
      %1851 = vmatprep.subr.mxu0 0.0
      %1852 = vmatpush1.msra.mxu0 0.0
      %1853 = vmatprep.subr.mxu0 0.0
      %1854 = vmatpush1.msra.mxu0 0.0
      %1855 = vmatprep.subr.mxu0 0.0
      %1856 = vmatpush1.msra.mxu0 0.0
      %1857 = vmatprep.subr.mxu0 0.0
      %1858 = vmatpush1.msra.mxu0 0.0
      %1859 = vmatprep.mubr.f32.mxu0 0.0
      %1860 = vmatmul.mubr.f32.gmra.mrb[0].mxu0 %v1790
      %v1861 = vpop.f32.mrb[0].mxu0
      %v1862 = vadd.f32 0.0, %v1861
      %v1863 = vpop.f32.mrb[0].mxu0
      %1864 = vmatprep.mubr.f32.mxu0 0.0
      %1865 = vmatmul.mubr.f32.gmra.mrb[0].mxu0 %v1793
      %v1866 = vpop.f32.mrb[0].mxu0
      %v1867 = vadd.f32 0.0, %v1866
      %v1868 = vpop.f32.mrb[0].mxu0
      %1869 = vdwg.mxu0
      %1872 = vrot.lane.b32.xlu0 %v1862, 16
      %v1873 = vpop.permute.xlu0 %1872
      %1874 = vrot.lane.b32.xlu0 %v1867, 16
      %v1875 = vpop.permute.xlu0 %1874
      %v1878 = vsub.f32 %v1634, %v1873
      %v1879 = vsub.f32 %v1635, %v1875
      %v1880 = vmul.f32 %v1878, %v1878
      %v1881 = vmul.f32 %v1879, %v1879
      %1884 = vrot.lane.b32.xlu0 %v1880, 112
      %v1885 = vpop.permute.xlu0 %1884
      %1886 = vrot.lane.b32.xlu0 %v1881, 112
      %v1887 = vpop.permute.xlu0 %1886
      %v1890 = vsel %vm1075, %v1885, 0.0
      %1891 = vadd.xlane.f32.xlu0 %v1890
      %v1892 = vpop.xlane.xlu0 %1891
      %v1893 = vsel %vm1075, %v1887, 0.0
      %1894 = vadd.xlane.f32.xlu0 %v1893
      %v1895 = vpop.xlane.xlu0 %1894
      %v1896 = vadd.f32 %v1614, %v1892
      %v1897 = vadd.f32 %v1615, %v1895
      %v1898 = vrot.slane %v1862, 7
      %v1899 = vrot.slane %v1867, 7
      %v1900 = vsel %vm1333, %v1898, %v1899
      %1901 = vrot.lane.b32.xlu0 %v1898, 24
      %v1902 = vpop.permute.xlu0 %1901
      %1903 = vrot.lane.b32.xlu0 %v1900, 24
      %v1904 = vpop.permute.xlu0 %1903
      %1905 = vrot.lane.b32.xlu0 %v1899, 24
      %v1906 = vpop.permute.xlu0 %1905
      %vm1910 = vcmask 261313
      %1911 = vst.msk [vmem:[#allocation3] sm:$0xfe] %vm1910, %v1902
      %vm1912 = vcmask 261312
      %1913 = vst.msk [vmem:[#allocation3 + $0x10] sm:$0xff] %vm1912, %v1904
      %vm1914 = vcmask 254144
      %1915 = vst.msk [vmem:[#allocation3 + $0x20] sm:$0x1] %vm1914, %v1906
      %v1916 = vld [vmem:[#allocation2] sm:$0xff]
      %v1917 = vld [vmem:[#allocation2 + $0x8] sm:$0xff]
      %1920 = vrot.lane.b32.xlu0 %v1916, 104
      %v1921 = vpop.permute.xlu0 %1920
      %1922 = vrot.lane.b32.xlu0 %v1917, 104
      %v1923 = vpop.permute.xlu0 %1922
      %v1924 = vsel %vm1075, %v1921, 0
      %v1926 = vsel %vm1075, %v1923, 0
      %1928 = vmatprep.subr.mxu0 0.0
      %1929 = vmatpush1.xpose.msra.mxu0 %v1083
      %1930 = vmatprep.subr.mxu0 0.0
      %1931 = vmatpush1.xpose.msra.mxu0 %v1086
      %1932 = vmatprep.subr.mxu0 0.0
      %1933 = vmatpush1.xpose.msra.mxu0 %v1089
      %1934 = vmatprep.subr.mxu0 0.0
      %1935 = vmatpush1.xpose.msra.mxu0 %v1092
      %1936 = vmatprep.subr.mxu0 0.0
      %1937 = vmatpush1.xpose.msra.mxu0 0.0
      %1938 = vmatprep.subr.mxu0 0.0
      %1939 = vmatpush1.xpose.msra.mxu0 0.0
      %1940 = vmatprep.subr.mxu0 0.0
      %1941 = vmatpush1.xpose.msra.mxu0 0.0
      %1942 = vmatprep.subr.mxu0 0.0
      %1943 = vmatpush1.xpose.msra.mxu0 0.0
      %1944 = vmatprep.subr.mxu0 0.0
      %1945 = vmatpush1.xpose.msra.mxu0 0.0
      %1946 = vmatprep.subr.mxu0 0.0
      %1947 = vmatpush1.xpose.msra.mxu0 0.0
      %1948 = vmatprep.subr.mxu0 0.0
      %1949 = vmatpush1.xpose.msra.mxu0 0.0
      %1950 = vmatprep.subr.mxu0 0.0
      %1951 = vmatpush1.xpose.msra.mxu0 0.0
      %1952 = vmatprep.subr.mxu0 0.0
      %1953 = vmatpush1.xpose.msra.mxu0 0.0
      %1954 = vmatprep.subr.mxu0 0.0
      %1955 = vmatpush1.xpose.msra.mxu0 0.0
      %1956 = vmatprep.subr.mxu0 0.0
      %1957 = vmatpush1.xpose.msra.mxu0 0.0
      %1958 = vmatprep.subr.mxu0 0.0
      %1959 = vmatpush1.xpose.msra.mxu0 0.0
      %1960 = vmatprep.subr.mxu0 0.0
      %1961 = vmatpush1.xpose.msra.mxu0 0.0
      %1962 = vmatprep.subr.mxu0 0.0
      %1963 = vmatpush1.xpose.msra.mxu0 0.0
      %1964 = vmatprep.subr.mxu0 0.0
      %1965 = vmatpush1.xpose.msra.mxu0 0.0
      %1966 = vmatprep.subr.mxu0 0.0
      %1967 = vmatpush1.xpose.msra.mxu0 0.0
      %1968 = vmatprep.subr.mxu0 0.0
      %1969 = vmatpush1.xpose.msra.mxu0 0.0
      %1970 = vmatprep.subr.mxu0 0.0
      %1971 = vmatpush1.xpose.msra.mxu0 0.0
      %1972 = vmatprep.subr.mxu0 0.0
      %1973 = vmatpush1.xpose.msra.mxu0 0.0
      %1974 = vmatprep.subr.mxu0 0.0
      %1975 = vmatpush1.xpose.msra.mxu0 0.0
      %1976 = vmatprep.subr.mxu0 0.0
      %1977 = vmatpush1.xpose.msra.mxu0 0.0
      %1978 = vmatprep.subr.mxu0 0.0
      %1979 = vmatpush1.xpose.msra.mxu0 0.0
      %1980 = vmatprep.subr.mxu0 0.0
      %1981 = vmatpush1.xpose.msra.mxu0 0.0
      %1982 = vmatprep.subr.mxu0 0.0
      %1983 = vmatpush1.xpose.msra.mxu0 0.0
      %1984 = vmatprep.subr.mxu0 0.0
      %1985 = vmatpush1.xpose.msra.mxu0 0.0
      %1986 = vmatprep.subr.mxu0 0.0
      %1987 = vmatpush1.xpose.msra.mxu0 0.0
      %1988 = vmatprep.subr.mxu0 0.0
      %1989 = vmatpush1.xpose.msra.mxu0 0.0
      %1990 = vmatprep.subr.mxu0 0.0
      %1991 = vmatpush1.xpose.msra.mxu0 0.0
      %1992 = vmatprep.mubr.f32.mxu0 0.0
      %1993 = vmatmul.mubr.f32.gmra.mrb[0].mxu0 %v1924
      %v1994 = vpop.f32.mrb[0].mxu0
      %v1995 = vadd.f32 0.0, %v1994
      %v1996 = vpop.f32.mrb[0].mxu0
      %1997 = vmatprep.mubr.f32.mxu0 0.0
      %1998 = vmatmul.mubr.f32.gmra.mrb[0].mxu0 %v1926
      %v1999 = vpop.f32.mrb[0].mxu0
      %v2000 = vadd.f32 0.0, %v1999
      %v2001 = vpop.f32.mrb[0].mxu0
      %2002 = vdwg.mxu0
      %v2003 = vmul.f32 %v1916, %v1916
      %v2004 = vmul.f32 %v1917, %v1917
      %2007 = vrot.lane.b32.xlu0 %v2003, 104
      %v2008 = vpop.permute.xlu0 %2007
      %2009 = vrot.lane.b32.xlu0 %v2004, 104
      %v2010 = vpop.permute.xlu0 %2009
      %v2013 = vsel %vm1075, %v2008, 0.0
      %2014 = vadd.xlane.f32.xlu0 %v2013
      %v2015 = vpop.xlane.xlu0 %2014
      %v2016 = vsel %vm1075, %v2010, 0.0
      %2017 = vadd.xlane.f32.xlu0 %v2016
      %v2018 = vpop.xlane.xlu0 %2017
      %v2019 = vadd.f32 %v2015, %v1181
      %v2020 = vadd.f32 %v2018, %v1181
      %v2021 = vmul.f32 %v1995, 2.0
      %v2022 = vmul.f32 %v2000, 2.0
      %v2023 = vsub.f32 %v2019, %v2021
      %v2024 = vsub.f32 %v2020, %v2022
      %v2025 = vsel %vm1189, %v2023, inf
      %2026 = vmin.xlane.f32.xlu0 %v2025
      %v2027 = vpop.xlane.xlu0 %2026
      %v2028 = vsel %vm1189, %v2024, inf
      %2029 = vmin.xlane.f32.xlu0 %v2028
      %v2030 = vpop.xlane.xlu0 %2029
      %vm2031 = vcmp.le.f32.partialorder %v2023, %v2027
      %vm2032 = vcmp.le.f32.partialorder %v2024, %v2030
      %v2033 = vsel %vm2031, %v1197, 32
      %v2034 = vsel %vm2032, %v1197, 32
      %v2035 = vsel %vm1189, %v2033, 2147483647
      %v2036 = vand.u32 %v2035, 65535
      %v2037 = vshra.s32 %v2035, 16
      %v2038 = vcvt.s32.f32 %v2036
      %v2039 = vcvt.s32.f32 %v2037
      %2040 = vmin.xlane.f32.xlu0 %v2039
      %v2041 = vpop.xlane.xlu0 %2040
      %vm2042 = vcmp.eq.f32.partialorder %v2039, %v2041
      %v2043 = vsel %vm2042, %v2038, inf
      %2044 = vmin.xlane.f32.xlu0 %v2043
      %v2045 = vpop.xlane.xlu0 %2044
      %v2046 = vcvt.f32.s32 %v2045
      %v2047 = vcvt.f32.s32 %v2041
      %v2048 = vshll.u32 %v2047, 16
      %v2049 = vadd.s32 %v2048, %v2046
      %v2050 = vsel %vm1189, %v2034, 2147483647
      %v2051 = vand.u32 %v2050, 65535
      %v2052 = vshra.s32 %v2050, 16
      %v2053 = vcvt.s32.f32 %v2051
      %v2054 = vcvt.s32.f32 %v2052
      %2055 = vmin.xlane.f32.xlu0 %v2054
      %v2056 = vpop.xlane.xlu0 %2055
      %vm2057 = vcmp.eq.f32.partialorder %v2054, %v2056
      %v2058 = vsel %vm2057, %v2053, inf
      %2059 = vmin.xlane.f32.xlu0 %v2058
      %v2060 = vpop.xlane.xlu0 %2059
      %v2061 = vcvt.f32.s32 %v2060
      %v2062 = vcvt.f32.s32 %v2056
      %v2063 = vshll.u32 %v2062, 16
      %v2064 = vadd.s32 %v2063, %v2061
      %vm2065 = vcmp.eq.s32.totalorder %v1197, %v2049
      %vm2066 = vcmp.eq.s32.totalorder %v1197, %v2064
      %v2067 = vsel %vm2065, 1, 0
      %v2068 = vsel %vm2066, 1, 0
      %v2069 = vcvt.s32.f32 %v2067
      %v2070 = vcvt.s32.f32 %v2068
      %v2072 = vsel %vm1189, %v2069, 0
      %v2075 = vsel %vm1189, %v2070, 0
      %2077 = vmatprep.subr.mxu0 0.0
      %2078 = vmatpush1.msra.mxu0 %v1068
      %2079 = vmatprep.subr.mxu0 0.0
      %2080 = vmatpush1.msra.mxu0 %v1069
      %2081 = vmatprep.subr.mxu0 0.0
      %2082 = vmatpush1.msra.mxu0 %v1070
      %2083 = vmatprep.subr.mxu0 0.0
      %2084 = vmatpush1.msra.mxu0 %v1071
      %2085 = vmatprep.subr.mxu0 0.0
      %2086 = vmatpush1.msra.mxu0 0.0
      %2087 = vmatprep.subr.mxu0 0.0
      %2088 = vmatpush1.msra.mxu0 0.0
      %2089 = vmatprep.subr.mxu0 0.0
      %2090 = vmatpush1.msra.mxu0 0.0
      %2091 = vmatprep.subr.mxu0 0.0
      %2092 = vmatpush1.msra.mxu0 0.0
      %2093 = vmatprep.subr.mxu0 0.0
      %2094 = vmatpush1.msra.mxu0 0.0
      %2095 = vmatprep.subr.mxu0 0.0
      %2096 = vmatpush1.msra.mxu0 0.0
      %2097 = vmatprep.subr.mxu0 0.0
      %2098 = vmatpush1.msra.mxu0 0.0
      %2099 = vmatprep.subr.mxu0 0.0
      %2100 = vmatpush1.msra.mxu0 0.0
      %2101 = vmatprep.subr.mxu0 0.0
      %2102 = vmatpush1.msra.mxu0 0.0
      %2103 = vmatprep.subr.mxu0 0.0
      %2104 = vmatpush1.msra.mxu0 0.0
      %2105 = vmatprep.subr.mxu0 0.0
      %2106 = vmatpush1.msra.mxu0 0.0
      %2107 = vmatprep.subr.mxu0 0.0
      %2108 = vmatpush1.msra.mxu0 0.0
      %2109 = vmatprep.subr.mxu0 0.0
      %2110 = vmatpush1.msra.mxu0 0.0
      %2111 = vmatprep.subr.mxu0 0.0
      %2112 = vmatpush1.msra.mxu0 0.0
      %2113 = vmatprep.subr.mxu0 0.0
      %2114 = vmatpush1.msra.mxu0 0.0
      %2115 = vmatprep.subr.mxu0 0.0
      %2116 = vmatpush1.msra.mxu0 0.0
      %2117 = vmatprep.subr.mxu0 0.0
      %2118 = vmatpush1.msra.mxu0 0.0
      %2119 = vmatprep.subr.mxu0 0.0
      %2120 = vmatpush1.msra.mxu0 0.0
      %2121 = vmatprep.subr.mxu0 0.0
      %2122 = vmatpush1.msra.mxu0 0.0
      %2123 = vmatprep.subr.mxu0 0.0
      %2124 = vmatpush1.msra.mxu0 0.0
      %2125 = vmatprep.subr.mxu0 0.0
      %2126 = vmatpush1.msra.mxu0 0.0
      %2127 = vmatprep.subr.mxu0 0.0
      %2128 = vmatpush1.msra.mxu0 0.0
      %2129 = vmatprep.subr.mxu0 0.0
      %2130 = vmatpush1.msra.mxu0 0.0
      %2131 = vmatprep.subr.mxu0 0.0
      %2132 = vmatpush1.msra.mxu0 0.0
      %2133 = vmatprep.subr.mxu0 0.0
      %2134 = vmatpush1.msra.mxu0 0.0
      %2135 = vmatprep.subr.mxu0 0.0
      %2136 = vmatpush1.msra.mxu0 0.0
      %2137 = vmatprep.subr.mxu0 0.0
      %2138 = vmatpush1.msra.mxu0 0.0
      %2139 = vmatprep.subr.mxu0 0.0
      %2140 = vmatpush1.msra.mxu0 0.0
      %2141 = vmatprep.mubr.f32.mxu0 0.0
      %2142 = vmatmul.mubr.f32.gmra.mrb[0].mxu0 %v2072
      %v2143 = vpop.f32.mrb[0].mxu0
      %v2144 = vadd.f32 0.0, %v2143
      %v2145 = vpop.f32.mrb[0].mxu0
      %2146 = vmatprep.mubr.f32.mxu0 0.0
      %2147 = vmatmul.mubr.f32.gmra.mrb[0].mxu0 %v2075
      %v2148 = vpop.f32.mrb[0].mxu0
      %v2149 = vadd.f32 0.0, %v2148
      %v2150 = vpop.f32.mrb[0].mxu0
      %2151 = vdwg.mxu0
      %2154 = vrot.lane.b32.xlu0 %v2144, 24
      %v2155 = vpop.permute.xlu0 %2154
      %2156 = vrot.lane.b32.xlu0 %v2149, 24
      %v2157 = vpop.permute.xlu0 %2156
      %v2160 = vsub.f32 %v1916, %v2155
      %v2161 = vsub.f32 %v1917, %v2157
      %v2162 = vmul.f32 %v2160, %v2160
      %v2163 = vmul.f32 %v2161, %v2161
      %2166 = vrot.lane.b32.xlu0 %v2162, 104
      %v2167 = vpop.permute.xlu0 %2166
      %2168 = vrot.lane.b32.xlu0 %v2163, 104
      %v2169 = vpop.permute.xlu0 %2168
      %v2172 = vsel %vm1075, %v2167, 0.0
      %2173 = vadd.xlane.f32.xlu0 %v2172
      %v2174 = vpop.xlane.xlu0 %2173
      %v2175 = vsel %vm1075, %v2169, 0.0
      %2176 = vadd.xlane.f32.xlu0 %v2175
      %v2177 = vpop.xlane.xlu0 %2176
      %v2178 = vadd.f32 %v1896, %v2174
      %v2179 = vadd.f32 %v1897, %v2177
      %v2180 = vrot.slane %v2144, 7
      %v2181 = vrot.slane %v2149, 7
      %v2182 = vsel %vm1333, %v2180, %v2181
      %2183 = vrot.lane.b32.xlu0 %v2180, 32
      %v2184 = vpop.permute.xlu0 %2183
      %2185 = vrot.lane.b32.xlu0 %v2182, 32
      %v2186 = vpop.permute.xlu0 %2185
      %2187 = vrot.lane.b32.xlu0 %v2181, 32
      %v2188 = vpop.permute.xlu0 %2187
      %vm2192 = vcmask 326913
      %2193 = vst.msk [vmem:[#allocation3] sm:$0xfe] %vm2192, %v2184
      %vm2194 = vcmask 326912
      %2195 = vst.msk [vmem:[#allocation3 + $0x10] sm:$0xff] %vm2194, %v2186
      %vm2196 = vcmask 319744
      %2197 = vst.msk [vmem:[#allocation3 + $0x20] sm:$0x1] %vm2196, %v2188
      %v2198 = vld [vmem:[#allocation2] sm:$0xff]
      %v2199 = vld [vmem:[#allocation2 + $0x8] sm:$0xff]
      %2202 = vrot.lane.b32.xlu0 %v2198, 96
      %v2203 = vpop.permute.xlu0 %2202
      %2204 = vrot.lane.b32.xlu0 %v2199, 96
      %v2205 = vpop.permute.xlu0 %2204
      %v2206 = vsel %vm1075, %v2203, 0
      %v2208 = vsel %vm1075, %v2205, 0
      %2210 = vmatprep.subr.mxu0 0.0
      %2211 = vmatpush1.xpose.msra.mxu0 %v1083
      %2212 = vmatprep.subr.mxu0 0.0
      %2213 = vmatpush1.xpose.msra.mxu0 %v1086
      %2214 = vmatprep.subr.mxu0 0.0
      %2215 = vmatpush1.xpose.msra.mxu0 %v1089
      %2216 = vmatprep.subr.mxu0 0.0
      %2217 = vmatpush1.xpose.msra.mxu0 %v1092
      %2218 = vmatprep.subr.mxu0 0.0
      %2219 = vmatpush1.xpose.msra.mxu0 0.0
      %2220 = vmatprep.subr.mxu0 0.0
      %2221 = vmatpush1.xpose.msra.mxu0 0.0
      %2222 = vmatprep.subr.mxu0 0.0
      %2223 = vmatpush1.xpose.msra.mxu0 0.0
      %2224 = vmatprep.subr.mxu0 0.0
      %2225 = vmatpush1.xpose.msra.mxu0 0.0
      %2226 = vmatprep.subr.mxu0 0.0
      %2227 = vmatpush1.xpose.msra.mxu0 0.0
      %2228 = vmatprep.subr.mxu0 0.0
      %2229 = vmatpush1.xpose.msra.mxu0 0.0
      %2230 = vmatprep.subr.mxu0 0.0
      %2231 = vmatpush1.xpose.msra.mxu0 0.0
      %2232 = vmatprep.subr.mxu0 0.0
      %2233 = vmatpush1.xpose.msra.mxu0 0.0
      %2234 = vmatprep.subr.mxu0 0.0
      %2235 = vmatpush1.xpose.msra.mxu0 0.0
      %2236 = vmatprep.subr.mxu0 0.0
      %2237 = vmatpush1.xpose.msra.mxu0 0.0
      %2238 = vmatprep.subr.mxu0 0.0
      %2239 = vmatpush1.xpose.msra.mxu0 0.0
      %2240 = vmatprep.subr.mxu0 0.0
      %2241 = vmatpush1.xpose.msra.mxu0 0.0
      %2242 = vmatprep.subr.mxu0 0.0
      %2243 = vmatpush1.xpose.msra.mxu0 0.0
      %2244 = vmatprep.subr.mxu0 0.0
      %2245 = vmatpush1.xpose.msra.mxu0 0.0
      %2246 = vmatprep.subr.mxu0 0.0
      %2247 = vmatpush1.xpose.msra.mxu0 0.0
      %2248 = vmatprep.subr.mxu0 0.0
      %2249 = vmatpush1.xpose.msra.mxu0 0.0
      %2250 = vmatprep.subr.mxu0 0.0
      %2251 = vmatpush1.xpose.msra.mxu0 0.0
      %2252 = vmatprep.subr.mxu0 0.0
      %2253 = vmatpush1.xpose.msra.mxu0 0.0
      %2254 = vmatprep.subr.mxu0 0.0
      %2255 = vmatpush1.xpose.msra.mxu0 0.0
      %2256 = vmatprep.subr.mxu0 0.0
      %2257 = vmatpush1.xpose.msra.mxu0 0.0
      %2258 = vmatprep.subr.mxu0 0.0
      %2259 = vmatpush1.xpose.msra.mxu0 0.0
      %2260 = vmatprep.subr.mxu0 0.0
      %2261 = vmatpush1.xpose.msra.mxu0 0.0
      %2262 = vmatprep.subr.mxu0 0.0
      %2263 = vmatpush1.xpose.msra.mxu0 0.0
      %2264 = vmatprep.subr.mxu0 0.0
      %2265 = vmatpush1.xpose.msra.mxu0 0.0
      %2266 = vmatprep.subr.mxu0 0.0
      %2267 = vmatpush1.xpose.msra.mxu0 0.0
      %2268 = vmatprep.subr.mxu0 0.0
      %2269 = vmatpush1.xpose.msra.mxu0 0.0
      %2270 = vmatprep.subr.mxu0 0.0
      %2271 = vmatpush1.xpose.msra.mxu0 0.0
      %2272 = vmatprep.subr.mxu0 0.0
      %2273 = vmatpush1.xpose.msra.mxu0 0.0
      %2274 = vmatprep.mubr.f32.mxu0 0.0
      %2275 = vmatmul.mubr.f32.gmra.mrb[0].mxu0 %v2206
      %v2276 = vpop.f32.mrb[0].mxu0
      %v2277 = vadd.f32 0.0, %v2276
      %v2278 = vpop.f32.mrb[0].mxu0
      %2279 = vmatprep.mubr.f32.mxu0 0.0
      %2280 = vmatmul.mubr.f32.gmra.mrb[0].mxu0 %v2208
      %v2281 = vpop.f32.mrb[0].mxu0
      %v2282 = vadd.f32 0.0, %v2281
      %v2283 = vpop.f32.mrb[0].mxu0
      %2284 = vdwg.mxu0
      %v2285 = vmul.f32 %v2198, %v2198
      %v2286 = vmul.f32 %v2199, %v2199
      %2289 = vrot.lane.b32.xlu0 %v2285, 96
      %v2290 = vpop.permute.xlu0 %2289
      %2291 = vrot.lane.b32.xlu0 %v2286, 96
      %v2292 = vpop.permute.xlu0 %2291
      %v2295 = vsel %vm1075, %v2290, 0.0
      %2296 = vadd.xlane.f32.xlu0 %v2295
      %v2297 = vpop.xlane.xlu0 %2296
      %v2298 = vsel %vm1075, %v2292, 0.0
      %2299 = vadd.xlane.f32.xlu0 %v2298
      %v2300 = vpop.xlane.xlu0 %2299
      %v2301 = vadd.f32 %v2297, %v1181
      %v2302 = vadd.f32 %v2300, %v1181
      %v2303 = vmul.f32 %v2277, 2.0
      %v2304 = vmul.f32 %v2282, 2.0
      %v2305 = vsub.f32 %v2301, %v2303
      %v2306 = vsub.f32 %v2302, %v2304
      %v2307 = vsel %vm1189, %v2305, inf
      %2308 = vmin.xlane.f32.xlu0 %v2307
      %v2309 = vpop.xlane.xlu0 %2308
      %v2310 = vsel %vm1189, %v2306, inf
      %2311 = vmin.xlane.f32.xlu0 %v2310
      %v2312 = vpop.xlane.xlu0 %2311
      %vm2313 = vcmp.le.f32.partialorder %v2305, %v2309
      %vm2314 = vcmp.le.f32.partialorder %v2306, %v2312
      %v2315 = vsel %vm2313, %v1197, 32
      %v2316 = vsel %vm2314, %v1197, 32
      %v2317 = vsel %vm1189, %v2315, 2147483647
      %v2318 = vand.u32 %v2317, 65535
      %v2319 = vshra.s32 %v2317, 16
      %v2320 = vcvt.s32.f32 %v2318
      %v2321 = vcvt.s32.f32 %v2319
      %2322 = vmin.xlane.f32.xlu0 %v2321
      %v2323 = vpop.xlane.xlu0 %2322
      %vm2324 = vcmp.eq.f32.partialorder %v2321, %v2323
      %v2325 = vsel %vm2324, %v2320, inf
      %2326 = vmin.xlane.f32.xlu0 %v2325
      %v2327 = vpop.xlane.xlu0 %2326
      %v2328 = vcvt.f32.s32 %v2327
      %v2329 = vcvt.f32.s32 %v2323
      %v2330 = vshll.u32 %v2329, 16
      %v2331 = vadd.s32 %v2330, %v2328
      %v2332 = vsel %vm1189, %v2316, 2147483647
      %v2333 = vand.u32 %v2332, 65535
      %v2334 = vshra.s32 %v2332, 16
      %v2335 = vcvt.s32.f32 %v2333
      %v2336 = vcvt.s32.f32 %v2334
      %2337 = vmin.xlane.f32.xlu0 %v2336
      %v2338 = vpop.xlane.xlu0 %2337
      %vm2339 = vcmp.eq.f32.partialorder %v2336, %v2338
      %v2340 = vsel %vm2339, %v2335, inf
      %2341 = vmin.xlane.f32.xlu0 %v2340
      %v2342 = vpop.xlane.xlu0 %2341
      %v2343 = vcvt.f32.s32 %v2342
      %v2344 = vcvt.f32.s32 %v2338
      %v2345 = vshll.u32 %v2344, 16
      %v2346 = vadd.s32 %v2345, %v2343
      %vm2347 = vcmp.eq.s32.totalorder %v1197, %v2331
      %vm2348 = vcmp.eq.s32.totalorder %v1197, %v2346
      %v2349 = vsel %vm2347, 1, 0
      %v2350 = vsel %vm2348, 1, 0
      %v2351 = vcvt.s32.f32 %v2349
      %v2352 = vcvt.s32.f32 %v2350
      %v2354 = vsel %vm1189, %v2351, 0
      %v2357 = vsel %vm1189, %v2352, 0
      %2359 = vmatprep.subr.mxu0 0.0
      %2360 = vmatpush1.msra.mxu0 %v1068
      %2361 = vmatprep.subr.mxu0 0.0
      %2362 = vmatpush1.msra.mxu0 %v1069
      %2363 = vmatprep.subr.mxu0 0.0
      %2364 = vmatpush1.msra.mxu0 %v1070
      %2365 = vmatprep.subr.mxu0 0.0
      %2366 = vmatpush1.msra.mxu0 %v1071
      %2367 = vmatprep.subr.mxu0 0.0
      %2368 = vmatpush1.msra.mxu0 0.0
      %2369 = vmatprep.subr.mxu0 0.0
      %2370 = vmatpush1.msra.mxu0 0.0
      %2371 = vmatprep.subr.mxu0 0.0
      %2372 = vmatpush1.msra.mxu0 0.0
      %2373 = vmatprep.subr.mxu0 0.0
      %2374 = vmatpush1.msra.mxu0 0.0
      %2375 = vmatprep.subr.mxu0 0.0
      %2376 = vmatpush1.msra.mxu0 0.0
      %2377 = vmatprep.subr.mxu0 0.0
      %2378 = vmatpush1.msra.mxu0 0.0
      %2379 = vmatprep.subr.mxu0 0.0
      %2380 = vmatpush1.msra.mxu0 0.0
      %2381 = vmatprep.subr.mxu0 0.0
      %2382 = vmatpush1.msra.mxu0 0.0
      %2383 = vmatprep.subr.mxu0 0.0
      %2384 = vmatpush1.msra.mxu0 0.0
      %2385 = vmatprep.subr.mxu0 0.0
      %2386 = vmatpush1.msra.mxu0 0.0
      %2387 = vmatprep.subr.mxu0 0.0
      %2388 = vmatpush1.msra.mxu0 0.0
      %2389 = vmatprep.subr.mxu0 0.0
      %2390 = vmatpush1.msra.mxu0 0.0
      %2391 = vmatprep.subr.mxu0 0.0
      %2392 = vmatpush1.msra.mxu0 0.0
      %2393 = vmatprep.subr.mxu0 0.0
      %2394 = vmatpush1.msra.mxu0 0.0
      %2395 = vmatprep.subr.mxu0 0.0
      %2396 = vmatpush1.msra.mxu0 0.0
      %2397 = vmatprep.subr.mxu0 0.0
      %2398 = vmatpush1.msra.mxu0 0.0
      %2399 = vmatprep.subr.mxu0 0.0
      %2400 = vmatpush1.msra.mxu0 0.0
      %2401 = vmatprep.subr.mxu0 0.0
      %2402 = vmatpush1.msra.mxu0 0.0
      %2403 = vmatprep.subr.mxu0 0.0
      %2404 = vmatpush1.msra.mxu0 0.0
      %2405 = vmatprep.subr.mxu0 0.0
      %2406 = vmatpush1.msra.mxu0 0.0
      %2407 = vmatprep.subr.mxu0 0.0
      %2408 = vmatpush1.msra.mxu0 0.0
      %2409 = vmatprep.subr.mxu0 0.0
      %2410 = vmatpush1.msra.mxu0 0.0
      %2411 = vmatprep.subr.mxu0 0.0
      %2412 = vmatpush1.msra.mxu0 0.0
      %2413 = vmatprep.subr.mxu0 0.0
      %2414 = vmatpush1.msra.mxu0 0.0
      %2415 = vmatprep.subr.mxu0 0.0
      %2416 = vmatpush1.msra.mxu0 0.0
      %2417 = vmatprep.subr.mxu0 0.0
      %2418 = vmatpush1.msra.mxu0 0.0
      %2419 = vmatprep.subr.mxu0 0.0
      %2420 = vmatpush1.msra.mxu0 0.0
      %2421 = vmatprep.subr.mxu0 0.0
      %2422 = vmatpush1.msra.mxu0 0.0
      %2423 = vmatprep.mubr.f32.mxu0 0.0
      %2424 = vmatmul.mubr.f32.gmra.mrb[0].mxu0 %v2354
      %v2425 = vpop.f32.mrb[0].mxu0
      %v2426 = vadd.f32 0.0, %v2425
      %v2427 = vpop.f32.mrb[0].mxu0
      %2428 = vmatprep.mubr.f32.mxu0 0.0
      %2429 = vmatmul.mubr.f32.gmra.mrb[0].mxu0 %v2357
      %v2430 = vpop.f32.mrb[0].mxu0
      %v2431 = vadd.f32 0.0, %v2430
      %v2432 = vpop.f32.mrb[0].mxu0
      %2433 = vdwg.mxu0
      %2436 = vrot.lane.b32.xlu0 %v2426, 32
      %v2437 = vpop.permute.xlu0 %2436
      %2438 = vrot.lane.b32.xlu0 %v2431, 32
      %v2439 = vpop.permute.xlu0 %2438
      %v2442 = vsub.f32 %v2198, %v2437
      %v2443 = vsub.f32 %v2199, %v2439
      %v2444 = vmul.f32 %v2442, %v2442
      %v2445 = vmul.f32 %v2443, %v2443
      %2448 = vrot.lane.b32.xlu0 %v2444, 96
      %v2449 = vpop.permute.xlu0 %2448
      %2450 = vrot.lane.b32.xlu0 %v2445, 96
      %v2451 = vpop.permute.xlu0 %2450
      %v2454 = vsel %vm1075, %v2449, 0.0
      %2455 = vadd.xlane.f32.xlu0 %v2454
      %v2456 = vpop.xlane.xlu0 %2455
      %v2457 = vsel %vm1075, %v2451, 0.0
      %2458 = vadd.xlane.f32.xlu0 %v2457
      %v2459 = vpop.xlane.xlu0 %2458
      %v2460 = vadd.f32 %v2178, %v2456
      %v2461 = vadd.f32 %v2179, %v2459
      %v2462 = vrot.slane %v2426, 7
      %v2463 = vrot.slane %v2431, 7
      %v2464 = vsel %vm1333, %v2462, %v2463
      %2465 = vrot.lane.b32.xlu0 %v2462, 40
      %v2466 = vpop.permute.xlu0 %2465
      %2467 = vrot.lane.b32.xlu0 %v2464, 40
      %v2468 = vpop.permute.xlu0 %2467
      %2469 = vrot.lane.b32.xlu0 %v2463, 40
      %v2470 = vpop.permute.xlu0 %2469
      %vm2474 = vcmask 392513
      %2475 = vst.msk [vmem:[#allocation3] sm:$0xfe] %vm2474, %v2466
      %vm2476 = vcmask 392512
      %2477 = vst.msk [vmem:[#allocation3 + $0x10] sm:$0xff] %vm2476, %v2468
      %vm2478 = vcmask 385344
      %2479 = vst.msk [vmem:[#allocation3 + $0x20] sm:$0x1] %vm2478, %v2470
      %v2480 = vld [vmem:[#allocation2] sm:$0xff]
      %v2481 = vld [vmem:[#allocation2 + $0x8] sm:$0xff]
      %2484 = vrot.lane.b32.xlu0 %v2480, 88
      %v2485 = vpop.permute.xlu0 %2484
      %2486 = vrot.lane.b32.xlu0 %v2481, 88
      %v2487 = vpop.permute.xlu0 %2486
      %v2488 = vsel %vm1075, %v2485, 0
      %v2490 = vsel %vm1075, %v2487, 0
      %2492 = vmatprep.subr.mxu0 0.0
      %2493 = vmatpush1.xpose.msra.mxu0 %v1083
      %2494 = vmatprep.subr.mxu0 0.0
      %2495 = vmatpush1.xpose.msra.mxu0 %v1086
      %2496 = vmatprep.subr.mxu0 0.0
      %2497 = vmatpush1.xpose.msra.mxu0 %v1089
      %2498 = vmatprep.subr.mxu0 0.0
      %2499 = vmatpush1.xpose.msra.mxu0 %v1092
      %2500 = vmatprep.subr.mxu0 0.0
      %2501 = vmatpush1.xpose.msra.mxu0 0.0
      %2502 = vmatprep.subr.mxu0 0.0
      %2503 = vmatpush1.xpose.msra.mxu0 0.0
      %2504 = vmatprep.subr.mxu0 0.0
      %2505 = vmatpush1.xpose.msra.mxu0 0.0
      %2506 = vmatprep.subr.mxu0 0.0
      %2507 = vmatpush1.xpose.msra.mxu0 0.0
      %2508 = vmatprep.subr.mxu0 0.0
      %2509 = vmatpush1.xpose.msra.mxu0 0.0
      %2510 = vmatprep.subr.mxu0 0.0
      %2511 = vmatpush1.xpose.msra.mxu0 0.0
      %2512 = vmatprep.subr.mxu0 0.0
      %2513 = vmatpush1.xpose.msra.mxu0 0.0
      %2514 = vmatprep.subr.mxu0 0.0
      %2515 = vmatpush1.xpose.msra.mxu0 0.0
      %2516 = vmatprep.subr.mxu0 0.0
      %2517 = vmatpush1.xpose.msra.mxu0 0.0
      %2518 = vmatprep.subr.mxu0 0.0
      %2519 = vmatpush1.xpose.msra.mxu0 0.0
      %2520 = vmatprep.subr.mxu0 0.0
      %2521 = vmatpush1.xpose.msra.mxu0 0.0
      %2522 = vmatprep.subr.mxu0 0.0
      %2523 = vmatpush1.xpose.msra.mxu0 0.0
      %2524 = vmatprep.subr.mxu0 0.0
      %2525 = vmatpush1.xpose.msra.mxu0 0.0
      %2526 = vmatprep.subr.mxu0 0.0
      %2527 = vmatpush1.xpose.msra.mxu0 0.0
      %2528 = vmatprep.subr.mxu0 0.0
      %2529 = vmatpush1.xpose.msra.mxu0 0.0
      %2530 = vmatprep.subr.mxu0 0.0
      %2531 = vmatpush1.xpose.msra.mxu0 0.0
      %2532 = vmatprep.subr.mxu0 0.0
      %2533 = vmatpush1.xpose.msra.mxu0 0.0
      %2534 = vmatprep.subr.mxu0 0.0
      %2535 = vmatpush1.xpose.msra.mxu0 0.0
      %2536 = vmatprep.subr.mxu0 0.0
      %2537 = vmatpush1.xpose.msra.mxu0 0.0
      %2538 = vmatprep.subr.mxu0 0.0
      %2539 = vmatpush1.xpose.msra.mxu0 0.0
      %2540 = vmatprep.subr.mxu0 0.0
      %2541 = vmatpush1.xpose.msra.mxu0 0.0
      %2542 = vmatprep.subr.mxu0 0.0
      %2543 = vmatpush1.xpose.msra.mxu0 0.0
      %2544 = vmatprep.subr.mxu0 0.0
      %2545 = vmatpush1.xpose.msra.mxu0 0.0
      %2546 = vmatprep.subr.mxu0 0.0
      %2547 = vmatpush1.xpose.msra.mxu0 0.0
      %2548 = vmatprep.subr.mxu0 0.0
      %2549 = vmatpush1.xpose.msra.mxu0 0.0
      %2550 = vmatprep.subr.mxu0 0.0
      %2551 = vmatpush1.xpose.msra.mxu0 0.0
      %2552 = vmatprep.subr.mxu0 0.0
      %2553 = vmatpush1.xpose.msra.mxu0 0.0
      %2554 = vmatprep.subr.mxu0 0.0
      %2555 = vmatpush1.xpose.msra.mxu0 0.0
      %2556 = vmatprep.mubr.f32.mxu0 0.0
      %2557 = vmatmul.mubr.f32.gmra.mrb[0].mxu0 %v2488
      %v2558 = vpop.f32.mrb[0].mxu0
      %v2559 = vadd.f32 0.0, %v2558
      %v2560 = vpop.f32.mrb[0].mxu0
      %2561 = vmatprep.mubr.f32.mxu0 0.0
      %2562 = vmatmul.mubr.f32.gmra.mrb[0].mxu0 %v2490
      %v2563 = vpop.f32.mrb[0].mxu0
      %v2564 = vadd.f32 0.0, %v2563
      %v2565 = vpop.f32.mrb[0].mxu0
      %2566 = vdwg.mxu0
      %v2567 = vmul.f32 %v2480, %v2480
      %v2568 = vmul.f32 %v2481, %v2481
      %2571 = vrot.lane.b32.xlu0 %v2567, 88
      %v2572 = vpop.permute.xlu0 %2571
      %2573 = vrot.lane.b32.xlu0 %v2568, 88
      %v2574 = vpop.permute.xlu0 %2573
      %v2577 = vsel %vm1075, %v2572, 0.0
      %2578 = vadd.xlane.f32.xlu0 %v2577
      %v2579 = vpop.xlane.xlu0 %2578
      %v2580 = vsel %vm1075, %v2574, 0.0
      %2581 = vadd.xlane.f32.xlu0 %v2580
      %v2582 = vpop.xlane.xlu0 %2581
      %v2583 = vadd.f32 %v2579, %v1181
      %v2584 = vadd.f32 %v2582, %v1181
      %v2585 = vmul.f32 %v2559, 2.0
      %v2586 = vmul.f32 %v2564, 2.0
      %v2587 = vsub.f32 %v2583, %v2585
      %v2588 = vsub.f32 %v2584, %v2586
      %v2589 = vsel %vm1189, %v2587, inf
      %2590 = vmin.xlane.f32.xlu0 %v2589
      %v2591 = vpop.xlane.xlu0 %2590
      %v2592 = vsel %vm1189, %v2588, inf
      %2593 = vmin.xlane.f32.xlu0 %v2592
      %v2594 = vpop.xlane.xlu0 %2593
      %vm2595 = vcmp.le.f32.partialorder %v2587, %v2591
      %vm2596 = vcmp.le.f32.partialorder %v2588, %v2594
      %v2597 = vsel %vm2595, %v1197, 32
      %v2598 = vsel %vm2596, %v1197, 32
      %v2599 = vsel %vm1189, %v2597, 2147483647
      %v2600 = vand.u32 %v2599, 65535
      %v2601 = vshra.s32 %v2599, 16
      %v2602 = vcvt.s32.f32 %v2600
      %v2603 = vcvt.s32.f32 %v2601
      %2604 = vmin.xlane.f32.xlu0 %v2603
      %v2605 = vpop.xlane.xlu0 %2604
      %vm2606 = vcmp.eq.f32.partialorder %v2603, %v2605
      %v2607 = vsel %vm2606, %v2602, inf
      %2608 = vmin.xlane.f32.xlu0 %v2607
      %v2609 = vpop.xlane.xlu0 %2608
      %v2610 = vcvt.f32.s32 %v2609
      %v2611 = vcvt.f32.s32 %v2605
      %v2612 = vshll.u32 %v2611, 16
      %v2613 = vadd.s32 %v2612, %v2610
      %v2614 = vsel %vm1189, %v2598, 2147483647
      %v2615 = vand.u32 %v2614, 65535
      %v2616 = vshra.s32 %v2614, 16
      %v2617 = vcvt.s32.f32 %v2615
      %v2618 = vcvt.s32.f32 %v2616
      %2619 = vmin.xlane.f32.xlu0 %v2618
      %v2620 = vpop.xlane.xlu0 %2619
      %vm2621 = vcmp.eq.f32.partialorder %v2618, %v2620
      %v2622 = vsel %vm2621, %v2617, inf
      %2623 = vmin.xlane.f32.xlu0 %v2622
      %v2624 = vpop.xlane.xlu0 %2623
      %v2625 = vcvt.f32.s32 %v2624
      %v2626 = vcvt.f32.s32 %v2620
      %v2627 = vshll.u32 %v2626, 16
      %v2628 = vadd.s32 %v2627, %v2625
      %vm2629 = vcmp.eq.s32.totalorder %v1197, %v2613
      %vm2630 = vcmp.eq.s32.totalorder %v1197, %v2628
      %v2631 = vsel %vm2629, 1, 0
      %v2632 = vsel %vm2630, 1, 0
      %v2633 = vcvt.s32.f32 %v2631
      %v2634 = vcvt.s32.f32 %v2632
      %v2636 = vsel %vm1189, %v2633, 0
      %v2639 = vsel %vm1189, %v2634, 0
      %2641 = vmatprep.subr.mxu0 0.0
      %2642 = vmatpush1.msra.mxu0 %v1068
      %2643 = vmatprep.subr.mxu0 0.0
      %2644 = vmatpush1.msra.mxu0 %v1069
      %2645 = vmatprep.subr.mxu0 0.0
      %2646 = vmatpush1.msra.mxu0 %v1070
      %2647 = vmatprep.subr.mxu0 0.0
      %2648 = vmatpush1.msra.mxu0 %v1071
      %2649 = vmatprep.subr.mxu0 0.0
      %2650 = vmatpush1.msra.mxu0 0.0
      %2651 = vmatprep.subr.mxu0 0.0
      %2652 = vmatpush1.msra.mxu0 0.0
      %2653 = vmatprep.subr.mxu0 0.0
      %2654 = vmatpush1.msra.mxu0 0.0
      %2655 = vmatprep.subr.mxu0 0.0
      %2656 = vmatpush1.msra.mxu0 0.0
      %2657 = vmatprep.subr.mxu0 0.0
      %2658 = vmatpush1.msra.mxu0 0.0
      %2659 = vmatprep.subr.mxu0 0.0
      %2660 = vmatpush1.msra.mxu0 0.0
      %2661 = vmatprep.subr.mxu0 0.0
      %2662 = vmatpush1.msra.mxu0 0.0
      %2663 = vmatprep.subr.mxu0 0.0
      %2664 = vmatpush1.msra.mxu0 0.0
      %2665 = vmatprep.subr.mxu0 0.0
      %2666 = vmatpush1.msra.mxu0 0.0
      %2667 = vmatprep.subr.mxu0 0.0
      %2668 = vmatpush1.msra.mxu0 0.0
      %2669 = vmatprep.subr.mxu0 0.0
      %2670 = vmatpush1.msra.mxu0 0.0
      %2671 = vmatprep.subr.mxu0 0.0
      %2672 = vmatpush1.msra.mxu0 0.0
      %2673 = vmatprep.subr.mxu0 0.0
      %2674 = vmatpush1.msra.mxu0 0.0
      %2675 = vmatprep.subr.mxu0 0.0
      %2676 = vmatpush1.msra.mxu0 0.0
      %2677 = vmatprep.subr.mxu0 0.0
      %2678 = vmatpush1.msra.mxu0 0.0
      %2679 = vmatprep.subr.mxu0 0.0
      %2680 = vmatpush1.msra.mxu0 0.0
      %2681 = vmatprep.subr.mxu0 0.0
      %2682 = vmatpush1.msra.mxu0 0.0
      %2683 = vmatprep.subr.mxu0 0.0
      %2684 = vmatpush1.msra.mxu0 0.0
      %2685 = vmatprep.subr.mxu0 0.0
      %2686 = vmatpush1.msra.mxu0 0.0
      %2687 = vmatprep.subr.mxu0 0.0
      %2688 = vmatpush1.msra.mxu0 0.0
      %2689 = vmatprep.subr.mxu0 0.0
      %2690 = vmatpush1.msra.mxu0 0.0
      %2691 = vmatprep.subr.mxu0 0.0
      %2692 = vmatpush1.msra.mxu0 0.0
      %2693 = vmatprep.subr.mxu0 0.0
      %2694 = vmatpush1.msra.mxu0 0.0
      %2695 = vmatprep.subr.mxu0 0.0
      %2696 = vmatpush1.msra.mxu0 0.0
      %2697 = vmatprep.subr.mxu0 0.0
      %2698 = vmatpush1.msra.mxu0 0.0
      %2699 = vmatprep.subr.mxu0 0.0
      %2700 = vmatpush1.msra.mxu0 0.0
      %2701 = vmatprep.subr.mxu0 0.0
      %2702 = vmatpush1.msra.mxu0 0.0
      %2703 = vmatprep.subr.mxu0 0.0
      %2704 = vmatpush1.msra.mxu0 0.0
      %2705 = vmatprep.mubr.f32.mxu0 0.0
      %2706 = vmatmul.mubr.f32.gmra.mrb[0].mxu0 %v2636
      %v2707 = vpop.f32.mrb[0].mxu0
      %v2708 = vadd.f32 0.0, %v2707
      %v2709 = vpop.f32.mrb[0].mxu0
      %2710 = vmatprep.mubr.f32.mxu0 0.0
      %2711 = vmatmul.mubr.f32.gmra.mrb[0].mxu0 %v2639
      %v2712 = vpop.f32.mrb[0].mxu0
      %v2713 = vadd.f32 0.0, %v2712
      %v2714 = vpop.f32.mrb[0].mxu0
      %2715 = vdwg.mxu0
      %2718 = vrot.lane.b32.xlu0 %v2708, 40
      %v2719 = vpop.permute.xlu0 %2718
      %2720 = vrot.lane.b32.xlu0 %v2713, 40
      %v2721 = vpop.permute.xlu0 %2720
      %v2724 = vsub.f32 %v2480, %v2719
      %v2725 = vsub.f32 %v2481, %v2721
      %v2726 = vmul.f32 %v2724, %v2724
      %v2727 = vmul.f32 %v2725, %v2725
      %2730 = vrot.lane.b32.xlu0 %v2726, 88
      %v2731 = vpop.permute.xlu0 %2730
      %2732 = vrot.lane.b32.xlu0 %v2727, 88
      %v2733 = vpop.permute.xlu0 %2732
      %v2736 = vsel %vm1075, %v2731, 0.0
      %2737 = vadd.xlane.f32.xlu0 %v2736
      %v2738 = vpop.xlane.xlu0 %2737
      %v2739 = vsel %vm1075, %v2733, 0.0
      %2740 = vadd.xlane.f32.xlu0 %v2739
      %v2741 = vpop.xlane.xlu0 %2740
      %v2742 = vadd.f32 %v2460, %v2738
      %v2743 = vadd.f32 %v2461, %v2741
      %v2744 = vrot.slane %v2708, 7
      %v2745 = vrot.slane %v2713, 7
      %v2746 = vsel %vm1333, %v2744, %v2745
      %2747 = vrot.lane.b32.xlu0 %v2744, 48
      %v2748 = vpop.permute.xlu0 %2747
      %2749 = vrot.lane.b32.xlu0 %v2746, 48
      %v2750 = vpop.permute.xlu0 %2749
      %2751 = vrot.lane.b32.xlu0 %v2745, 48
      %v2752 = vpop.permute.xlu0 %2751
      %vm2756 = vcmask 458113
      %2757 = vst.msk [vmem:[#allocation3] sm:$0xfe] %vm2756, %v2748
      %vm2758 = vcmask 458112
      %2759 = vst.msk [vmem:[#allocation3 + $0x10] sm:$0xff] %vm2758, %v2750
      %vm2760 = vcmask 450944
      %2761 = vst.msk [vmem:[#allocation3 + $0x20] sm:$0x1] %vm2760, %v2752
      %v2762 = vld [vmem:[#allocation2] sm:$0xff]
      %v2763 = vld [vmem:[#allocation2 + $0x8] sm:$0xff]
      %2766 = vrot.lane.b32.xlu0 %v2762, 80
      %v2767 = vpop.permute.xlu0 %2766
      %2768 = vrot.lane.b32.xlu0 %v2763, 80
      %v2769 = vpop.permute.xlu0 %2768
      %v2770 = vsel %vm1075, %v2767, 0
      %v2772 = vsel %vm1075, %v2769, 0
      %2774 = vmatprep.subr.mxu0 0.0
      %2775 = vmatpush1.xpose.msra.mxu0 %v1083
      %2776 = vmatprep.subr.mxu0 0.0
      %2777 = vmatpush1.xpose.msra.mxu0 %v1086
      %2778 = vmatprep.subr.mxu0 0.0
      %2779 = vmatpush1.xpose.msra.mxu0 %v1089
      %2780 = vmatprep.subr.mxu0 0.0
      %2781 = vmatpush1.xpose.msra.mxu0 %v1092
      %2782 = vmatprep.subr.mxu0 0.0
      %2783 = vmatpush1.xpose.msra.mxu0 0.0
      %2784 = vmatprep.subr.mxu0 0.0
      %2785 = vmatpush1.xpose.msra.mxu0 0.0
      %2786 = vmatprep.subr.mxu0 0.0
      %2787 = vmatpush1.xpose.msra.mxu0 0.0
      %2788 = vmatprep.subr.mxu0 0.0
      %2789 = vmatpush1.xpose.msra.mxu0 0.0
      %2790 = vmatprep.subr.mxu0 0.0
      %2791 = vmatpush1.xpose.msra.mxu0 0.0
      %2792 = vmatprep.subr.mxu0 0.0
      %2793 = vmatpush1.xpose.msra.mxu0 0.0
      %2794 = vmatprep.subr.mxu0 0.0
      %2795 = vmatpush1.xpose.msra.mxu0 0.0
      %2796 = vmatprep.subr.mxu0 0.0
      %2797 = vmatpush1.xpose.msra.mxu0 0.0
      %2798 = vmatprep.subr.mxu0 0.0
      %2799 = vmatpush1.xpose.msra.mxu0 0.0
      %2800 = vmatprep.subr.mxu0 0.0
      %2801 = vmatpush1.xpose.msra.mxu0 0.0
      %2802 = vmatprep.subr.mxu0 0.0
      %2803 = vmatpush1.xpose.msra.mxu0 0.0
      %2804 = vmatprep.subr.mxu0 0.0
      %2805 = vmatpush1.xpose.msra.mxu0 0.0
      %2806 = vmatprep.subr.mxu0 0.0
      %2807 = vmatpush1.xpose.msra.mxu0 0.0
      %2808 = vmatprep.subr.mxu0 0.0
      %2809 = vmatpush1.xpose.msra.mxu0 0.0
      %2810 = vmatprep.subr.mxu0 0.0
      %2811 = vmatpush1.xpose.msra.mxu0 0.0
      %2812 = vmatprep.subr.mxu0 0.0
      %2813 = vmatpush1.xpose.msra.mxu0 0.0
      %2814 = vmatprep.subr.mxu0 0.0
      %2815 = vmatpush1.xpose.msra.mxu0 0.0
      %2816 = vmatprep.subr.mxu0 0.0
      %2817 = vmatpush1.xpose.msra.mxu0 0.0
      %2818 = vmatprep.subr.mxu0 0.0
      %2819 = vmatpush1.xpose.msra.mxu0 0.0
      %2820 = vmatprep.subr.mxu0 0.0
      %2821 = vmatpush1.xpose.msra.mxu0 0.0
      %2822 = vmatprep.subr.mxu0 0.0
      %2823 = vmatpush1.xpose.msra.mxu0 0.0
      %2824 = vmatprep.subr.mxu0 0.0
      %2825 = vmatpush1.xpose.msra.mxu0 0.0
      %2826 = vmatprep.subr.mxu0 0.0
      %2827 = vmatpush1.xpose.msra.mxu0 0.0
      %2828 = vmatprep.subr.mxu0 0.0
      %2829 = vmatpush1.xpose.msra.mxu0 0.0
      %2830 = vmatprep.subr.mxu0 0.0
      %2831 = vmatpush1.xpose.msra.mxu0 0.0
      %2832 = vmatprep.subr.mxu0 0.0
      %2833 = vmatpush1.xpose.msra.mxu0 0.0
      %2834 = vmatprep.subr.mxu0 0.0
      %2835 = vmatpush1.xpose.msra.mxu0 0.0
      %2836 = vmatprep.subr.mxu0 0.0
      %2837 = vmatpush1.xpose.msra.mxu0 0.0
      %2838 = vmatprep.mubr.f32.mxu0 0.0
      %2839 = vmatmul.mubr.f32.gmra.mrb[0].mxu0 %v2770
      %v2840 = vpop.f32.mrb[0].mxu0
      %v2841 = vadd.f32 0.0, %v2840
      %v2842 = vpop.f32.mrb[0].mxu0
      %2843 = vmatprep.mubr.f32.mxu0 0.0
      %2844 = vmatmul.mubr.f32.gmra.mrb[0].mxu0 %v2772
      %v2845 = vpop.f32.mrb[0].mxu0
      %v2846 = vadd.f32 0.0, %v2845
      %v2847 = vpop.f32.mrb[0].mxu0
      %2848 = vdwg.mxu0
      %v2849 = vmul.f32 %v2762, %v2762
      %v2850 = vmul.f32 %v2763, %v2763
      %2853 = vrot.lane.b32.xlu0 %v2849, 80
      %v2854 = vpop.permute.xlu0 %2853
      %2855 = vrot.lane.b32.xlu0 %v2850, 80
      %v2856 = vpop.permute.xlu0 %2855
      %v2859 = vsel %vm1075, %v2854, 0.0
      %2860 = vadd.xlane.f32.xlu0 %v2859
      %v2861 = vpop.xlane.xlu0 %2860
      %v2862 = vsel %vm1075, %v2856, 0.0
      %2863 = vadd.xlane.f32.xlu0 %v2862
      %v2864 = vpop.xlane.xlu0 %2863
      %v2865 = vadd.f32 %v2861, %v1181
      %v2866 = vadd.f32 %v2864, %v1181
      %v2867 = vmul.f32 %v2841, 2.0
      %v2868 = vmul.f32 %v2846, 2.0
      %v2869 = vsub.f32 %v2865, %v2867
      %v2870 = vsub.f32 %v2866, %v2868
      %v2871 = vsel %vm1189, %v2869, inf
      %2872 = vmin.xlane.f32.xlu0 %v2871
      %v2873 = vpop.xlane.xlu0 %2872
      %v2874 = vsel %vm1189, %v2870, inf
      %2875 = vmin.xlane.f32.xlu0 %v2874
      %v2876 = vpop.xlane.xlu0 %2875
      %vm2877 = vcmp.le.f32.partialorder %v2869, %v2873
      %vm2878 = vcmp.le.f32.partialorder %v2870, %v2876
      %v2879 = vsel %vm2877, %v1197, 32
      %v2880 = vsel %vm2878, %v1197, 32
      %v2881 = vsel %vm1189, %v2879, 2147483647
      %v2882 = vand.u32 %v2881, 65535
      %v2883 = vshra.s32 %v2881, 16
      %v2884 = vcvt.s32.f32 %v2882
      %v2885 = vcvt.s32.f32 %v2883
      %2886 = vmin.xlane.f32.xlu0 %v2885
      %v2887 = vpop.xlane.xlu0 %2886
      %vm2888 = vcmp.eq.f32.partialorder %v2885, %v2887
      %v2889 = vsel %vm2888, %v2884, inf
      %2890 = vmin.xlane.f32.xlu0 %v2889
      %v2891 = vpop.xlane.xlu0 %2890
      %v2892 = vcvt.f32.s32 %v2891
      %v2893 = vcvt.f32.s32 %v2887
      %v2894 = vshll.u32 %v2893, 16
      %v2895 = vadd.s32 %v2894, %v2892
      %v2896 = vsel %vm1189, %v2880, 2147483647
      %v2897 = vand.u32 %v2896, 65535
      %v2898 = vshra.s32 %v2896, 16
      %v2899 = vcvt.s32.f32 %v2897
      %v2900 = vcvt.s32.f32 %v2898
      %2901 = vmin.xlane.f32.xlu0 %v2900
      %v2902 = vpop.xlane.xlu0 %2901
      %vm2903 = vcmp.eq.f32.partialorder %v2900, %v2902
      %v2904 = vsel %vm2903, %v2899, inf
      %2905 = vmin.xlane.f32.xlu0 %v2904
      %v2906 = vpop.xlane.xlu0 %2905
      %v2907 = vcvt.f32.s32 %v2906
      %v2908 = vcvt.f32.s32 %v2902
      %v2909 = vshll.u32 %v2908, 16
      %v2910 = vadd.s32 %v2909, %v2907
      %vm2911 = vcmp.eq.s32.totalorder %v1197, %v2895
      %vm2912 = vcmp.eq.s32.totalorder %v1197, %v2910
      %v2913 = vsel %vm2911, 1, 0
      %v2914 = vsel %vm2912, 1, 0
      %v2915 = vcvt.s32.f32 %v2913
      %v2916 = vcvt.s32.f32 %v2914
      %v2918 = vsel %vm1189, %v2915, 0
      %v2921 = vsel %vm1189, %v2916, 0
      %2923 = vmatprep.subr.mxu0 0.0
      %2924 = vmatpush1.msra.mxu0 %v1068
      %2925 = vmatprep.subr.mxu0 0.0
      %2926 = vmatpush1.msra.mxu0 %v1069
      %2927 = vmatprep.subr.mxu0 0.0
      %2928 = vmatpush1.msra.mxu0 %v1070
      %2929 = vmatprep.subr.mxu0 0.0
      %2930 = vmatpush1.msra.mxu0 %v1071
      %2931 = vmatprep.subr.mxu0 0.0
      %2932 = vmatpush1.msra.mxu0 0.0
      %2933 = vmatprep.subr.mxu0 0.0
      %2934 = vmatpush1.msra.mxu0 0.0
      %2935 = vmatprep.subr.mxu0 0.0
      %2936 = vmatpush1.msra.mxu0 0.0
      %2937 = vmatprep.subr.mxu0 0.0
      %2938 = vmatpush1.msra.mxu0 0.0
      %2939 = vmatprep.subr.mxu0 0.0
      %2940 = vmatpush1.msra.mxu0 0.0
      %2941 = vmatprep.subr.mxu0 0.0
      %2942 = vmatpush1.msra.mxu0 0.0
      %2943 = vmatprep.subr.mxu0 0.0
      %2944 = vmatpush1.msra.mxu0 0.0
      %2945 = vmatprep.subr.mxu0 0.0
      %2946 = vmatpush1.msra.mxu0 0.0
      %2947 = vmatprep.subr.mxu0 0.0
      %2948 = vmatpush1.msra.mxu0 0.0
      %2949 = vmatprep.subr.mxu0 0.0
      %2950 = vmatpush1.msra.mxu0 0.0
      %2951 = vmatprep.subr.mxu0 0.0
      %2952 = vmatpush1.msra.mxu0 0.0
      %2953 = vmatprep.subr.mxu0 0.0
      %2954 = vmatpush1.msra.mxu0 0.0
      %2955 = vmatprep.subr.mxu0 0.0
      %2956 = vmatpush1.msra.mxu0 0.0
      %2957 = vmatprep.subr.mxu0 0.0
      %2958 = vmatpush1.msra.mxu0 0.0
      %2959 = vmatprep.subr.mxu0 0.0
      %2960 = vmatpush1.msra.mxu0 0.0
      %2961 = vmatprep.subr.mxu0 0.0
      %2962 = vmatpush1.msra.mxu0 0.0
      %2963 = vmatprep.subr.mxu0 0.0
      %2964 = vmatpush1.msra.mxu0 0.0
      %2965 = vmatprep.subr.mxu0 0.0
      %2966 = vmatpush1.msra.mxu0 0.0
      %2967 = vmatprep.subr.mxu0 0.0
      %2968 = vmatpush1.msra.mxu0 0.0
      %2969 = vmatprep.subr.mxu0 0.0
      %2970 = vmatpush1.msra.mxu0 0.0
      %2971 = vmatprep.subr.mxu0 0.0
      %2972 = vmatpush1.msra.mxu0 0.0
      %2973 = vmatprep.subr.mxu0 0.0
      %2974 = vmatpush1.msra.mxu0 0.0
      %2975 = vmatprep.subr.mxu0 0.0
      %2976 = vmatpush1.msra.mxu0 0.0
      %2977 = vmatprep.subr.mxu0 0.0
      %2978 = vmatpush1.msra.mxu0 0.0
      %2979 = vmatprep.subr.mxu0 0.0
      %2980 = vmatpush1.msra.mxu0 0.0
      %2981 = vmatprep.subr.mxu0 0.0
      %2982 = vmatpush1.msra.mxu0 0.0
      %2983 = vmatprep.subr.mxu0 0.0
      %2984 = vmatpush1.msra.mxu0 0.0
      %2985 = vmatprep.subr.mxu0 0.0
      %2986 = vmatpush1.msra.mxu0 0.0
      %2987 = vmatprep.mubr.f32.mxu0 0.0
      %2988 = vmatmul.mubr.f32.gmra.mrb[0].mxu0 %v2918
      %v2989 = vpop.f32.mrb[0].mxu0
      %v2990 = vadd.f32 0.0, %v2989
      %v2991 = vpop.f32.mrb[0].mxu0
      %2992 = vmatprep.mubr.f32.mxu0 0.0
      %2993 = vmatmul.mubr.f32.gmra.mrb[0].mxu0 %v2921
      %v2994 = vpop.f32.mrb[0].mxu0
      %v2995 = vadd.f32 0.0, %v2994
      %v2996 = vpop.f32.mrb[0].mxu0
      %2997 = vdwg.mxu0
      %3000 = vrot.lane.b32.xlu0 %v2990, 48
      %v3001 = vpop.permute.xlu0 %3000
      %3002 = vrot.lane.b32.xlu0 %v2995, 48
      %v3003 = vpop.permute.xlu0 %3002
      %v3006 = vsub.f32 %v2762, %v3001
      %v3007 = vsub.f32 %v2763, %v3003
      %v3008 = vmul.f32 %v3006, %v3006
      %v3009 = vmul.f32 %v3007, %v3007
      %3012 = vrot.lane.b32.xlu0 %v3008, 80
      %v3013 = vpop.permute.xlu0 %3012
      %3014 = vrot.lane.b32.xlu0 %v3009, 80
      %v3015 = vpop.permute.xlu0 %3014
      %v3018 = vsel %vm1075, %v3013, 0.0
      %3019 = vadd.xlane.f32.xlu0 %v3018
      %v3020 = vpop.xlane.xlu0 %3019
      %v3021 = vsel %vm1075, %v3015, 0.0
      %3022 = vadd.xlane.f32.xlu0 %v3021
      %v3023 = vpop.xlane.xlu0 %3022
      %v3024 = vadd.f32 %v2742, %v3020
      %v3025 = vadd.f32 %v2743, %v3023
      %v3026 = vrot.slane %v2990, 7
      %v3027 = vrot.slane %v2995, 7
      %v3028 = vsel %vm1333, %v3026, %v3027
      %3029 = vrot.lane.b32.xlu0 %v3026, 56
      %v3030 = vpop.permute.xlu0 %3029
      %3031 = vrot.lane.b32.xlu0 %v3028, 56
      %v3032 = vpop.permute.xlu0 %3031
      %3033 = vrot.lane.b32.xlu0 %v3027, 56
      %v3034 = vpop.permute.xlu0 %3033
      %vm3038 = vcmask 523713
      %3039 = vst.msk [vmem:[#allocation3] sm:$0xfe] %vm3038, %v3030
      %vm3040 = vcmask 523712
      %3041 = vst.msk [vmem:[#allocation3 + $0x10] sm:$0xff] %vm3040, %v3032
      %vm3042 = vcmask 516544
      %3043 = vst.msk [vmem:[#allocation3 + $0x20] sm:$0x1] %vm3042, %v3034
      %v3044 = vld [vmem:[#allocation2] sm:$0xff]
      %v3045 = vld [vmem:[#allocation2 + $0x8] sm:$0xff]
      %3048 = vrot.lane.b32.xlu0 %v3044, 72
      %v3049 = vpop.permute.xlu0 %3048
      %3050 = vrot.lane.b32.xlu0 %v3045, 72
      %v3051 = vpop.permute.xlu0 %3050
      %v3052 = vsel %vm1075, %v3049, 0
      %v3054 = vsel %vm1075, %v3051, 0
      %3056 = vmatprep.subr.mxu0 0.0
      %3057 = vmatpush1.xpose.msra.mxu0 %v1083
      %3058 = vmatprep.subr.mxu0 0.0
      %3059 = vmatpush1.xpose.msra.mxu0 %v1086
      %3060 = vmatprep.subr.mxu0 0.0
      %3061 = vmatpush1.xpose.msra.mxu0 %v1089
      %3062 = vmatprep.subr.mxu0 0.0
      %3063 = vmatpush1.xpose.msra.mxu0 %v1092
      %3064 = vmatprep.subr.mxu0 0.0
      %3065 = vmatpush1.xpose.msra.mxu0 0.0
      %3066 = vmatprep.subr.mxu0 0.0
      %3067 = vmatpush1.xpose.msra.mxu0 0.0
      %3068 = vmatprep.subr.mxu0 0.0
      %3069 = vmatpush1.xpose.msra.mxu0 0.0
      %3070 = vmatprep.subr.mxu0 0.0
      %3071 = vmatpush1.xpose.msra.mxu0 0.0
      %3072 = vmatprep.subr.mxu0 0.0
      %3073 = vmatpush1.xpose.msra.mxu0 0.0
      %3074 = vmatprep.subr.mxu0 0.0
      %3075 = vmatpush1.xpose.msra.mxu0 0.0
      %3076 = vmatprep.subr.mxu0 0.0
      %3077 = vmatpush1.xpose.msra.mxu0 0.0
      %3078 = vmatprep.subr.mxu0 0.0
      %3079 = vmatpush1.xpose.msra.mxu0 0.0
      %3080 = vmatprep.subr.mxu0 0.0
      %3081 = vmatpush1.xpose.msra.mxu0 0.0
      %3082 = vmatprep.subr.mxu0 0.0
      %3083 = vmatpush1.xpose.msra.mxu0 0.0
      %3084 = vmatprep.subr.mxu0 0.0
      %3085 = vmatpush1.xpose.msra.mxu0 0.0
      %3086 = vmatprep.subr.mxu0 0.0
      %3087 = vmatpush1.xpose.msra.mxu0 0.0
      %3088 = vmatprep.subr.mxu0 0.0
      %3089 = vmatpush1.xpose.msra.mxu0 0.0
      %3090 = vmatprep.subr.mxu0 0.0
      %3091 = vmatpush1.xpose.msra.mxu0 0.0
      %3092 = vmatprep.subr.mxu0 0.0
      %3093 = vmatpush1.xpose.msra.mxu0 0.0
      %3094 = vmatprep.subr.mxu0 0.0
      %3095 = vmatpush1.xpose.msra.mxu0 0.0
      %3096 = vmatprep.subr.mxu0 0.0
      %3097 = vmatpush1.xpose.msra.mxu0 0.0
      %3098 = vmatprep.subr.mxu0 0.0
      %3099 = vmatpush1.xpose.msra.mxu0 0.0
      %3100 = vmatprep.subr.mxu0 0.0
      %3101 = vmatpush1.xpose.msra.mxu0 0.0
      %3102 = vmatprep.subr.mxu0 0.0
      %3103 = vmatpush1.xpose.msra.mxu0 0.0
      %3104 = vmatprep.subr.mxu0 0.0
      %3105 = vmatpush1.xpose.msra.mxu0 0.0
      %3106 = vmatprep.subr.mxu0 0.0
      %3107 = vmatpush1.xpose.msra.mxu0 0.0
      %3108 = vmatprep.subr.mxu0 0.0
      %3109 = vmatpush1.xpose.msra.mxu0 0.0
      %3110 = vmatprep.subr.mxu0 0.0
      %3111 = vmatpush1.xpose.msra.mxu0 0.0
      %3112 = vmatprep.subr.mxu0 0.0
      %3113 = vmatpush1.xpose.msra.mxu0 0.0
      %3114 = vmatprep.subr.mxu0 0.0
      %3115 = vmatpush1.xpose.msra.mxu0 0.0
      %3116 = vmatprep.subr.mxu0 0.0
      %3117 = vmatpush1.xpose.msra.mxu0 0.0
      %3118 = vmatprep.subr.mxu0 0.0
      %3119 = vmatpush1.xpose.msra.mxu0 0.0
      %3120 = vmatprep.mubr.f32.mxu0 0.0
      %3121 = vmatmul.mubr.f32.gmra.mrb[0].mxu0 %v3052
      %v3122 = vpop.f32.mrb[0].mxu0
      %v3123 = vadd.f32 0.0, %v3122
      %v3124 = vpop.f32.mrb[0].mxu0
      %3125 = vmatprep.mubr.f32.mxu0 0.0
      %3126 = vmatmul.mubr.f32.gmra.mrb[0].mxu0 %v3054
      %v3127 = vpop.f32.mrb[0].mxu0
      %v3128 = vadd.f32 0.0, %v3127
      %v3129 = vpop.f32.mrb[0].mxu0
      %3130 = vdwg.mxu0
      %v3131 = vmul.f32 %v3044, %v3044
      %v3132 = vmul.f32 %v3045, %v3045
      %3135 = vrot.lane.b32.xlu0 %v3131, 72
      %v3136 = vpop.permute.xlu0 %3135
      %3137 = vrot.lane.b32.xlu0 %v3132, 72
      %v3138 = vpop.permute.xlu0 %3137
      %v3141 = vsel %vm1075, %v3136, 0.0
      %3142 = vadd.xlane.f32.xlu0 %v3141
      %v3143 = vpop.xlane.xlu0 %3142
      %v3144 = vsel %vm1075, %v3138, 0.0
      %3145 = vadd.xlane.f32.xlu0 %v3144
      %v3146 = vpop.xlane.xlu0 %3145
      %v3147 = vadd.f32 %v3143, %v1181
      %v3148 = vadd.f32 %v3146, %v1181
      %v3149 = vmul.f32 %v3123, 2.0
      %v3150 = vmul.f32 %v3128, 2.0
      %v3151 = vsub.f32 %v3147, %v3149
      %v3152 = vsub.f32 %v3148, %v3150
      %v3153 = vsel %vm1189, %v3151, inf
      %3154 = vmin.xlane.f32.xlu0 %v3153
      %v3155 = vpop.xlane.xlu0 %3154
      %v3156 = vsel %vm1189, %v3152, inf
      %3157 = vmin.xlane.f32.xlu0 %v3156
      %v3158 = vpop.xlane.xlu0 %3157
      %vm3159 = vcmp.le.f32.partialorder %v3151, %v3155
      %vm3160 = vcmp.le.f32.partialorder %v3152, %v3158
      %v3161 = vsel %vm3159, %v1197, 32
      %v3162 = vsel %vm3160, %v1197, 32
      %v3163 = vsel %vm1189, %v3161, 2147483647
      %v3164 = vand.u32 %v3163, 65535
      %v3165 = vshra.s32 %v3163, 16
      %v3166 = vcvt.s32.f32 %v3164
      %v3167 = vcvt.s32.f32 %v3165
      %3168 = vmin.xlane.f32.xlu0 %v3167
      %v3169 = vpop.xlane.xlu0 %3168
      %vm3170 = vcmp.eq.f32.partialorder %v3167, %v3169
      %v3171 = vsel %vm3170, %v3166, inf
      %3172 = vmin.xlane.f32.xlu0 %v3171
      %v3173 = vpop.xlane.xlu0 %3172
      %v3174 = vcvt.f32.s32 %v3173
      %v3175 = vcvt.f32.s32 %v3169
      %v3176 = vshll.u32 %v3175, 16
      %v3177 = vadd.s32 %v3176, %v3174
      %v3178 = vsel %vm1189, %v3162, 2147483647
      %v3179 = vand.u32 %v3178, 65535
      %v3180 = vshra.s32 %v3178, 16
      %v3181 = vcvt.s32.f32 %v3179
      %v3182 = vcvt.s32.f32 %v3180
      %3183 = vmin.xlane.f32.xlu0 %v3182
      %v3184 = vpop.xlane.xlu0 %3183
      %vm3185 = vcmp.eq.f32.partialorder %v3182, %v3184
      %v3186 = vsel %vm3185, %v3181, inf
      %3187 = vmin.xlane.f32.xlu0 %v3186
      %v3188 = vpop.xlane.xlu0 %3187
      %v3189 = vcvt.f32.s32 %v3188
      %v3190 = vcvt.f32.s32 %v3184
      %v3191 = vshll.u32 %v3190, 16
      %v3192 = vadd.s32 %v3191, %v3189
      %vm3193 = vcmp.eq.s32.totalorder %v1197, %v3177
      %vm3194 = vcmp.eq.s32.totalorder %v1197, %v3192
      %v3195 = vsel %vm3193, 1, 0
      %v3196 = vsel %vm3194, 1, 0
      %v3197 = vcvt.s32.f32 %v3195
      %v3198 = vcvt.s32.f32 %v3196
      %v3200 = vsel %vm1189, %v3197, 0
      %v3203 = vsel %vm1189, %v3198, 0
      %3205 = vmatprep.subr.mxu0 0.0
      %3206 = vmatpush1.msra.mxu0 %v1068
      %3207 = vmatprep.subr.mxu0 0.0
      %3208 = vmatpush1.msra.mxu0 %v1069
      %3209 = vmatprep.subr.mxu0 0.0
      %3210 = vmatpush1.msra.mxu0 %v1070
      %3211 = vmatprep.subr.mxu0 0.0
      %3212 = vmatpush1.msra.mxu0 %v1071
      %3213 = vmatprep.subr.mxu0 0.0
      %3214 = vmatpush1.msra.mxu0 0.0
      %3215 = vmatprep.subr.mxu0 0.0
      %3216 = vmatpush1.msra.mxu0 0.0
      %3217 = vmatprep.subr.mxu0 0.0
      %3218 = vmatpush1.msra.mxu0 0.0
      %3219 = vmatprep.subr.mxu0 0.0
      %3220 = vmatpush1.msra.mxu0 0.0
      %3221 = vmatprep.subr.mxu0 0.0
      %3222 = vmatpush1.msra.mxu0 0.0
      %3223 = vmatprep.subr.mxu0 0.0
      %3224 = vmatpush1.msra.mxu0 0.0
      %3225 = vmatprep.subr.mxu0 0.0
      %3226 = vmatpush1.msra.mxu0 0.0
      %3227 = vmatprep.subr.mxu0 0.0
      %3228 = vmatpush1.msra.mxu0 0.0
      %3229 = vmatprep.subr.mxu0 0.0
      %3230 = vmatpush1.msra.mxu0 0.0
      %3231 = vmatprep.subr.mxu0 0.0
      %3232 = vmatpush1.msra.mxu0 0.0
      %3233 = vmatprep.subr.mxu0 0.0
      %3234 = vmatpush1.msra.mxu0 0.0
      %3235 = vmatprep.subr.mxu0 0.0
      %3236 = vmatpush1.msra.mxu0 0.0
      %3237 = vmatprep.subr.mxu0 0.0
      %3238 = vmatpush1.msra.mxu0 0.0
      %3239 = vmatprep.subr.mxu0 0.0
      %3240 = vmatpush1.msra.mxu0 0.0
      %3241 = vmatprep.subr.mxu0 0.0
      %3242 = vmatpush1.msra.mxu0 0.0
      %3243 = vmatprep.subr.mxu0 0.0
      %3244 = vmatpush1.msra.mxu0 0.0
      %3245 = vmatprep.subr.mxu0 0.0
      %3246 = vmatpush1.msra.mxu0 0.0
      %3247 = vmatprep.subr.mxu0 0.0
      %3248 = vmatpush1.msra.mxu0 0.0
      %3249 = vmatprep.subr.mxu0 0.0
      %3250 = vmatpush1.msra.mxu0 0.0
      %3251 = vmatprep.subr.mxu0 0.0
      %3252 = vmatpush1.msra.mxu0 0.0
      %3253 = vmatprep.subr.mxu0 0.0
      %3254 = vmatpush1.msra.mxu0 0.0
      %3255 = vmatprep.subr.mxu0 0.0
      %3256 = vmatpush1.msra.mxu0 0.0
      %3257 = vmatprep.subr.mxu0 0.0
      %3258 = vmatpush1.msra.mxu0 0.0
      %3259 = vmatprep.subr.mxu0 0.0
      %3260 = vmatpush1.msra.mxu0 0.0
      %3261 = vmatprep.subr.mxu0 0.0
      %3262 = vmatpush1.msra.mxu0 0.0
      %3263 = vmatprep.subr.mxu0 0.0
      %3264 = vmatpush1.msra.mxu0 0.0
      %3265 = vmatprep.subr.mxu0 0.0
      %3266 = vmatpush1.msra.mxu0 0.0
      %3267 = vmatprep.subr.mxu0 0.0
      %3268 = vmatpush1.msra.mxu0 0.0
      %3269 = vmatprep.mubr.f32.mxu0 0.0
      %3270 = vmatmul.mubr.f32.gmra.mrb[0].mxu0 %v3200
      %v3271 = vpop.f32.mrb[0].mxu0
      %v3272 = vadd.f32 0.0, %v3271
      %v3273 = vpop.f32.mrb[0].mxu0
      %3274 = vmatprep.mubr.f32.mxu0 0.0
      %3275 = vmatmul.mubr.f32.gmra.mrb[0].mxu0 %v3203
      %v3276 = vpop.f32.mrb[0].mxu0
      %v3277 = vadd.f32 0.0, %v3276
      %v3278 = vpop.f32.mrb[0].mxu0
      %3279 = vdwg.mxu0
      %3282 = vrot.lane.b32.xlu0 %v3272, 56
      %v3283 = vpop.permute.xlu0 %3282
      %3284 = vrot.lane.b32.xlu0 %v3277, 56
      %v3285 = vpop.permute.xlu0 %3284
      %v3288 = vsub.f32 %v3044, %v3283
      %v3289 = vsub.f32 %v3045, %v3285
      %v3290 = vmul.f32 %v3288, %v3288
      %v3291 = vmul.f32 %v3289, %v3289
      %3294 = vrot.lane.b32.xlu0 %v3290, 72
      %v3295 = vpop.permute.xlu0 %3294
      %3296 = vrot.lane.b32.xlu0 %v3291, 72
      %v3297 = vpop.permute.xlu0 %3296
      %v3300 = vsel %vm1075, %v3295, 0.0
      %3301 = vadd.xlane.f32.xlu0 %v3300
      %v3302 = vpop.xlane.xlu0 %3301
      %v3303 = vsel %vm1075, %v3297, 0.0
      %3304 = vadd.xlane.f32.xlu0 %v3303
      %v3305 = vpop.xlane.xlu0 %3304
      %v3306 = vadd.f32 %v3024, %v3302
      %v3307 = vadd.f32 %v3025, %v3305
      %v3308 = vrot.slane %v3272, 7
      %v3309 = vrot.slane %v3277, 7
      %v3310 = vsel %vm1333, %v3308, %v3309
      %3311 = vrot.lane.b32.xlu0 %v3308, 64
      %v3312 = vpop.permute.xlu0 %3311
      %3313 = vrot.lane.b32.xlu0 %v3310, 64
      %v3314 = vpop.permute.xlu0 %3313
      %3315 = vrot.lane.b32.xlu0 %v3309, 64
      %v3316 = vpop.permute.xlu0 %3315
      %vm3320 = vcmask 589313
      %3321 = vst.msk [vmem:[#allocation3] sm:$0xfe] %vm3320, %v3312
      %vm3322 = vcmask 589312
      %3323 = vst.msk [vmem:[#allocation3 + $0x10] sm:$0xff] %vm3322, %v3314
      %vm3324 = vcmask 582144
      %3325 = vst.msk [vmem:[#allocation3 + $0x20] sm:$0x1] %vm3324, %v3316
      %v3326 = vld [vmem:[#allocation2] sm:$0xff]
      %v3327 = vld [vmem:[#allocation2 + $0x8] sm:$0xff]
      %3330 = vrot.lane.b32.xlu0 %v3326, 64
      %v3331 = vpop.permute.xlu0 %3330
      %3332 = vrot.lane.b32.xlu0 %v3327, 64
      %v3333 = vpop.permute.xlu0 %3332
      %v3334 = vsel %vm1075, %v3331, 0
      %v3336 = vsel %vm1075, %v3333, 0
      %3338 = vmatprep.subr.mxu0 0.0
      %3339 = vmatpush1.xpose.msra.mxu0 %v1083
      %3340 = vmatprep.subr.mxu0 0.0
      %3341 = vmatpush1.xpose.msra.mxu0 %v1086
      %3342 = vmatprep.subr.mxu0 0.0
      %3343 = vmatpush1.xpose.msra.mxu0 %v1089
      %3344 = vmatprep.subr.mxu0 0.0
      %3345 = vmatpush1.xpose.msra.mxu0 %v1092
      %3346 = vmatprep.subr.mxu0 0.0
      %3347 = vmatpush1.xpose.msra.mxu0 0.0
      %3348 = vmatprep.subr.mxu0 0.0
      %3349 = vmatpush1.xpose.msra.mxu0 0.0
      %3350 = vmatprep.subr.mxu0 0.0
      %3351 = vmatpush1.xpose.msra.mxu0 0.0
      %3352 = vmatprep.subr.mxu0 0.0
      %3353 = vmatpush1.xpose.msra.mxu0 0.0
      %3354 = vmatprep.subr.mxu0 0.0
      %3355 = vmatpush1.xpose.msra.mxu0 0.0
      %3356 = vmatprep.subr.mxu0 0.0
      %3357 = vmatpush1.xpose.msra.mxu0 0.0
      %3358 = vmatprep.subr.mxu0 0.0
      %3359 = vmatpush1.xpose.msra.mxu0 0.0
      %3360 = vmatprep.subr.mxu0 0.0
      %3361 = vmatpush1.xpose.msra.mxu0 0.0
      %3362 = vmatprep.subr.mxu0 0.0
      %3363 = vmatpush1.xpose.msra.mxu0 0.0
      %3364 = vmatprep.subr.mxu0 0.0
      %3365 = vmatpush1.xpose.msra.mxu0 0.0
      %3366 = vmatprep.subr.mxu0 0.0
      %3367 = vmatpush1.xpose.msra.mxu0 0.0
      %3368 = vmatprep.subr.mxu0 0.0
      %3369 = vmatpush1.xpose.msra.mxu0 0.0
      %3370 = vmatprep.subr.mxu0 0.0
      %3371 = vmatpush1.xpose.msra.mxu0 0.0
      %3372 = vmatprep.subr.mxu0 0.0
      %3373 = vmatpush1.xpose.msra.mxu0 0.0
      %3374 = vmatprep.subr.mxu0 0.0
      %3375 = vmatpush1.xpose.msra.mxu0 0.0
      %3376 = vmatprep.subr.mxu0 0.0
      %3377 = vmatpush1.xpose.msra.mxu0 0.0
      %3378 = vmatprep.subr.mxu0 0.0
      %3379 = vmatpush1.xpose.msra.mxu0 0.0
      %3380 = vmatprep.subr.mxu0 0.0
      %3381 = vmatpush1.xpose.msra.mxu0 0.0
      %3382 = vmatprep.subr.mxu0 0.0
      %3383 = vmatpush1.xpose.msra.mxu0 0.0
      %3384 = vmatprep.subr.mxu0 0.0
      %3385 = vmatpush1.xpose.msra.mxu0 0.0
      %3386 = vmatprep.subr.mxu0 0.0
      %3387 = vmatpush1.xpose.msra.mxu0 0.0
      %3388 = vmatprep.subr.mxu0 0.0
      %3389 = vmatpush1.xpose.msra.mxu0 0.0
      %3390 = vmatprep.subr.mxu0 0.0
      %3391 = vmatpush1.xpose.msra.mxu0 0.0
      %3392 = vmatprep.subr.mxu0 0.0
      %3393 = vmatpush1.xpose.msra.mxu0 0.0
      %3394 = vmatprep.subr.mxu0 0.0
      %3395 = vmatpush1.xpose.msra.mxu0 0.0
      %3396 = vmatprep.subr.mxu0 0.0
      %3397 = vmatpush1.xpose.msra.mxu0 0.0
      %3398 = vmatprep.subr.mxu0 0.0
      %3399 = vmatpush1.xpose.msra.mxu0 0.0
      %3400 = vmatprep.subr.mxu0 0.0
      %3401 = vmatpush1.xpose.msra.mxu0 0.0
      %3402 = vmatprep.mubr.f32.mxu0 0.0
      %3403 = vmatmul.mubr.f32.gmra.mrb[0].mxu0 %v3334
      %v3404 = vpop.f32.mrb[0].mxu0
      %v3405 = vadd.f32 0.0, %v3404
      %v3406 = vpop.f32.mrb[0].mxu0
      %3407 = vmatprep.mubr.f32.mxu0 0.0
      %3408 = vmatmul.mubr.f32.gmra.mrb[0].mxu0 %v3336
      %v3409 = vpop.f32.mrb[0].mxu0
      %v3410 = vadd.f32 0.0, %v3409
      %v3411 = vpop.f32.mrb[0].mxu0
      %3412 = vdwg.mxu0
      %v3413 = vmul.f32 %v3326, %v3326
      %v3414 = vmul.f32 %v3327, %v3327
      %3417 = vrot.lane.b32.xlu0 %v3413, 64
      %v3418 = vpop.permute.xlu0 %3417
      %3419 = vrot.lane.b32.xlu0 %v3414, 64
      %v3420 = vpop.permute.xlu0 %3419
      %v3423 = vsel %vm1075, %v3418, 0.0
      %3424 = vadd.xlane.f32.xlu0 %v3423
      %v3425 = vpop.xlane.xlu0 %3424
      %v3426 = vsel %vm1075, %v3420, 0.0
      %3427 = vadd.xlane.f32.xlu0 %v3426
      %v3428 = vpop.xlane.xlu0 %3427
      %v3429 = vadd.f32 %v3425, %v1181
      %v3430 = vadd.f32 %v3428, %v1181
      %v3431 = vmul.f32 %v3405, 2.0
      %v3432 = vmul.f32 %v3410, 2.0
      %v3433 = vsub.f32 %v3429, %v3431
      %v3434 = vsub.f32 %v3430, %v3432
      %v3435 = vsel %vm1189, %v3433, inf
      %3436 = vmin.xlane.f32.xlu0 %v3435
      %v3437 = vpop.xlane.xlu0 %3436
      %v3438 = vsel %vm1189, %v3434, inf
      %3439 = vmin.xlane.f32.xlu0 %v3438
      %v3440 = vpop.xlane.xlu0 %3439
      %vm3441 = vcmp.le.f32.partialorder %v3433, %v3437
      %vm3442 = vcmp.le.f32.partialorder %v3434, %v3440
      %v3443 = vsel %vm3441, %v1197, 32
      %v3444 = vsel %vm3442, %v1197, 32
      %v3445 = vsel %vm1189, %v3443, 2147483647
      %v3446 = vand.u32 %v3445, 65535
      %v3447 = vshra.s32 %v3445, 16
      %v3448 = vcvt.s32.f32 %v3446
      %v3449 = vcvt.s32.f32 %v3447
      %3450 = vmin.xlane.f32.xlu0 %v3449
      %v3451 = vpop.xlane.xlu0 %3450
      %vm3452 = vcmp.eq.f32.partialorder %v3449, %v3451
      %v3453 = vsel %vm3452, %v3448, inf
      %3454 = vmin.xlane.f32.xlu0 %v3453
      %v3455 = vpop.xlane.xlu0 %3454
      %v3456 = vcvt.f32.s32 %v3455
      %v3457 = vcvt.f32.s32 %v3451
      %v3458 = vshll.u32 %v3457, 16
      %v3459 = vadd.s32 %v3458, %v3456
      %v3460 = vsel %vm1189, %v3444, 2147483647
      %v3461 = vand.u32 %v3460, 65535
      %v3462 = vshra.s32 %v3460, 16
      %v3463 = vcvt.s32.f32 %v3461
      %v3464 = vcvt.s32.f32 %v3462
      %3465 = vmin.xlane.f32.xlu0 %v3464
      %v3466 = vpop.xlane.xlu0 %3465
      %vm3467 = vcmp.eq.f32.partialorder %v3464, %v3466
      %v3468 = vsel %vm3467, %v3463, inf
      %3469 = vmin.xlane.f32.xlu0 %v3468
      %v3470 = vpop.xlane.xlu0 %3469
      %v3471 = vcvt.f32.s32 %v3470
      %v3472 = vcvt.f32.s32 %v3466
      %v3473 = vshll.u32 %v3472, 16
      %v3474 = vadd.s32 %v3473, %v3471
      %vm3475 = vcmp.eq.s32.totalorder %v1197, %v3459
      %vm3476 = vcmp.eq.s32.totalorder %v1197, %v3474
      %v3477 = vsel %vm3475, 1, 0
      %v3478 = vsel %vm3476, 1, 0
      %v3479 = vcvt.s32.f32 %v3477
      %v3480 = vcvt.s32.f32 %v3478
      %v3482 = vsel %vm1189, %v3479, 0
      %v3485 = vsel %vm1189, %v3480, 0
      %3487 = vmatprep.subr.mxu0 0.0
      %3488 = vmatpush1.msra.mxu0 %v1068
      %3489 = vmatprep.subr.mxu0 0.0
      %3490 = vmatpush1.msra.mxu0 %v1069
      %3491 = vmatprep.subr.mxu0 0.0
      %3492 = vmatpush1.msra.mxu0 %v1070
      %3493 = vmatprep.subr.mxu0 0.0
      %3494 = vmatpush1.msra.mxu0 %v1071
      %3495 = vmatprep.subr.mxu0 0.0
      %3496 = vmatpush1.msra.mxu0 0.0
      %3497 = vmatprep.subr.mxu0 0.0
      %3498 = vmatpush1.msra.mxu0 0.0
      %3499 = vmatprep.subr.mxu0 0.0
      %3500 = vmatpush1.msra.mxu0 0.0
      %3501 = vmatprep.subr.mxu0 0.0
      %3502 = vmatpush1.msra.mxu0 0.0
      %3503 = vmatprep.subr.mxu0 0.0
      %3504 = vmatpush1.msra.mxu0 0.0
      %3505 = vmatprep.subr.mxu0 0.0
      %3506 = vmatpush1.msra.mxu0 0.0
      %3507 = vmatprep.subr.mxu0 0.0
      %3508 = vmatpush1.msra.mxu0 0.0
      %3509 = vmatprep.subr.mxu0 0.0
      %3510 = vmatpush1.msra.mxu0 0.0
      %3511 = vmatprep.subr.mxu0 0.0
      %3512 = vmatpush1.msra.mxu0 0.0
      %3513 = vmatprep.subr.mxu0 0.0
      %3514 = vmatpush1.msra.mxu0 0.0
      %3515 = vmatprep.subr.mxu0 0.0
      %3516 = vmatpush1.msra.mxu0 0.0
      %3517 = vmatprep.subr.mxu0 0.0
      %3518 = vmatpush1.msra.mxu0 0.0
      %3519 = vmatprep.subr.mxu0 0.0
      %3520 = vmatpush1.msra.mxu0 0.0
      %3521 = vmatprep.subr.mxu0 0.0
      %3522 = vmatpush1.msra.mxu0 0.0
      %3523 = vmatprep.subr.mxu0 0.0
      %3524 = vmatpush1.msra.mxu0 0.0
      %3525 = vmatprep.subr.mxu0 0.0
      %3526 = vmatpush1.msra.mxu0 0.0
      %3527 = vmatprep.subr.mxu0 0.0
      %3528 = vmatpush1.msra.mxu0 0.0
      %3529 = vmatprep.subr.mxu0 0.0
      %3530 = vmatpush1.msra.mxu0 0.0
      %3531 = vmatprep.subr.mxu0 0.0
      %3532 = vmatpush1.msra.mxu0 0.0
      %3533 = vmatprep.subr.mxu0 0.0
      %3534 = vmatpush1.msra.mxu0 0.0
      %3535 = vmatprep.subr.mxu0 0.0
      %3536 = vmatpush1.msra.mxu0 0.0
      %3537 = vmatprep.subr.mxu0 0.0
      %3538 = vmatpush1.msra.mxu0 0.0
      %3539 = vmatprep.subr.mxu0 0.0
      %3540 = vmatpush1.msra.mxu0 0.0
      %3541 = vmatprep.subr.mxu0 0.0
      %3542 = vmatpush1.msra.mxu0 0.0
      %3543 = vmatprep.subr.mxu0 0.0
      %3544 = vmatpush1.msra.mxu0 0.0
      %3545 = vmatprep.subr.mxu0 0.0
      %3546 = vmatpush1.msra.mxu0 0.0
      %3547 = vmatprep.subr.mxu0 0.0
      %3548 = vmatpush1.msra.mxu0 0.0
      %3549 = vmatprep.subr.mxu0 0.0
      %3550 = vmatpush1.msra.mxu0 0.0
      %3551 = vmatprep.mubr.f32.mxu0 0.0
      %3552 = vmatmul.mubr.f32.gmra.mrb[0].mxu0 %v3482
      %v3553 = vpop.f32.mrb[0].mxu0
      %v3554 = vadd.f32 0.0, %v3553
      %v3555 = vpop.f32.mrb[0].mxu0
      %3556 = vmatprep.mubr.f32.mxu0 0.0
      %3557 = vmatmul.mubr.f32.gmra.mrb[0].mxu0 %v3485
      %v3558 = vpop.f32.mrb[0].mxu0
      %v3559 = vadd.f32 0.0, %v3558
      %v3560 = vpop.f32.mrb[0].mxu0
      %3561 = vdwg.mxu0
      %3564 = vrot.lane.b32.xlu0 %v3554, 64
      %v3565 = vpop.permute.xlu0 %3564
      %3566 = vrot.lane.b32.xlu0 %v3559, 64
      %v3567 = vpop.permute.xlu0 %3566
      %v3570 = vsub.f32 %v3326, %v3565
      %v3571 = vsub.f32 %v3327, %v3567
      %v3572 = vmul.f32 %v3570, %v3570
      %v3573 = vmul.f32 %v3571, %v3571
      %3576 = vrot.lane.b32.xlu0 %v3572, 64
      %v3577 = vpop.permute.xlu0 %3576
      %3578 = vrot.lane.b32.xlu0 %v3573, 64
      %v3579 = vpop.permute.xlu0 %3578
      %v3582 = vsel %vm1075, %v3577, 0.0
      %3583 = vadd.xlane.f32.xlu0 %v3582
      %v3584 = vpop.xlane.xlu0 %3583
      %v3585 = vsel %vm1075, %v3579, 0.0
      %3586 = vadd.xlane.f32.xlu0 %v3585
      %v3587 = vpop.xlane.xlu0 %3586
      %v3588 = vadd.f32 %v3306, %v3584
      %v3589 = vadd.f32 %v3307, %v3587
      %v3590 = vrot.slane %v3554, 7
      %v3591 = vrot.slane %v3559, 7
      %v3592 = vsel %vm1333, %v3590, %v3591
      %3593 = vrot.lane.b32.xlu0 %v3590, 72
      %v3594 = vpop.permute.xlu0 %3593
      %3595 = vrot.lane.b32.xlu0 %v3592, 72
      %v3596 = vpop.permute.xlu0 %3595
      %3597 = vrot.lane.b32.xlu0 %v3591, 72
      %v3598 = vpop.permute.xlu0 %3597
      %vm3602 = vcmask 654913
      %3603 = vst.msk [vmem:[#allocation3] sm:$0xfe] %vm3602, %v3594
      %vm3604 = vcmask 654912
      %3605 = vst.msk [vmem:[#allocation3 + $0x10] sm:$0xff] %vm3604, %v3596
      %vm3606 = vcmask 647744
      %3607 = vst.msk [vmem:[#allocation3 + $0x20] sm:$0x1] %vm3606, %v3598
      %v3608 = vld [vmem:[#allocation2] sm:$0xff]
      %v3609 = vld [vmem:[#allocation2 + $0x8] sm:$0xff]
      %3612 = vrot.lane.b32.xlu0 %v3608, 56
      %v3613 = vpop.permute.xlu0 %3612
      %3614 = vrot.lane.b32.xlu0 %v3609, 56
      %v3615 = vpop.permute.xlu0 %3614
      %v3616 = vsel %vm1075, %v3613, 0
      %v3618 = vsel %vm1075, %v3615, 0
      %3620 = vmatprep.subr.mxu0 0.0
      %3621 = vmatpush1.xpose.msra.mxu0 %v1083
      %3622 = vmatprep.subr.mxu0 0.0
      %3623 = vmatpush1.xpose.msra.mxu0 %v1086
      %3624 = vmatprep.subr.mxu0 0.0
      %3625 = vmatpush1.xpose.msra.mxu0 %v1089
      %3626 = vmatprep.subr.mxu0 0.0
      %3627 = vmatpush1.xpose.msra.mxu0 %v1092
      %3628 = vmatprep.subr.mxu0 0.0
      %3629 = vmatpush1.xpose.msra.mxu0 0.0
      %3630 = vmatprep.subr.mxu0 0.0
      %3631 = vmatpush1.xpose.msra.mxu0 0.0
      %3632 = vmatprep.subr.mxu0 0.0
      %3633 = vmatpush1.xpose.msra.mxu0 0.0
      %3634 = vmatprep.subr.mxu0 0.0
      %3635 = vmatpush1.xpose.msra.mxu0 0.0
      %3636 = vmatprep.subr.mxu0 0.0
      %3637 = vmatpush1.xpose.msra.mxu0 0.0
      %3638 = vmatprep.subr.mxu0 0.0
      %3639 = vmatpush1.xpose.msra.mxu0 0.0
      %3640 = vmatprep.subr.mxu0 0.0
      %3641 = vmatpush1.xpose.msra.mxu0 0.0
      %3642 = vmatprep.subr.mxu0 0.0
      %3643 = vmatpush1.xpose.msra.mxu0 0.0
      %3644 = vmatprep.subr.mxu0 0.0
      %3645 = vmatpush1.xpose.msra.mxu0 0.0
      %3646 = vmatprep.subr.mxu0 0.0
      %3647 = vmatpush1.xpose.msra.mxu0 0.0
      %3648 = vmatprep.subr.mxu0 0.0
      %3649 = vmatpush1.xpose.msra.mxu0 0.0
      %3650 = vmatprep.subr.mxu0 0.0
      %3651 = vmatpush1.xpose.msra.mxu0 0.0
      %3652 = vmatprep.subr.mxu0 0.0
      %3653 = vmatpush1.xpose.msra.mxu0 0.0
      %3654 = vmatprep.subr.mxu0 0.0
      %3655 = vmatpush1.xpose.msra.mxu0 0.0
      %3656 = vmatprep.subr.mxu0 0.0
      %3657 = vmatpush1.xpose.msra.mxu0 0.0
      %3658 = vmatprep.subr.mxu0 0.0
      %3659 = vmatpush1.xpose.msra.mxu0 0.0
      %3660 = vmatprep.subr.mxu0 0.0
      %3661 = vmatpush1.xpose.msra.mxu0 0.0
      %3662 = vmatprep.subr.mxu0 0.0
      %3663 = vmatpush1.xpose.msra.mxu0 0.0
      %3664 = vmatprep.subr.mxu0 0.0
      %3665 = vmatpush1.xpose.msra.mxu0 0.0
      %3666 = vmatprep.subr.mxu0 0.0
      %3667 = vmatpush1.xpose.msra.mxu0 0.0
      %3668 = vmatprep.subr.mxu0 0.0
      %3669 = vmatpush1.xpose.msra.mxu0 0.0
      %3670 = vmatprep.subr.mxu0 0.0
      %3671 = vmatpush1.xpose.msra.mxu0 0.0
      %3672 = vmatprep.subr.mxu0 0.0
      %3673 = vmatpush1.xpose.msra.mxu0 0.0
      %3674 = vmatprep.subr.mxu0 0.0
      %3675 = vmatpush1.xpose.msra.mxu0 0.0
      %3676 = vmatprep.subr.mxu0 0.0
      %3677 = vmatpush1.xpose.msra.mxu0 0.0
      %3678 = vmatprep.subr.mxu0 0.0
      %3679 = vmatpush1.xpose.msra.mxu0 0.0
      %3680 = vmatprep.subr.mxu0 0.0
      %3681 = vmatpush1.xpose.msra.mxu0 0.0
      %3682 = vmatprep.subr.mxu0 0.0
      %3683 = vmatpush1.xpose.msra.mxu0 0.0
      %3684 = vmatprep.mubr.f32.mxu0 0.0
      %3685 = vmatmul.mubr.f32.gmra.mrb[0].mxu0 %v3616
      %v3686 = vpop.f32.mrb[0].mxu0
      %v3687 = vadd.f32 0.0, %v3686
      %v3688 = vpop.f32.mrb[0].mxu0
      %3689 = vmatprep.mubr.f32.mxu0 0.0
      %3690 = vmatmul.mubr.f32.gmra.mrb[0].mxu0 %v3618
      %v3691 = vpop.f32.mrb[0].mxu0
      %v3692 = vadd.f32 0.0, %v3691
      %v3693 = vpop.f32.mrb[0].mxu0
      %3694 = vdwg.mxu0
      %v3695 = vmul.f32 %v3608, %v3608
      %v3696 = vmul.f32 %v3609, %v3609
      %3699 = vrot.lane.b32.xlu0 %v3695, 56
      %v3700 = vpop.permute.xlu0 %3699
      %3701 = vrot.lane.b32.xlu0 %v3696, 56
      %v3702 = vpop.permute.xlu0 %3701
      %v3705 = vsel %vm1075, %v3700, 0.0
      %3706 = vadd.xlane.f32.xlu0 %v3705
      %v3707 = vpop.xlane.xlu0 %3706
      %v3708 = vsel %vm1075, %v3702, 0.0
      %3709 = vadd.xlane.f32.xlu0 %v3708
      %v3710 = vpop.xlane.xlu0 %3709
      %v3711 = vadd.f32 %v3707, %v1181
      %v3712 = vadd.f32 %v3710, %v1181
      %v3713 = vmul.f32 %v3687, 2.0
      %v3714 = vmul.f32 %v3692, 2.0
      %v3715 = vsub.f32 %v3711, %v3713
      %v3716 = vsub.f32 %v3712, %v3714
      %v3717 = vsel %vm1189, %v3715, inf
      %3718 = vmin.xlane.f32.xlu0 %v3717
      %v3719 = vpop.xlane.xlu0 %3718
      %v3720 = vsel %vm1189, %v3716, inf
      %3721 = vmin.xlane.f32.xlu0 %v3720
      %v3722 = vpop.xlane.xlu0 %3721
      %vm3723 = vcmp.le.f32.partialorder %v3715, %v3719
      %vm3724 = vcmp.le.f32.partialorder %v3716, %v3722
      %v3725 = vsel %vm3723, %v1197, 32
      %v3726 = vsel %vm3724, %v1197, 32
      %v3727 = vsel %vm1189, %v3725, 2147483647
      %v3728 = vand.u32 %v3727, 65535
      %v3729 = vshra.s32 %v3727, 16
      %v3730 = vcvt.s32.f32 %v3728
      %v3731 = vcvt.s32.f32 %v3729
      %3732 = vmin.xlane.f32.xlu0 %v3731
      %v3733 = vpop.xlane.xlu0 %3732
      %vm3734 = vcmp.eq.f32.partialorder %v3731, %v3733
      %v3735 = vsel %vm3734, %v3730, inf
      %3736 = vmin.xlane.f32.xlu0 %v3735
      %v3737 = vpop.xlane.xlu0 %3736
      %v3738 = vcvt.f32.s32 %v3737
      %v3739 = vcvt.f32.s32 %v3733
      %v3740 = vshll.u32 %v3739, 16
      %v3741 = vadd.s32 %v3740, %v3738
      %v3742 = vsel %vm1189, %v3726, 2147483647
      %v3743 = vand.u32 %v3742, 65535
      %v3744 = vshra.s32 %v3742, 16
      %v3745 = vcvt.s32.f32 %v3743
      %v3746 = vcvt.s32.f32 %v3744
      %3747 = vmin.xlane.f32.xlu0 %v3746
      %v3748 = vpop.xlane.xlu0 %3747
      %vm3749 = vcmp.eq.f32.partialorder %v3746, %v3748
      %v3750 = vsel %vm3749, %v3745, inf
      %3751 = vmin.xlane.f32.xlu0 %v3750
      %v3752 = vpop.xlane.xlu0 %3751
      %v3753 = vcvt.f32.s32 %v3752
      %v3754 = vcvt.f32.s32 %v3748
      %v3755 = vshll.u32 %v3754, 16
      %v3756 = vadd.s32 %v3755, %v3753
      %vm3757 = vcmp.eq.s32.totalorder %v1197, %v3741
      %vm3758 = vcmp.eq.s32.totalorder %v1197, %v3756
      %v3759 = vsel %vm3757, 1, 0
      %v3760 = vsel %vm3758, 1, 0
      %v3761 = vcvt.s32.f32 %v3759
      %v3762 = vcvt.s32.f32 %v3760
      %v3764 = vsel %vm1189, %v3761, 0
      %v3767 = vsel %vm1189, %v3762, 0
      %3769 = vmatprep.subr.mxu0 0.0
      %3770 = vmatpush1.msra.mxu0 %v1068
      %3771 = vmatprep.subr.mxu0 0.0
      %3772 = vmatpush1.msra.mxu0 %v1069
      %3773 = vmatprep.subr.mxu0 0.0
      %3774 = vmatpush1.msra.mxu0 %v1070
      %3775 = vmatprep.subr.mxu0 0.0
      %3776 = vmatpush1.msra.mxu0 %v1071
      %3777 = vmatprep.subr.mxu0 0.0
      %3778 = vmatpush1.msra.mxu0 0.0
      %3779 = vmatprep.subr.mxu0 0.0
      %3780 = vmatpush1.msra.mxu0 0.0
      %3781 = vmatprep.subr.mxu0 0.0
      %3782 = vmatpush1.msra.mxu0 0.0
      %3783 = vmatprep.subr.mxu0 0.0
      %3784 = vmatpush1.msra.mxu0 0.0
      %3785 = vmatprep.subr.mxu0 0.0
      %3786 = vmatpush1.msra.mxu0 0.0
      %3787 = vmatprep.subr.mxu0 0.0
      %3788 = vmatpush1.msra.mxu0 0.0
      %3789 = vmatprep.subr.mxu0 0.0
      %3790 = vmatpush1.msra.mxu0 0.0
      %3791 = vmatprep.subr.mxu0 0.0
      %3792 = vmatpush1.msra.mxu0 0.0
      %3793 = vmatprep.subr.mxu0 0.0
      %3794 = vmatpush1.msra.mxu0 0.0
      %3795 = vmatprep.subr.mxu0 0.0
      %3796 = vmatpush1.msra.mxu0 0.0
      %3797 = vmatprep.subr.mxu0 0.0
      %3798 = vmatpush1.msra.mxu0 0.0
      %3799 = vmatprep.subr.mxu0 0.0
      %3800 = vmatpush1.msra.mxu0 0.0
      %3801 = vmatprep.subr.mxu0 0.0
      %3802 = vmatpush1.msra.mxu0 0.0
      %3803 = vmatprep.subr.mxu0 0.0
      %3804 = vmatpush1.msra.mxu0 0.0
      %3805 = vmatprep.subr.mxu0 0.0
      %3806 = vmatpush1.msra.mxu0 0.0
      %3807 = vmatprep.subr.mxu0 0.0
      %3808 = vmatpush1.msra.mxu0 0.0
      %3809 = vmatprep.subr.mxu0 0.0
      %3810 = vmatpush1.msra.mxu0 0.0
      %3811 = vmatprep.subr.mxu0 0.0
      %3812 = vmatpush1.msra.mxu0 0.0
      %3813 = vmatprep.subr.mxu0 0.0
      %3814 = vmatpush1.msra.mxu0 0.0
      %3815 = vmatprep.subr.mxu0 0.0
      %3816 = vmatpush1.msra.mxu0 0.0
      %3817 = vmatprep.subr.mxu0 0.0
      %3818 = vmatpush1.msra.mxu0 0.0
      %3819 = vmatprep.subr.mxu0 0.0
      %3820 = vmatpush1.msra.mxu0 0.0
      %3821 = vmatprep.subr.mxu0 0.0
      %3822 = vmatpush1.msra.mxu0 0.0
      %3823 = vmatprep.subr.mxu0 0.0
      %3824 = vmatpush1.msra.mxu0 0.0
      %3825 = vmatprep.subr.mxu0 0.0
      %3826 = vmatpush1.msra.mxu0 0.0
      %3827 = vmatprep.subr.mxu0 0.0
      %3828 = vmatpush1.msra.mxu0 0.0
      %3829 = vmatprep.subr.mxu0 0.0
      %3830 = vmatpush1.msra.mxu0 0.0
      %3831 = vmatprep.subr.mxu0 0.0
      %3832 = vmatpush1.msra.mxu0 0.0
      %3833 = vmatprep.mubr.f32.mxu0 0.0
      %3834 = vmatmul.mubr.f32.gmra.mrb[0].mxu0 %v3764
      %v3835 = vpop.f32.mrb[0].mxu0
      %v3836 = vadd.f32 0.0, %v3835
      %v3837 = vpop.f32.mrb[0].mxu0
      %3838 = vmatprep.mubr.f32.mxu0 0.0
      %3839 = vmatmul.mubr.f32.gmra.mrb[0].mxu0 %v3767
      %v3840 = vpop.f32.mrb[0].mxu0
      %v3841 = vadd.f32 0.0, %v3840
      %v3842 = vpop.f32.mrb[0].mxu0
      %3843 = vdwg.mxu0
      %3846 = vrot.lane.b32.xlu0 %v3836, 72
      %v3847 = vpop.permute.xlu0 %3846
      %3848 = vrot.lane.b32.xlu0 %v3841, 72
      %v3849 = vpop.permute.xlu0 %3848
      %v3852 = vsub.f32 %v3608, %v3847
      %v3853 = vsub.f32 %v3609, %v3849
      %v3854 = vmul.f32 %v3852, %v3852
      %v3855 = vmul.f32 %v3853, %v3853
      %3858 = vrot.lane.b32.xlu0 %v3854, 56
      %v3859 = vpop.permute.xlu0 %3858
      %3860 = vrot.lane.b32.xlu0 %v3855, 56
      %v3861 = vpop.permute.xlu0 %3860
      %v3864 = vsel %vm1075, %v3859, 0.0
      %3865 = vadd.xlane.f32.xlu0 %v3864
      %v3866 = vpop.xlane.xlu0 %3865
      %v3867 = vsel %vm1075, %v3861, 0.0
      %3868 = vadd.xlane.f32.xlu0 %v3867
      %v3869 = vpop.xlane.xlu0 %3868
      %v3870 = vadd.f32 %v3588, %v3866
      %v3871 = vadd.f32 %v3589, %v3869
      %v3872 = vrot.slane %v3836, 7
      %v3873 = vrot.slane %v3841, 7
      %v3874 = vsel %vm1333, %v3872, %v3873
      %3875 = vrot.lane.b32.xlu0 %v3872, 80
      %v3876 = vpop.permute.xlu0 %3875
      %3877 = vrot.lane.b32.xlu0 %v3874, 80
      %v3878 = vpop.permute.xlu0 %3877
      %3879 = vrot.lane.b32.xlu0 %v3873, 80
      %v3880 = vpop.permute.xlu0 %3879
      %vm3884 = vcmask 720513
      %3885 = vst.msk [vmem:[#allocation3] sm:$0xfe] %vm3884, %v3876
      %vm3886 = vcmask 720512
      %3887 = vst.msk [vmem:[#allocation3 + $0x10] sm:$0xff] %vm3886, %v3878
      %vm3888 = vcmask 713344
      %3889 = vst.msk [vmem:[#allocation3 + $0x20] sm:$0x1] %vm3888, %v3880
      %v3890 = vld [vmem:[#allocation2] sm:$0xff]
      %v3891 = vld [vmem:[#allocation2 + $0x8] sm:$0xff]
      %3894 = vrot.lane.b32.xlu0 %v3890, 48
      %v3895 = vpop.permute.xlu0 %3894
      %3896 = vrot.lane.b32.xlu0 %v3891, 48
      %v3897 = vpop.permute.xlu0 %3896
      %v3898 = vsel %vm1075, %v3895, 0
      %v3900 = vsel %vm1075, %v3897, 0
      %3902 = vmatprep.subr.mxu0 0.0
      %3903 = vmatpush1.xpose.msra.mxu0 %v1083
      %3904 = vmatprep.subr.mxu0 0.0
      %3905 = vmatpush1.xpose.msra.mxu0 %v1086
      %3906 = vmatprep.subr.mxu0 0.0
      %3907 = vmatpush1.xpose.msra.mxu0 %v1089
      %3908 = vmatprep.subr.mxu0 0.0
      %3909 = vmatpush1.xpose.msra.mxu0 %v1092
      %3910 = vmatprep.subr.mxu0 0.0
      %3911 = vmatpush1.xpose.msra.mxu0 0.0
      %3912 = vmatprep.subr.mxu0 0.0
      %3913 = vmatpush1.xpose.msra.mxu0 0.0
      %3914 = vmatprep.subr.mxu0 0.0
      %3915 = vmatpush1.xpose.msra.mxu0 0.0
      %3916 = vmatprep.subr.mxu0 0.0
      %3917 = vmatpush1.xpose.msra.mxu0 0.0
      %3918 = vmatprep.subr.mxu0 0.0
      %3919 = vmatpush1.xpose.msra.mxu0 0.0
      %3920 = vmatprep.subr.mxu0 0.0
      %3921 = vmatpush1.xpose.msra.mxu0 0.0
      %3922 = vmatprep.subr.mxu0 0.0
      %3923 = vmatpush1.xpose.msra.mxu0 0.0
      %3924 = vmatprep.subr.mxu0 0.0
      %3925 = vmatpush1.xpose.msra.mxu0 0.0
      %3926 = vmatprep.subr.mxu0 0.0
      %3927 = vmatpush1.xpose.msra.mxu0 0.0
      %3928 = vmatprep.subr.mxu0 0.0
      %3929 = vmatpush1.xpose.msra.mxu0 0.0
      %3930 = vmatprep.subr.mxu0 0.0
      %3931 = vmatpush1.xpose.msra.mxu0 0.0
      %3932 = vmatprep.subr.mxu0 0.0
      %3933 = vmatpush1.xpose.msra.mxu0 0.0
      %3934 = vmatprep.subr.mxu0 0.0
      %3935 = vmatpush1.xpose.msra.mxu0 0.0
      %3936 = vmatprep.subr.mxu0 0.0
      %3937 = vmatpush1.xpose.msra.mxu0 0.0
      %3938 = vmatprep.subr.mxu0 0.0
      %3939 = vmatpush1.xpose.msra.mxu0 0.0
      %3940 = vmatprep.subr.mxu0 0.0
      %3941 = vmatpush1.xpose.msra.mxu0 0.0
      %3942 = vmatprep.subr.mxu0 0.0
      %3943 = vmatpush1.xpose.msra.mxu0 0.0
      %3944 = vmatprep.subr.mxu0 0.0
      %3945 = vmatpush1.xpose.msra.mxu0 0.0
      %3946 = vmatprep.subr.mxu0 0.0
      %3947 = vmatpush1.xpose.msra.mxu0 0.0
      %3948 = vmatprep.subr.mxu0 0.0
      %3949 = vmatpush1.xpose.msra.mxu0 0.0
      %3950 = vmatprep.subr.mxu0 0.0
      %3951 = vmatpush1.xpose.msra.mxu0 0.0
      %3952 = vmatprep.subr.mxu0 0.0
      %3953 = vmatpush1.xpose.msra.mxu0 0.0
      %3954 = vmatprep.subr.mxu0 0.0
      %3955 = vmatpush1.xpose.msra.mxu0 0.0
      %3956 = vmatprep.subr.mxu0 0.0
      %3957 = vmatpush1.xpose.msra.mxu0 0.0
      %3958 = vmatprep.subr.mxu0 0.0
      %3959 = vmatpush1.xpose.msra.mxu0 0.0
      %3960 = vmatprep.subr.mxu0 0.0
      %3961 = vmatpush1.xpose.msra.mxu0 0.0
      %3962 = vmatprep.subr.mxu0 0.0
      %3963 = vmatpush1.xpose.msra.mxu0 0.0
      %3964 = vmatprep.subr.mxu0 0.0
      %3965 = vmatpush1.xpose.msra.mxu0 0.0
      %3966 = vmatprep.mubr.f32.mxu0 0.0
      %3967 = vmatmul.mubr.f32.gmra.mrb[0].mxu0 %v3898
      %v3968 = vpop.f32.mrb[0].mxu0
      %v3969 = vadd.f32 0.0, %v3968
      %v3970 = vpop.f32.mrb[0].mxu0
      %3971 = vmatprep.mubr.f32.mxu0 0.0
      %3972 = vmatmul.mubr.f32.gmra.mrb[0].mxu0 %v3900
      %v3973 = vpop.f32.mrb[0].mxu0
      %v3974 = vadd.f32 0.0, %v3973
      %v3975 = vpop.f32.mrb[0].mxu0
      %3976 = vdwg.mxu0
      %v3977 = vmul.f32 %v3890, %v3890
      %v3978 = vmul.f32 %v3891, %v3891
      %3981 = vrot.lane.b32.xlu0 %v3977, 48
      %v3982 = vpop.permute.xlu0 %3981
      %3983 = vrot.lane.b32.xlu0 %v3978, 48
      %v3984 = vpop.permute.xlu0 %3983
      %v3987 = vsel %vm1075, %v3982, 0.0
      %3988 = vadd.xlane.f32.xlu0 %v3987
      %v3989 = vpop.xlane.xlu0 %3988
      %v3990 = vsel %vm1075, %v3984, 0.0
      %3991 = vadd.xlane.f32.xlu0 %v3990
      %v3992 = vpop.xlane.xlu0 %3991
      %v3993 = vadd.f32 %v3989, %v1181
      %v3994 = vadd.f32 %v3992, %v1181
      %v3995 = vmul.f32 %v3969, 2.0
      %v3996 = vmul.f32 %v3974, 2.0
      %v3997 = vsub.f32 %v3993, %v3995
      %v3998 = vsub.f32 %v3994, %v3996
      %v3999 = vsel %vm1189, %v3997, inf
      %4000 = vmin.xlane.f32.xlu0 %v3999
      %v4001 = vpop.xlane.xlu0 %4000
      %v4002 = vsel %vm1189, %v3998, inf
      %4003 = vmin.xlane.f32.xlu0 %v4002
      %v4004 = vpop.xlane.xlu0 %4003
      %vm4005 = vcmp.le.f32.partialorder %v3997, %v4001
      %vm4006 = vcmp.le.f32.partialorder %v3998, %v4004
      %v4007 = vsel %vm4005, %v1197, 32
      %v4008 = vsel %vm4006, %v1197, 32
      %v4009 = vsel %vm1189, %v4007, 2147483647
      %v4010 = vand.u32 %v4009, 65535
      %v4011 = vshra.s32 %v4009, 16
      %v4012 = vcvt.s32.f32 %v4010
      %v4013 = vcvt.s32.f32 %v4011
      %4014 = vmin.xlane.f32.xlu0 %v4013
      %v4015 = vpop.xlane.xlu0 %4014
      %vm4016 = vcmp.eq.f32.partialorder %v4013, %v4015
      %v4017 = vsel %vm4016, %v4012, inf
      %4018 = vmin.xlane.f32.xlu0 %v4017
      %v4019 = vpop.xlane.xlu0 %4018
      %v4020 = vcvt.f32.s32 %v4019
      %v4021 = vcvt.f32.s32 %v4015
      %v4022 = vshll.u32 %v4021, 16
      %v4023 = vadd.s32 %v4022, %v4020
      %v4024 = vsel %vm1189, %v4008, 2147483647
      %v4025 = vand.u32 %v4024, 65535
      %v4026 = vshra.s32 %v4024, 16
      %v4027 = vcvt.s32.f32 %v4025
      %v4028 = vcvt.s32.f32 %v4026
      %4029 = vmin.xlane.f32.xlu0 %v4028
      %v4030 = vpop.xlane.xlu0 %4029
      %vm4031 = vcmp.eq.f32.partialorder %v4028, %v4030
      %v4032 = vsel %vm4031, %v4027, inf
      %4033 = vmin.xlane.f32.xlu0 %v4032
      %v4034 = vpop.xlane.xlu0 %4033
      %v4035 = vcvt.f32.s32 %v4034
      %v4036 = vcvt.f32.s32 %v4030
      %v4037 = vshll.u32 %v4036, 16
      %v4038 = vadd.s32 %v4037, %v4035
      %vm4039 = vcmp.eq.s32.totalorder %v1197, %v4023
      %vm4040 = vcmp.eq.s32.totalorder %v1197, %v4038
      %v4041 = vsel %vm4039, 1, 0
      %v4042 = vsel %vm4040, 1, 0
      %v4043 = vcvt.s32.f32 %v4041
      %v4044 = vcvt.s32.f32 %v4042
      %v4046 = vsel %vm1189, %v4043, 0
      %v4049 = vsel %vm1189, %v4044, 0
      %4051 = vmatprep.subr.mxu0 0.0
      %4052 = vmatpush1.msra.mxu0 %v1068
      %4053 = vmatprep.subr.mxu0 0.0
      %4054 = vmatpush1.msra.mxu0 %v1069
      %4055 = vmatprep.subr.mxu0 0.0
      %4056 = vmatpush1.msra.mxu0 %v1070
      %4057 = vmatprep.subr.mxu0 0.0
      %4058 = vmatpush1.msra.mxu0 %v1071
      %4059 = vmatprep.subr.mxu0 0.0
      %4060 = vmatpush1.msra.mxu0 0.0
      %4061 = vmatprep.subr.mxu0 0.0
      %4062 = vmatpush1.msra.mxu0 0.0
      %4063 = vmatprep.subr.mxu0 0.0
      %4064 = vmatpush1.msra.mxu0 0.0
      %4065 = vmatprep.subr.mxu0 0.0
      %4066 = vmatpush1.msra.mxu0 0.0
      %4067 = vmatprep.subr.mxu0 0.0
      %4068 = vmatpush1.msra.mxu0 0.0
      %4069 = vmatprep.subr.mxu0 0.0
      %4070 = vmatpush1.msra.mxu0 0.0
      %4071 = vmatprep.subr.mxu0 0.0
      %4072 = vmatpush1.msra.mxu0 0.0
      %4073 = vmatprep.subr.mxu0 0.0
      %4074 = vmatpush1.msra.mxu0 0.0
      %4075 = vmatprep.subr.mxu0 0.0
      %4076 = vmatpush1.msra.mxu0 0.0
      %4077 = vmatprep.subr.mxu0 0.0
      %4078 = vmatpush1.msra.mxu0 0.0
      %4079 = vmatprep.subr.mxu0 0.0
      %4080 = vmatpush1.msra.mxu0 0.0
      %4081 = vmatprep.subr.mxu0 0.0
      %4082 = vmatpush1.msra.mxu0 0.0
      %4083 = vmatprep.subr.mxu0 0.0
      %4084 = vmatpush1.msra.mxu0 0.0
      %4085 = vmatprep.subr.mxu0 0.0
      %4086 = vmatpush1.msra.mxu0 0.0
      %4087 = vmatprep.subr.mxu0 0.0
      %4088 = vmatpush1.msra.mxu0 0.0
      %4089 = vmatprep.subr.mxu0 0.0
      %4090 = vmatpush1.msra.mxu0 0.0
      %4091 = vmatprep.subr.mxu0 0.0
      %4092 = vmatpush1.msra.mxu0 0.0
      %4093 = vmatprep.subr.mxu0 0.0
      %4094 = vmatpush1.msra.mxu0 0.0
      %4095 = vmatprep.subr.mxu0 0.0
      %4096 = vmatpush1.msra.mxu0 0.0
      %4097 = vmatprep.subr.mxu0 0.0
      %4098 = vmatpush1.msra.mxu0 0.0
      %4099 = vmatprep.subr.mxu0 0.0
      %4100 = vmatpush1.msra.mxu0 0.0
      %4101 = vmatprep.subr.mxu0 0.0
      %4102 = vmatpush1.msra.mxu0 0.0
      %4103 = vmatprep.subr.mxu0 0.0
      %4104 = vmatpush1.msra.mxu0 0.0
      %4105 = vmatprep.subr.mxu0 0.0
      %4106 = vmatpush1.msra.mxu0 0.0
      %4107 = vmatprep.subr.mxu0 0.0
      %4108 = vmatpush1.msra.mxu0 0.0
      %4109 = vmatprep.subr.mxu0 0.0
      %4110 = vmatpush1.msra.mxu0 0.0
      %4111 = vmatprep.subr.mxu0 0.0
      %4112 = vmatpush1.msra.mxu0 0.0
      %4113 = vmatprep.subr.mxu0 0.0
      %4114 = vmatpush1.msra.mxu0 0.0
      %4115 = vmatprep.mubr.f32.mxu0 0.0
      %4116 = vmatmul.mubr.f32.gmra.mrb[0].mxu0 %v4046
      %v4117 = vpop.f32.mrb[0].mxu0
      %v4118 = vadd.f32 0.0, %v4117
      %v4119 = vpop.f32.mrb[0].mxu0
      %4120 = vmatprep.mubr.f32.mxu0 0.0
      %4121 = vmatmul.mubr.f32.gmra.mrb[0].mxu0 %v4049
      %v4122 = vpop.f32.mrb[0].mxu0
      %v4123 = vadd.f32 0.0, %v4122
      %v4124 = vpop.f32.mrb[0].mxu0
      %4125 = vdwg.mxu0
      %4128 = vrot.lane.b32.xlu0 %v4118, 80
      %v4129 = vpop.permute.xlu0 %4128
      %4130 = vrot.lane.b32.xlu0 %v4123, 80
      %v4131 = vpop.permute.xlu0 %4130
      %v4134 = vsub.f32 %v3890, %v4129
      %v4135 = vsub.f32 %v3891, %v4131
      %v4136 = vmul.f32 %v4134, %v4134
      %v4137 = vmul.f32 %v4135, %v4135
      %4140 = vrot.lane.b32.xlu0 %v4136, 48
      %v4141 = vpop.permute.xlu0 %4140
      %4142 = vrot.lane.b32.xlu0 %v4137, 48
      %v4143 = vpop.permute.xlu0 %4142
      %v4146 = vsel %vm1075, %v4141, 0.0
      %4147 = vadd.xlane.f32.xlu0 %v4146
      %v4148 = vpop.xlane.xlu0 %4147
      %v4149 = vsel %vm1075, %v4143, 0.0
      %4150 = vadd.xlane.f32.xlu0 %v4149
      %v4151 = vpop.xlane.xlu0 %4150
      %v4152 = vadd.f32 %v3870, %v4148
      %v4153 = vadd.f32 %v3871, %v4151
      %v4154 = vrot.slane %v4118, 7
      %v4155 = vrot.slane %v4123, 7
      %v4156 = vsel %vm1333, %v4154, %v4155
      %4157 = vrot.lane.b32.xlu0 %v4154, 88
      %v4158 = vpop.permute.xlu0 %4157
      %4159 = vrot.lane.b32.xlu0 %v4156, 88
      %v4160 = vpop.permute.xlu0 %4159
      %4161 = vrot.lane.b32.xlu0 %v4155, 88
      %v4162 = vpop.permute.xlu0 %4161
      %vm4166 = vcmask 786113
      %4167 = vst.msk [vmem:[#allocation3] sm:$0xfe] %vm4166, %v4158
      %vm4168 = vcmask 786112
      %4169 = vst.msk [vmem:[#allocation3 + $0x10] sm:$0xff] %vm4168, %v4160
      %vm4170 = vcmask 778944
      %4171 = vst.msk [vmem:[#allocation3 + $0x20] sm:$0x1] %vm4170, %v4162
      %v4172 = vld [vmem:[#allocation2] sm:$0xff]
      %v4173 = vld [vmem:[#allocation2 + $0x8] sm:$0xff]
      %4176 = vrot.lane.b32.xlu0 %v4172, 40
      %v4177 = vpop.permute.xlu0 %4176
      %4178 = vrot.lane.b32.xlu0 %v4173, 40
      %v4179 = vpop.permute.xlu0 %4178
      %v4180 = vsel %vm1075, %v4177, 0
      %v4182 = vsel %vm1075, %v4179, 0
      %4184 = vmatprep.subr.mxu0 0.0
      %4185 = vmatpush1.xpose.msra.mxu0 %v1083
      %4186 = vmatprep.subr.mxu0 0.0
      %4187 = vmatpush1.xpose.msra.mxu0 %v1086
      %4188 = vmatprep.subr.mxu0 0.0
      %4189 = vmatpush1.xpose.msra.mxu0 %v1089
      %4190 = vmatprep.subr.mxu0 0.0
      %4191 = vmatpush1.xpose.msra.mxu0 %v1092
      %4192 = vmatprep.subr.mxu0 0.0
      %4193 = vmatpush1.xpose.msra.mxu0 0.0
      %4194 = vmatprep.subr.mxu0 0.0
      %4195 = vmatpush1.xpose.msra.mxu0 0.0
      %4196 = vmatprep.subr.mxu0 0.0
      %4197 = vmatpush1.xpose.msra.mxu0 0.0
      %4198 = vmatprep.subr.mxu0 0.0
      %4199 = vmatpush1.xpose.msra.mxu0 0.0
      %4200 = vmatprep.subr.mxu0 0.0
      %4201 = vmatpush1.xpose.msra.mxu0 0.0
      %4202 = vmatprep.subr.mxu0 0.0
      %4203 = vmatpush1.xpose.msra.mxu0 0.0
      %4204 = vmatprep.subr.mxu0 0.0
      %4205 = vmatpush1.xpose.msra.mxu0 0.0
      %4206 = vmatprep.subr.mxu0 0.0
      %4207 = vmatpush1.xpose.msra.mxu0 0.0
      %4208 = vmatprep.subr.mxu0 0.0
      %4209 = vmatpush1.xpose.msra.mxu0 0.0
      %4210 = vmatprep.subr.mxu0 0.0
      %4211 = vmatpush1.xpose.msra.mxu0 0.0
      %4212 = vmatprep.subr.mxu0 0.0
      %4213 = vmatpush1.xpose.msra.mxu0 0.0
      %4214 = vmatprep.subr.mxu0 0.0
      %4215 = vmatpush1.xpose.msra.mxu0 0.0
      %4216 = vmatprep.subr.mxu0 0.0
      %4217 = vmatpush1.xpose.msra.mxu0 0.0
      %4218 = vmatprep.subr.mxu0 0.0
      %4219 = vmatpush1.xpose.msra.mxu0 0.0
      %4220 = vmatprep.subr.mxu0 0.0
      %4221 = vmatpush1.xpose.msra.mxu0 0.0
      %4222 = vmatprep.subr.mxu0 0.0
      %4223 = vmatpush1.xpose.msra.mxu0 0.0
      %4224 = vmatprep.subr.mxu0 0.0
      %4225 = vmatpush1.xpose.msra.mxu0 0.0
      %4226 = vmatprep.subr.mxu0 0.0
      %4227 = vmatpush1.xpose.msra.mxu0 0.0
      %4228 = vmatprep.subr.mxu0 0.0
      %4229 = vmatpush1.xpose.msra.mxu0 0.0
      %4230 = vmatprep.subr.mxu0 0.0
      %4231 = vmatpush1.xpose.msra.mxu0 0.0
      %4232 = vmatprep.subr.mxu0 0.0
      %4233 = vmatpush1.xpose.msra.mxu0 0.0
      %4234 = vmatprep.subr.mxu0 0.0
      %4235 = vmatpush1.xpose.msra.mxu0 0.0
      %4236 = vmatprep.subr.mxu0 0.0
      %4237 = vmatpush1.xpose.msra.mxu0 0.0
      %4238 = vmatprep.subr.mxu0 0.0
      %4239 = vmatpush1.xpose.msra.mxu0 0.0
      %4240 = vmatprep.subr.mxu0 0.0
      %4241 = vmatpush1.xpose.msra.mxu0 0.0
      %4242 = vmatprep.subr.mxu0 0.0
      %4243 = vmatpush1.xpose.msra.mxu0 0.0
      %4244 = vmatprep.subr.mxu0 0.0
      %4245 = vmatpush1.xpose.msra.mxu0 0.0
      %4246 = vmatprep.subr.mxu0 0.0
      %4247 = vmatpush1.xpose.msra.mxu0 0.0
      %4248 = vmatprep.mubr.f32.mxu0 0.0
      %4249 = vmatmul.mubr.f32.gmra.mrb[0].mxu0 %v4180
      %v4250 = vpop.f32.mrb[0].mxu0
      %v4251 = vadd.f32 0.0, %v4250
      %v4252 = vpop.f32.mrb[0].mxu0
      %4253 = vmatprep.mubr.f32.mxu0 0.0
      %4254 = vmatmul.mubr.f32.gmra.mrb[0].mxu0 %v4182
      %v4255 = vpop.f32.mrb[0].mxu0
      %v4256 = vadd.f32 0.0, %v4255
      %v4257 = vpop.f32.mrb[0].mxu0
      %4258 = vdwg.mxu0
      %v4259 = vmul.f32 %v4172, %v4172
      %v4260 = vmul.f32 %v4173, %v4173
      %4263 = vrot.lane.b32.xlu0 %v4259, 40
      %v4264 = vpop.permute.xlu0 %4263
      %4265 = vrot.lane.b32.xlu0 %v4260, 40
      %v4266 = vpop.permute.xlu0 %4265
      %v4269 = vsel %vm1075, %v4264, 0.0
      %4270 = vadd.xlane.f32.xlu0 %v4269
      %v4271 = vpop.xlane.xlu0 %4270
      %v4272 = vsel %vm1075, %v4266, 0.0
      %4273 = vadd.xlane.f32.xlu0 %v4272
      %v4274 = vpop.xlane.xlu0 %4273
      %v4275 = vadd.f32 %v4271, %v1181
      %v4276 = vadd.f32 %v4274, %v1181
      %v4277 = vmul.f32 %v4251, 2.0
      %v4278 = vmul.f32 %v4256, 2.0
      %v4279 = vsub.f32 %v4275, %v4277
      %v4280 = vsub.f32 %v4276, %v4278
      %v4281 = vsel %vm1189, %v4279, inf
      %4282 = vmin.xlane.f32.xlu0 %v4281
      %v4283 = vpop.xlane.xlu0 %4282
      %v4284 = vsel %vm1189, %v4280, inf
      %4285 = vmin.xlane.f32.xlu0 %v4284
      %v4286 = vpop.xlane.xlu0 %4285
      %vm4287 = vcmp.le.f32.partialorder %v4279, %v4283
      %vm4288 = vcmp.le.f32.partialorder %v4280, %v4286
      %v4289 = vsel %vm4287, %v1197, 32
      %v4290 = vsel %vm4288, %v1197, 32
      %v4291 = vsel %vm1189, %v4289, 2147483647
      %v4292 = vand.u32 %v4291, 65535
      %v4293 = vshra.s32 %v4291, 16
      %v4294 = vcvt.s32.f32 %v4292
      %v4295 = vcvt.s32.f32 %v4293
      %4296 = vmin.xlane.f32.xlu0 %v4295
      %v4297 = vpop.xlane.xlu0 %4296
      %vm4298 = vcmp.eq.f32.partialorder %v4295, %v4297
      %v4299 = vsel %vm4298, %v4294, inf
      %4300 = vmin.xlane.f32.xlu0 %v4299
      %v4301 = vpop.xlane.xlu0 %4300
      %v4302 = vcvt.f32.s32 %v4301
      %v4303 = vcvt.f32.s32 %v4297
      %v4304 = vshll.u32 %v4303, 16
      %v4305 = vadd.s32 %v4304, %v4302
      %v4306 = vsel %vm1189, %v4290, 2147483647
      %v4307 = vand.u32 %v4306, 65535
      %v4308 = vshra.s32 %v4306, 16
      %v4309 = vcvt.s32.f32 %v4307
      %v4310 = vcvt.s32.f32 %v4308
      %4311 = vmin.xlane.f32.xlu0 %v4310
      %v4312 = vpop.xlane.xlu0 %4311
      %vm4313 = vcmp.eq.f32.partialorder %v4310, %v4312
      %v4314 = vsel %vm4313, %v4309, inf
      %4315 = vmin.xlane.f32.xlu0 %v4314
      %v4316 = vpop.xlane.xlu0 %4315
      %v4317 = vcvt.f32.s32 %v4316
      %v4318 = vcvt.f32.s32 %v4312
      %v4319 = vshll.u32 %v4318, 16
      %v4320 = vadd.s32 %v4319, %v4317
      %vm4321 = vcmp.eq.s32.totalorder %v1197, %v4305
      %vm4322 = vcmp.eq.s32.totalorder %v1197, %v4320
      %v4323 = vsel %vm4321, 1, 0
      %v4324 = vsel %vm4322, 1, 0
      %v4325 = vcvt.s32.f32 %v4323
      %v4326 = vcvt.s32.f32 %v4324
      %v4328 = vsel %vm1189, %v4325, 0
      %v4331 = vsel %vm1189, %v4326, 0
      %4333 = vmatprep.subr.mxu0 0.0
      %4334 = vmatpush1.msra.mxu0 %v1068
      %4335 = vmatprep.subr.mxu0 0.0
      %4336 = vmatpush1.msra.mxu0 %v1069
      %4337 = vmatprep.subr.mxu0 0.0
      %4338 = vmatpush1.msra.mxu0 %v1070
      %4339 = vmatprep.subr.mxu0 0.0
      %4340 = vmatpush1.msra.mxu0 %v1071
      %4341 = vmatprep.subr.mxu0 0.0
      %4342 = vmatpush1.msra.mxu0 0.0
      %4343 = vmatprep.subr.mxu0 0.0
      %4344 = vmatpush1.msra.mxu0 0.0
      %4345 = vmatprep.subr.mxu0 0.0
      %4346 = vmatpush1.msra.mxu0 0.0
      %4347 = vmatprep.subr.mxu0 0.0
      %4348 = vmatpush1.msra.mxu0 0.0
      %4349 = vmatprep.subr.mxu0 0.0
      %4350 = vmatpush1.msra.mxu0 0.0
      %4351 = vmatprep.subr.mxu0 0.0
      %4352 = vmatpush1.msra.mxu0 0.0
      %4353 = vmatprep.subr.mxu0 0.0
      %4354 = vmatpush1.msra.mxu0 0.0
      %4355 = vmatprep.subr.mxu0 0.0
      %4356 = vmatpush1.msra.mxu0 0.0
      %4357 = vmatprep.subr.mxu0 0.0
      %4358 = vmatpush1.msra.mxu0 0.0
      %4359 = vmatprep.subr.mxu0 0.0
      %4360 = vmatpush1.msra.mxu0 0.0
      %4361 = vmatprep.subr.mxu0 0.0
      %4362 = vmatpush1.msra.mxu0 0.0
      %4363 = vmatprep.subr.mxu0 0.0
      %4364 = vmatpush1.msra.mxu0 0.0
      %4365 = vmatprep.subr.mxu0 0.0
      %4366 = vmatpush1.msra.mxu0 0.0
      %4367 = vmatprep.subr.mxu0 0.0
      %4368 = vmatpush1.msra.mxu0 0.0
      %4369 = vmatprep.subr.mxu0 0.0
      %4370 = vmatpush1.msra.mxu0 0.0
      %4371 = vmatprep.subr.mxu0 0.0
      %4372 = vmatpush1.msra.mxu0 0.0
      %4373 = vmatprep.subr.mxu0 0.0
      %4374 = vmatpush1.msra.mxu0 0.0
      %4375 = vmatprep.subr.mxu0 0.0
      %4376 = vmatpush1.msra.mxu0 0.0
      %4377 = vmatprep.subr.mxu0 0.0
      %4378 = vmatpush1.msra.mxu0 0.0
      %4379 = vmatprep.subr.mxu0 0.0
      %4380 = vmatpush1.msra.mxu0 0.0
      %4381 = vmatprep.subr.mxu0 0.0
      %4382 = vmatpush1.msra.mxu0 0.0
      %4383 = vmatprep.subr.mxu0 0.0
      %4384 = vmatpush1.msra.mxu0 0.0
      %4385 = vmatprep.subr.mxu0 0.0
      %4386 = vmatpush1.msra.mxu0 0.0
      %4387 = vmatprep.subr.mxu0 0.0
      %4388 = vmatpush1.msra.mxu0 0.0
      %4389 = vmatprep.subr.mxu0 0.0
      %4390 = vmatpush1.msra.mxu0 0.0
      %4391 = vmatprep.subr.mxu0 0.0
      %4392 = vmatpush1.msra.mxu0 0.0
      %4393 = vmatprep.subr.mxu0 0.0
      %4394 = vmatpush1.msra.mxu0 0.0
      %4395 = vmatprep.subr.mxu0 0.0
      %4396 = vmatpush1.msra.mxu0 0.0
      %4397 = vmatprep.mubr.f32.mxu0 0.0
      %4398 = vmatmul.mubr.f32.gmra.mrb[0].mxu0 %v4328
      %v4399 = vpop.f32.mrb[0].mxu0
      %v4400 = vadd.f32 0.0, %v4399
      %v4401 = vpop.f32.mrb[0].mxu0
      %4402 = vmatprep.mubr.f32.mxu0 0.0
      %4403 = vmatmul.mubr.f32.gmra.mrb[0].mxu0 %v4331
      %v4404 = vpop.f32.mrb[0].mxu0
      %v4405 = vadd.f32 0.0, %v4404
      %v4406 = vpop.f32.mrb[0].mxu0
      %4407 = vdwg.mxu0
      %4410 = vrot.lane.b32.xlu0 %v4400, 88
      %v4411 = vpop.permute.xlu0 %4410
      %4412 = vrot.lane.b32.xlu0 %v4405, 88
      %v4413 = vpop.permute.xlu0 %4412
      %v4416 = vsub.f32 %v4172, %v4411
      %v4417 = vsub.f32 %v4173, %v4413
      %v4418 = vmul.f32 %v4416, %v4416
      %v4419 = vmul.f32 %v4417, %v4417
      %4422 = vrot.lane.b32.xlu0 %v4418, 40
      %v4423 = vpop.permute.xlu0 %4422
      %4424 = vrot.lane.b32.xlu0 %v4419, 40
      %v4425 = vpop.permute.xlu0 %4424
      %v4428 = vsel %vm1075, %v4423, 0.0
      %4429 = vadd.xlane.f32.xlu0 %v4428
      %v4430 = vpop.xlane.xlu0 %4429
      %v4431 = vsel %vm1075, %v4425, 0.0
      %4432 = vadd.xlane.f32.xlu0 %v4431
      %v4433 = vpop.xlane.xlu0 %4432
      %v4434 = vadd.f32 %v4152, %v4430
      %v4435 = vadd.f32 %v4153, %v4433
      %v4436 = vrot.slane %v4400, 7
      %v4437 = vrot.slane %v4405, 7
      %v4438 = vsel %vm1333, %v4436, %v4437
      %4439 = vrot.lane.b32.xlu0 %v4436, 96
      %v4440 = vpop.permute.xlu0 %4439
      %4441 = vrot.lane.b32.xlu0 %v4438, 96
      %v4442 = vpop.permute.xlu0 %4441
      %4443 = vrot.lane.b32.xlu0 %v4437, 96
      %v4444 = vpop.permute.xlu0 %4443
      %vm4448 = vcmask 851713
      %4449 = vst.msk [vmem:[#allocation3] sm:$0xfe] %vm4448, %v4440
      %vm4450 = vcmask 851712
      %4451 = vst.msk [vmem:[#allocation3 + $0x10] sm:$0xff] %vm4450, %v4442
      %vm4452 = vcmask 844544
      %4453 = vst.msk [vmem:[#allocation3 + $0x20] sm:$0x1] %vm4452, %v4444
      %v4454 = vld [vmem:[#allocation2] sm:$0xff]
      %v4455 = vld [vmem:[#allocation2 + $0x8] sm:$0xff]
      %4458 = vrot.lane.b32.xlu0 %v4454, 32
      %v4459 = vpop.permute.xlu0 %4458
      %4460 = vrot.lane.b32.xlu0 %v4455, 32
      %v4461 = vpop.permute.xlu0 %4460
      %v4462 = vsel %vm1075, %v4459, 0
      %v4464 = vsel %vm1075, %v4461, 0
      %4466 = vmatprep.subr.mxu0 0.0
      %4467 = vmatpush1.xpose.msra.mxu0 %v1083
      %4468 = vmatprep.subr.mxu0 0.0
      %4469 = vmatpush1.xpose.msra.mxu0 %v1086
      %4470 = vmatprep.subr.mxu0 0.0
      %4471 = vmatpush1.xpose.msra.mxu0 %v1089
      %4472 = vmatprep.subr.mxu0 0.0
      %4473 = vmatpush1.xpose.msra.mxu0 %v1092
      %4474 = vmatprep.subr.mxu0 0.0
      %4475 = vmatpush1.xpose.msra.mxu0 0.0
      %4476 = vmatprep.subr.mxu0 0.0
      %4477 = vmatpush1.xpose.msra.mxu0 0.0
      %4478 = vmatprep.subr.mxu0 0.0
      %4479 = vmatpush1.xpose.msra.mxu0 0.0
      %4480 = vmatprep.subr.mxu0 0.0
      %4481 = vmatpush1.xpose.msra.mxu0 0.0
      %4482 = vmatprep.subr.mxu0 0.0
      %4483 = vmatpush1.xpose.msra.mxu0 0.0
      %4484 = vmatprep.subr.mxu0 0.0
      %4485 = vmatpush1.xpose.msra.mxu0 0.0
      %4486 = vmatprep.subr.mxu0 0.0
      %4487 = vmatpush1.xpose.msra.mxu0 0.0
      %4488 = vmatprep.subr.mxu0 0.0
      %4489 = vmatpush1.xpose.msra.mxu0 0.0
      %4490 = vmatprep.subr.mxu0 0.0
      %4491 = vmatpush1.xpose.msra.mxu0 0.0
      %4492 = vmatprep.subr.mxu0 0.0
      %4493 = vmatpush1.xpose.msra.mxu0 0.0
      %4494 = vmatprep.subr.mxu0 0.0
      %4495 = vmatpush1.xpose.msra.mxu0 0.0
      %4496 = vmatprep.subr.mxu0 0.0
      %4497 = vmatpush1.xpose.msra.mxu0 0.0
      %4498 = vmatprep.subr.mxu0 0.0
      %4499 = vmatpush1.xpose.msra.mxu0 0.0
      %4500 = vmatprep.subr.mxu0 0.0
      %4501 = vmatpush1.xpose.msra.mxu0 0.0
      %4502 = vmatprep.subr.mxu0 0.0
      %4503 = vmatpush1.xpose.msra.mxu0 0.0
      %4504 = vmatprep.subr.mxu0 0.0
      %4505 = vmatpush1.xpose.msra.mxu0 0.0
      %4506 = vmatprep.subr.mxu0 0.0
      %4507 = vmatpush1.xpose.msra.mxu0 0.0
      %4508 = vmatprep.subr.mxu0 0.0
      %4509 = vmatpush1.xpose.msra.mxu0 0.0
      %4510 = vmatprep.subr.mxu0 0.0
      %4511 = vmatpush1.xpose.msra.mxu0 0.0
      %4512 = vmatprep.subr.mxu0 0.0
      %4513 = vmatpush1.xpose.msra.mxu0 0.0
      %4514 = vmatprep.subr.mxu0 0.0
      %4515 = vmatpush1.xpose.msra.mxu0 0.0
      %4516 = vmatprep.subr.mxu0 0.0
      %4517 = vmatpush1.xpose.msra.mxu0 0.0
      %4518 = vmatprep.subr.mxu0 0.0
      %4519 = vmatpush1.xpose.msra.mxu0 0.0
      %4520 = vmatprep.subr.mxu0 0.0
      %4521 = vmatpush1.xpose.msra.mxu0 0.0
      %4522 = vmatprep.subr.mxu0 0.0
      %4523 = vmatpush1.xpose.msra.mxu0 0.0
      %4524 = vmatprep.subr.mxu0 0.0
      %4525 = vmatpush1.xpose.msra.mxu0 0.0
      %4526 = vmatprep.subr.mxu0 0.0
      %4527 = vmatpush1.xpose.msra.mxu0 0.0
      %4528 = vmatprep.subr.mxu0 0.0
      %4529 = vmatpush1.xpose.msra.mxu0 0.0
      %4530 = vmatprep.mubr.f32.mxu0 0.0
      %4531 = vmatmul.mubr.f32.gmra.mrb[0].mxu0 %v4462
      %v4532 = vpop.f32.mrb[0].mxu0
      %v4533 = vadd.f32 0.0, %v4532
      %v4534 = vpop.f32.mrb[0].mxu0
      %4535 = vmatprep.mubr.f32.mxu0 0.0
      %4536 = vmatmul.mubr.f32.gmra.mrb[0].mxu0 %v4464
      %v4537 = vpop.f32.mrb[0].mxu0
      %v4538 = vadd.f32 0.0, %v4537
      %v4539 = vpop.f32.mrb[0].mxu0
      %4540 = vdwg.mxu0
      %v4541 = vmul.f32 %v4454, %v4454
      %v4542 = vmul.f32 %v4455, %v4455
      %4545 = vrot.lane.b32.xlu0 %v4541, 32
      %v4546 = vpop.permute.xlu0 %4545
      %4547 = vrot.lane.b32.xlu0 %v4542, 32
      %v4548 = vpop.permute.xlu0 %4547
      %v4551 = vsel %vm1075, %v4546, 0.0
      %4552 = vadd.xlane.f32.xlu0 %v4551
      %v4553 = vpop.xlane.xlu0 %4552
      %v4554 = vsel %vm1075, %v4548, 0.0
      %4555 = vadd.xlane.f32.xlu0 %v4554
      %v4556 = vpop.xlane.xlu0 %4555
      %v4557 = vadd.f32 %v4553, %v1181
      %v4558 = vadd.f32 %v4556, %v1181
      %v4559 = vmul.f32 %v4533, 2.0
      %v4560 = vmul.f32 %v4538, 2.0
      %v4561 = vsub.f32 %v4557, %v4559
      %v4562 = vsub.f32 %v4558, %v4560
      %v4563 = vsel %vm1189, %v4561, inf
      %4564 = vmin.xlane.f32.xlu0 %v4563
      %v4565 = vpop.xlane.xlu0 %4564
      %v4566 = vsel %vm1189, %v4562, inf
      %4567 = vmin.xlane.f32.xlu0 %v4566
      %v4568 = vpop.xlane.xlu0 %4567
      %vm4569 = vcmp.le.f32.partialorder %v4561, %v4565
      %vm4570 = vcmp.le.f32.partialorder %v4562, %v4568
      %v4571 = vsel %vm4569, %v1197, 32
      %v4572 = vsel %vm4570, %v1197, 32
      %v4573 = vsel %vm1189, %v4571, 2147483647
      %v4574 = vand.u32 %v4573, 65535
      %v4575 = vshra.s32 %v4573, 16
      %v4576 = vcvt.s32.f32 %v4574
      %v4577 = vcvt.s32.f32 %v4575
      %4578 = vmin.xlane.f32.xlu0 %v4577
      %v4579 = vpop.xlane.xlu0 %4578
      %vm4580 = vcmp.eq.f32.partialorder %v4577, %v4579
      %v4581 = vsel %vm4580, %v4576, inf
      %4582 = vmin.xlane.f32.xlu0 %v4581
      %v4583 = vpop.xlane.xlu0 %4582
      %v4584 = vcvt.f32.s32 %v4583
      %v4585 = vcvt.f32.s32 %v4579
      %v4586 = vshll.u32 %v4585, 16
      %v4587 = vadd.s32 %v4586, %v4584
      %v4588 = vsel %vm1189, %v4572, 2147483647
      %v4589 = vand.u32 %v4588, 65535
      %v4590 = vshra.s32 %v4588, 16
      %v4591 = vcvt.s32.f32 %v4589
      %v4592 = vcvt.s32.f32 %v4590
      %4593 = vmin.xlane.f32.xlu0 %v4592
      %v4594 = vpop.xlane.xlu0 %4593
      %vm4595 = vcmp.eq.f32.partialorder %v4592, %v4594
      %v4596 = vsel %vm4595, %v4591, inf
      %4597 = vmin.xlane.f32.xlu0 %v4596
      %v4598 = vpop.xlane.xlu0 %4597
      %v4599 = vcvt.f32.s32 %v4598
      %v4600 = vcvt.f32.s32 %v4594
      %v4601 = vshll.u32 %v4600, 16
      %v4602 = vadd.s32 %v4601, %v4599
      %vm4603 = vcmp.eq.s32.totalorder %v1197, %v4587
      %vm4604 = vcmp.eq.s32.totalorder %v1197, %v4602
      %v4605 = vsel %vm4603, 1, 0
      %v4606 = vsel %vm4604, 1, 0
      %v4607 = vcvt.s32.f32 %v4605
      %v4608 = vcvt.s32.f32 %v4606
      %v4610 = vsel %vm1189, %v4607, 0
      %v4613 = vsel %vm1189, %v4608, 0
      %4615 = vmatprep.subr.mxu0 0.0
      %4616 = vmatpush1.msra.mxu0 %v1068
      %4617 = vmatprep.subr.mxu0 0.0
      %4618 = vmatpush1.msra.mxu0 %v1069
      %4619 = vmatprep.subr.mxu0 0.0
      %4620 = vmatpush1.msra.mxu0 %v1070
      %4621 = vmatprep.subr.mxu0 0.0
      %4622 = vmatpush1.msra.mxu0 %v1071
      %4623 = vmatprep.subr.mxu0 0.0
      %4624 = vmatpush1.msra.mxu0 0.0
      %4625 = vmatprep.subr.mxu0 0.0
      %4626 = vmatpush1.msra.mxu0 0.0
      %4627 = vmatprep.subr.mxu0 0.0
      %4628 = vmatpush1.msra.mxu0 0.0
      %4629 = vmatprep.subr.mxu0 0.0
      %4630 = vmatpush1.msra.mxu0 0.0
      %4631 = vmatprep.subr.mxu0 0.0
      %4632 = vmatpush1.msra.mxu0 0.0
      %4633 = vmatprep.subr.mxu0 0.0
      %4634 = vmatpush1.msra.mxu0 0.0
      %4635 = vmatprep.subr.mxu0 0.0
      %4636 = vmatpush1.msra.mxu0 0.0
      %4637 = vmatprep.subr.mxu0 0.0
      %4638 = vmatpush1.msra.mxu0 0.0
      %4639 = vmatprep.subr.mxu0 0.0
      %4640 = vmatpush1.msra.mxu0 0.0
      %4641 = vmatprep.subr.mxu0 0.0
      %4642 = vmatpush1.msra.mxu0 0.0
      %4643 = vmatprep.subr.mxu0 0.0
      %4644 = vmatpush1.msra.mxu0 0.0
      %4645 = vmatprep.subr.mxu0 0.0
      %4646 = vmatpush1.msra.mxu0 0.0
      %4647 = vmatprep.subr.mxu0 0.0
      %4648 = vmatpush1.msra.mxu0 0.0
      %4649 = vmatprep.subr.mxu0 0.0
      %4650 = vmatpush1.msra.mxu0 0.0
      %4651 = vmatprep.subr.mxu0 0.0
      %4652 = vmatpush1.msra.mxu0 0.0
      %4653 = vmatprep.subr.mxu0 0.0
      %4654 = vmatpush1.msra.mxu0 0.0
      %4655 = vmatprep.subr.mxu0 0.0
      %4656 = vmatpush1.msra.mxu0 0.0
      %4657 = vmatprep.subr.mxu0 0.0
      %4658 = vmatpush1.msra.mxu0 0.0
      %4659 = vmatprep.subr.mxu0 0.0
      %4660 = vmatpush1.msra.mxu0 0.0
      %4661 = vmatprep.subr.mxu0 0.0
      %4662 = vmatpush1.msra.mxu0 0.0
      %4663 = vmatprep.subr.mxu0 0.0
      %4664 = vmatpush1.msra.mxu0 0.0
      %4665 = vmatprep.subr.mxu0 0.0
      %4666 = vmatpush1.msra.mxu0 0.0
      %4667 = vmatprep.subr.mxu0 0.0
      %4668 = vmatpush1.msra.mxu0 0.0
      %4669 = vmatprep.subr.mxu0 0.0
      %4670 = vmatpush1.msra.mxu0 0.0
      %4671 = vmatprep.subr.mxu0 0.0
      %4672 = vmatpush1.msra.mxu0 0.0
      %4673 = vmatprep.subr.mxu0 0.0
      %4674 = vmatpush1.msra.mxu0 0.0
      %4675 = vmatprep.subr.mxu0 0.0
      %4676 = vmatpush1.msra.mxu0 0.0
      %4677 = vmatprep.subr.mxu0 0.0
      %4678 = vmatpush1.msra.mxu0 0.0
      %4679 = vmatprep.mubr.f32.mxu0 0.0
      %4680 = vmatmul.mubr.f32.gmra.mrb[0].mxu0 %v4610
      %v4681 = vpop.f32.mrb[0].mxu0
      %v4682 = vadd.f32 0.0, %v4681
      %v4683 = vpop.f32.mrb[0].mxu0
      %4684 = vmatprep.mubr.f32.mxu0 0.0
      %4685 = vmatmul.mubr.f32.gmra.mrb[0].mxu0 %v4613
      %v4686 = vpop.f32.mrb[0].mxu0
      %v4687 = vadd.f32 0.0, %v4686
      %v4688 = vpop.f32.mrb[0].mxu0
      %4689 = vdwg.mxu0
      %4692 = vrot.lane.b32.xlu0 %v4682, 96
      %v4693 = vpop.permute.xlu0 %4692
      %4694 = vrot.lane.b32.xlu0 %v4687, 96
      %v4695 = vpop.permute.xlu0 %4694
      %v4698 = vsub.f32 %v4454, %v4693
      %v4699 = vsub.f32 %v4455, %v4695
      %v4700 = vmul.f32 %v4698, %v4698
      %v4701 = vmul.f32 %v4699, %v4699
      %4704 = vrot.lane.b32.xlu0 %v4700, 32
      %v4705 = vpop.permute.xlu0 %4704
      %4706 = vrot.lane.b32.xlu0 %v4701, 32
      %v4707 = vpop.permute.xlu0 %4706
      %v4710 = vsel %vm1075, %v4705, 0.0
      %4711 = vadd.xlane.f32.xlu0 %v4710
      %v4712 = vpop.xlane.xlu0 %4711
      %v4713 = vsel %vm1075, %v4707, 0.0
      %4714 = vadd.xlane.f32.xlu0 %v4713
      %v4715 = vpop.xlane.xlu0 %4714
      %v4716 = vadd.f32 %v4434, %v4712
      %v4717 = vadd.f32 %v4435, %v4715
      %v4718 = vrot.slane %v4682, 7
      %v4719 = vrot.slane %v4687, 7
      %v4720 = vsel %vm1333, %v4718, %v4719
      %4721 = vrot.lane.b32.xlu0 %v4718, 104
      %v4722 = vpop.permute.xlu0 %4721
      %4723 = vrot.lane.b32.xlu0 %v4720, 104
      %v4724 = vpop.permute.xlu0 %4723
      %4725 = vrot.lane.b32.xlu0 %v4719, 104
      %v4726 = vpop.permute.xlu0 %4725
      %vm4730 = vcmask 917313
      %4731 = vst.msk [vmem:[#allocation3] sm:$0xfe] %vm4730, %v4722
      %vm4732 = vcmask 917312
      %4733 = vst.msk [vmem:[#allocation3 + $0x10] sm:$0xff] %vm4732, %v4724
      %vm4734 = vcmask 910144
      %4735 = vst.msk [vmem:[#allocation3 + $0x20] sm:$0x1] %vm4734, %v4726
      %v4736 = vld [vmem:[#allocation2] sm:$0xff]
      %v4737 = vld [vmem:[#allocation2 + $0x8] sm:$0xff]
      %4740 = vrot.lane.b32.xlu0 %v4736, 24
      %v4741 = vpop.permute.xlu0 %4740
      %4742 = vrot.lane.b32.xlu0 %v4737, 24
      %v4743 = vpop.permute.xlu0 %4742
      %v4744 = vsel %vm1075, %v4741, 0
      %v4746 = vsel %vm1075, %v4743, 0
      %4748 = vmatprep.subr.mxu0 0.0
      %4749 = vmatpush1.xpose.msra.mxu0 %v1083
      %4750 = vmatprep.subr.mxu0 0.0
      %4751 = vmatpush1.xpose.msra.mxu0 %v1086
      %4752 = vmatprep.subr.mxu0 0.0
      %4753 = vmatpush1.xpose.msra.mxu0 %v1089
      %4754 = vmatprep.subr.mxu0 0.0
      %4755 = vmatpush1.xpose.msra.mxu0 %v1092
      %4756 = vmatprep.subr.mxu0 0.0
      %4757 = vmatpush1.xpose.msra.mxu0 0.0
      %4758 = vmatprep.subr.mxu0 0.0
      %4759 = vmatpush1.xpose.msra.mxu0 0.0
      %4760 = vmatprep.subr.mxu0 0.0
      %4761 = vmatpush1.xpose.msra.mxu0 0.0
      %4762 = vmatprep.subr.mxu0 0.0
      %4763 = vmatpush1.xpose.msra.mxu0 0.0
      %4764 = vmatprep.subr.mxu0 0.0
      %4765 = vmatpush1.xpose.msra.mxu0 0.0
      %4766 = vmatprep.subr.mxu0 0.0
      %4767 = vmatpush1.xpose.msra.mxu0 0.0
      %4768 = vmatprep.subr.mxu0 0.0
      %4769 = vmatpush1.xpose.msra.mxu0 0.0
      %4770 = vmatprep.subr.mxu0 0.0
      %4771 = vmatpush1.xpose.msra.mxu0 0.0
      %4772 = vmatprep.subr.mxu0 0.0
      %4773 = vmatpush1.xpose.msra.mxu0 0.0
      %4774 = vmatprep.subr.mxu0 0.0
      %4775 = vmatpush1.xpose.msra.mxu0 0.0
      %4776 = vmatprep.subr.mxu0 0.0
      %4777 = vmatpush1.xpose.msra.mxu0 0.0
      %4778 = vmatprep.subr.mxu0 0.0
      %4779 = vmatpush1.xpose.msra.mxu0 0.0
      %4780 = vmatprep.subr.mxu0 0.0
      %4781 = vmatpush1.xpose.msra.mxu0 0.0
      %4782 = vmatprep.subr.mxu0 0.0
      %4783 = vmatpush1.xpose.msra.mxu0 0.0
      %4784 = vmatprep.subr.mxu0 0.0
      %4785 = vmatpush1.xpose.msra.mxu0 0.0
      %4786 = vmatprep.subr.mxu0 0.0
      %4787 = vmatpush1.xpose.msra.mxu0 0.0
      %4788 = vmatprep.subr.mxu0 0.0
      %4789 = vmatpush1.xpose.msra.mxu0 0.0
      %4790 = vmatprep.subr.mxu0 0.0
      %4791 = vmatpush1.xpose.msra.mxu0 0.0
      %4792 = vmatprep.subr.mxu0 0.0
      %4793 = vmatpush1.xpose.msra.mxu0 0.0
      %4794 = vmatprep.subr.mxu0 0.0
      %4795 = vmatpush1.xpose.msra.mxu0 0.0
      %4796 = vmatprep.subr.mxu0 0.0
      %4797 = vmatpush1.xpose.msra.mxu0 0.0
      %4798 = vmatprep.subr.mxu0 0.0
      %4799 = vmatpush1.xpose.msra.mxu0 0.0
      %4800 = vmatprep.subr.mxu0 0.0
      %4801 = vmatpush1.xpose.msra.mxu0 0.0
      %4802 = vmatprep.subr.mxu0 0.0
      %4803 = vmatpush1.xpose.msra.mxu0 0.0
      %4804 = vmatprep.subr.mxu0 0.0
      %4805 = vmatpush1.xpose.msra.mxu0 0.0
      %4806 = vmatprep.subr.mxu0 0.0
      %4807 = vmatpush1.xpose.msra.mxu0 0.0
      %4808 = vmatprep.subr.mxu0 0.0
      %4809 = vmatpush1.xpose.msra.mxu0 0.0
      %4810 = vmatprep.subr.mxu0 0.0
      %4811 = vmatpush1.xpose.msra.mxu0 0.0
      %4812 = vmatprep.mubr.f32.mxu0 0.0
      %4813 = vmatmul.mubr.f32.gmra.mrb[0].mxu0 %v4744
      %v4814 = vpop.f32.mrb[0].mxu0
      %v4815 = vadd.f32 0.0, %v4814
      %v4816 = vpop.f32.mrb[0].mxu0
      %4817 = vmatprep.mubr.f32.mxu0 0.0
      %4818 = vmatmul.mubr.f32.gmra.mrb[0].mxu0 %v4746
      %v4819 = vpop.f32.mrb[0].mxu0
      %v4820 = vadd.f32 0.0, %v4819
      %v4821 = vpop.f32.mrb[0].mxu0
      %4822 = vdwg.mxu0
      %v4823 = vmul.f32 %v4736, %v4736
      %v4824 = vmul.f32 %v4737, %v4737
      %4827 = vrot.lane.b32.xlu0 %v4823, 24
      %v4828 = vpop.permute.xlu0 %4827
      %4829 = vrot.lane.b32.xlu0 %v4824, 24
      %v4830 = vpop.permute.xlu0 %4829
      %v4833 = vsel %vm1075, %v4828, 0.0
      %4834 = vadd.xlane.f32.xlu0 %v4833
      %v4835 = vpop.xlane.xlu0 %4834
      %v4836 = vsel %vm1075, %v4830, 0.0
      %4837 = vadd.xlane.f32.xlu0 %v4836
      %v4838 = vpop.xlane.xlu0 %4837
      %v4839 = vadd.f32 %v4835, %v1181
      %v4840 = vadd.f32 %v4838, %v1181
      %v4841 = vmul.f32 %v4815, 2.0
      %v4842 = vmul.f32 %v4820, 2.0
      %v4843 = vsub.f32 %v4839, %v4841
      %v4844 = vsub.f32 %v4840, %v4842
      %v4845 = vsel %vm1189, %v4843, inf
      %4846 = vmin.xlane.f32.xlu0 %v4845
      %v4847 = vpop.xlane.xlu0 %4846
      %v4848 = vsel %vm1189, %v4844, inf
      %4849 = vmin.xlane.f32.xlu0 %v4848
      %v4850 = vpop.xlane.xlu0 %4849
      %vm4851 = vcmp.le.f32.partialorder %v4843, %v4847
      %vm4852 = vcmp.le.f32.partialorder %v4844, %v4850
      %v4853 = vsel %vm4851, %v1197, 32
      %v4854 = vsel %vm4852, %v1197, 32
      %v4855 = vsel %vm1189, %v4853, 2147483647
      %v4856 = vand.u32 %v4855, 65535
      %v4857 = vshra.s32 %v4855, 16
      %v4858 = vcvt.s32.f32 %v4856
      %v4859 = vcvt.s32.f32 %v4857
      %4860 = vmin.xlane.f32.xlu0 %v4859
      %v4861 = vpop.xlane.xlu0 %4860
      %vm4862 = vcmp.eq.f32.partialorder %v4859, %v4861
      %v4863 = vsel %vm4862, %v4858, inf
      %4864 = vmin.xlane.f32.xlu0 %v4863
      %v4865 = vpop.xlane.xlu0 %4864
      %v4866 = vcvt.f32.s32 %v4865
      %v4867 = vcvt.f32.s32 %v4861
      %v4868 = vshll.u32 %v4867, 16
      %v4869 = vadd.s32 %v4868, %v4866
      %v4870 = vsel %vm1189, %v4854, 2147483647
      %v4871 = vand.u32 %v4870, 65535
      %v4872 = vshra.s32 %v4870, 16
      %v4873 = vcvt.s32.f32 %v4871
      %v4874 = vcvt.s32.f32 %v4872
      %4875 = vmin.xlane.f32.xlu0 %v4874
      %v4876 = vpop.xlane.xlu0 %4875
      %vm4877 = vcmp.eq.f32.partialorder %v4874, %v4876
      %v4878 = vsel %vm4877, %v4873, inf
      %4879 = vmin.xlane.f32.xlu0 %v4878
      %v4880 = vpop.xlane.xlu0 %4879
      %v4881 = vcvt.f32.s32 %v4880
      %v4882 = vcvt.f32.s32 %v4876
      %v4883 = vshll.u32 %v4882, 16
      %v4884 = vadd.s32 %v4883, %v4881
      %vm4885 = vcmp.eq.s32.totalorder %v1197, %v4869
      %vm4886 = vcmp.eq.s32.totalorder %v1197, %v4884
      %v4887 = vsel %vm4885, 1, 0
      %v4888 = vsel %vm4886, 1, 0
      %v4889 = vcvt.s32.f32 %v4887
      %v4890 = vcvt.s32.f32 %v4888
      %v4892 = vsel %vm1189, %v4889, 0
      %v4895 = vsel %vm1189, %v4890, 0
      %4897 = vmatprep.subr.mxu0 0.0
      %4898 = vmatpush1.msra.mxu0 %v1068
      %4899 = vmatprep.subr.mxu0 0.0
      %4900 = vmatpush1.msra.mxu0 %v1069
      %4901 = vmatprep.subr.mxu0 0.0
      %4902 = vmatpush1.msra.mxu0 %v1070
      %4903 = vmatprep.subr.mxu0 0.0
      %4904 = vmatpush1.msra.mxu0 %v1071
      %4905 = vmatprep.subr.mxu0 0.0
      %4906 = vmatpush1.msra.mxu0 0.0
      %4907 = vmatprep.subr.mxu0 0.0
      %4908 = vmatpush1.msra.mxu0 0.0
      %4909 = vmatprep.subr.mxu0 0.0
      %4910 = vmatpush1.msra.mxu0 0.0
      %4911 = vmatprep.subr.mxu0 0.0
      %4912 = vmatpush1.msra.mxu0 0.0
      %4913 = vmatprep.subr.mxu0 0.0
      %4914 = vmatpush1.msra.mxu0 0.0
      %4915 = vmatprep.subr.mxu0 0.0
      %4916 = vmatpush1.msra.mxu0 0.0
      %4917 = vmatprep.subr.mxu0 0.0
      %4918 = vmatpush1.msra.mxu0 0.0
      %4919 = vmatprep.subr.mxu0 0.0
      %4920 = vmatpush1.msra.mxu0 0.0
      %4921 = vmatprep.subr.mxu0 0.0
      %4922 = vmatpush1.msra.mxu0 0.0
      %4923 = vmatprep.subr.mxu0 0.0
      %4924 = vmatpush1.msra.mxu0 0.0
      %4925 = vmatprep.subr.mxu0 0.0
      %4926 = vmatpush1.msra.mxu0 0.0
      %4927 = vmatprep.subr.mxu0 0.0
      %4928 = vmatpush1.msra.mxu0 0.0
      %4929 = vmatprep.subr.mxu0 0.0
      %4930 = vmatpush1.msra.mxu0 0.0
      %4931 = vmatprep.subr.mxu0 0.0
      %4932 = vmatpush1.msra.mxu0 0.0
      %4933 = vmatprep.subr.mxu0 0.0
      %4934 = vmatpush1.msra.mxu0 0.0
      %4935 = vmatprep.subr.mxu0 0.0
      %4936 = vmatpush1.msra.mxu0 0.0
      %4937 = vmatprep.subr.mxu0 0.0
      %4938 = vmatpush1.msra.mxu0 0.0
      %4939 = vmatprep.subr.mxu0 0.0
      %4940 = vmatpush1.msra.mxu0 0.0
      %4941 = vmatprep.subr.mxu0 0.0
      %4942 = vmatpush1.msra.mxu0 0.0
      %4943 = vmatprep.subr.mxu0 0.0
      %4944 = vmatpush1.msra.mxu0 0.0
      %4945 = vmatprep.subr.mxu0 0.0
      %4946 = vmatpush1.msra.mxu0 0.0
      %4947 = vmatprep.subr.mxu0 0.0
      %4948 = vmatpush1.msra.mxu0 0.0
      %4949 = vmatprep.subr.mxu0 0.0
      %4950 = vmatpush1.msra.mxu0 0.0
      %4951 = vmatprep.subr.mxu0 0.0
      %4952 = vmatpush1.msra.mxu0 0.0
      %4953 = vmatprep.subr.mxu0 0.0
      %4954 = vmatpush1.msra.mxu0 0.0
      %4955 = vmatprep.subr.mxu0 0.0
      %4956 = vmatpush1.msra.mxu0 0.0
      %4957 = vmatprep.subr.mxu0 0.0
      %4958 = vmatpush1.msra.mxu0 0.0
      %4959 = vmatprep.subr.mxu0 0.0
      %4960 = vmatpush1.msra.mxu0 0.0
      %4961 = vmatprep.mubr.f32.mxu0 0.0
      %4962 = vmatmul.mubr.f32.gmra.mrb[0].mxu0 %v4892
      %v4963 = vpop.f32.mrb[0].mxu0
      %v4964 = vadd.f32 0.0, %v4963
      %v4965 = vpop.f32.mrb[0].mxu0
      %4966 = vmatprep.mubr.f32.mxu0 0.0
      %4967 = vmatmul.mubr.f32.gmra.mrb[0].mxu0 %v4895
      %v4968 = vpop.f32.mrb[0].mxu0
      %v4969 = vadd.f32 0.0, %v4968
      %v4970 = vpop.f32.mrb[0].mxu0
      %4971 = vdwg.mxu0
      %4974 = vrot.lane.b32.xlu0 %v4964, 104
      %v4975 = vpop.permute.xlu0 %4974
      %4976 = vrot.lane.b32.xlu0 %v4969, 104
      %v4977 = vpop.permute.xlu0 %4976
      %v4980 = vsub.f32 %v4736, %v4975
      %v4981 = vsub.f32 %v4737, %v4977
      %v4982 = vmul.f32 %v4980, %v4980
      %v4983 = vmul.f32 %v4981, %v4981
      %4986 = vrot.lane.b32.xlu0 %v4982, 24
      %v4987 = vpop.permute.xlu0 %4986
      %4988 = vrot.lane.b32.xlu0 %v4983, 24
      %v4989 = vpop.permute.xlu0 %4988
      %v4992 = vsel %vm1075, %v4987, 0.0
      %4993 = vadd.xlane.f32.xlu0 %v4992
      %v4994 = vpop.xlane.xlu0 %4993
      %v4995 = vsel %vm1075, %v4989, 0.0
      %4996 = vadd.xlane.f32.xlu0 %v4995
      %v4997 = vpop.xlane.xlu0 %4996
      %v4998 = vadd.f32 %v4716, %v4994
      %v4999 = vadd.f32 %v4717, %v4997
      %v5000 = vrot.slane %v4964, 7
      %v5001 = vrot.slane %v4969, 7
      %v5002 = vsel %vm1333, %v5000, %v5001
      %5003 = vrot.lane.b32.xlu0 %v5000, 112
      %v5004 = vpop.permute.xlu0 %5003
      %5005 = vrot.lane.b32.xlu0 %v5002, 112
      %v5006 = vpop.permute.xlu0 %5005
      %5007 = vrot.lane.b32.xlu0 %v5001, 112
      %v5008 = vpop.permute.xlu0 %5007
      %vm5012 = vcmask 982913
      %5013 = vst.msk [vmem:[#allocation3] sm:$0xfe] %vm5012, %v5004
      %vm5014 = vcmask 982912
      %5015 = vst.msk [vmem:[#allocation3 + $0x10] sm:$0xff] %vm5014, %v5006
      %vm5016 = vcmask 975744
      %5017 = vst.msk [vmem:[#allocation3 + $0x20] sm:$0x1] %vm5016, %v5008
      %v5018 = vld [vmem:[#allocation2] sm:$0xff]
      %v5019 = vld [vmem:[#allocation2 + $0x8] sm:$0xff]
      %5022 = vrot.lane.b32.xlu0 %v5018, 16
      %v5023 = vpop.permute.xlu0 %5022
      %5024 = vrot.lane.b32.xlu0 %v5019, 16
      %v5025 = vpop.permute.xlu0 %5024
      %v5026 = vsel %vm1075, %v5023, 0
      %v5028 = vsel %vm1075, %v5025, 0
      %5030 = vmatprep.subr.mxu0 0.0
      %5031 = vmatpush1.xpose.msra.mxu0 %v1083
      %5032 = vmatprep.subr.mxu0 0.0
      %5033 = vmatpush1.xpose.msra.mxu0 %v1086
      %5034 = vmatprep.subr.mxu0 0.0
      %5035 = vmatpush1.xpose.msra.mxu0 %v1089
      %5036 = vmatprep.subr.mxu0 0.0
      %5037 = vmatpush1.xpose.msra.mxu0 %v1092
      %5038 = vmatprep.subr.mxu0 0.0
      %5039 = vmatpush1.xpose.msra.mxu0 0.0
      %5040 = vmatprep.subr.mxu0 0.0
      %5041 = vmatpush1.xpose.msra.mxu0 0.0
      %5042 = vmatprep.subr.mxu0 0.0
      %5043 = vmatpush1.xpose.msra.mxu0 0.0
      %5044 = vmatprep.subr.mxu0 0.0
      %5045 = vmatpush1.xpose.msra.mxu0 0.0
      %5046 = vmatprep.subr.mxu0 0.0
      %5047 = vmatpush1.xpose.msra.mxu0 0.0
      %5048 = vmatprep.subr.mxu0 0.0
      %5049 = vmatpush1.xpose.msra.mxu0 0.0
      %5050 = vmatprep.subr.mxu0 0.0
      %5051 = vmatpush1.xpose.msra.mxu0 0.0
      %5052 = vmatprep.subr.mxu0 0.0
      %5053 = vmatpush1.xpose.msra.mxu0 0.0
      %5054 = vmatprep.subr.mxu0 0.0
      %5055 = vmatpush1.xpose.msra.mxu0 0.0
      %5056 = vmatprep.subr.mxu0 0.0
      %5057 = vmatpush1.xpose.msra.mxu0 0.0
      %5058 = vmatprep.subr.mxu0 0.0
      %5059 = vmatpush1.xpose.msra.mxu0 0.0
      %5060 = vmatprep.subr.mxu0 0.0
      %5061 = vmatpush1.xpose.msra.mxu0 0.0
      %5062 = vmatprep.subr.mxu0 0.0
      %5063 = vmatpush1.xpose.msra.mxu0 0.0
      %5064 = vmatprep.subr.mxu0 0.0
      %5065 = vmatpush1.xpose.msra.mxu0 0.0
      %5066 = vmatprep.subr.mxu0 0.0
      %5067 = vmatpush1.xpose.msra.mxu0 0.0
      %5068 = vmatprep.subr.mxu0 0.0
      %5069 = vmatpush1.xpose.msra.mxu0 0.0
      %5070 = vmatprep.subr.mxu0 0.0
      %5071 = vmatpush1.xpose.msra.mxu0 0.0
      %5072 = vmatprep.subr.mxu0 0.0
      %5073 = vmatpush1.xpose.msra.mxu0 0.0
      %5074 = vmatprep.subr.mxu0 0.0
      %5075 = vmatpush1.xpose.msra.mxu0 0.0
      %5076 = vmatprep.subr.mxu0 0.0
      %5077 = vmatpush1.xpose.msra.mxu0 0.0
      %5078 = vmatprep.subr.mxu0 0.0
      %5079 = vmatpush1.xpose.msra.mxu0 0.0
      %5080 = vmatprep.subr.mxu0 0.0
      %5081 = vmatpush1.xpose.msra.mxu0 0.0
      %5082 = vmatprep.subr.mxu0 0.0
      %5083 = vmatpush1.xpose.msra.mxu0 0.0
      %5084 = vmatprep.subr.mxu0 0.0
      %5085 = vmatpush1.xpose.msra.mxu0 0.0
      %5086 = vmatprep.subr.mxu0 0.0
      %5087 = vmatpush1.xpose.msra.mxu0 0.0
      %5088 = vmatprep.subr.mxu0 0.0
      %5089 = vmatpush1.xpose.msra.mxu0 0.0
      %5090 = vmatprep.subr.mxu0 0.0
      %5091 = vmatpush1.xpose.msra.mxu0 0.0
      %5092 = vmatprep.subr.mxu0 0.0
      %5093 = vmatpush1.xpose.msra.mxu0 0.0
      %5094 = vmatprep.mubr.f32.mxu0 0.0
      %5095 = vmatmul.mubr.f32.gmra.mrb[0].mxu0 %v5026
      %v5096 = vpop.f32.mrb[0].mxu0
      %v5097 = vadd.f32 0.0, %v5096
      %v5098 = vpop.f32.mrb[0].mxu0
      %5099 = vmatprep.mubr.f32.mxu0 0.0
      %5100 = vmatmul.mubr.f32.gmra.mrb[0].mxu0 %v5028
      %v5101 = vpop.f32.mrb[0].mxu0
      %v5102 = vadd.f32 0.0, %v5101
      %v5103 = vpop.f32.mrb[0].mxu0
      %5104 = vdwg.mxu0
      %v5105 = vmul.f32 %v5018, %v5018
      %v5106 = vmul.f32 %v5019, %v5019
      %5109 = vrot.lane.b32.xlu0 %v5105, 16
      %v5110 = vpop.permute.xlu0 %5109
      %5111 = vrot.lane.b32.xlu0 %v5106, 16
      %v5112 = vpop.permute.xlu0 %5111
      %v5115 = vsel %vm1075, %v5110, 0.0
      %5116 = vadd.xlane.f32.xlu0 %v5115
      %v5117 = vpop.xlane.xlu0 %5116
      %v5118 = vsel %vm1075, %v5112, 0.0
      %5119 = vadd.xlane.f32.xlu0 %v5118
      %v5120 = vpop.xlane.xlu0 %5119
      %v5121 = vadd.f32 %v5117, %v1181
      %v5122 = vadd.f32 %v5120, %v1181
      %v5123 = vmul.f32 %v5097, 2.0
      %v5124 = vmul.f32 %v5102, 2.0
      %v5125 = vsub.f32 %v5121, %v5123
      %v5126 = vsub.f32 %v5122, %v5124
      %v5127 = vsel %vm1189, %v5125, inf
      %5128 = vmin.xlane.f32.xlu0 %v5127
      %v5129 = vpop.xlane.xlu0 %5128
      %v5130 = vsel %vm1189, %v5126, inf
      %5131 = vmin.xlane.f32.xlu0 %v5130
      %v5132 = vpop.xlane.xlu0 %5131
      %vm5133 = vcmp.le.f32.partialorder %v5125, %v5129
      %vm5134 = vcmp.le.f32.partialorder %v5126, %v5132
      %v5135 = vsel %vm5133, %v1197, 32
      %v5136 = vsel %vm5134, %v1197, 32
      %v5137 = vsel %vm1189, %v5135, 2147483647
      %v5138 = vand.u32 %v5137, 65535
      %v5139 = vshra.s32 %v5137, 16
      %v5140 = vcvt.s32.f32 %v5138
      %v5141 = vcvt.s32.f32 %v5139
      %5142 = vmin.xlane.f32.xlu0 %v5141
      %v5143 = vpop.xlane.xlu0 %5142
      %vm5144 = vcmp.eq.f32.partialorder %v5141, %v5143
      %v5145 = vsel %vm5144, %v5140, inf
      %5146 = vmin.xlane.f32.xlu0 %v5145
      %v5147 = vpop.xlane.xlu0 %5146
      %v5148 = vcvt.f32.s32 %v5147
      %v5149 = vcvt.f32.s32 %v5143
      %v5150 = vshll.u32 %v5149, 16
      %v5151 = vadd.s32 %v5150, %v5148
      %v5152 = vsel %vm1189, %v5136, 2147483647
      %v5153 = vand.u32 %v5152, 65535
      %v5154 = vshra.s32 %v5152, 16
      %v5155 = vcvt.s32.f32 %v5153
      %v5156 = vcvt.s32.f32 %v5154
      %5157 = vmin.xlane.f32.xlu0 %v5156
      %v5158 = vpop.xlane.xlu0 %5157
      %vm5159 = vcmp.eq.f32.partialorder %v5156, %v5158
      %v5160 = vsel %vm5159, %v5155, inf
      %5161 = vmin.xlane.f32.xlu0 %v5160
      %v5162 = vpop.xlane.xlu0 %5161
      %v5163 = vcvt.f32.s32 %v5162
      %v5164 = vcvt.f32.s32 %v5158
      %v5165 = vshll.u32 %v5164, 16
      %v5166 = vadd.s32 %v5165, %v5163
      %vm5167 = vcmp.eq.s32.totalorder %v1197, %v5151
      %vm5168 = vcmp.eq.s32.totalorder %v1197, %v5166
      %v5169 = vsel %vm5167, 1, 0
      %v5170 = vsel %vm5168, 1, 0
      %v5171 = vcvt.s32.f32 %v5169
      %v5172 = vcvt.s32.f32 %v5170
      %v5174 = vsel %vm1189, %v5171, 0
      %v5177 = vsel %vm1189, %v5172, 0
      %5179 = vmatprep.subr.mxu0 0.0
      %5180 = vmatpush1.msra.mxu0 %v1068
      %5181 = vmatprep.subr.mxu0 0.0
      %5182 = vmatpush1.msra.mxu0 %v1069
      %5183 = vmatprep.subr.mxu0 0.0
      %5184 = vmatpush1.msra.mxu0 %v1070
      %5185 = vmatprep.subr.mxu0 0.0
      %5186 = vmatpush1.msra.mxu0 %v1071
      %5187 = vmatprep.subr.mxu0 0.0
      %5188 = vmatpush1.msra.mxu0 0.0
      %5189 = vmatprep.subr.mxu0 0.0
      %5190 = vmatpush1.msra.mxu0 0.0
      %5191 = vmatprep.subr.mxu0 0.0
      %5192 = vmatpush1.msra.mxu0 0.0
      %5193 = vmatprep.subr.mxu0 0.0
      %5194 = vmatpush1.msra.mxu0 0.0
      %5195 = vmatprep.subr.mxu0 0.0
      %5196 = vmatpush1.msra.mxu0 0.0
      %5197 = vmatprep.subr.mxu0 0.0
      %5198 = vmatpush1.msra.mxu0 0.0
      %5199 = vmatprep.subr.mxu0 0.0
      %5200 = vmatpush1.msra.mxu0 0.0
      %5201 = vmatprep.subr.mxu0 0.0
      %5202 = vmatpush1.msra.mxu0 0.0
      %5203 = vmatprep.subr.mxu0 0.0
      %5204 = vmatpush1.msra.mxu0 0.0
      %5205 = vmatprep.subr.mxu0 0.0
      %5206 = vmatpush1.msra.mxu0 0.0
      %5207 = vmatprep.subr.mxu0 0.0
      %5208 = vmatpush1.msra.mxu0 0.0
      %5209 = vmatprep.subr.mxu0 0.0
      %5210 = vmatpush1.msra.mxu0 0.0
      %5211 = vmatprep.subr.mxu0 0.0
      %5212 = vmatpush1.msra.mxu0 0.0
      %5213 = vmatprep.subr.mxu0 0.0
      %5214 = vmatpush1.msra.mxu0 0.0
      %5215 = vmatprep.subr.mxu0 0.0
      %5216 = vmatpush1.msra.mxu0 0.0
      %5217 = vmatprep.subr.mxu0 0.0
      %5218 = vmatpush1.msra.mxu0 0.0
      %5219 = vmatprep.subr.mxu0 0.0
      %5220 = vmatpush1.msra.mxu0 0.0
      %5221 = vmatprep.subr.mxu0 0.0
      %5222 = vmatpush1.msra.mxu0 0.0
      %5223 = vmatprep.subr.mxu0 0.0
      %5224 = vmatpush1.msra.mxu0 0.0
      %5225 = vmatprep.subr.mxu0 0.0
      %5226 = vmatpush1.msra.mxu0 0.0
      %5227 = vmatprep.subr.mxu0 0.0
      %5228 = vmatpush1.msra.mxu0 0.0
      %5229 = vmatprep.subr.mxu0 0.0
      %5230 = vmatpush1.msra.mxu0 0.0
      %5231 = vmatprep.subr.mxu0 0.0
      %5232 = vmatpush1.msra.mxu0 0.0
      %5233 = vmatprep.subr.mxu0 0.0
      %5234 = vmatpush1.msra.mxu0 0.0
      %5235 = vmatprep.subr.mxu0 0.0
      %5236 = vmatpush1.msra.mxu0 0.0
      %5237 = vmatprep.subr.mxu0 0.0
      %5238 = vmatpush1.msra.mxu0 0.0
      %5239 = vmatprep.subr.mxu0 0.0
      %5240 = vmatpush1.msra.mxu0 0.0
      %5241 = vmatprep.subr.mxu0 0.0
      %5242 = vmatpush1.msra.mxu0 0.0
      %5243 = vmatprep.mubr.f32.mxu0 0.0
      %5244 = vmatmul.mubr.f32.gmra.mrb[0].mxu0 %v5174
      %v5245 = vpop.f32.mrb[0].mxu0
      %v5246 = vadd.f32 0.0, %v5245
      %v5247 = vpop.f32.mrb[0].mxu0
      %5248 = vmatprep.mubr.f32.mxu0 0.0
      %5249 = vmatmul.mubr.f32.gmra.mrb[0].mxu0 %v5177
      %v5250 = vpop.f32.mrb[0].mxu0
      %v5251 = vadd.f32 0.0, %v5250
      %v5252 = vpop.f32.mrb[0].mxu0
      %5253 = vdwg.mxu0
      %5256 = vrot.lane.b32.xlu0 %v5246, 112
      %v5257 = vpop.permute.xlu0 %5256
      %5258 = vrot.lane.b32.xlu0 %v5251, 112
      %v5259 = vpop.permute.xlu0 %5258
      %v5262 = vsub.f32 %v5018, %v5257
      %v5263 = vsub.f32 %v5019, %v5259
      %v5264 = vmul.f32 %v5262, %v5262
      %v5265 = vmul.f32 %v5263, %v5263
      %5268 = vrot.lane.b32.xlu0 %v5264, 16
      %v5269 = vpop.permute.xlu0 %5268
      %5270 = vrot.lane.b32.xlu0 %v5265, 16
      %v5271 = vpop.permute.xlu0 %5270
      %v5274 = vsel %vm1075, %v5269, 0.0
      %5275 = vadd.xlane.f32.xlu0 %v5274
      %v5276 = vpop.xlane.xlu0 %5275
      %v5277 = vsel %vm1075, %v5271, 0.0
      %5278 = vadd.xlane.f32.xlu0 %v5277
      %v5279 = vpop.xlane.xlu0 %5278
      %v5280 = vadd.f32 %v4998, %v5276
      %v5281 = vadd.f32 %v4999, %v5279
      %v5282 = vrot.slane %v5246, 7
      %v5283 = vrot.slane %v5251, 7
      %v5284 = vsel %vm1333, %v5282, %v5283
      %5285 = vrot.lane.b32.xlu0 %v5282, 120
      %v5286 = vpop.permute.xlu0 %5285
      %5287 = vrot.lane.b32.xlu0 %v5284, 120
      %v5288 = vpop.permute.xlu0 %5287
      %5289 = vrot.lane.b32.xlu0 %v5283, 120
      %v5290 = vpop.permute.xlu0 %5289
      %vm5294 = vcmask 1048513
      %5295 = vst.msk [vmem:[#allocation3] sm:$0xfe] %vm5294, %v5286
      %vm5296 = vcmask 1048512
      %5297 = vst.msk [vmem:[#allocation3 + $0x10] sm:$0xff] %vm5296, %v5288
      %vm5298 = vcmask 1041344
      %5299 = vst.msk [vmem:[#allocation3 + $0x20] sm:$0x1] %vm5298, %v5290
      %v5300 = vld [vmem:[#allocation2] sm:$0xff]
      %v5301 = vld [vmem:[#allocation2 + $0x8] sm:$0xff]
      %5304 = vrot.lane.b32.xlu0 %v5300, 8
      %v5305 = vpop.permute.xlu0 %5304
      %5306 = vrot.lane.b32.xlu0 %v5301, 8
      %v5307 = vpop.permute.xlu0 %5306
      %v5308 = vsel %vm1075, %v5305, 0
      %v5310 = vsel %vm1075, %v5307, 0
      %5312 = vmatprep.subr.mxu0 0.0
      %5313 = vmatpush1.xpose.msra.mxu0 %v1083
      %5314 = vmatprep.subr.mxu0 0.0
      %5315 = vmatpush1.xpose.msra.mxu0 %v1086
      %5316 = vmatprep.subr.mxu0 0.0
      %5317 = vmatpush1.xpose.msra.mxu0 %v1089
      %5318 = vmatprep.subr.mxu0 0.0
      %5319 = vmatpush1.xpose.msra.mxu0 %v1092
      %5320 = vmatprep.subr.mxu0 0.0
      %5321 = vmatpush1.xpose.msra.mxu0 0.0
      %5322 = vmatprep.subr.mxu0 0.0
      %5323 = vmatpush1.xpose.msra.mxu0 0.0
      %5324 = vmatprep.subr.mxu0 0.0
      %5325 = vmatpush1.xpose.msra.mxu0 0.0
      %5326 = vmatprep.subr.mxu0 0.0
      %5327 = vmatpush1.xpose.msra.mxu0 0.0
      %5328 = vmatprep.subr.mxu0 0.0
      %5329 = vmatpush1.xpose.msra.mxu0 0.0
      %5330 = vmatprep.subr.mxu0 0.0
      %5331 = vmatpush1.xpose.msra.mxu0 0.0
      %5332 = vmatprep.subr.mxu0 0.0
      %5333 = vmatpush1.xpose.msra.mxu0 0.0
      %5334 = vmatprep.subr.mxu0 0.0
      %5335 = vmatpush1.xpose.msra.mxu0 0.0
      %5336 = vmatprep.subr.mxu0 0.0
      %5337 = vmatpush1.xpose.msra.mxu0 0.0
      %5338 = vmatprep.subr.mxu0 0.0
      %5339 = vmatpush1.xpose.msra.mxu0 0.0
      %5340 = vmatprep.subr.mxu0 0.0
      %5341 = vmatpush1.xpose.msra.mxu0 0.0
      %5342 = vmatprep.subr.mxu0 0.0
      %5343 = vmatpush1.xpose.msra.mxu0 0.0
      %5344 = vmatprep.subr.mxu0 0.0
      %5345 = vmatpush1.xpose.msra.mxu0 0.0
      %5346 = vmatprep.subr.mxu0 0.0
      %5347 = vmatpush1.xpose.msra.mxu0 0.0
      %5348 = vmatprep.subr.mxu0 0.0
      %5349 = vmatpush1.xpose.msra.mxu0 0.0
      %5350 = vmatprep.subr.mxu0 0.0
      %5351 = vmatpush1.xpose.msra.mxu0 0.0
      %5352 = vmatprep.subr.mxu0 0.0
      %5353 = vmatpush1.xpose.msra.mxu0 0.0
      %5354 = vmatprep.subr.mxu0 0.0
      %5355 = vmatpush1.xpose.msra.mxu0 0.0
      %5356 = vmatprep.subr.mxu0 0.0
      %5357 = vmatpush1.xpose.msra.mxu0 0.0
      %5358 = vmatprep.subr.mxu0 0.0
      %5359 = vmatpush1.xpose.msra.mxu0 0.0
      %5360 = vmatprep.subr.mxu0 0.0
      %5361 = vmatpush1.xpose.msra.mxu0 0.0
      %5362 = vmatprep.subr.mxu0 0.0
      %5363 = vmatpush1.xpose.msra.mxu0 0.0
      %5364 = vmatprep.subr.mxu0 0.0
      %5365 = vmatpush1.xpose.msra.mxu0 0.0
      %5366 = vmatprep.subr.mxu0 0.0
      %5367 = vmatpush1.xpose.msra.mxu0 0.0
      %5368 = vmatprep.subr.mxu0 0.0
      %5369 = vmatpush1.xpose.msra.mxu0 0.0
      %5370 = vmatprep.subr.mxu0 0.0
      %5371 = vmatpush1.xpose.msra.mxu0 0.0
      %5372 = vmatprep.subr.mxu0 0.0
      %5373 = vmatpush1.xpose.msra.mxu0 0.0
      %5374 = vmatprep.subr.mxu0 0.0
      %5375 = vmatpush1.xpose.msra.mxu0 0.0
      %5376 = vmatprep.mubr.f32.mxu0 0.0
      %5377 = vmatmul.mubr.f32.gmra.mrb[0].mxu0 %v5308
      %v5378 = vpop.f32.mrb[0].mxu0
      %v5379 = vadd.f32 0.0, %v5378
      %v5380 = vpop.f32.mrb[0].mxu0
      %5381 = vmatprep.mubr.f32.mxu0 0.0
      %5382 = vmatmul.mubr.f32.gmra.mrb[0].mxu0 %v5310
      %v5383 = vpop.f32.mrb[0].mxu0
      %v5384 = vadd.f32 0.0, %v5383
      %v5385 = vpop.f32.mrb[0].mxu0
      %5386 = vdwg.mxu0
      %v5387 = vmul.f32 %v5300, %v5300
      %v5388 = vmul.f32 %v5301, %v5301
      %5391 = vrot.lane.b32.xlu0 %v5387, 8
      %v5392 = vpop.permute.xlu0 %5391
      %5393 = vrot.lane.b32.xlu0 %v5388, 8
      %v5394 = vpop.permute.xlu0 %5393
      %v5397 = vsel %vm1075, %v5392, 0.0
      %5398 = vadd.xlane.f32.xlu0 %v5397
      %v5399 = vpop.xlane.xlu0 %5398
      %v5400 = vsel %vm1075, %v5394, 0.0
      %5401 = vadd.xlane.f32.xlu0 %v5400
      %v5402 = vpop.xlane.xlu0 %5401
      %v5403 = vadd.f32 %v5399, %v1181
      %v5404 = vadd.f32 %v5402, %v1181
      %v5405 = vmul.f32 %v5379, 2.0
      %v5406 = vmul.f32 %v5384, 2.0
      %v5407 = vsub.f32 %v5403, %v5405
      %v5408 = vsub.f32 %v5404, %v5406
      %v5409 = vsel %vm1189, %v5407, inf
      %5410 = vmin.xlane.f32.xlu0 %v5409
      %v5411 = vpop.xlane.xlu0 %5410
      %v5412 = vsel %vm1189, %v5408, inf
      %5413 = vmin.xlane.f32.xlu0 %v5412
      %v5414 = vpop.xlane.xlu0 %5413
      %vm5415 = vcmp.le.f32.partialorder %v5407, %v5411
      %vm5416 = vcmp.le.f32.partialorder %v5408, %v5414
      %v5417 = vsel %vm5415, %v1197, 32
      %v5418 = vsel %vm5416, %v1197, 32
      %v5419 = vsel %vm1189, %v5417, 2147483647
      %v5420 = vand.u32 %v5419, 65535
      %v5421 = vshra.s32 %v5419, 16
      %v5422 = vcvt.s32.f32 %v5420
      %v5423 = vcvt.s32.f32 %v5421
      %5424 = vmin.xlane.f32.xlu0 %v5423
      %v5425 = vpop.xlane.xlu0 %5424
      %vm5426 = vcmp.eq.f32.partialorder %v5423, %v5425
      %v5427 = vsel %vm5426, %v5422, inf
      %5428 = vmin.xlane.f32.xlu0 %v5427
      %v5429 = vpop.xlane.xlu0 %5428
      %v5430 = vcvt.f32.s32 %v5429
      %v5431 = vcvt.f32.s32 %v5425
      %v5432 = vshll.u32 %v5431, 16
      %v5433 = vadd.s32 %v5432, %v5430
      %v5434 = vsel %vm1189, %v5418, 2147483647
      %v5435 = vand.u32 %v5434, 65535
      %v5436 = vshra.s32 %v5434, 16
      %v5437 = vcvt.s32.f32 %v5435
      %v5438 = vcvt.s32.f32 %v5436
      %5439 = vmin.xlane.f32.xlu0 %v5438
      %v5440 = vpop.xlane.xlu0 %5439
      %vm5441 = vcmp.eq.f32.partialorder %v5438, %v5440
      %v5442 = vsel %vm5441, %v5437, inf
      %5443 = vmin.xlane.f32.xlu0 %v5442
      %v5444 = vpop.xlane.xlu0 %5443
      %v5445 = vcvt.f32.s32 %v5444
      %v5446 = vcvt.f32.s32 %v5440
      %v5447 = vshll.u32 %v5446, 16
      %v5448 = vadd.s32 %v5447, %v5445
      %vm5449 = vcmp.eq.s32.totalorder %v1197, %v5433
      %vm5450 = vcmp.eq.s32.totalorder %v1197, %v5448
      %v5451 = vsel %vm5449, 1, 0
      %v5452 = vsel %vm5450, 1, 0
      %v5453 = vcvt.s32.f32 %v5451
      %v5454 = vcvt.s32.f32 %v5452
      %v5456 = vsel %vm1189, %v5453, 0
      %v5459 = vsel %vm1189, %v5454, 0
      %5461 = vmatprep.subr.mxu0 0.0
      %5462 = vmatpush1.msra.mxu0 %v1068
      %5463 = vmatprep.subr.mxu0 0.0
      %5464 = vmatpush1.msra.mxu0 %v1069
      %5465 = vmatprep.subr.mxu0 0.0
      %5466 = vmatpush1.msra.mxu0 %v1070
      %5467 = vmatprep.subr.mxu0 0.0
      %5468 = vmatpush1.msra.mxu0 %v1071
      %5469 = vmatprep.subr.mxu0 0.0
      %5470 = vmatpush1.msra.mxu0 0.0
      %5471 = vmatprep.subr.mxu0 0.0
      %5472 = vmatpush1.msra.mxu0 0.0
      %5473 = vmatprep.subr.mxu0 0.0
      %5474 = vmatpush1.msra.mxu0 0.0
      %5475 = vmatprep.subr.mxu0 0.0
      %5476 = vmatpush1.msra.mxu0 0.0
      %5477 = vmatprep.subr.mxu0 0.0
      %5478 = vmatpush1.msra.mxu0 0.0
      %5479 = vmatprep.subr.mxu0 0.0
      %5480 = vmatpush1.msra.mxu0 0.0
      %5481 = vmatprep.subr.mxu0 0.0
      %5482 = vmatpush1.msra.mxu0 0.0
      %5483 = vmatprep.subr.mxu0 0.0
      %5484 = vmatpush1.msra.mxu0 0.0
      %5485 = vmatprep.subr.mxu0 0.0
      %5486 = vmatpush1.msra.mxu0 0.0
      %5487 = vmatprep.subr.mxu0 0.0
      %5488 = vmatpush1.msra.mxu0 0.0
      %5489 = vmatprep.subr.mxu0 0.0
      %5490 = vmatpush1.msra.mxu0 0.0
      %5491 = vmatprep.subr.mxu0 0.0
      %5492 = vmatpush1.msra.mxu0 0.0
      %5493 = vmatprep.subr.mxu0 0.0
      %5494 = vmatpush1.msra.mxu0 0.0
      %5495 = vmatprep.subr.mxu0 0.0
      %5496 = vmatpush1.msra.mxu0 0.0
      %5497 = vmatprep.subr.mxu0 0.0
      %5498 = vmatpush1.msra.mxu0 0.0
      %5499 = vmatprep.subr.mxu0 0.0
      %5500 = vmatpush1.msra.mxu0 0.0
      %5501 = vmatprep.subr.mxu0 0.0
      %5502 = vmatpush1.msra.mxu0 0.0
      %5503 = vmatprep.subr.mxu0 0.0
      %5504 = vmatpush1.msra.mxu0 0.0
      %5505 = vmatprep.subr.mxu0 0.0
      %5506 = vmatpush1.msra.mxu0 0.0
      %5507 = vmatprep.subr.mxu0 0.0
      %5508 = vmatpush1.msra.mxu0 0.0
      %5509 = vmatprep.subr.mxu0 0.0
      %5510 = vmatpush1.msra.mxu0 0.0
      %5511 = vmatprep.subr.mxu0 0.0
      %5512 = vmatpush1.msra.mxu0 0.0
      %5513 = vmatprep.subr.mxu0 0.0
      %5514 = vmatpush1.msra.mxu0 0.0
      %5515 = vmatprep.subr.mxu0 0.0
      %5516 = vmatpush1.msra.mxu0 0.0
      %5517 = vmatprep.subr.mxu0 0.0
      %5518 = vmatpush1.msra.mxu0 0.0
      %5519 = vmatprep.subr.mxu0 0.0
      %5520 = vmatpush1.msra.mxu0 0.0
      %5521 = vmatprep.subr.mxu0 0.0
      %5522 = vmatpush1.msra.mxu0 0.0
      %5523 = vmatprep.subr.mxu0 0.0
      %5524 = vmatpush1.msra.mxu0 0.0
      %5525 = vmatprep.mubr.f32.mxu0 0.0
      %5526 = vmatmul.mubr.f32.gmra.mrb[0].mxu0 %v5456
      %v5527 = vpop.f32.mrb[0].mxu0
      %v5528 = vadd.f32 0.0, %v5527
      %v5529 = vpop.f32.mrb[0].mxu0
      %5530 = vmatprep.mubr.f32.mxu0 0.0
      %5531 = vmatmul.mubr.f32.gmra.mrb[0].mxu0 %v5459
      %v5532 = vpop.f32.mrb[0].mxu0
      %v5533 = vadd.f32 0.0, %v5532
      %v5534 = vpop.f32.mrb[0].mxu0
      %5535 = vdwg.mxu0
      %5538 = vrot.lane.b32.xlu0 %v5528, 120
      %v5539 = vpop.permute.xlu0 %5538
      %5540 = vrot.lane.b32.xlu0 %v5533, 120
      %v5541 = vpop.permute.xlu0 %5540
      %v5544 = vsub.f32 %v5300, %v5539
      %v5545 = vsub.f32 %v5301, %v5541
      %v5546 = vmul.f32 %v5544, %v5544
      %v5547 = vmul.f32 %v5545, %v5545
      %5550 = vrot.lane.b32.xlu0 %v5546, 8
      %v5551 = vpop.permute.xlu0 %5550
      %5552 = vrot.lane.b32.xlu0 %v5547, 8
      %v5553 = vpop.permute.xlu0 %5552
      %v5556 = vsel %vm1075, %v5551, 0.0
      %5557 = vadd.xlane.f32.xlu0 %v5556
      %v5558 = vpop.xlane.xlu0 %5557
      %v5559 = vsel %vm1075, %v5553, 0.0
      %5560 = vadd.xlane.f32.xlu0 %v5559
      %v5561 = vpop.xlane.xlu0 %5560
      %v5562 = vadd.f32 %v5280, %v5558
      %v5563 = vadd.f32 %v5281, %v5561
      %v5564 = vrot.slane %v5528, 7
      %v5565 = vrot.slane %v5533, 7
      %v5566 = vsel %vm1333, %v5564, %v5565
      %vm5570 = vcmask 64513
      %5571 = vst.msk [vmem:[#allocation3 + $0x8] sm:$0xfe] %vm5570, %v5564
      %5572 = vst.msk [vmem:[#allocation3 + $0x18] sm:$0xff] %vm1075, %v5566
      %vm5573 = vcmask 57344
      %5574 = vst.msk [vmem:[#allocation3 + $0x28] sm:$0x1] %vm5573, %v5565
      %v5575 = vadd.f32 %v5562, %v5563
      %v5576 = vrot.slane %v5575, 4
      %v5577 = vadd.f32 %v5575, %v5576
      %v5578 = vrot.slane %v5577, 2
      %v5579 = vadd.f32 %v5577, %v5578
      %v5580 = vrot.slane %v5579, 1
      %v5581 = vadd.f32 %v5579, %v5580
      %5582 = vst [vmem:[%s314] sm:$0x1] %v5581
      %v5583 = vld [vmem:[#allocation3] sm:$0xff]
      %v5584 = vld [vmem:[#allocation3 + $0x10] sm:$0xff]
      %v5585 = vpack.c.bf16 %v5584, %v5583
      %v5586 = vld [vmem:[%s5] sm:$0xf]
      %v5587 = vld [vmem:[%s5 + $0x4] sm:$0xf]
      %v5588 = vld [vmem:[%s5 + $0x8] sm:$0xf]
      %v5589 = vld [vmem:[%s5 + $0xc] sm:$0xf]
      %v5590 = vld [vmem:[%s5 + $0x10] sm:$0xf]
      %v5591 = vld [vmem:[%s5 + $0x14] sm:$0xf]
      %v5592 = vld [vmem:[%s5 + $0x18] sm:$0xf]
      %v5593 = vld [vmem:[%s5 + $0x1c] sm:$0xf]
      %v5594 = vld [vmem:[%s5 + $0x20] sm:$0xf]
      %v5595 = vld [vmem:[%s5 + $0x24] sm:$0xf]
      %v5596 = vld [vmem:[%s5 + $0x28] sm:$0xf]
      %v5597 = vld [vmem:[%s5 + $0x2c] sm:$0xf]
      %v5598 = vld [vmem:[%s5 + $0x30] sm:$0xf]
      %v5599 = vld [vmem:[%s5 + $0x34] sm:$0xf]
      %v5600 = vld [vmem:[%s5 + $0x38] sm:$0xf]
      %v5601 = vld [vmem:[%s5 + $0x3c] sm:$0xf]
      %v5602 = vld [vmem:[#allocation3 + $0x8] sm:$0xff]
      %v5603 = vld [vmem:[#allocation3 + $0x18] sm:$0xff]
      %v5604 = vpack.c.bf16 %v5603, %v5602
      %s5605 = scalar_lea.vmem %s5, 64
      %v5606 = vld [vmem:[%s5605] sm:$0xf]
      %v5607 = vld [vmem:[%s5605 + $0x4] sm:$0xf]
      %v5608 = vld [vmem:[%s5605 + $0x8] sm:$0xf]
      %v5609 = vld [vmem:[%s5605 + $0xc] sm:$0xf]
      %v5610 = vld [vmem:[%s5605 + $0x10] sm:$0xf]
      %v5611 = vld [vmem:[%s5605 + $0x14] sm:$0xf]
      %v5612 = vld [vmem:[%s5605 + $0x18] sm:$0xf]
      %v5613 = vld [vmem:[%s5605 + $0x1c] sm:$0xf]
      %v5614 = vld [vmem:[%s5605 + $0x20] sm:$0xf]
      %v5615 = vld [vmem:[%s5605 + $0x24] sm:$0xf]
      %v5616 = vld [vmem:[%s5605 + $0x28] sm:$0xf]
      %v5617 = vld [vmem:[%s5605 + $0x2c] sm:$0xf]
      %v5618 = vld [vmem:[%s5605 + $0x30] sm:$0xf]
      %v5619 = vld [vmem:[%s5605 + $0x34] sm:$0xf]
      %v5620 = vld [vmem:[%s5605 + $0x38] sm:$0xf]
      %v5621 = vld [vmem:[%s5605 + $0x3c] sm:$0xf]
      %5624 = vrot.lane.b32.xlu0 %v5585, 120
      %v5625 = vpop.permute.xlu0 %5624
      %5626 = vrot.lane.b32.xlu0 %v5604, 120
      %v5627 = vpop.permute.xlu0 %5626
      %vm5628 = vcmask 982016
      %v5629 = vsel %vm5628, %v5625, %v5627
      %v5647 = vunpack.c.l.b16 %v5606
      %v5648 = vunpack.c.l.b16 %v5607
      %v5649 = vunpack.c.l.b16 %v5608
      %v5650 = vunpack.c.l.b16 %v5609
      %v5651 = vunpack.c.l.b16 %v5610
      %v5652 = vunpack.c.l.b16 %v5611
      %v5653 = vunpack.c.l.b16 %v5612
      %v5654 = vunpack.c.l.b16 %v5613
      %v5655 = vunpack.c.l.b16 %v5614
      %v5656 = vunpack.c.l.b16 %v5615
      %v5657 = vunpack.c.l.b16 %v5616
      %v5658 = vunpack.c.l.b16 %v5617
      %v5659 = vunpack.c.l.b16 %v5618
      %v5660 = vunpack.c.l.b16 %v5619
      %v5661 = vunpack.c.l.b16 %v5620
      %v5662 = vunpack.c.l.b16 %v5621
      %v5663 = vpack.c.b16 %v5648, %v5647
      %v5664 = vpack.c.b16 %v5650, %v5649
      %v5665 = vpack.c.b16 %v5652, %v5651
      %v5666 = vpack.c.b16 %v5654, %v5653
      %v5667 = vpack.c.b16 %v5656, %v5655
      %v5668 = vpack.c.b16 %v5658, %v5657
      %v5669 = vpack.c.b16 %v5660, %v5659
      %v5670 = vpack.c.b16 %v5662, %v5661
      %5679 = vmatprep.subr.bf16.mxu0 0
      %5680 = vmatpush1.bf16.msra.mxu0 %v5663
      %5681 = vmatprep.subr.bf16.mxu0 0
      %5682 = vmatpush1.bf16.msra.mxu0 %v5664
      %5683 = vmatprep.subr.bf16.mxu0 0
      %5684 = vmatpush1.bf16.msra.mxu0 %v5665
      %5685 = vmatprep.subr.bf16.mxu0 0
      %5686 = vmatpush1.bf16.msra.mxu0 %v5666
      %5687 = vmatprep.subr.bf16.mxu0 0
      %5688 = vmatpush1.bf16.msra.mxu0 %v5667
      %5689 = vmatprep.subr.bf16.mxu0 0
      %5690 = vmatpush1.bf16.msra.mxu0 %v5668
      %5691 = vmatprep.subr.bf16.mxu0 0
      %5692 = vmatpush1.bf16.msra.mxu0 %v5669
      %5693 = vmatprep.subr.bf16.mxu0 0
      %5694 = vmatpush1.bf16.msra.mxu0 %v5670
      %5695 = vmatprep.subr.bf16.mxu0 0
      %5696 = vmatpush1.bf16.msra.mxu0 0
      %5697 = vmatprep.subr.bf16.mxu0 0
      %5698 = vmatpush1.bf16.msra.mxu0 0
      %5699 = vmatprep.subr.bf16.mxu0 0
      %5700 = vmatpush1.bf16.msra.mxu0 0
      %5701 = vmatprep.subr.bf16.mxu0 0
      %5702 = vmatpush1.bf16.msra.mxu0 0
      %5703 = vmatprep.subr.bf16.mxu0 0
      %5704 = vmatpush1.bf16.msra.mxu0 0
      %5705 = vmatprep.subr.bf16.mxu0 0
      %5706 = vmatpush1.bf16.msra.mxu0 0
      %5707 = vmatprep.subr.bf16.mxu0 0
      %5708 = vmatpush1.bf16.msra.mxu0 0
      %5709 = vmatprep.subr.bf16.mxu0 0
      %5710 = vmatpush1.bf16.msra.mxu0 0
      %5711 = vmatprep.mubr.bf16.mxu0 0
      %5712 = vmatmul.mubr.bf16.gmra.mrb[0].mxu0 %v5629
      %v5713 = vpop.f32.mrb[0].mxu0
      %v5714 = vadd.f32 0.0, %v5713
      %v5715 = vpop.f32.mrb[0].mxu0
      %v5716 = vpop.f32.mrb[0].mxu0
      %v5717 = vadd.f32 0.0, %v5716
      %v5718 = vpop.f32.mrb[0].mxu0
      %5719 = vdwg.mxu0
      %v5736 = vunpack.c.l.b16 %v5586
      %v5737 = vunpack.c.l.b16 %v5587
      %v5738 = vunpack.c.l.b16 %v5588
      %v5739 = vunpack.c.l.b16 %v5589
      %v5740 = vunpack.c.l.b16 %v5590
      %v5741 = vunpack.c.l.b16 %v5591
      %v5742 = vunpack.c.l.b16 %v5592
      %v5743 = vunpack.c.l.b16 %v5593
      %v5744 = vunpack.c.l.b16 %v5594
      %v5745 = vunpack.c.l.b16 %v5595
      %v5746 = vunpack.c.l.b16 %v5596
      %v5747 = vunpack.c.l.b16 %v5597
      %v5748 = vunpack.c.l.b16 %v5598
      %v5749 = vunpack.c.l.b16 %v5599
      %v5750 = vunpack.c.l.b16 %v5600
      %v5751 = vunpack.c.l.b16 %v5601
      %v5752 = vpack.c.b16 %v5737, %v5736
      %v5753 = vpack.c.b16 %v5739, %v5738
      %v5754 = vpack.c.b16 %v5741, %v5740
      %v5755 = vpack.c.b16 %v5743, %v5742
      %v5756 = vpack.c.b16 %v5745, %v5744
      %v5757 = vpack.c.b16 %v5747, %v5746
      %v5758 = vpack.c.b16 %v5749, %v5748
      %v5759 = vpack.c.b16 %v5751, %v5750
      %5768 = vmatprep.subr.bf16.mxu0 0
      %5769 = vmatpush1.bf16.msra.mxu0 %v5752
      %5770 = vmatprep.subr.bf16.mxu0 0
      %5771 = vmatpush1.bf16.msra.mxu0 %v5753
      %5772 = vmatprep.subr.bf16.mxu0 0
      %5773 = vmatpush1.bf16.msra.mxu0 %v5754
      %5774 = vmatprep.subr.bf16.mxu0 0
      %5775 = vmatpush1.bf16.msra.mxu0 %v5755
      %5776 = vmatprep.subr.bf16.mxu0 0
      %5777 = vmatpush1.bf16.msra.mxu0 %v5756
      %5778 = vmatprep.subr.bf16.mxu0 0
      %5779 = vmatpush1.bf16.msra.mxu0 %v5757
      %5780 = vmatprep.subr.bf16.mxu0 0
      %5781 = vmatpush1.bf16.msra.mxu0 %v5758
      %5782 = vmatprep.subr.bf16.mxu0 0
      %5783 = vmatpush1.bf16.msra.mxu0 %v5759
      %5784 = vmatprep.subr.bf16.mxu0 0
      %5785 = vmatpush1.bf16.msra.mxu0 0
      %5786 = vmatprep.subr.bf16.mxu0 0
      %5787 = vmatpush1.bf16.msra.mxu0 0
      %5788 = vmatprep.subr.bf16.mxu0 0
      %5789 = vmatpush1.bf16.msra.mxu0 0
      %5790 = vmatprep.subr.bf16.mxu0 0
      %5791 = vmatpush1.bf16.msra.mxu0 0
      %5792 = vmatprep.subr.bf16.mxu0 0
      %5793 = vmatpush1.bf16.msra.mxu0 0
      %5794 = vmatprep.subr.bf16.mxu0 0
      %5795 = vmatpush1.bf16.msra.mxu0 0
      %5796 = vmatprep.subr.bf16.mxu0 0
      %5797 = vmatpush1.bf16.msra.mxu0 0
      %5798 = vmatprep.subr.bf16.mxu0 0
      %5799 = vmatpush1.bf16.msra.mxu0 0
      %5800 = vmatprep.mubr.bf16.mxu0 0
      %5801 = vmatmul.mubr.bf16.gmra.mrb[0].mxu0 %v5585
      %v5802 = vpop.f32.mrb[0].mxu0
      %v5803 = vadd.f32 %v5714, %v5802
      %v5804 = vpop.f32.mrb[0].mxu0
      %v5805 = vpop.f32.mrb[0].mxu0
      %v5806 = vadd.f32 %v5717, %v5805
      %v5807 = vpop.f32.mrb[0].mxu0
      %5808 = vdwg.mxu0
      %s5809 = scalar_lea.vmem %s5, 128
      %v5810 = vld [vmem:[%s5809] sm:$0xf]
      %v5811 = vld [vmem:[%s5809 + $0x4] sm:$0xf]
      %v5812 = vld [vmem:[%s5809 + $0x8] sm:$0xf]
      %v5813 = vld [vmem:[%s5809 + $0xc] sm:$0xf]
      %v5814 = vld [vmem:[%s5809 + $0x10] sm:$0xf]
      %v5815 = vld [vmem:[%s5809 + $0x14] sm:$0xf]
      %v5816 = vld [vmem:[%s5809 + $0x18] sm:$0xf]
      %v5817 = vld [vmem:[%s5809 + $0x1c] sm:$0xf]
      %v5818 = vld [vmem:[%s5809 + $0x20] sm:$0xf]
      %v5819 = vld [vmem:[%s5809 + $0x24] sm:$0xf]
      %v5820 = vld [vmem:[%s5809 + $0x28] sm:$0xf]
      %v5821 = vld [vmem:[%s5809 + $0x2c] sm:$0xf]
      %v5822 = vld [vmem:[%s5809 + $0x30] sm:$0xf]
      %v5823 = vld [vmem:[%s5809 + $0x34] sm:$0xf]
      %v5824 = vld [vmem:[%s5809 + $0x38] sm:$0xf]
      %v5825 = vld [vmem:[%s5809 + $0x3c] sm:$0xf]
      %5826 = vrot.lane.b32.xlu0 %v5585, 112
      %v5827 = vpop.permute.xlu0 %5826
      %5828 = vrot.lane.b32.xlu0 %v5604, 112
      %v5829 = vpop.permute.xlu0 %5828
      %vm5830 = vcmask 916480
      %v5831 = vsel %vm5830, %v5827, %v5829
      %v5849 = vunpack.c.l.b16 %v5810
      %v5850 = vunpack.c.l.b16 %v5811
      %v5851 = vunpack.c.l.b16 %v5812
      %v5852 = vunpack.c.l.b16 %v5813
      %v5853 = vunpack.c.l.b16 %v5814
      %v5854 = vunpack.c.l.b16 %v5815
      %v5855 = vunpack.c.l.b16 %v5816
      %v5856 = vunpack.c.l.b16 %v5817
      %v5857 = vunpack.c.l.b16 %v5818
      %v5858 = vunpack.c.l.b16 %v5819
      %v5859 = vunpack.c.l.b16 %v5820
      %v5860 = vunpack.c.l.b16 %v5821
      %v5861 = vunpack.c.l.b16 %v5822
      %v5862 = vunpack.c.l.b16 %v5823
      %v5863 = vunpack.c.l.b16 %v5824
      %v5864 = vunpack.c.l.b16 %v5825
      %v5865 = vpack.c.b16 %v5850, %v5849
      %v5866 = vpack.c.b16 %v5852, %v5851
      %v5867 = vpack.c.b16 %v5854, %v5853
      %v5868 = vpack.c.b16 %v5856, %v5855
      %v5869 = vpack.c.b16 %v5858, %v5857
      %v5870 = vpack.c.b16 %v5860, %v5859
      %v5871 = vpack.c.b16 %v5862, %v5861
      %v5872 = vpack.c.b16 %v5864, %v5863
      %5881 = vmatprep.subr.bf16.mxu0 0
      %5882 = vmatpush1.bf16.msra.mxu0 %v5865
      %5883 = vmatprep.subr.bf16.mxu0 0
      %5884 = vmatpush1.bf16.msra.mxu0 %v5866
      %5885 = vmatprep.subr.bf16.mxu0 0
      %5886 = vmatpush1.bf16.msra.mxu0 %v5867
      %5887 = vmatprep.subr.bf16.mxu0 0
      %5888 = vmatpush1.bf16.msra.mxu0 %v5868
      %5889 = vmatprep.subr.bf16.mxu0 0
      %5890 = vmatpush1.bf16.msra.mxu0 %v5869
      %5891 = vmatprep.subr.bf16.mxu0 0
      %5892 = vmatpush1.bf16.msra.mxu0 %v5870
      %5893 = vmatprep.subr.bf16.mxu0 0
      %5894 = vmatpush1.bf16.msra.mxu0 %v5871
      %5895 = vmatprep.subr.bf16.mxu0 0
      %5896 = vmatpush1.bf16.msra.mxu0 %v5872
      %5897 = vmatprep.subr.bf16.mxu0 0
      %5898 = vmatpush1.bf16.msra.mxu0 0
      %5899 = vmatprep.subr.bf16.mxu0 0
      %5900 = vmatpush1.bf16.msra.mxu0 0
      %5901 = vmatprep.subr.bf16.mxu0 0
      %5902 = vmatpush1.bf16.msra.mxu0 0
      %5903 = vmatprep.subr.bf16.mxu0 0
      %5904 = vmatpush1.bf16.msra.mxu0 0
      %5905 = vmatprep.subr.bf16.mxu0 0
      %5906 = vmatpush1.bf16.msra.mxu0 0
      %5907 = vmatprep.subr.bf16.mxu0 0
      %5908 = vmatpush1.bf16.msra.mxu0 0
      %5909 = vmatprep.subr.bf16.mxu0 0
      %5910 = vmatpush1.bf16.msra.mxu0 0
      %5911 = vmatprep.subr.bf16.mxu0 0
      %5912 = vmatpush1.bf16.msra.mxu0 0
      %5913 = vmatprep.mubr.bf16.mxu0 0
      %5914 = vmatmul.mubr.bf16.gmra.mrb[0].mxu0 %v5831
      %v5915 = vpop.f32.mrb[0].mxu0
      %v5916 = vadd.f32 0.0, %v5915
      %v5917 = vpop.f32.mrb[0].mxu0
      %v5918 = vpop.f32.mrb[0].mxu0
      %v5919 = vadd.f32 0.0, %v5918
      %v5920 = vpop.f32.mrb[0].mxu0
      %5921 = vdwg.mxu0
      %v5922 = vadd.f32 %v5803, %v5916
      %v5923 = vadd.f32 %v5806, %v5919
      %v5924 = vld [vmem:[#allocation3] sm:$0xfe]
      %v5925 = vld [vmem:[#allocation3 + $0x10] sm:$0xff]
      %v5926 = vld [vmem:[#allocation3 + $0x20] sm:$0x1]
      %v5927 = vpack.c.bf16 %v5925, %v5924
      %v5928 = vpack.c.bf16 %v5926, %v5926
      %s5929 = scalar_lea.vmem %s5, 192
      %v5930 = vld [vmem:[%s5929] sm:$0xf]
      %v5931 = vld [vmem:[%s5929 + $0x4] sm:$0xf]
      %v5932 = vld [vmem:[%s5929 + $0x8] sm:$0xf]
      %v5933 = vld [vmem:[%s5929 + $0xc] sm:$0xf]
      %v5934 = vld [vmem:[%s5929 + $0x10] sm:$0xf]
      %v5935 = vld [vmem:[%s5929 + $0x14] sm:$0xf]
      %v5936 = vld [vmem:[%s5929 + $0x18] sm:$0xf]
      %v5937 = vld [vmem:[%s5929 + $0x1c] sm:$0xf]
      %v5938 = vld [vmem:[%s5929 + $0x20] sm:$0xf]
      %v5939 = vld [vmem:[%s5929 + $0x24] sm:$0xf]
      %v5940 = vld [vmem:[%s5929 + $0x28] sm:$0xf]
      %v5941 = vld [vmem:[%s5929 + $0x2c] sm:$0xf]
      %v5942 = vld [vmem:[%s5929 + $0x30] sm:$0xf]
      %v5943 = vld [vmem:[%s5929 + $0x34] sm:$0xf]
      %v5944 = vld [vmem:[%s5929 + $0x38] sm:$0xf]
      %v5945 = vld [vmem:[%s5929 + $0x3c] sm:$0xf]
      %vm5946 = vsmask.f32 7424
      %v5948 = vshrl.u32 %v5927, 16
      %v5950 = vshll.u32 %v5927, 16
      %v5952 = vrot.slane %v5950, 1
      %v5953 = vor.u32 %v5948, %v5952
      %v5955 = vshll.u32 %v5928, 16
      %v5957 = vrot.slane %v5955, 1
      %v5958 = vsel %vm5946, %v5953, %v5957
      %v5976 = vunpack.c.l.b16 %v5930
      %v5977 = vunpack.c.l.b16 %v5931
      %v5978 = vunpack.c.l.b16 %v5932
      %v5979 = vunpack.c.l.b16 %v5933
      %v5980 = vunpack.c.l.b16 %v5934
      %v5981 = vunpack.c.l.b16 %v5935
      %v5982 = vunpack.c.l.b16 %v5936
      %v5983 = vunpack.c.l.b16 %v5937
      %v5984 = vunpack.c.l.b16 %v5938
      %v5985 = vunpack.c.l.b16 %v5939
      %v5986 = vunpack.c.l.b16 %v5940
      %v5987 = vunpack.c.l.b16 %v5941
      %v5988 = vunpack.c.l.b16 %v5942
      %v5989 = vunpack.c.l.b16 %v5943
      %v5990 = vunpack.c.l.b16 %v5944
      %v5991 = vunpack.c.l.b16 %v5945
      %v5992 = vpack.c.b16 %v5977, %v5976
      %v5993 = vpack.c.b16 %v5979, %v5978
      %v5994 = vpack.c.b16 %v5981, %v5980
      %v5995 = vpack.c.b16 %v5983, %v5982
      %v5996 = vpack.c.b16 %v5985, %v5984
      %v5997 = vpack.c.b16 %v5987, %v5986
      %v5998 = vpack.c.b16 %v5989, %v5988
      %v5999 = vpack.c.b16 %v5991, %v5990
      %6008 = vmatprep.subr.bf16.mxu0 0
      %6009 = vmatpush1.bf16.msra.mxu0 %v5992
      %6010 = vmatprep.subr.bf16.mxu0 0
      %6011 = vmatpush1.bf16.msra.mxu0 %v5993
      %6012 = vmatprep.subr.bf16.mxu0 0
      %6013 = vmatpush1.bf16.msra.mxu0 %v5994
      %6014 = vmatprep.subr.bf16.mxu0 0
      %6015 = vmatpush1.bf16.msra.mxu0 %v5995
      %6016 = vmatprep.subr.bf16.mxu0 0
      %6017 = vmatpush1.bf16.msra.mxu0 %v5996
      %6018 = vmatprep.subr.bf16.mxu0 0
      %6019 = vmatpush1.bf16.msra.mxu0 %v5997
      %6020 = vmatprep.subr.bf16.mxu0 0
      %6021 = vmatpush1.bf16.msra.mxu0 %v5998
      %6022 = vmatprep.subr.bf16.mxu0 0
      %6023 = vmatpush1.bf16.msra.mxu0 %v5999
      %6024 = vmatprep.subr.bf16.mxu0 0
      %6025 = vmatpush1.bf16.msra.mxu0 0
      %6026 = vmatprep.subr.bf16.mxu0 0
      %6027 = vmatpush1.bf16.msra.mxu0 0
      %6028 = vmatprep.subr.bf16.mxu0 0
      %6029 = vmatpush1.bf16.msra.mxu0 0
      %6030 = vmatprep.subr.bf16.mxu0 0
      %6031 = vmatpush1.bf16.msra.mxu0 0
      %6032 = vmatprep.subr.bf16.mxu0 0
      %6033 = vmatpush1.bf16.msra.mxu0 0
      %6034 = vmatprep.subr.bf16.mxu0 0
      %6035 = vmatpush1.bf16.msra.mxu0 0
      %6036 = vmatprep.subr.bf16.mxu0 0
      %6037 = vmatpush1.bf16.msra.mxu0 0
      %6038 = vmatprep.subr.bf16.mxu0 0
      %6039 = vmatpush1.bf16.msra.mxu0 0
      %6040 = vmatprep.mubr.bf16.mxu0 0
      %6041 = vmatmul.mubr.bf16.gmra.mrb[0].mxu0 %v5958
      %v6042 = vpop.f32.mrb[0].mxu0
      %v6043 = vadd.f32 0.0, %v6042
      %v6044 = vpop.f32.mrb[0].mxu0
      %v6045 = vpop.f32.mrb[0].mxu0
      %v6046 = vadd.f32 0.0, %v6045
      %v6047 = vpop.f32.mrb[0].mxu0
      %6048 = vdwg.mxu0
      %v6049 = vadd.f32 %v5922, %v6043
      %v6050 = vadd.f32 %v5923, %v6046
      %v6051 = vld [vmem:[#allocation3] sm:$0xfe]
      %v6052 = vld [vmem:[#allocation3 + $0x8] sm:$0xfe]
      %v6053 = vld [vmem:[#allocation3 + $0x10] sm:$0xff]
      %v6054 = vld [vmem:[#allocation3 + $0x18] sm:$0xff]
      %v6055 = vld [vmem:[#allocation3 + $0x20] sm:$0x1]
      %v6056 = vld [vmem:[#allocation3 + $0x28] sm:$0x1]
      %v6057 = vpack.c.bf16 %v6053, %v6051
      %v6058 = vpack.c.bf16 %v6054, %v6052
      %v6059 = vpack.c.bf16 %v6055, %v6055
      %v6060 = vpack.c.bf16 %v6056, %v6056
      %s6061 = scalar_lea.vmem %s5, 256
      %v6062 = vld [vmem:[%s6061] sm:$0xf]
      %v6063 = vld [vmem:[%s6061 + $0x4] sm:$0xf]
      %v6064 = vld [vmem:[%s6061 + $0x8] sm:$0xf]
      %v6065 = vld [vmem:[%s6061 + $0xc] sm:$0xf]
      %v6066 = vld [vmem:[%s6061 + $0x10] sm:$0xf]
      %v6067 = vld [vmem:[%s6061 + $0x14] sm:$0xf]
      %v6068 = vld [vmem:[%s6061 + $0x18] sm:$0xf]
      %v6069 = vld [vmem:[%s6061 + $0x1c] sm:$0xf]
      %v6070 = vld [vmem:[%s6061 + $0x20] sm:$0xf]
      %v6071 = vld [vmem:[%s6061 + $0x24] sm:$0xf]
      %v6072 = vld [vmem:[%s6061 + $0x28] sm:$0xf]
      %v6073 = vld [vmem:[%s6061 + $0x2c] sm:$0xf]
      %v6074 = vld [vmem:[%s6061 + $0x30] sm:$0xf]
      %v6075 = vld [vmem:[%s6061 + $0x34] sm:$0xf]
      %v6076 = vld [vmem:[%s6061 + $0x38] sm:$0xf]
      %v6077 = vld [vmem:[%s6061 + $0x3c] sm:$0xf]
      %v6079 = vshrl.u32 %v6057, 16
      %v6081 = vshll.u32 %v6057, 16
      %v6083 = vrot.slane %v6081, 1
      %v6084 = vor.u32 %v6079, %v6083
      %v6086 = vshll.u32 %v6059, 16
      %v6088 = vrot.slane %v6086, 1
      %v6089 = vsel %vm5946, %v6084, %v6088
      %v6091 = vshrl.u32 %v6058, 16
      %v6093 = vshll.u32 %v6058, 16
      %v6095 = vrot.slane %v6093, 1
      %v6096 = vor.u32 %v6091, %v6095
      %v6098 = vshll.u32 %v6060, 16
      %v6100 = vrot.slane %v6098, 1
      %v6101 = vsel %vm5946, %v6096, %v6100
      %6102 = vrot.lane.b32.xlu0 %v6089, 120
      %v6103 = vpop.permute.xlu0 %6102
      %6104 = vrot.lane.b32.xlu0 %v6101, 120
      %v6105 = vpop.permute.xlu0 %6104
      %v6106 = vsel %vm5628, %v6103, %v6105
      %v6124 = vunpack.c.l.b16 %v6062
      %v6125 = vunpack.c.l.b16 %v6063
      %v6126 = vunpack.c.l.b16 %v6064
      %v6127 = vunpack.c.l.b16 %v6065
      %v6128 = vunpack.c.l.b16 %v6066
      %v6129 = vunpack.c.l.b16 %v6067
      %v6130 = vunpack.c.l.b16 %v6068
      %v6131 = vunpack.c.l.b16 %v6069
      %v6132 = vunpack.c.l.b16 %v6070
      %v6133 = vunpack.c.l.b16 %v6071
      %v6134 = vunpack.c.l.b16 %v6072
      %v6135 = vunpack.c.l.b16 %v6073
      %v6136 = vunpack.c.l.b16 %v6074
      %v6137 = vunpack.c.l.b16 %v6075
      %v6138 = vunpack.c.l.b16 %v6076
      %v6139 = vunpack.c.l.b16 %v6077
      %v6140 = vpack.c.b16 %v6125, %v6124
      %v6141 = vpack.c.b16 %v6127, %v6126
      %v6142 = vpack.c.b16 %v6129, %v6128
      %v6143 = vpack.c.b16 %v6131, %v6130
      %v6144 = vpack.c.b16 %v6133, %v6132
      %v6145 = vpack.c.b16 %v6135, %v6134
      %v6146 = vpack.c.b16 %v6137, %v6136
      %v6147 = vpack.c.b16 %v6139, %v6138
      %6156 = vmatprep.subr.bf16.mxu0 0
      %6157 = vmatpush1.bf16.msra.mxu0 %v6140
      %6158 = vmatprep.subr.bf16.mxu0 0
      %6159 = vmatpush1.bf16.msra.mxu0 %v6141
      %6160 = vmatprep.subr.bf16.mxu0 0
      %6161 = vmatpush1.bf16.msra.mxu0 %v6142
      %6162 = vmatprep.subr.bf16.mxu0 0
      %6163 = vmatpush1.bf16.msra.mxu0 %v6143
      %6164 = vmatprep.subr.bf16.mxu0 0
      %6165 = vmatpush1.bf16.msra.mxu0 %v6144
      %6166 = vmatprep.subr.bf16.mxu0 0
      %6167 = vmatpush1.bf16.msra.mxu0 %v6145
      %6168 = vmatprep.subr.bf16.mxu0 0
      %6169 = vmatpush1.bf16.msra.mxu0 %v6146
      %6170 = vmatprep.subr.bf16.mxu0 0
      %6171 = vmatpush1.bf16.msra.mxu0 %v6147
      %6172 = vmatprep.subr.bf16.mxu0 0
      %6173 = vmatpush1.bf16.msra.mxu0 0
      %6174 = vmatprep.subr.bf16.mxu0 0
      %6175 = vmatpush1.bf16.msra.mxu0 0
      %6176 = vmatprep.subr.bf16.mxu0 0
      %6177 = vmatpush1.bf16.msra.mxu0 0
      %6178 = vmatprep.subr.bf16.mxu0 0
      %6179 = vmatpush1.bf16.msra.mxu0 0
      %6180 = vmatprep.subr.bf16.mxu0 0
      %6181 = vmatpush1.bf16.msra.mxu0 0
      %6182 = vmatprep.subr.bf16.mxu0 0
      %6183 = vmatpush1.bf16.msra.mxu0 0
      %6184 = vmatprep.subr.bf16.mxu0 0
      %6185 = vmatpush1.bf16.msra.mxu0 0
      %6186 = vmatprep.subr.bf16.mxu0 0
      %6187 = vmatpush1.bf16.msra.mxu0 0
      %6188 = vmatprep.mubr.bf16.mxu0 0
      %6189 = vmatmul.mubr.bf16.gmra.mrb[0].mxu0 %v6106
      %v6190 = vpop.f32.mrb[0].mxu0
      %v6191 = vadd.f32 0.0, %v6190
      %v6192 = vpop.f32.mrb[0].mxu0
      %v6193 = vpop.f32.mrb[0].mxu0
      %v6194 = vadd.f32 0.0, %v6193
      %v6195 = vpop.f32.mrb[0].mxu0
      %6196 = vdwg.mxu0
      %v6197 = vadd.f32 %v6049, %v6191
      %v6198 = vadd.f32 %v6050, %v6194
      %s6199 = scalar_lea.vmem %s5, 320
      %v6200 = vld [vmem:[%s6199] sm:$0xf]
      %v6201 = vld [vmem:[%s6199 + $0x4] sm:$0xf]
      %v6202 = vld [vmem:[%s6199 + $0x8] sm:$0xf]
      %v6203 = vld [vmem:[%s6199 + $0xc] sm:$0xf]
      %v6204 = vld [vmem:[%s6199 + $0x10] sm:$0xf]
      %v6205 = vld [vmem:[%s6199 + $0x14] sm:$0xf]
      %v6206 = vld [vmem:[%s6199 + $0x18] sm:$0xf]
      %v6207 = vld [vmem:[%s6199 + $0x1c] sm:$0xf]
      %v6208 = vld [vmem:[%s6199 + $0x20] sm:$0xf]
      %v6209 = vld [vmem:[%s6199 + $0x24] sm:$0xf]
      %v6210 = vld [vmem:[%s6199 + $0x28] sm:$0xf]
      %v6211 = vld [vmem:[%s6199 + $0x2c] sm:$0xf]
      %v6212 = vld [vmem:[%s6199 + $0x30] sm:$0xf]
      %v6213 = vld [vmem:[%s6199 + $0x34] sm:$0xf]
      %v6214 = vld [vmem:[%s6199 + $0x38] sm:$0xf]
      %v6215 = vld [vmem:[%s6199 + $0x3c] sm:$0xf]
      %6216 = vrot.lane.b32.xlu0 %v6089, 112
      %v6217 = vpop.permute.xlu0 %6216
      %6218 = vrot.lane.b32.xlu0 %v6101, 112
      %v6219 = vpop.permute.xlu0 %6218
      %v6220 = vsel %vm5830, %v6217, %v6219
      %v6238 = vunpack.c.l.b16 %v6200
      %v6239 = vunpack.c.l.b16 %v6201
      %v6240 = vunpack.c.l.b16 %v6202
      %v6241 = vunpack.c.l.b16 %v6203
      %v6242 = vunpack.c.l.b16 %v6204
      %v6243 = vunpack.c.l.b16 %v6205
      %v6244 = vunpack.c.l.b16 %v6206
      %v6245 = vunpack.c.l.b16 %v6207
      %v6246 = vunpack.c.l.b16 %v6208
      %v6247 = vunpack.c.l.b16 %v6209
      %v6248 = vunpack.c.l.b16 %v6210
      %v6249 = vunpack.c.l.b16 %v6211
      %v6250 = vunpack.c.l.b16 %v6212
      %v6251 = vunpack.c.l.b16 %v6213
      %v6252 = vunpack.c.l.b16 %v6214
      %v6253 = vunpack.c.l.b16 %v6215
      %v6254 = vpack.c.b16 %v6239, %v6238
      %v6255 = vpack.c.b16 %v6241, %v6240
      %v6256 = vpack.c.b16 %v6243, %v6242
      %v6257 = vpack.c.b16 %v6245, %v6244
      %v6258 = vpack.c.b16 %v6247, %v6246
      %v6259 = vpack.c.b16 %v6249, %v6248
      %v6260 = vpack.c.b16 %v6251, %v6250
      %v6261 = vpack.c.b16 %v6253, %v6252
      %6270 = vmatprep.subr.bf16.mxu0 0
      %6271 = vmatpush1.bf16.msra.mxu0 %v6254
      %6272 = vmatprep.subr.bf16.mxu0 0
      %6273 = vmatpush1.bf16.msra.mxu0 %v6255
      %6274 = vmatprep.subr.bf16.mxu0 0
      %6275 = vmatpush1.bf16.msra.mxu0 %v6256
      %6276 = vmatprep.subr.bf16.mxu0 0
      %6277 = vmatpush1.bf16.msra.mxu0 %v6257
      %6278 = vmatprep.subr.bf16.mxu0 0
      %6279 = vmatpush1.bf16.msra.mxu0 %v6258
      %6280 = vmatprep.subr.bf16.mxu0 0
      %6281 = vmatpush1.bf16.msra.mxu0 %v6259
      %6282 = vmatprep.subr.bf16.mxu0 0
      %6283 = vmatpush1.bf16.msra.mxu0 %v6260
      %6284 = vmatprep.subr.bf16.mxu0 0
      %6285 = vmatpush1.bf16.msra.mxu0 %v6261
      %6286 = vmatprep.subr.bf16.mxu0 0
      %6287 = vmatpush1.bf16.msra.mxu0 0
      %6288 = vmatprep.subr.bf16.mxu0 0
      %6289 = vmatpush1.bf16.msra.mxu0 0
      %6290 = vmatprep.subr.bf16.mxu0 0
      %6291 = vmatpush1.bf16.msra.mxu0 0
      %6292 = vmatprep.subr.bf16.mxu0 0
      %6293 = vmatpush1.bf16.msra.mxu0 0
      %6294 = vmatprep.subr.bf16.mxu0 0
      %6295 = vmatpush1.bf16.msra.mxu0 0
      %6296 = vmatprep.subr.bf16.mxu0 0
      %6297 = vmatpush1.bf16.msra.mxu0 0
      %6298 = vmatprep.subr.bf16.mxu0 0
      %6299 = vmatpush1.bf16.msra.mxu0 0
      %6300 = vmatprep.subr.bf16.mxu0 0
      %6301 = vmatpush1.bf16.msra.mxu0 0
      %6302 = vmatprep.mubr.bf16.mxu0 0
      %6303 = vmatmul.mubr.bf16.gmra.mrb[0].mxu0 %v6220
      %v6304 = vpop.f32.mrb[0].mxu0
      %v6305 = vadd.f32 0.0, %v6304
      %v6306 = vpop.f32.mrb[0].mxu0
      %v6307 = vpop.f32.mrb[0].mxu0
      %v6308 = vadd.f32 0.0, %v6307
      %v6309 = vpop.f32.mrb[0].mxu0
      %6310 = vdwg.mxu0
      %v6311 = vadd.f32 %v6197, %v6305
      %v6312 = vadd.f32 %v6198, %v6308
      %v6313 = vld [vmem:[#allocation3] sm:$0xfc]
      %v6314 = vld [vmem:[#allocation3 + $0x20] sm:$0x3]
      %v6315 = vpack.c.bf16 %v5925, %v6313
      %v6316 = vpack.c.bf16 %v6314, %v6314
      %s6317 = scalar_lea.vmem %s5, 384
      %v6318 = vld [vmem:[%s6317] sm:$0xf]
      %v6319 = vld [vmem:[%s6317 + $0x4] sm:$0xf]
      %v6320 = vld [vmem:[%s6317 + $0x8] sm:$0xf]
      %v6321 = vld [vmem:[%s6317 + $0xc] sm:$0xf]
      %v6322 = vld [vmem:[%s6317 + $0x10] sm:$0xf]
      %v6323 = vld [vmem:[%s6317 + $0x14] sm:$0xf]
      %v6324 = vld [vmem:[%s6317 + $0x18] sm:$0xf]
      %v6325 = vld [vmem:[%s6317 + $0x1c] sm:$0xf]
      %v6326 = vld [vmem:[%s6317 + $0x20] sm:$0xf]
      %v6327 = vld [vmem:[%s6317 + $0x24] sm:$0xf]
      %v6328 = vld [vmem:[%s6317 + $0x28] sm:$0xf]
      %v6329 = vld [vmem:[%s6317 + $0x2c] sm:$0xf]
      %v6330 = vld [vmem:[%s6317 + $0x30] sm:$0xf]
      %v6331 = vld [vmem:[%s6317 + $0x34] sm:$0xf]
      %v6332 = vld [vmem:[%s6317 + $0x38] sm:$0xf]
      %v6333 = vld [vmem:[%s6317 + $0x3c] sm:$0xf]
      %vm6336 = vcmask 1046528
      %v6337 = vrot.slane %v6315, 1
      %v6338 = vrot.slane %v6316, 1
      %v6339 = vsel %vm6336, %v6337, %v6338
      %v6357 = vunpack.c.l.b16 %v6318
      %v6358 = vunpack.c.l.b16 %v6319
      %v6359 = vunpack.c.l.b16 %v6320
      %v6360 = vunpack.c.l.b16 %v6321
      %v6361 = vunpack.c.l.b16 %v6322
      %v6362 = vunpack.c.l.b16 %v6323
      %v6363 = vunpack.c.l.b16 %v6324
      %v6364 = vunpack.c.l.b16 %v6325
      %v6365 = vunpack.c.l.b16 %v6326
      %v6366 = vunpack.c.l.b16 %v6327
      %v6367 = vunpack.c.l.b16 %v6328
      %v6368 = vunpack.c.l.b16 %v6329
      %v6369 = vunpack.c.l.b16 %v6330
      %v6370 = vunpack.c.l.b16 %v6331
      %v6371 = vunpack.c.l.b16 %v6332
      %v6372 = vunpack.c.l.b16 %v6333
      %v6373 = vpack.c.b16 %v6358, %v6357
      %v6374 = vpack.c.b16 %v6360, %v6359
      %v6375 = vpack.c.b16 %v6362, %v6361
      %v6376 = vpack.c.b16 %v6364, %v6363
      %v6377 = vpack.c.b16 %v6366, %v6365
      %v6378 = vpack.c.b16 %v6368, %v6367
      %v6379 = vpack.c.b16 %v6370, %v6369
      %v6380 = vpack.c.b16 %v6372, %v6371
      %6389 = vmatprep.subr.bf16.mxu0 0
      %6390 = vmatpush1.bf16.msra.mxu0 %v6373
      %6391 = vmatprep.subr.bf16.mxu0 0
      %6392 = vmatpush1.bf16.msra.mxu0 %v6374
      %6393 = vmatprep.subr.bf16.mxu0 0
      %6394 = vmatpush1.bf16.msra.mxu0 %v6375
      %6395 = vmatprep.subr.bf16.mxu0 0
      %6396 = vmatpush1.bf16.msra.mxu0 %v6376
      %6397 = vmatprep.subr.bf16.mxu0 0
      %6398 = vmatpush1.bf16.msra.mxu0 %v6377
      %6399 = vmatprep.subr.bf16.mxu0 0
      %6400 = vmatpush1.bf16.msra.mxu0 %v6378
      %6401 = vmatprep.subr.bf16.mxu0 0
      %6402 = vmatpush1.bf16.msra.mxu0 %v6379
      %6403 = vmatprep.subr.bf16.mxu0 0
      %6404 = vmatpush1.bf16.msra.mxu0 %v6380
      %6405 = vmatprep.subr.bf16.mxu0 0
      %6406 = vmatpush1.bf16.msra.mxu0 0
      %6407 = vmatprep.subr.bf16.mxu0 0
      %6408 = vmatpush1.bf16.msra.mxu0 0
      %6409 = vmatprep.subr.bf16.mxu0 0
      %6410 = vmatpush1.bf16.msra.mxu0 0
      %6411 = vmatprep.subr.bf16.mxu0 0
      %6412 = vmatpush1.bf16.msra.mxu0 0
      %6413 = vmatprep.subr.bf16.mxu0 0
      %6414 = vmatpush1.bf16.msra.mxu0 0
      %6415 = vmatprep.subr.bf16.mxu0 0
      %6416 = vmatpush1.bf16.msra.mxu0 0
      %6417 = vmatprep.subr.bf16.mxu0 0
      %6418 = vmatpush1.bf16.msra.mxu0 0
      %6419 = vmatprep.subr.bf16.mxu0 0
      %6420 = vmatpush1.bf16.msra.mxu0 0
      %6421 = vmatprep.mubr.bf16.mxu0 0
      %6422 = vmatmul.mubr.bf16.gmra.mrb[0].mxu0 %v6339
      %v6423 = vpop.f32.mrb[0].mxu0
      %v6424 = vadd.f32 0.0, %v6423
      %v6425 = vpop.f32.mrb[0].mxu0
      %v6426 = vpop.f32.mrb[0].mxu0
      %v6427 = vadd.f32 0.0, %v6426
      %v6428 = vpop.f32.mrb[0].mxu0
      %6429 = vdwg.mxu0
      %v6430 = vadd.f32 %v6311, %v6424
      %v6431 = vadd.f32 %v6312, %v6427
      %v6432 = vld [vmem:[#allocation3] sm:$0xfc]
      %v6433 = vld [vmem:[#allocation3 + $0x8] sm:$0xfc]
      %v6434 = vld [vmem:[#allocation3 + $0x20] sm:$0x3]
      %v6435 = vld [vmem:[#allocation3 + $0x28] sm:$0x3]
      %v6436 = vpack.c.bf16 %v6053, %v6432
      %v6437 = vpack.c.bf16 %v6054, %v6433
      %v6438 = vpack.c.bf16 %v6434, %v6434
      %v6439 = vpack.c.bf16 %v6435, %v6435
      %s6440 = scalar_lea.vmem %s5, 448
      %v6441 = vld [vmem:[%s6440] sm:$0xf]
      %v6442 = vld [vmem:[%s6440 + $0x4] sm:$0xf]
      %v6443 = vld [vmem:[%s6440 + $0x8] sm:$0xf]
      %v6444 = vld [vmem:[%s6440 + $0xc] sm:$0xf]
      %v6445 = vld [vmem:[%s6440 + $0x10] sm:$0xf]
      %v6446 = vld [vmem:[%s6440 + $0x14] sm:$0xf]
      %v6447 = vld [vmem:[%s6440 + $0x18] sm:$0xf]
      %v6448 = vld [vmem:[%s6440 + $0x1c] sm:$0xf]
      %v6449 = vld [vmem:[%s6440 + $0x20] sm:$0xf]
      %v6450 = vld [vmem:[%s6440 + $0x24] sm:$0xf]
      %v6451 = vld [vmem:[%s6440 + $0x28] sm:$0xf]
      %v6452 = vld [vmem:[%s6440 + $0x2c] sm:$0xf]
      %v6453 = vld [vmem:[%s6440 + $0x30] sm:$0xf]
      %v6454 = vld [vmem:[%s6440 + $0x34] sm:$0xf]
      %v6455 = vld [vmem:[%s6440 + $0x38] sm:$0xf]
      %v6456 = vld [vmem:[%s6440 + $0x3c] sm:$0xf]
      %v6461 = vrot.slane %v6436, 1
      %v6462 = vrot.slane %v6438, 1
      %v6463 = vsel %vm6336, %v6461, %v6462
      %v6464 = vrot.slane %v6437, 1
      %v6465 = vrot.slane %v6439, 1
      %v6466 = vsel %vm6336, %v6464, %v6465
      %6467 = vrot.lane.b32.xlu0 %v6463, 120
      %v6468 = vpop.permute.xlu0 %6467
      %6469 = vrot.lane.b32.xlu0 %v6466, 120
      %v6470 = vpop.permute.xlu0 %6469
      %v6471 = vsel %vm5628, %v6468, %v6470
      %v6489 = vunpack.c.l.b16 %v6441
      %v6490 = vunpack.c.l.b16 %v6442
      %v6491 = vunpack.c.l.b16 %v6443
      %v6492 = vunpack.c.l.b16 %v6444
      %v6493 = vunpack.c.l.b16 %v6445
      %v6494 = vunpack.c.l.b16 %v6446
      %v6495 = vunpack.c.l.b16 %v6447
      %v6496 = vunpack.c.l.b16 %v6448
      %v6497 = vunpack.c.l.b16 %v6449
      %v6498 = vunpack.c.l.b16 %v6450
      %v6499 = vunpack.c.l.b16 %v6451
      %v6500 = vunpack.c.l.b16 %v6452
      %v6501 = vunpack.c.l.b16 %v6453
      %v6502 = vunpack.c.l.b16 %v6454
      %v6503 = vunpack.c.l.b16 %v6455
      %v6504 = vunpack.c.l.b16 %v6456
      %v6505 = vpack.c.b16 %v6490, %v6489
      %v6506 = vpack.c.b16 %v6492, %v6491
      %v6507 = vpack.c.b16 %v6494, %v6493
      %v6508 = vpack.c.b16 %v6496, %v6495
      %v6509 = vpack.c.b16 %v6498, %v6497
      %v6510 = vpack.c.b16 %v6500, %v6499
      %v6511 = vpack.c.b16 %v6502, %v6501
      %v6512 = vpack.c.b16 %v6504, %v6503
      %6521 = vmatprep.subr.bf16.mxu0 0
      %6522 = vmatpush1.bf16.msra.mxu0 %v6505
      %6523 = vmatprep.subr.bf16.mxu0 0
      %6524 = vmatpush1.bf16.msra.mxu0 %v6506
      %6525 = vmatprep.subr.bf16.mxu0 0
      %6526 = vmatpush1.bf16.msra.mxu0 %v6507
      %6527 = vmatprep.subr.bf16.mxu0 0
      %6528 = vmatpush1.bf16.msra.mxu0 %v6508
      %6529 = vmatprep.subr.bf16.mxu0 0
      %6530 = vmatpush1.bf16.msra.mxu0 %v6509
      %6531 = vmatprep.subr.bf16.mxu0 0
      %6532 = vmatpush1.bf16.msra.mxu0 %v6510
      %6533 = vmatprep.subr.bf16.mxu0 0
      %6534 = vmatpush1.bf16.msra.mxu0 %v6511
      %6535 = vmatprep.subr.bf16.mxu0 0
      %6536 = vmatpush1.bf16.msra.mxu0 %v6512
      %6537 = vmatprep.subr.bf16.mxu0 0
      %6538 = vmatpush1.bf16.msra.mxu0 0
      %6539 = vmatprep.subr.bf16.mxu0 0
      %6540 = vmatpush1.bf16.msra.mxu0 0
      %6541 = vmatprep.subr.bf16.mxu0 0
      %6542 = vmatpush1.bf16.msra.mxu0 0
      %6543 = vmatprep.subr.bf16.mxu0 0
      %6544 = vmatpush1.bf16.msra.mxu0 0
      %6545 = vmatprep.subr.bf16.mxu0 0
      %6546 = vmatpush1.bf16.msra.mxu0 0
      %6547 = vmatprep.subr.bf16.mxu0 0
      %6548 = vmatpush1.bf16.msra.mxu0 0
      %6549 = vmatprep.subr.bf16.mxu0 0
      %6550 = vmatpush1.bf16.msra.mxu0 0
      %6551 = vmatprep.subr.bf16.mxu0 0
      %6552 = vmatpush1.bf16.msra.mxu0 0
      %6553 = vmatprep.mubr.bf16.mxu0 0
      %6554 = vmatmul.mubr.bf16.gmra.mrb[0].mxu0 %v6471
      %v6555 = vpop.f32.mrb[0].mxu0
      %v6556 = vadd.f32 0.0, %v6555
      %v6557 = vpop.f32.mrb[0].mxu0
      %v6558 = vpop.f32.mrb[0].mxu0
      %v6559 = vadd.f32 0.0, %v6558
      %v6560 = vpop.f32.mrb[0].mxu0
      %6561 = vdwg.mxu0
      %v6562 = vadd.f32 %v6430, %v6556
      %v6563 = vadd.f32 %v6431, %v6559
      %s6564 = scalar_lea.vmem %s5, 512
      %v6565 = vld [vmem:[%s6564] sm:$0xf]
      %v6566 = vld [vmem:[%s6564 + $0x4] sm:$0xf]
      %v6567 = vld [vmem:[%s6564 + $0x8] sm:$0xf]
      %v6568 = vld [vmem:[%s6564 + $0xc] sm:$0xf]
      %v6569 = vld [vmem:[%s6564 + $0x10] sm:$0xf]
      %v6570 = vld [vmem:[%s6564 + $0x14] sm:$0xf]
      %v6571 = vld [vmem:[%s6564 + $0x18] sm:$0xf]
      %v6572 = vld [vmem:[%s6564 + $0x1c] sm:$0xf]
      %v6573 = vld [vmem:[%s6564 + $0x20] sm:$0xf]
      %v6574 = vld [vmem:[%s6564 + $0x24] sm:$0xf]
      %v6575 = vld [vmem:[%s6564 + $0x28] sm:$0xf]
      %v6576 = vld [vmem:[%s6564 + $0x2c] sm:$0xf]
      %v6577 = vld [vmem:[%s6564 + $0x30] sm:$0xf]
      %v6578 = vld [vmem:[%s6564 + $0x34] sm:$0xf]
      %v6579 = vld [vmem:[%s6564 + $0x38] sm:$0xf]
      %v6580 = vld [vmem:[%s6564 + $0x3c] sm:$0xf]
      %6581 = vrot.lane.b32.xlu0 %v6463, 112
      %v6582 = vpop.permute.xlu0 %6581
      %6583 = vrot.lane.b32.xlu0 %v6466, 112
      %v6584 = vpop.permute.xlu0 %6583
      %v6585 = vsel %vm5830, %v6582, %v6584
      %v6603 = vunpack.c.l.b16 %v6565
      %v6604 = vunpack.c.l.b16 %v6566
      %v6605 = vunpack.c.l.b16 %v6567
      %v6606 = vunpack.c.l.b16 %v6568
      %v6607 = vunpack.c.l.b16 %v6569
      %v6608 = vunpack.c.l.b16 %v6570
      %v6609 = vunpack.c.l.b16 %v6571
      %v6610 = vunpack.c.l.b16 %v6572
      %v6611 = vunpack.c.l.b16 %v6573
      %v6612 = vunpack.c.l.b16 %v6574
      %v6613 = vunpack.c.l.b16 %v6575
      %v6614 = vunpack.c.l.b16 %v6576
      %v6615 = vunpack.c.l.b16 %v6577
      %v6616 = vunpack.c.l.b16 %v6578
      %v6617 = vunpack.c.l.b16 %v6579
      %v6618 = vunpack.c.l.b16 %v6580
      %v6619 = vpack.c.b16 %v6604, %v6603
      %v6620 = vpack.c.b16 %v6606, %v6605
      %v6621 = vpack.c.b16 %v6608, %v6607
      %v6622 = vpack.c.b16 %v6610, %v6609
      %v6623 = vpack.c.b16 %v6612, %v6611
      %v6624 = vpack.c.b16 %v6614, %v6613
      %v6625 = vpack.c.b16 %v6616, %v6615
      %v6626 = vpack.c.b16 %v6618, %v6617
      %6635 = vmatprep.subr.bf16.mxu0 0
      %6636 = vmatpush1.bf16.msra.mxu0 %v6619
      %6637 = vmatprep.subr.bf16.mxu0 0
      %6638 = vmatpush1.bf16.msra.mxu0 %v6620
      %6639 = vmatprep.subr.bf16.mxu0 0
      %6640 = vmatpush1.bf16.msra.mxu0 %v6621
      %6641 = vmatprep.subr.bf16.mxu0 0
      %6642 = vmatpush1.bf16.msra.mxu0 %v6622
      %6643 = vmatprep.subr.bf16.mxu0 0
      %6644 = vmatpush1.bf16.msra.mxu0 %v6623
      %6645 = vmatprep.subr.bf16.mxu0 0
      %6646 = vmatpush1.bf16.msra.mxu0 %v6624
      %6647 = vmatprep.subr.bf16.mxu0 0
      %6648 = vmatpush1.bf16.msra.mxu0 %v6625
      %6649 = vmatprep.subr.bf16.mxu0 0
      %6650 = vmatpush1.bf16.msra.mxu0 %v6626
      %6651 = vmatprep.subr.bf16.mxu0 0
      %6652 = vmatpush1.bf16.msra.mxu0 0
      %6653 = vmatprep.subr.bf16.mxu0 0
      %6654 = vmatpush1.bf16.msra.mxu0 0
      %6655 = vmatprep.subr.bf16.mxu0 0
      %6656 = vmatpush1.bf16.msra.mxu0 0
      %6657 = vmatprep.subr.bf16.mxu0 0
      %6658 = vmatpush1.bf16.msra.mxu0 0
      %6659 = vmatprep.subr.bf16.mxu0 0
      %6660 = vmatpush1.bf16.msra.mxu0 0
      %6661 = vmatprep.subr.bf16.mxu0 0
      %6662 = vmatpush1.bf16.msra.mxu0 0
      %6663 = vmatprep.subr.bf16.mxu0 0
      %6664 = vmatpush1.bf16.msra.mxu0 0
      %6665 = vmatprep.subr.bf16.mxu0 0
      %6666 = vmatpush1.bf16.msra.mxu0 0
      %6667 = vmatprep.mubr.bf16.mxu0 0
      %6668 = vmatmul.mubr.bf16.gmra.mrb[0].mxu0 %v6585
      %v6669 = vpop.f32.mrb[0].mxu0
      %v6670 = vadd.f32 0.0, %v6669
      %v6671 = vpop.f32.mrb[0].mxu0
      %v6672 = vpop.f32.mrb[0].mxu0
      %v6673 = vadd.f32 0.0, %v6672
      %v6674 = vpop.f32.mrb[0].mxu0
      %6675 = vdwg.mxu0
      %v6676 = vadd.f32 %v6562, %v6670
      %v6677 = vadd.f32 %v6563, %v6673
      %v6678 = vld [vmem:[%s6] sm:$0x1]
      %v6680 = vlaneseq
      %v6681 = vshrl.u32 %v6680, 7
      %v6682 = vsub.s32 0, %v6681
      %v6683 = vrot.slane %v6678, %v6682
      %v6685 = vadd.f32 %v6676, %v6683
      %v6686 = vadd.f32 %v6677, %v6683
      %6687 = vst.msk [vmem:[%s311] sm:$0xff] %vm371, %v6685
      %6688 = vst.msk [vmem:[%s311 + $0x8] sm:$0xff] %vm371, %v6686
      %p6689 = scmp.lt.s32.totalorder %s20, 1
      %s6690 = scalar_select %p6689, %s20, 1
      %s6691 = smul.addr %s6690, 2
      %s6692 = smul.addr %s6691, 8
      %s6693 = scalar_lea.vmem %s7, %s6692
      %p6694 = scmp.lt.s32.totalorder %s20, 1
      %s6695 = scalar_select %p6694, %s20, 1
      %s6696 = scalar_lea.vmem %s8, %s6695
      // Predicated region
      $region49: #{vqvae_forward.1} parent=47 // pred_check
        %p6697 = pneg %p190
      $region50: #{vqvae_forward.1} parent=47 // pred_check_branch
        %6699 = sbr.rel (%p6697) target = $region52
      $region51: #{vqvae_forward.1} parent=47 // pred_region
        _
      $region52: #{vqvae_forward.1} parent=47 // pred_fallthru
        _
      // Predicated region
      $region53: #{vqvae_forward.1} parent=47 // pred_check
        %p6700 = pneg %p216
      $region54: #{vqvae_forward.1} parent=47 // pred_check_branch
        %6702 = sbr.rel (%p6700) target = $region56
      $region55: #{vqvae_forward.1} parent=47 // pred_region
        _
      $region56: #{vqvae_forward.1} parent=47 // pred_fallthru
        _
    $region48: #{vqvae_forward.1} parent=5 // pred_fallthru
      _
    %p6703 = scmp.le.s32.totalorder 2, %s15
    // Predicated region
    $region57: #{vqvae_forward.1} parent=5 // pred_check
      %p6704 = pneg %p6703
    $region58: #{vqvae_forward.1} parent=5 // pred_check_branch
      %6706 = sbr.rel (%p6704) target = $region60
    $region59: #{vqvae_forward.1} parent=5 // pred_region
      %s6707 = ssub.s32 %s15, 2
      // Predicated region
      $region61: #{vqvae_forward.1} parent=59 // pred_check
        %p6708 = pneg %p196
      $region62: #{vqvae_forward.1} parent=59 // pred_check_branch
        %6710 = sbr.rel (%p6708) target = $region64
      $region63: #{vqvae_forward.1} parent=59 // pred_region
        %p6711 = scmp.lt.s32.totalorder %s21, 1
        %s6712 = scalar_select %p6711, %s21, 1
        %s6713 = smul.addr %s6712, 2
        %s6714 = smul.addr %s6713, 8
        %s6715 = scalar_lea.vmem %s7, %s6714
      $region64: #{vqvae_forward.1} parent=59 // pred_fallthru
        _
      // Predicated region
      $region65: #{vqvae_forward.1} parent=59 // pred_check
        %p6716 = pneg %p222
      $region66: #{vqvae_forward.1} parent=59 // pred_check_branch
        %6718 = sbr.rel (%p6716) target = $region68
      $region67: #{vqvae_forward.1} parent=59 // pred_region
        %p6719 = scmp.lt.s32.totalorder %s21, 1
        %s6720 = scalar_select %p6719, %s21, 1
        %s6721 = scalar_lea.vmem %s8, %s6720
      $region68: #{vqvae_forward.1} parent=59 // pred_fallthru
        _
    $region60: #{vqvae_forward.1} parent=5 // pred_fallthru
      _
  $region6: #{vqvae_forward.1} parent=0 // loop_footer
    %s19 = sadd.s32 1, %s15
  $region7: #{vqvae_forward.1} parent=0 // loop_footer_branch
    %14 = sbr.rel target = $region3
  $region8: #{vqvae_forward.1} parent=0 // loop_exit
    _

</llo_original>
